<compile_context>
chip_gen: v6e
topology: v6e:2x2x1
jax: 0.10.0
libtpu: 0.0.40
codegen_flags: <defaults>
</compile_context>

<pallas_src>
import functools

import jax
import jax.numpy as jnp
from jax import lax
from jax.experimental import pallas as pl
from jax.experimental.pallas import tpu as pltpu

LANE = 128  # channel axes are padded to this inside the kernels (lane width)
# TODO(synk): make the output-channel pad generation-dependent (256 for the
# 2x256^2 MXUs of v6e/v7x at production channel counts, 128 for v5e).


def _round_up(x, m):
    return (x + m - 1) // m * m


def _pick_band_height(H, W, Cp, Coutp, budget_bytes=12 << 20):
    """Largest divisor of H whose per-band working set fits the VMEM budget,
    preferring >= 2 bands so the grid can pipeline / split across cores.
    # TODO(synk): scale budget with the generation (v7x 64 MiB vs v6e 128 MiB)."""
    divs = [d for d in range(1, H + 1) if H % d == 0]

    def est(bh):
        halo = (bh + 2) * (W + 2) * Cp * 2        # bf16 halo scratch
        x_in = 2 * bh * W * Cp * 4 * 2            # inputs (f32 upper bound, 2x buffered)
        y_out = 2 * bh * W * Coutp * 2            # bf16 band out, double-buffered
        acc = bh * W * Coutp * 4                  # f32 matmul accumulator
        taps = bh * W * Cp * 2                    # transient tap copy
        return halo + x_in + y_out + acc + taps

    ok = [d for d in divs if est(d) <= budget_bytes] or divs[:1]
    bh = max(ok)
    if bh == H and H > 1:
        smaller = [d for d in ok if d < H]
        if smaller:
            bh = max(smaller)
    return bh


# ----------------------------------------------------------------------------
# Kernel 1: fused [optional per-channel affine+ReLU prologue] ->
#           scatter-into-halo-scratch (does the concat / channel-pad / spatial
#           zero-pad) -> 3x3 conv (stride 1, pad 1, no bias) as 9 accumulating
#           MXU matmuls -> per-band per-channel sum / sum-of-squares partials.
# Grid = (N, num_bands); both axes "parallel".
# ----------------------------------------------------------------------------
def _conv3x3_band_kernel(*refs, bh, W, Cp, Coutp, cins, coffs, nb,
                         apply_prologue):
    n_in = len(cins)
    x_refs = refs[:3 * n_in]
    w_ref, s_ref, b_ref, y_ref, st_ref, xpad = refs[3 * n_in:3 * n_in + 6]

    band = pl.program_id(1)
    is_first = band == 0
    is_last = band == nb - 1

    # Zero the halo scratch: provides both the conv's spatial zero padding and
    # the zero padding of unused channel lanes in one cheap store.
    xpad[...] = jnp.zeros_like(xpad)

    if apply_prologue:
        scale = s_ref[...].reshape(1, Cp)
        bias = b_ref[...].reshape(1, Cp)

    for idx in range(n_in):
        cur_ref, prev_ref, nxt_ref = x_refs[3 * idx:3 * idx + 3]
        c, off = cins[idx], coffs[idx]
        cur = cur_ref[0, 0].astype(jnp.float32)          # (bh, W, c)
        top = prev_ref[0, 0, 0].astype(jnp.float32)      # (W, c)
        bot = nxt_ref[0, 0, 0].astype(jnp.float32)       # (W, c)
        if apply_prologue:
            # BN + ReLU of the previous layer, applied to real rows only
            # (the spatial zero padding stays zero, matching the reference).
            cur = jnp.maximum(cur * scale.reshape(1, 1, Cp)
                              + bias.reshape(1, 1, Cp), 0.0)
            top = jnp.maximum(top * scale + bias, 0.0)
            bot = jnp.maximum(bot * scale + bias, 0.0)
        # Boundary bands: the halo row is the conv's spatial zero padding.
        top = jnp.where(is_first, jnp.zeros_like(top), top)
        bot = jnp.where(is_last, jnp.zeros_like(bot), bot)
        xpad[1:bh + 1, 1:W + 1, off:off + c] = cur.astype(jnp.bfloat16)
        xpad[0:1, 1:W + 1, off:off + c] = (
            top.astype(jnp.bfloat16).reshape(1, W, c))
        xpad[bh + 1:bh + 2, 1:W + 1, off:off + c] = (
            bot.astype(jnp.bfloat16).reshape(1, W, c))

    # 9 accumulating MXU matmuls from shifted views of the halo scratch
    # (no 9*Cp-wide im2col buffer, no concatenates).
    acc = None
    k = 0
    for kh in range(3):
        for kw in range(3):
            tap = xpad[kh:kh + bh, kw:kw + W, :].reshape(bh * W, Cp)
            part = jnp.dot(tap, w_ref[k], preferred_element_type=jnp.float32)
            acc = part if acc is None else acc + part
            k += 1

    y_ref[0, 0] = acc.reshape(bh, W, Coutp).astype(y_ref.dtype)

    # Per-band partial BatchNorm statistics (row 0 = sum, row 1 = sum of sq),
    # reduced over (N, bands) in the wrapper.
    st_ref[0, 0] = jnp.concatenate(
        [jnp.sum(acc, axis=0, keepdims=True),
         jnp.sum(acc * acc, axis=0, keepdims=True)], axis=0)


def conv3x3_bn_stats(inputs, w, scale, bias, *, apply_prologue,
                     out_dtype=jnp.bfloat16):
    """inputs: list of banded NHWC activations, each (N, nb, bh, W, c_i).
    w: (9, Cp, Coutp) bf16 (zero-padded, im2col tap-major).  scale/bias:
    (1, Cp) f32 folded BN+ReLU of the previous layer (only read when
    apply_prologue=True, which requires len(inputs)==1 and c_0==Cp).
    Returns (y: (N, nb, bh, W, Coutp) out_dtype, stats: (N, nb, 2, Coutp))."""
    N, nb, bh, W, _ = inputs[0].shape
    cins = tuple(int(x.shape[-1]) for x in inputs)
    coffs = tuple(int(sum(cins[:i])) for i in range(len(cins)))
    _, Cp, Coutp = w.shape
    assert sum(cins) <= Cp
    if apply_prologue:
        assert len(inputs) == 1 and cins[0] == Cp

    def cur_spec(c):
        return pl.BlockSpec((1, 1, bh, W, c), lambda n, b: (n, b, 0, 0, 0))

    def prev_spec(c):  # previous band's last row (clamped; zeroed in-kernel at b==0)
        return pl.BlockSpec((1, 1, 1, W, c),
                            lambda n, b: (n, jnp.maximum(b - 1, 0), bh - 1, 0, 0))

    def next_spec(c):  # next band's first row (clamped; zeroed in-kernel at b==nb-1)
        return pl.BlockSpec((1, 1, 1, W, c),
                            lambda n, b: (n, jnp.minimum(b + 1, nb - 1), 0, 0, 0))

    in_specs, operands = [], []
    for x, c in zip(inputs, cins):
        in_specs += [cur_spec(c), prev_spec(c), next_spec(c)]
        operands += [x, x, x]
    # TODO(synk): pin the grid-invariant weight/scale/bias to a single buffer
    # (pipeline_mode=pl.Buffered(1)) to save VMEM at production channel counts.
    in_specs += [
        pl.BlockSpec((9, Cp, Coutp), lambda n, b: (0, 0, 0)),
        pl.BlockSpec((1, Cp), lambda n, b: (0, 0)),
        pl.BlockSpec((1, Cp), lambda n, b: (0, 0)),
    ]
    operands += [w, scale, bias]

    kernel = functools.partial(_conv3x3_band_kernel, bh=bh, W=W, Cp=Cp,
                               Coutp=Coutp, cins=cins, coffs=coffs, nb=nb,
                               apply_prologue=apply_prologue)
    return pl.pallas_call(
        kernel,
        out_shape=(jax.ShapeDtypeStruct((N, nb, bh, W, Coutp), out_dtype),
                   jax.ShapeDtypeStruct((N, nb, 2, Coutp), jnp.float32)),
        grid=(N, nb),
        in_specs=in_specs,
        out_specs=(pl.BlockSpec((1, 1, bh, W, Coutp),
                                lambda n, b: (n, b, 0, 0, 0)),
                   pl.BlockSpec((1, 1, 2, Coutp), lambda n, b: (n, b, 0, 0))),
        scratch_shapes=[pltpu.VMEM((bh + 2, W + 2, Cp), jnp.bfloat16)],
        compiler_params=pltpu.CompilerParams(
            dimension_semantics=("parallel", "parallel"),
            vmem_limit_bytes=64 * 1024 * 1024),
    )(*operands)


# ----------------------------------------------------------------------------
# Kernel 2: lane-dense per-channel affine (folded BN) + ReLU (final layer).
# ----------------------------------------------------------------------------
def _affine_relu_kernel(x_ref, s_ref, b_ref, o_ref):
    Cp = x_ref.shape[-1]
    x = x_ref[0, 0].astype(jnp.float32)
    s = s_ref[...].reshape(1, 1, Cp)
    b = b_ref[...].reshape(1, 1, Cp)
    o_ref[0, 0] = jnp.maximum(x * s + b, 0.0)


def affine_relu(x, scale, bias):
    N, nb, bh, W, Cp = x.shape
    return pl.pallas_call(
        _affine_relu_kernel,
        out_shape=jax.ShapeDtypeStruct((N, nb, bh, W, Cp), jnp.float32),
        grid=(N, nb),
        in_specs=[pl.BlockSpec((1, 1, bh, W, Cp), lambda n, b: (n, b, 0, 0, 0)),
                  pl.BlockSpec((1, Cp), lambda n, b: (0, 0)),
                  pl.BlockSpec((1, Cp), lambda n, b: (0, 0))],
        out_specs=pl.BlockSpec((1, 1, bh, W, Cp), lambda n, b: (n, b, 0, 0, 0)),
        compiler_params=pltpu.CompilerParams(
            dimension_semantics=("parallel", "parallel"),
            vmem_limit_bytes=64 * 1024 * 1024),
    )(x, scale, bias)


# ----------------------------------------------------------------------------
# Plain-JAX glue.
# ----------------------------------------------------------------------------
def _interp_matrix_1d(n_in, n_out):
    """(n_out, n_in) bilinear align_corners=True interpolation matrix."""
    src = jnp.arange(n_out, dtype=jnp.float32) * (n_in - 1) / max(n_out - 1, 1)
    i0 = jnp.clip(jnp.floor(src).astype(jnp.int32), 0, n_in - 1)
    i1 = jnp.clip(i0 + 1, 0, n_in - 1)
    f = (src - i0.astype(jnp.float32))[:, None]
    return (jax.nn.one_hot(i0, n_in, dtype=jnp.float32) * (1.0 - f)
            + jax.nn.one_hot(i1, n_in, dtype=jnp.float32) * f)


def bilinear_upsample_2x(x):
    """(N,H,W,C) -> (N,2H,2W,C); torch Upsample(scale_factor=2, align_corners=True).
    Two tiny interpolation-matrix contractions instead of gathers."""
    # TODO(synk): fold the upsample + spatial pad into conv1's input pipeline.
    N, H, W, C = x.shape
    mh = _interp_matrix_1d(H, 2 * H)
    mw = _interp_matrix_1d(W, 2 * W)
    x = jnp.einsum('oh,nhwc->nowc', mh, x, precision=lax.Precision.HIGHEST)
    x = jnp.einsum('pw,nhwc->nhpc', mw, x, precision=lax.Precision.HIGHEST)
    return x


def _bn_scale_bias(stats, count, gamma_p, beta_p, eps=1e-5):
    """Fold training-mode BatchNorm (biased variance) into scale/bias.
    stats: (N, nb, 2, Cp); row 0 = per-channel sum, row 1 = sum of squares."""
    tot = jnp.sum(stats, axis=(0, 1))                  # (2, Cp)
    mean = tot[0] / count
    var = jnp.maximum(tot[1] / count - mean * mean, 0.0)
    # TODO(synk): at production pixel counts use a centered two-pass / Welford
    # fold; E[x^2]-E[x]^2 in f32 is cancellation-prone.
    scale = gamma_p / jnp.sqrt(var + eps)
    bias = beta_p - mean * scale
    return (scale.reshape(1, -1).astype(jnp.float32),
            bias.reshape(1, -1).astype(jnp.float32))


# ----------------------------------------------------------------------------
# The Up module (bilinear branch) with deterministic synthetic parameters.
# ----------------------------------------------------------------------------
class UpPallas:
    def __init__(self, in_channels, out_channels, key):
        mid = in_channels // 2
        # The reference module applies BatchNorm2d(mid) to conv2's output, so
        # it only runs when mid == out_channels (standard bilinear-UNet usage).
        assert mid == out_channels
        self.in_channels, self.mid, self.out_channels = in_channels, mid, out_channels
        self.cin_p = max(LANE, _round_up(in_channels, LANE))
        self.cmid_p = max(LANE, _round_up(mid, LANE))
        self.cout_p = max(LANE, _round_up(out_channels, LANE))

        k1, k2 = jax.random.split(key)
        # PyTorch Conv2d weight layout: (Cout, Cin, kH, kW), bias=False.
        w1 = jax.random.normal(k1, (mid, in_channels, 3, 3), jnp.float32) \
            * (1.0 / jnp.sqrt(in_channels * 9.0))
        w2 = jax.random.normal(k2, (out_channels, mid, 3, 3), jnp.float32) \
            * (1.0 / jnp.sqrt(mid * 9.0))
        self.w1 = self._prep_weight(w1, self.cin_p, self.cmid_p)
        self.w2 = self._prep_weight(w2, self.cmid_p, self.cout_p)
        # BatchNorm2d defaults: weight (gamma) = 1, bias (beta) = 0.
        self.g1 = jnp.ones((mid,), jnp.float32)
        self.b1 = jnp.zeros((mid,), jnp.float32)
        self.g2 = jnp.ones((out_channels,), jnp.float32)
        self.b2 = jnp.zeros((out_channels,), jnp.float32)

    @staticmethod
    def _prep_weight(w_oihw, cin_p, cout_p):
        """(Cout,Cin,3,3) -> zero-padded tap-major (9, cin_p, cout_p) bf16."""
        cout, cin = w_oihw.shape[:2]
        w = jnp.transpose(w_oihw, (2, 3, 1, 0))                    # (3,3,Cin,Cout)
        w = jnp.pad(w, ((0, 0), (0, 0), (0, cin_p - cin), (0, cout_p - cout)))
        return w.reshape(9, cin_p, cout_p).astype(jnp.bfloat16)

    def __call__(self, x1, x2):
        # x1, x2: NCHW float32 (PyTorch convention).  Transpose once to NHWC.
        x1 = jnp.transpose(x1, (0, 2, 3, 1))
        x2 = jnp.transpose(x2, (0, 2, 3, 1))
        x1u = bilinear_upsample_2x(x1)
        dY = x2.shape[1] - x1u.shape[1]
        dX = x2.shape[2] - x1u.shape[2]
        x1p = jnp.pad(x1u, ((0, 0), (dY // 2, dY - dY // 2),
                            (dX // 2, dX - dX // 2), (0, 0)))
        N, H, W, c2 = x2.shape
        c1 = x1p.shape[-1]
        assert c1 + c2 == self.in_channels

        bh = _pick_band_height(H, W, self.cin_p, self.cmid_p)
        nb = H // bh
        x2b = x2.reshape(N, nb, bh, W, c2)
        x1b = x1p.reshape(N, nb, bh, W, c1)
        count = float(N * H * W)

        # conv1 + BN1 partial stats; the channel concat/pad happens inside the
        # kernel's halo scratch (no HBM concat, no pad-to-128 materialization).
        dummy = jnp.zeros((1, self.cin_p), jnp.float32)
        y1, st1 = conv3x3_bn_stats([x2b, x1b], self.w1, dummy, dummy,
                                   apply_prologue=False)
        g1p = jnp.pad(self.g1, (0, self.cmid_p - self.mid))
        b1p = jnp.pad(self.b1, (0, self.cmid_p - self.mid))
        s1, o1 = _bn_scale_bias(st1, count, g1p, b1p)

        # conv2 with fused BN1+ReLU prologue; emits BN2 partial stats.
        y2, st2 = conv3x3_bn_stats([y1], self.w2, s1, o1, apply_prologue=True)
        g2p = jnp.pad(self.g2, (0, self.cout_p - self.out_channels))
        b2p = jnp.pad(self.b2, (0, self.cout_p - self.out_channels))
        s2, o2 = _bn_scale_bias(st2, count, g2p, b2p)

        # final BN2 + ReLU (lane-dense), then drop the padding -> NCHW f32.
        out = affine_relu(y2, s2, o2)
        out = out.reshape(N, H, W, self.cout_p)[:, :, :, :self.out_channels]
        return jnp.transpose(out, (0, 3, 1, 2))


if __name__ == "__main__":
    key = jax.random.PRNGKey(0)
    kx1, kx2, kp = jax.random.split(key, 3)
    in_channels, out_channels = 8, 4
    # x1: deep feature map (pre-upsample), x2: skip connection.
    # 7x7 -> upsampled 14x14 -> padded to 16x16, exercising the F.pad path.
    x1 = jax.random.normal(kx1, (2, 4, 7, 7), jnp.float32)
    x2 = jax.random.normal(kx2, (2, 4, 16, 16), jnp.float32)

    up = UpPallas(in_channels, out_channels, kp)
    fwd = jax.jit(lambda a, b: up(a, b))
    out = jax.block_until_ready(fwd(x1, x2))
    assert out.shape == (2, out_channels, 16, 16), out.shape
    assert bool(jnp.all(jnp.isfinite(out)))
    print("KERNEL_OK")
</pallas_src>

<mosaic_0001>
module attributes {stable_mosaic.version = 11 : i64} {
  func.func @_conv3x3_band_kernel(%arg0: i32, %arg1: i32, %arg2: memref<1x1x8x16x4xf32, #tpu.memory_space<vmem>>, %arg3: memref<1x1x1x16x4xf32, #tpu.memory_space<vmem>>, %arg4: memref<1x1x1x16x4xf32, #tpu.memory_space<vmem>>, %arg5: memref<1x1x8x16x4xf32, #tpu.memory_space<vmem>>, %arg6: memref<1x1x1x16x4xf32, #tpu.memory_space<vmem>>, %arg7: memref<1x1x1x16x4xf32, #tpu.memory_space<vmem>>, %arg8: memref<9x128x128xbf16, #tpu.memory_space<vmem>>, %arg9: memref<1x128xf32, #tpu.memory_space<vmem>>, %arg10: memref<1x128xf32, #tpu.memory_space<vmem>>, %arg11: memref<1x1x8x16x128xbf16, #tpu.memory_space<vmem>>, %arg12: memref<1x1x2x128xf32, #tpu.memory_space<vmem>>, %arg13: memref<10x18x128xbf16, #tpu.memory_space<vmem>>) attributes {dimension_semantics = [#tpu.dimension_semantics<parallel>, #tpu.dimension_semantics<parallel>], iteration_bounds = array<i64: 2, 2>, scalar_prefetch = 0 : i64, scratch_operands = 1 : i64, tpu.core_type = #tpu.core_type<tc>, window_params = [{transform_indices = @transform_0, window_bounds = array<i64: 1, 1, 8, 16, 4>}, {transform_indices = @transform_1, window_bounds = array<i64: 1, 1, 1, 16, 4>}, {transform_indices = @transform_2, window_bounds = array<i64: 1, 1, 1, 16, 4>}, {transform_indices = @transform_3, window_bounds = array<i64: 1, 1, 8, 16, 4>}, {transform_indices = @transform_4, window_bounds = array<i64: 1, 1, 1, 16, 4>}, {transform_indices = @transform_5, window_bounds = array<i64: 1, 1, 1, 16, 4>}, {pipeline_mode = #tpu.pipeline_mode<synchronous>, transform_indices = @transform_6, window_bounds = array<i64: 9, 128, 128>}, {pipeline_mode = #tpu.pipeline_mode<synchronous>, transform_indices = @transform_7, window_bounds = array<i64: 1, 128>}, {pipeline_mode = #tpu.pipeline_mode<synchronous>, transform_indices = @transform_8, window_bounds = array<i64: 1, 128>}, {transform_indices = @transform_9, window_bounds = array<i64: 1, 1, 8, 16, 128>}, {transform_indices = @transform_10, window_bounds = array<i64: 1, 1, 2, 128>}]} {
    %c0_i32 = arith.constant 0 : i32
    %0 = arith.cmpi eq, %arg1, %c0_i32 : i32
    %c1_i32 = arith.constant 1 : i32
    %1 = arith.cmpi eq, %arg1, %c1_i32 : i32
    %cst = arith.constant 0.000000e+00 : bf16
    %2 = vector.broadcast %cst : bf16 to vector<10x18x128xbf16>
    %c0 = arith.constant 0 : index
    %c0_0 = arith.constant 0 : index
    %c0_1 = arith.constant 0 : index
    %3 = vector.load %arg13[%c0, %c0_0, %c0_1] : memref<10x18x128xbf16, #tpu.memory_space<vmem>>, vector<10x18x128xbf16>
    tpu.vector_store %arg13[%c0, %c0_0, %c0_1], %2 {strides = array<i32>} : memref<10x18x128xbf16, #tpu.memory_space<vmem>>, vector<10x18x128xbf16>,
    %c0_2 = arith.constant 0 : index
    %c0_3 = arith.constant 0 : index
    %c0_4 = arith.constant 0 : index
    %c0_5 = arith.constant 0 : index
    %c0_6 = arith.constant 0 : index
    %4 = vector.load %arg2[%c0_2, %c0_3, %c0_4, %c0_5, %c0_6] : memref<1x1x8x16x4xf32, #tpu.memory_space<vmem>>, vector<1x1x8x16x4xf32>
    %5 = vector.shape_cast %4 : vector<1x1x8x16x4xf32> to vector<8x16x4xf32>
    %c0_7 = arith.constant 0 : index
    %c0_8 = arith.constant 0 : index
    %c0_9 = arith.constant 0 : index
    %c0_10 = arith.constant 0 : index
    %c0_11 = arith.constant 0 : index
    %6 = vector.load %arg3[%c0_7, %c0_8, %c0_9, %c0_10, %c0_11] : memref<1x1x1x16x4xf32, #tpu.memory_space<vmem>>, vector<1x1x1x16x4xf32>
    %7 = vector.shape_cast %6 : vector<1x1x1x16x4xf32> to vector<16x4xf32>
    %c0_12 = arith.constant 0 : index
    %c0_13 = arith.constant 0 : index
    %c0_14 = arith.constant 0 : index
    %c0_15 = arith.constant 0 : index
    %c0_16 = arith.constant 0 : index
    %8 = vector.load %arg4[%c0_12, %c0_13, %c0_14, %c0_15, %c0_16] : memref<1x1x1x16x4xf32, #tpu.memory_space<vmem>>, vector<1x1x1x16x4xf32>
    %9 = vector.shape_cast %8 : vector<1x1x1x16x4xf32> to vector<16x4xf32>
    %cst_17 = arith.constant 0.000000e+00 : f32
    %10 = vector.broadcast %cst_17 : f32 to vector<16x4xf32>
    %11 = arith.select %0, %10, %7 : vector<16x4xf32>
    %cst_18 = arith.constant 0.000000e+00 : f32
    %12 = vector.broadcast %cst_18 : f32 to vector<16x4xf32>
    %13 = arith.select %1, %12, %9 : vector<16x4xf32>
    %14 = arith.truncf %5 : vector<8x16x4xf32> to vector<8x16x4xbf16>
    %c1 = arith.constant 1 : index
    %c1_19 = arith.constant 1 : index
    %c0_20 = arith.constant 0 : index
    %15 = vector.load %arg13[%c1, %c1_19, %c0_20] : memref<10x18x128xbf16, #tpu.memory_space<vmem>>, vector<8x16x4xbf16>
    tpu.vector_store %arg13[%c1, %c1_19, %c0_20], %14 {strides = array<i32>} : memref<10x18x128xbf16, #tpu.memory_space<vmem>>, vector<8x16x4xbf16>,
    %16 = arith.truncf %11 : vector<16x4xf32> to vector<16x4xbf16>
    %17 = vector.shape_cast %16 : vector<16x4xbf16> to vector<1x16x4xbf16>
    %c0_21 = arith.constant 0 : index
    %c1_22 = arith.constant 1 : index
    %c0_23 = arith.constant 0 : index
    %18 = vector.load %arg13[%c0_21, %c1_22, %c0_23] : memref<10x18x128xbf16, #tpu.memory_space<vmem>>, vector<1x16x4xbf16>
    tpu.vector_store %arg13[%c0_21, %c1_22, %c0_23], %17 {strides = array<i32>} : memref<10x18x128xbf16, #tpu.memory_space<vmem>>, vector<1x16x4xbf16>,
    %19 = arith.truncf %13 : vector<16x4xf32> to vector<16x4xbf16>
    %20 = vector.shape_cast %19 : vector<16x4xbf16> to vector<1x16x4xbf16>
    %c9 = arith.constant 9 : index
    %c1_24 = arith.constant 1 : index
    %c0_25 = arith.constant 0 : index
    %21 = vector.load %arg13[%c9, %c1_24, %c0_25] : memref<10x18x128xbf16, #tpu.memory_space<vmem>>, vector<1x16x4xbf16>
    tpu.vector_store %arg13[%c9, %c1_24, %c0_25], %20 {strides = array<i32>} : memref<10x18x128xbf16, #tpu.memory_space<vmem>>, vector<1x16x4xbf16>,
    %c0_26 = arith.constant 0 : index
    %c0_27 = arith.constant 0 : index
    %c0_28 = arith.constant 0 : index
    %c0_29 = arith.constant 0 : index
    %c0_30 = arith.constant 0 : index
    %22 = vector.load %arg5[%c0_26, %c0_27, %c0_28, %c0_29, %c0_30] : memref<1x1x8x16x4xf32, #tpu.memory_space<vmem>>, vector<1x1x8x16x4xf32>
    %23 = vector.shape_cast %22 : vector<1x1x8x16x4xf32> to vector<8x16x4xf32>
    %c0_31 = arith.constant 0 : index
    %c0_32 = arith.constant 0 : index
    %c0_33 = arith.constant 0 : index
    %c0_34 = arith.constant 0 : index
    %c0_35 = arith.constant 0 : index
    %24 = vector.load %arg6[%c0_31, %c0_32, %c0_33, %c0_34, %c0_35] : memref<1x1x1x16x4xf32, #tpu.memory_space<vmem>>, vector<1x1x1x16x4xf32>
    %25 = vector.shape_cast %24 : vector<1x1x1x16x4xf32> to vector<16x4xf32>
    %c0_36 = arith.constant 0 : index
    %c0_37 = arith.constant 0 : index
    %c0_38 = arith.constant 0 : index
    %c0_39 = arith.constant 0 : index
    %c0_40 = arith.constant 0 : index
    %26 = vector.load %arg7[%c0_36, %c0_37, %c0_38, %c0_39, %c0_40] : memref<1x1x1x16x4xf32, #tpu.memory_space<vmem>>, vector<1x1x1x16x4xf32>
    %27 = vector.shape_cast %26 : vector<1x1x1x16x4xf32> to vector<16x4xf32>
    %cst_41 = arith.constant 0.000000e+00 : f32
    %28 = vector.broadcast %cst_41 : f32 to vector<16x4xf32>
    %29 = arith.select %0, %28, %25 : vector<16x4xf32>
    %cst_42 = arith.constant 0.000000e+00 : f32
    %30 = vector.broadcast %cst_42 : f32 to vector<16x4xf32>
    %31 = arith.select %1, %30, %27 : vector<16x4xf32>
    %32 = arith.truncf %23 : vector<8x16x4xf32> to vector<8x16x4xbf16>
    %c1_43 = arith.constant 1 : index
    %c1_44 = arith.constant 1 : index
    %c4 = arith.constant 4 : index
    %33 = vector.load %arg13[%c1_43, %c1_44, %c4] : memref<10x18x128xbf16, #tpu.memory_space<vmem>>, vector<8x16x4xbf16>
    tpu.vector_store %arg13[%c1_43, %c1_44, %c4], %32 {strides = array<i32>} : memref<10x18x128xbf16, #tpu.memory_space<vmem>>, vector<8x16x4xbf16>,
    %34 = arith.truncf %29 : vector<16x4xf32> to vector<16x4xbf16>
    %35 = vector.shape_cast %34 : vector<16x4xbf16> to vector<1x16x4xbf16>
    %c0_45 = arith.constant 0 : index
    %c1_46 = arith.constant 1 : index
    %c4_47 = arith.constant 4 : index
    %36 = vector.load %arg13[%c0_45, %c1_46, %c4_47] : memref<10x18x128xbf16, #tpu.memory_space<vmem>>, vector<1x16x4xbf16>
    tpu.vector_store %arg13[%c0_45, %c1_46, %c4_47], %35 {strides = array<i32>} : memref<10x18x128xbf16, #tpu.memory_space<vmem>>, vector<1x16x4xbf16>,
    %37 = arith.truncf %31 : vector<16x4xf32> to vector<16x4xbf16>
    %38 = vector.shape_cast %37 : vector<16x4xbf16> to vector<1x16x4xbf16>
    %c9_48 = arith.constant 9 : index
    %c1_49 = arith.constant 1 : index
    %c4_50 = arith.constant 4 : index
    %39 = vector.load %arg13[%c9_48, %c1_49, %c4_50] : memref<10x18x128xbf16, #tpu.memory_space<vmem>>, vector<1x16x4xbf16>
    tpu.vector_store %arg13[%c9_48, %c1_49, %c4_50], %38 {strides = array<i32>} : memref<10x18x128xbf16, #tpu.memory_space<vmem>>, vector<1x16x4xbf16>,
    %c0_51 = arith.constant 0 : index
    %c0_52 = arith.constant 0 : index
    %c0_53 = arith.constant 0 : index
    %40 = vector.load %arg13[%c0_51, %c0_52, %c0_53] : memref<10x18x128xbf16, #tpu.memory_space<vmem>>, vector<8x16x128xbf16>
    %41 = vector.shape_cast %40 : vector<8x16x128xbf16> to vector<128x128xbf16>
    %c0_54 = arith.constant 0 : index
    %c0_55 = arith.constant 0 : index
    %c0_56 = arith.constant 0 : index
    %42 = vector.load %arg8[%c0_54, %c0_55, %c0_56] : memref<9x128x128xbf16, #tpu.memory_space<vmem>>, vector<1x128x128xbf16>
    %43 = vector.shape_cast %42 : vector<1x128x128xbf16> to vector<128x128xbf16>
    %cst_57 = arith.constant dense<0.000000e+00> : vector<128x128xf32>
    %44 = tpu.matmul %41, %43, %cst_57 {dimension_numbers = #tpu.dot_dimension_numbers<[1], [0], [0], [1], [0, 0, 1, 1], [], []>} : vector<128x128xbf16>, vector<128x128xbf16>, vector<128x128xf32> -> vector<128x128xf32>
    %c0_58 = arith.constant 0 : index
    %c1_59 = arith.constant 1 : index
    %c0_60 = arith.constant 0 : index
    %45 = vector.load %arg13[%c0_58, %c1_59, %c0_60] : memref<10x18x128xbf16, #tpu.memory_space<vmem>>, vector<8x16x128xbf16>
    %46 = vector.shape_cast %45 : vector<8x16x128xbf16> to vector<128x128xbf16>
    %c1_61 = arith.constant 1 : index
    %c0_62 = arith.constant 0 : index
    %c0_63 = arith.constant 0 : index
    %47 = vector.load %arg8[%c1_61, %c0_62, %c0_63] : memref<9x128x128xbf16, #tpu.memory_space<vmem>>, vector<1x128x128xbf16>
    %48 = vector.shape_cast %47 : vector<1x128x128xbf16> to vector<128x128xbf16>
    %cst_64 = arith.constant dense<0.000000e+00> : vector<128x128xf32>
    %49 = tpu.matmul %46, %48, %cst_64 {dimension_numbers = #tpu.dot_dimension_numbers<[1], [0], [0], [1], [0, 0, 1, 1], [], []>} : vector<128x128xbf16>, vector<128x128xbf16>, vector<128x128xf32> -> vector<128x128xf32>
    %50 = arith.addf %44, %49 : vector<128x128xf32>
    %c0_65 = arith.constant 0 : index
    %c2 = arith.constant 2 : index
    %c0_66 = arith.constant 0 : index
    %51 = vector.load %arg13[%c0_65, %c2, %c0_66] : memref<10x18x128xbf16, #tpu.memory_space<vmem>>, vector<8x16x128xbf16>
    %52 = vector.shape_cast %51 : vector<8x16x128xbf16> to vector<128x128xbf16>
    %c2_67 = arith.constant 2 : index
    %c0_68 = arith.constant 0 : index
    %c0_69 = arith.constant 0 : index
    %53 = vector.load %arg8[%c2_67, %c0_68, %c0_69] : memref<9x128x128xbf16, #tpu.memory_space<vmem>>, vector<1x128x128xbf16>
    %54 = vector.shape_cast %53 : vector<1x128x128xbf16> to vector<128x128xbf16>
    %cst_70 = arith.constant dense<0.000000e+00> : vector<128x128xf32>
    %55 = tpu.matmul %52, %54, %cst_70 {dimension_numbers = #tpu.dot_dimension_numbers<[1], [0], [0], [1], [0, 0, 1, 1], [], []>} : vector<128x128xbf16>, vector<128x128xbf16>, vector<128x128xf32> -> vector<128x128xf32>
    %56 = arith.addf %50, %55 : vector<128x128xf32>
    %c1_71 = arith.constant 1 : index
    %c0_72 = arith.constant 0 : index
    %c0_73 = arith.constant 0 : index
    %57 = vector.load %arg13[%c1_71, %c0_72, %c0_73] : memref<10x18x128xbf16, #tpu.memory_space<vmem>>, vector<8x16x128xbf16>
    %58 = vector.shape_cast %57 : vector<8x16x128xbf16> to vector<128x128xbf16>
    %c3 = arith.constant 3 : index
    %c0_74 = arith.constant 0 : index
    %c0_75 = arith.constant 0 : index
    %59 = vector.load %arg8[%c3, %c0_74, %c0_75] : memref<9x128x128xbf16, #tpu.memory_space<vmem>>, vector<1x128x128xbf16>
    %60 = vector.shape_cast %59 : vector<1x128x128xbf16> to vector<128x128xbf16>
    %cst_76 = arith.constant dense<0.000000e+00> : vector<128x128xf32>
    %61 = tpu.matmul %58, %60, %cst_76 {dimension_numbers = #tpu.dot_dimension_numbers<[1], [0], [0], [1], [0, 0, 1, 1], [], []>} : vector<128x128xbf16>, vector<128x128xbf16>, vector<128x128xf32> -> vector<128x128xf32>
    %62 = arith.addf %56, %61 : vector<128x128xf32>
    %c1_77 = arith.constant 1 : index
    %c1_78 = arith.constant 1 : index
    %c0_79 = arith.constant 0 : index
    %63 = vector.load %arg13[%c1_77, %c1_78, %c0_79] : memref<10x18x128xbf16, #tpu.memory_space<vmem>>, vector<8x16x128xbf16>
    %64 = vector.shape_cast %63 : vector<8x16x128xbf16> to vector<128x128xbf16>
    %c4_80 = arith.constant 4 : index
    %c0_81 = arith.constant 0 : index
    %c0_82 = arith.constant 0 : index
    %65 = vector.load %arg8[%c4_80, %c0_81, %c0_82] : memref<9x128x128xbf16, #tpu.memory_space<vmem>>, vector<1x128x128xbf16>
    %66 = vector.shape_cast %65 : vector<1x128x128xbf16> to vector<128x128xbf16>
    %cst_83 = arith.constant dense<0.000000e+00> : vector<128x128xf32>
    %67 = tpu.matmul %64, %66, %cst_83 {dimension_numbers = #tpu.dot_dimension_numbers<[1], [0], [0], [1], [0, 0, 1, 1], [], []>} : vector<128x128xbf16>, vector<128x128xbf16>, vector<128x128xf32> -> vector<128x128xf32>
    %68 = arith.addf %62, %67 : vector<128x128xf32>
    %c1_84 = arith.constant 1 : index
    %c2_85 = arith.constant 2 : index
    %c0_86 = arith.constant 0 : index
    %69 = vector.load %arg13[%c1_84, %c2_85, %c0_86] : memref<10x18x128xbf16, #tpu.memory_space<vmem>>, vector<8x16x128xbf16>
    %70 = vector.shape_cast %69 : vector<8x16x128xbf16> to vector<128x128xbf16>
    %c5 = arith.constant 5 : index
    %c0_87 = arith.constant 0 : index
    %c0_88 = arith.constant 0 : index
    %71 = vector.load %arg8[%c5, %c0_87, %c0_88] : memref<9x128x128xbf16, #tpu.memory_space<vmem>>, vector<1x128x128xbf16>
    %72 = vector.shape_cast %71 : vector<1x128x128xbf16> to vector<128x128xbf16>
    %cst_89 = arith.constant dense<0.000000e+00> : vector<128x128xf32>
    %73 = tpu.matmul %70, %72, %cst_89 {dimension_numbers = #tpu.dot_dimension_numbers<[1], [0], [0], [1], [0, 0, 1, 1], [], []>} : vector<128x128xbf16>, vector<128x128xbf16>, vector<128x128xf32> -> vector<128x128xf32>
    %74 = arith.addf %68, %73 : vector<128x128xf32>
    %c2_90 = arith.constant 2 : index
    %c0_91 = arith.constant 0 : index
    %c0_92 = arith.constant 0 : index
    %75 = vector.load %arg13[%c2_90, %c0_91, %c0_92] : memref<10x18x128xbf16, #tpu.memory_space<vmem>>, vector<8x16x128xbf16>
    %76 = vector.shape_cast %75 : vector<8x16x128xbf16> to vector<128x128xbf16>
    %c6 = arith.constant 6 : index
    %c0_93 = arith.constant 0 : index
    %c0_94 = arith.constant 0 : index
    %77 = vector.load %arg8[%c6, %c0_93, %c0_94] : memref<9x128x128xbf16, #tpu.memory_space<vmem>>, vector<1x128x128xbf16>
    %78 = vector.shape_cast %77 : vector<1x128x128xbf16> to vector<128x128xbf16>
    %cst_95 = arith.constant dense<0.000000e+00> : vector<128x128xf32>
    %79 = tpu.matmul %76, %78, %cst_95 {dimension_numbers = #tpu.dot_dimension_numbers<[1], [0], [0], [1], [0, 0, 1, 1], [], []>} : vector<128x128xbf16>, vector<128x128xbf16>, vector<128x128xf32> -> vector<128x128xf32>
    %80 = arith.addf %74, %79 : vector<128x128xf32>
    %c2_96 = arith.constant 2 : index
    %c1_97 = arith.constant 1 : index
    %c0_98 = arith.constant 0 : index
    %81 = vector.load %arg13[%c2_96, %c1_97, %c0_98] : memref<10x18x128xbf16, #tpu.memory_space<vmem>>, vector<8x16x128xbf16>
    %82 = vector.shape_cast %81 : vector<8x16x128xbf16> to vector<128x128xbf16>
    %c7 = arith.constant 7 : index
    %c0_99 = arith.constant 0 : index
    %c0_100 = arith.constant 0 : index
    %83 = vector.load %arg8[%c7, %c0_99, %c0_100] : memref<9x128x128xbf16, #tpu.memory_space<vmem>>, vector<1x128x128xbf16>
    %84 = vector.shape_cast %83 : vector<1x128x128xbf16> to vector<128x128xbf16>
    %cst_101 = arith.constant dense<0.000000e+00> : vector<128x128xf32>
    %85 = tpu.matmul %82, %84, %cst_101 {dimension_numbers = #tpu.dot_dimension_numbers<[1], [0], [0], [1], [0, 0, 1, 1], [], []>} : vector<128x128xbf16>, vector<128x128xbf16>, vector<128x128xf32> -> vector<128x128xf32>
    %86 = arith.addf %80, %85 : vector<128x128xf32>
    %c2_102 = arith.constant 2 : index
    %c2_103 = arith.constant 2 : index
    %c0_104 = arith.constant 0 : index
    %87 = vector.load %arg13[%c2_102, %c2_103, %c0_104] : memref<10x18x128xbf16, #tpu.memory_space<vmem>>, vector<8x16x128xbf16>
    %88 = vector.shape_cast %87 : vector<8x16x128xbf16> to vector<128x128xbf16>
    %c8 = arith.constant 8 : index
    %c0_105 = arith.constant 0 : index
    %c0_106 = arith.constant 0 : index
    %89 = vector.load %arg8[%c8, %c0_105, %c0_106] : memref<9x128x128xbf16, #tpu.memory_space<vmem>>, vector<1x128x128xbf16>
    %90 = vector.shape_cast %89 : vector<1x128x128xbf16> to vector<128x128xbf16>
    %cst_107 = arith.constant dense<0.000000e+00> : vector<128x128xf32>
    %91 = tpu.matmul %88, %90, %cst_107 {dimension_numbers = #tpu.dot_dimension_numbers<[1], [0], [0], [1], [0, 0, 1, 1], [], []>} : vector<128x128xbf16>, vector<128x128xbf16>, vector<128x128xf32> -> vector<128x128xf32>
    %92 = arith.addf %86, %91 : vector<128x128xf32>
    %93 = vector.shape_cast %92 : vector<128x128xf32> to vector<8x16x128xf32>
    %94 = arith.truncf %93 : vector<8x16x128xf32> to vector<8x16x128xbf16>
    %c0_108 = arith.constant 0 : index
    %c0_109 = arith.constant 0 : index
    %c0_110 = arith.constant 0 : index
    %c0_111 = arith.constant 0 : index
    %c0_112 = arith.constant 0 : index
    %95 = vector.load %arg11[%c0_108, %c0_109, %c0_110, %c0_111, %c0_112] : memref<1x1x8x16x128xbf16, #tpu.memory_space<vmem>>, vector<1x1x8x16x128xbf16>
    %96 = vector.shape_cast %95 : vector<1x1x8x16x128xbf16> to vector<8x16x128xbf16>
    %97 = vector.shape_cast %94 : vector<8x16x128xbf16> to vector<1x1x8x16x128xbf16>
    tpu.vector_store %arg11[%c0_108, %c0_109, %c0_110, %c0_111, %c0_112], %97 {strides = array<i32>} : memref<1x1x8x16x128xbf16, #tpu.memory_space<vmem>>, vector<1x1x8x16x128xbf16>,
    %cst_113 = arith.constant dense<0.000000e+00> : vector<128xf32>
    %98 = vector.multi_reduction <add>, %92, %cst_113 [0] : vector<128x128xf32> to vector<128xf32>
    %99 = vector.shape_cast %98 : vector<128xf32> to vector<1x128xf32>
    %100 = arith.mulf %92, %92 : vector<128x128xf32>
    %cst_114 = arith.constant dense<0.000000e+00> : vector<128xf32>
    %101 = vector.multi_reduction <add>, %100, %cst_114 [0] : vector<128x128xf32> to vector<128xf32>
    %102 = vector.shape_cast %101 : vector<128xf32> to vector<1x128xf32>
    %103 = tpu.concatenate %99, %102 in 0 : vector<1x128xf32>, vector<1x128xf32> -> vector<2x128xf32>
    %c0_115 = arith.constant 0 : index
    %c0_116 = arith.constant 0 : index
    %c0_117 = arith.constant 0 : index
    %c0_118 = arith.constant 0 : index
    %104 = vector.load %arg12[%c0_115, %c0_116, %c0_117, %c0_118] : memref<1x1x2x128xf32, #tpu.memory_space<vmem>>, vector<1x1x2x128xf32>
    %105 = vector.shape_cast %104 : vector<1x1x2x128xf32> to vector<2x128xf32>
    %106 = vector.shape_cast %103 : vector<2x128xf32> to vector<1x1x2x128xf32>
    tpu.vector_store %arg12[%c0_115, %c0_116, %c0_117, %c0_118], %106 {strides = array<i32>} : memref<1x1x2x128xf32, #tpu.memory_space<vmem>>, vector<1x1x2x128xf32>,
    return
  }
  func.func @transform_0(%arg0: i32, %arg1: i32) -> (i32, i32, i32, i32, i32) {
    %c0_i32 = arith.constant 0 : i32
    %c0_i32_0 = arith.constant 0 : i32
    %c0_i32_1 = arith.constant 0 : i32
    %c0_i32_2 = arith.constant 0 : i32
    return %arg0, %arg1, %c0_i32, %c0_i32_0, %c0_i32_1 : i32, i32, i32, i32, i32
  }
  func.func @transform_1(%arg0: i32, %arg1: i32) -> (i32, i32, i32, i32, i32) {
    %c1_i32 = arith.constant 1 : i32
    %0 = arith.subi %arg1, %c1_i32 : i32
    %c0_i32 = arith.constant 0 : i32
    %1 = arith.maxsi %0, %c0_i32 : i32
    %c7_i32 = arith.constant 7 : i32
    %c0_i32_0 = arith.constant 0 : i32
    %c0_i32_1 = arith.constant 0 : i32
    %c0_i32_2 = arith.constant 0 : i32
    return %arg0, %1, %c7_i32, %c0_i32_0, %c0_i32_1 : i32, i32, i32, i32, i32
  }
  func.func @transform_2(%arg0: i32, %arg1: i32) -> (i32, i32, i32, i32, i32) {
    %c1_i32 = arith.constant 1 : i32
    %0 = arith.addi %arg1, %c1_i32 : i32
    %c1_i32_0 = arith.constant 1 : i32
    %1 = arith.minsi %0, %c1_i32_0 : i32
    %c0_i32 = arith.constant 0 : i32
    %c0_i32_1 = arith.constant 0 : i32
    %c0_i32_2 = arith.constant 0 : i32
    %c0_i32_3 = arith.constant 0 : i32
    return %arg0, %1, %c0_i32, %c0_i32_1, %c0_i32_2 : i32, i32, i32, i32, i32
  }
  func.func @transform_3(%arg0: i32, %arg1: i32) -> (i32, i32, i32, i32, i32) {
    %c0_i32 = arith.constant 0 : i32
    %c0_i32_0 = arith.constant 0 : i32
    %c0_i32_1 = arith.constant 0 : i32
    %c0_i32_2 = arith.constant 0 : i32
    return %arg0, %arg1, %c0_i32, %c0_i32_0, %c0_i32_1 : i32, i32, i32, i32, i32
  }
  func.func @transform_4(%arg0: i32, %arg1: i32) -> (i32, i32, i32, i32, i32) {
    %c1_i32 = arith.constant 1 : i32
    %0 = arith.subi %arg1, %c1_i32 : i32
    %c0_i32 = arith.constant 0 : i32
    %1 = arith.maxsi %0, %c0_i32 : i32
    %c7_i32 = arith.constant 7 : i32
    %c0_i32_0 = arith.constant 0 : i32
    %c0_i32_1 = arith.constant 0 : i32
    %c0_i32_2 = arith.constant 0 : i32
    return %arg0, %1, %c7_i32, %c0_i32_0, %c0_i32_1 : i32, i32, i32, i32, i32
  }
  func.func @transform_5(%arg0: i32, %arg1: i32) -> (i32, i32, i32, i32, i32) {
    %c1_i32 = arith.constant 1 : i32
    %0 = arith.addi %arg1, %c1_i32 : i32
    %c1_i32_0 = arith.constant 1 : i32
    %1 = arith.minsi %0, %c1_i32_0 : i32
    %c0_i32 = arith.constant 0 : i32
    %c0_i32_1 = arith.constant 0 : i32
    %c0_i32_2 = arith.constant 0 : i32
    %c0_i32_3 = arith.constant 0 : i32
    return %arg0, %1, %c0_i32, %c0_i32_1, %c0_i32_2 : i32, i32, i32, i32, i32
  }
  func.func @transform_6(%arg0: i32, %arg1: i32) -> (i32, i32, i32) {
    %c0_i32 = arith.constant 0 : i32
    %c0_i32_0 = arith.constant 0 : i32
    %c0_i32_1 = arith.constant 0 : i32
    %c0_i32_2 = arith.constant 0 : i32
    return %c0_i32, %c0_i32_0, %c0_i32_1 : i32, i32, i32
  }
  func.func @transform_7(%arg0: i32, %arg1: i32) -> (i32, i32) {
    %c0_i32 = arith.constant 0 : i32
    %c0_i32_0 = arith.constant 0 : i32
    %c0_i32_1 = arith.constant 0 : i32
    return %c0_i32, %c0_i32_0 : i32, i32
  }
  func.func @transform_8(%arg0: i32, %arg1: i32) -> (i32, i32) {
    %c0_i32 = arith.constant 0 : i32
    %c0_i32_0 = arith.constant 0 : i32
    %c0_i32_1 = arith.constant 0 : i32
    return %c0_i32, %c0_i32_0 : i32, i32
  }
  func.func @transform_9(%arg0: i32, %arg1: i32) -> (i32, i32, i32, i32, i32) {
    %c0_i32 = arith.constant 0 : i32
    %c0_i32_0 = arith.constant 0 : i32
    %c0_i32_1 = arith.constant 0 : i32
    %c0_i32_2 = arith.constant 0 : i32
    return %arg0, %arg1, %c0_i32, %c0_i32_0, %c0_i32_1 : i32, i32, i32, i32, i32
  }
  func.func @transform_10(%arg0: i32, %arg1: i32) -> (i32, i32, i32, i32) {
    %c0_i32 = arith.constant 0 : i32
    %c0_i32_0 = arith.constant 0 : i32
    %c0_i32_1 = arith.constant 0 : i32
    return %arg0, %arg1, %c0_i32, %c0_i32_0 : i32, i32, i32, i32
  }
}

module attributes {stable_mosaic.version = 11 : i64} {
  func.func @_affine_relu_kernel(%arg0: i32, %arg1: i32, %arg2: memref<1x1x8x16x128xbf16, #tpu.memory_space<vmem>>, %arg3: memref<1x128xf32, #tpu.memory_space<vmem>>, %arg4: memref<1x128xf32, #tpu.memory_space<vmem>>, %arg5: memref<1x1x8x16x128xf32, #tpu.memory_space<vmem>>) attributes {dimension_semantics = [#tpu.dimension_semantics<parallel>, #tpu.dimension_semantics<parallel>], iteration_bounds = array<i64: 2, 2>, scalar_prefetch = 0 : i64, scratch_operands = 0 : i64, tpu.core_type = #tpu.core_type<tc>, window_params = [{transform_indices = @transform_0, window_bounds = array<i64: 1, 1, 8, 16, 128>}, {pipeline_mode = #tpu.pipeline_mode<synchronous>, transform_indices = @transform_1, window_bounds = array<i64: 1, 128>}, {pipeline_mode = #tpu.pipeline_mode<synchronous>, transform_indices = @transform_2, window_bounds = array<i64: 1, 128>}, {transform_indices = @transform_3, window_bounds = array<i64: 1, 1, 8, 16, 128>}]} {
    %c0 = arith.constant 0 : index
    %c0_0 = arith.constant 0 : index
    %c0_1 = arith.constant 0 : index
    %c0_2 = arith.constant 0 : index
    %c0_3 = arith.constant 0 : index
    %0 = vector.load %arg2[%c0, %c0_0, %c0_1, %c0_2, %c0_3] : memref<1x1x8x16x128xbf16, #tpu.memory_space<vmem>>, vector<1x1x8x16x128xbf16>
    %1 = vector.shape_cast %0 : vector<1x1x8x16x128xbf16> to vector<8x16x128xbf16>
    %2 = arith.extf %1 : vector<8x16x128xbf16> to vector<8x16x128xf32>
    %c0_4 = arith.constant 0 : index
    %c0_5 = arith.constant 0 : index
    %3 = vector.load %arg3[%c0_4, %c0_5] : memref<1x128xf32, #tpu.memory_space<vmem>>, vector<1x128xf32>
    %4 = vector.shape_cast %3 : vector<1x128xf32> to vector<1x1x128xf32>
    %c0_6 = arith.constant 0 : index
    %c0_7 = arith.constant 0 : index
    %5 = vector.load %arg4[%c0_6, %c0_7] : memref<1x128xf32, #tpu.memory_space<vmem>>, vector<1x128xf32>
    %6 = vector.shape_cast %5 : vector<1x128xf32> to vector<1x1x128xf32>
    %7 = vector.broadcast %4 : vector<1x1x128xf32> to vector<8x16x128xf32>
    %8 = arith.mulf %2, %7 : vector<8x16x128xf32>
    %9 = vector.broadcast %6 : vector<1x1x128xf32> to vector<8x16x128xf32>
    %10 = arith.addf %8, %9 : vector<8x16x128xf32>
    %cst = arith.constant 0.000000e+00 : f32
    %11 = vector.broadcast %cst : f32 to vector<8x16x128xf32>
    %12 = arith.maximumf %10, %11 : vector<8x16x128xf32>
    %c0_8 = arith.constant 0 : index
    %c0_9 = arith.constant 0 : index
    %c0_10 = arith.constant 0 : index
    %c0_11 = arith.constant 0 : index
    %c0_12 = arith.constant 0 : index
    %13 = vector.load %arg5[%c0_8, %c0_9, %c0_10, %c0_11, %c0_12] : memref<1x1x8x16x128xf32, #tpu.memory_space<vmem>>, vector<1x1x8x16x128xf32>
    %14 = vector.shape_cast %13 : vector<1x1x8x16x128xf32> to vector<8x16x128xf32>
    %15 = vector.shape_cast %12 : vector<8x16x128xf32> to vector<1x1x8x16x128xf32>
    tpu.vector_store %arg5[%c0_8, %c0_9, %c0_10, %c0_11, %c0_12], %15 {strides = array<i32>} : memref<1x1x8x16x128xf32, #tpu.memory_space<vmem>>, vector<1x1x8x16x128xf32>,
    return
  }
  func.func @transform_0(%arg0: i32, %arg1: i32) -> (i32, i32, i32, i32, i32) {
    %c0_i32 = arith.constant 0 : i32
    %c0_i32_0 = arith.constant 0 : i32
    %c0_i32_1 = arith.constant 0 : i32
    %c0_i32_2 = arith.constant 0 : i32
    return %arg0, %arg1, %c0_i32, %c0_i32_0, %c0_i32_1 : i32, i32, i32, i32, i32
  }
  func.func @transform_1(%arg0: i32, %arg1: i32) -> (i32, i32) {
    %c0_i32 = arith.constant 0 : i32
    %c0_i32_0 = arith.constant 0 : i32
    %c0_i32_1 = arith.constant 0 : i32
    return %c0_i32, %c0_i32_0 : i32, i32
  }
  func.func @transform_2(%arg0: i32, %arg1: i32) -> (i32, i32) {
    %c0_i32 = arith.constant 0 : i32
    %c0_i32_0 = arith.constant 0 : i32
    %c0_i32_1 = arith.constant 0 : i32
    return %c0_i32, %c0_i32_0 : i32, i32
  }
  func.func @transform_3(%arg0: i32, %arg1: i32) -> (i32, i32, i32, i32, i32) {
    %c0_i32 = arith.constant 0 : i32
    %c0_i32_0 = arith.constant 0 : i32
    %c0_i32_1 = arith.constant 0 : i32
    %c0_i32_2 = arith.constant 0 : i32
    return %arg0, %arg1, %c0_i32, %c0_i32_0, %c0_i32_1 : i32, i32, i32, i32, i32
  }
}

module attributes {stable_mosaic.version = 11 : i64} {
  func.func @_conv3x3_band_kernel(%arg0: i32, %arg1: i32, %arg2: memref<1x1x8x16x128xbf16, #tpu.memory_space<vmem>>, %arg3: memref<1x1x1x16x128xbf16, #tpu.memory_space<vmem>>, %arg4: memref<1x1x1x16x128xbf16, #tpu.memory_space<vmem>>, %arg5: memref<9x128x128xbf16, #tpu.memory_space<vmem>>, %arg6: memref<1x128xf32, #tpu.memory_space<vmem>>, %arg7: memref<1x128xf32, #tpu.memory_space<vmem>>, %arg8: memref<1x1x8x16x128xbf16, #tpu.memory_space<vmem>>, %arg9: memref<1x1x2x128xf32, #tpu.memory_space<vmem>>, %arg10: memref<10x18x128xbf16, #tpu.memory_space<vmem>>) attributes {dimension_semantics = [#tpu.dimension_semantics<parallel>, #tpu.dimension_semantics<parallel>], iteration_bounds = array<i64: 2, 2>, scalar_prefetch = 0 : i64, scratch_operands = 1 : i64, tpu.core_type = #tpu.core_type<tc>, window_params = [{transform_indices = @transform_0, window_bounds = array<i64: 1, 1, 8, 16, 128>}, {transform_indices = @transform_1, window_bounds = array<i64: 1, 1, 1, 16, 128>}, {transform_indices = @transform_2, window_bounds = array<i64: 1, 1, 1, 16, 128>}, {pipeline_mode = #tpu.pipeline_mode<synchronous>, transform_indices = @transform_3, window_bounds = array<i64: 9, 128, 128>}, {pipeline_mode = #tpu.pipeline_mode<synchronous>, transform_indices = @transform_4, window_bounds = array<i64: 1, 128>}, {pipeline_mode = #tpu.pipeline_mode<synchronous>, transform_indices = @transform_5, window_bounds = array<i64: 1, 128>}, {transform_indices = @transform_6, window_bounds = array<i64: 1, 1, 8, 16, 128>}, {transform_indices = @transform_7, window_bounds = array<i64: 1, 1, 2, 128>}]} {
    %c0_i32 = arith.constant 0 : i32
    %0 = arith.cmpi eq, %arg1, %c0_i32 : i32
    %c1_i32 = arith.constant 1 : i32
    %1 = arith.cmpi eq, %arg1, %c1_i32 : i32
    %cst = arith.constant 0.000000e+00 : bf16
    %2 = vector.broadcast %cst : bf16 to vector<10x18x128xbf16>
    %c0 = arith.constant 0 : index
    %c0_0 = arith.constant 0 : index
    %c0_1 = arith.constant 0 : index
    %3 = vector.load %arg10[%c0, %c0_0, %c0_1] : memref<10x18x128xbf16, #tpu.memory_space<vmem>>, vector<10x18x128xbf16>
    tpu.vector_store %arg10[%c0, %c0_0, %c0_1], %2 {strides = array<i32>} : memref<10x18x128xbf16, #tpu.memory_space<vmem>>, vector<10x18x128xbf16>,
    %c0_2 = arith.constant 0 : index
    %c0_3 = arith.constant 0 : index
    %4 = vector.load %arg6[%c0_2, %c0_3] : memref<1x128xf32, #tpu.memory_space<vmem>>, vector<1x128xf32>
    %c0_4 = arith.constant 0 : index
    %c0_5 = arith.constant 0 : index
    %5 = vector.load %arg7[%c0_4, %c0_5] : memref<1x128xf32, #tpu.memory_space<vmem>>, vector<1x128xf32>
    %c0_6 = arith.constant 0 : index
    %c0_7 = arith.constant 0 : index
    %c0_8 = arith.constant 0 : index
    %c0_9 = arith.constant 0 : index
    %c0_10 = arith.constant 0 : index
    %6 = vector.load %arg2[%c0_6, %c0_7, %c0_8, %c0_9, %c0_10] : memref<1x1x8x16x128xbf16, #tpu.memory_space<vmem>>, vector<1x1x8x16x128xbf16>
    %7 = vector.shape_cast %6 : vector<1x1x8x16x128xbf16> to vector<8x16x128xbf16>
    %8 = arith.extf %7 : vector<8x16x128xbf16> to vector<8x16x128xf32>
    %c0_11 = arith.constant 0 : index
    %c0_12 = arith.constant 0 : index
    %c0_13 = arith.constant 0 : index
    %c0_14 = arith.constant 0 : index
    %c0_15 = arith.constant 0 : index
    %9 = vector.load %arg3[%c0_11, %c0_12, %c0_13, %c0_14, %c0_15] : memref<1x1x1x16x128xbf16, #tpu.memory_space<vmem>>, vector<1x1x1x16x128xbf16>
    %10 = vector.shape_cast %9 : vector<1x1x1x16x128xbf16> to vector<16x128xbf16>
    %11 = arith.extf %10 : vector<16x128xbf16> to vector<16x128xf32>
    %c0_16 = arith.constant 0 : index
    %c0_17 = arith.constant 0 : index
    %c0_18 = arith.constant 0 : index
    %c0_19 = arith.constant 0 : index
    %c0_20 = arith.constant 0 : index
    %12 = vector.load %arg4[%c0_16, %c0_17, %c0_18, %c0_19, %c0_20] : memref<1x1x1x16x128xbf16, #tpu.memory_space<vmem>>, vector<1x1x1x16x128xbf16>
    %13 = vector.shape_cast %12 : vector<1x1x1x16x128xbf16> to vector<16x128xbf16>
    %14 = arith.extf %13 : vector<16x128xbf16> to vector<16x128xf32>
    %15 = vector.shape_cast %4 : vector<1x128xf32> to vector<1x1x128xf32>
    %16 = vector.broadcast %15 : vector<1x1x128xf32> to vector<8x16x128xf32>
    %17 = arith.mulf %8, %16 : vector<8x16x128xf32>
    %18 = vector.shape_cast %5 : vector<1x128xf32> to vector<1x1x128xf32>
    %19 = vector.broadcast %18 : vector<1x1x128xf32> to vector<8x16x128xf32>
    %20 = arith.addf %17, %19 : vector<8x16x128xf32>
    %cst_21 = arith.constant 0.000000e+00 : f32
    %21 = vector.broadcast %cst_21 : f32 to vector<8x16x128xf32>
    %22 = arith.maximumf %20, %21 : vector<8x16x128xf32>
    %23 = vector.broadcast %4 : vector<1x128xf32> to vector<16x128xf32>
    %24 = arith.mulf %11, %23 : vector<16x128xf32>
    %25 = vector.broadcast %5 : vector<1x128xf32> to vector<16x128xf32>
    %26 = arith.addf %24, %25 : vector<16x128xf32>
    %cst_22 = arith.constant 0.000000e+00 : f32
    %27 = vector.broadcast %cst_22 : f32 to vector<16x128xf32>
    %28 = arith.maximumf %26, %27 : vector<16x128xf32>
    %29 = vector.broadcast %4 : vector<1x128xf32> to vector<16x128xf32>
    %30 = arith.mulf %14, %29 : vector<16x128xf32>
    %31 = vector.broadcast %5 : vector<1x128xf32> to vector<16x128xf32>
    %32 = arith.addf %30, %31 : vector<16x128xf32>
    %cst_23 = arith.constant 0.000000e+00 : f32
    %33 = vector.broadcast %cst_23 : f32 to vector<16x128xf32>
    %34 = arith.maximumf %32, %33 : vector<16x128xf32>
    %cst_24 = arith.constant 0.000000e+00 : f32
    %35 = vector.broadcast %cst_24 : f32 to vector<16x128xf32>
    %36 = arith.select %0, %35, %28 : vector<16x128xf32>
    %cst_25 = arith.constant 0.000000e+00 : f32
    %37 = vector.broadcast %cst_25 : f32 to vector<16x128xf32>
    %38 = arith.select %1, %37, %34 : vector<16x128xf32>
    %39 = arith.truncf %22 : vector<8x16x128xf32> to vector<8x16x128xbf16>
    %c1 = arith.constant 1 : index
    %c1_26 = arith.constant 1 : index
    %c0_27 = arith.constant 0 : index
    %40 = vector.load %arg10[%c1, %c1_26, %c0_27] : memref<10x18x128xbf16, #tpu.memory_space<vmem>>, vector<8x16x128xbf16>
    tpu.vector_store %arg10[%c1, %c1_26, %c0_27], %39 {strides = array<i32>} : memref<10x18x128xbf16, #tpu.memory_space<vmem>>, vector<8x16x128xbf16>,
    %41 = arith.truncf %36 : vector<16x128xf32> to vector<16x128xbf16>
    %42 = vector.shape_cast %41 : vector<16x128xbf16> to vector<1x16x128xbf16>
    %c0_28 = arith.constant 0 : index
    %c1_29 = arith.constant 1 : index
    %c0_30 = arith.constant 0 : index
    %43 = vector.load %arg10[%c0_28, %c1_29, %c0_30] : memref<10x18x128xbf16, #tpu.memory_space<vmem>>, vector<1x16x128xbf16>
    tpu.vector_store %arg10[%c0_28, %c1_29, %c0_30], %42 {strides = array<i32>} : memref<10x18x128xbf16, #tpu.memory_space<vmem>>, vector<1x16x128xbf16>,
    %44 = arith.truncf %38 : vector<16x128xf32> to vector<16x128xbf16>
    %45 = vector.shape_cast %44 : vector<16x128xbf16> to vector<1x16x128xbf16>
    %c9 = arith.constant 9 : index
    %c1_31 = arith.constant 1 : index
    %c0_32 = arith.constant 0 : index
    %46 = vector.load %arg10[%c9, %c1_31, %c0_32] : memref<10x18x128xbf16, #tpu.memory_space<vmem>>, vector<1x16x128xbf16>
    tpu.vector_store %arg10[%c9, %c1_31, %c0_32], %45 {strides = array<i32>} : memref<10x18x128xbf16, #tpu.memory_space<vmem>>, vector<1x16x128xbf16>,
    %c0_33 = arith.constant 0 : index
    %c0_34 = arith.constant 0 : index
    %c0_35 = arith.constant 0 : index
    %47 = vector.load %arg10[%c0_33, %c0_34, %c0_35] : memref<10x18x128xbf16, #tpu.memory_space<vmem>>, vector<8x16x128xbf16>
    %48 = vector.shape_cast %47 : vector<8x16x128xbf16> to vector<128x128xbf16>
    %c0_36 = arith.constant 0 : index
    %c0_37 = arith.constant 0 : index
    %c0_38 = arith.constant 0 : index
    %49 = vector.load %arg5[%c0_36, %c0_37, %c0_38] : memref<9x128x128xbf16, #tpu.memory_space<vmem>>, vector<1x128x128xbf16>
    %50 = vector.shape_cast %49 : vector<1x128x128xbf16> to vector<128x128xbf16>
    %cst_39 = arith.constant dense<0.000000e+00> : vector<128x128xf32>
    %51 = tpu.matmul %48, %50, %cst_39 {dimension_numbers = #tpu.dot_dimension_numbers<[1], [0], [0], [1], [0, 0, 1, 1], [], []>} : vector<128x128xbf16>, vector<128x128xbf16>, vector<128x128xf32> -> vector<128x128xf32>
    %c0_40 = arith.constant 0 : index
    %c1_41 = arith.constant 1 : index
    %c0_42 = arith.constant 0 : index
    %52 = vector.load %arg10[%c0_40, %c1_41, %c0_42] : memref<10x18x128xbf16, #tpu.memory_space<vmem>>, vector<8x16x128xbf16>
    %53 = vector.shape_cast %52 : vector<8x16x128xbf16> to vector<128x128xbf16>
    %c1_43 = arith.constant 1 : index
    %c0_44 = arith.constant 0 : index
    %c0_45 = arith.constant 0 : index
    %54 = vector.load %arg5[%c1_43, %c0_44, %c0_45] : memref<9x128x128xbf16, #tpu.memory_space<vmem>>, vector<1x128x128xbf16>
    %55 = vector.shape_cast %54 : vector<1x128x128xbf16> to vector<128x128xbf16>
    %cst_46 = arith.constant dense<0.000000e+00> : vector<128x128xf32>
    %56 = tpu.matmul %53, %55, %cst_46 {dimension_numbers = #tpu.dot_dimension_numbers<[1], [0], [0], [1], [0, 0, 1, 1], [], []>} : vector<128x128xbf16>, vector<128x128xbf16>, vector<128x128xf32> -> vector<128x128xf32>
    %57 = arith.addf %51, %56 : vector<128x128xf32>
    %c0_47 = arith.constant 0 : index
    %c2 = arith.constant 2 : index
    %c0_48 = arith.constant 0 : index
    %58 = vector.load %arg10[%c0_47, %c2, %c0_48] : memref<10x18x128xbf16, #tpu.memory_space<vmem>>, vector<8x16x128xbf16>
    %59 = vector.shape_cast %58 : vector<8x16x128xbf16> to vector<128x128xbf16>
    %c2_49 = arith.constant 2 : index
    %c0_50 = arith.constant 0 : index
    %c0_51 = arith.constant 0 : index
    %60 = vector.load %arg5[%c2_49, %c0_50, %c0_51] : memref<9x128x128xbf16, #tpu.memory_space<vmem>>, vector<1x128x128xbf16>
    %61 = vector.shape_cast %60 : vector<1x128x128xbf16> to vector<128x128xbf16>
    %cst_52 = arith.constant dense<0.000000e+00> : vector<128x128xf32>
    %62 = tpu.matmul %59, %61, %cst_52 {dimension_numbers = #tpu.dot_dimension_numbers<[1], [0], [0], [1], [0, 0, 1, 1], [], []>} : vector<128x128xbf16>, vector<128x128xbf16>, vector<128x128xf32> -> vector<128x128xf32>
    %63 = arith.addf %57, %62 : vector<128x128xf32>
    %c1_53 = arith.constant 1 : index
    %c0_54 = arith.constant 0 : index
    %c0_55 = arith.constant 0 : index
    %64 = vector.load %arg10[%c1_53, %c0_54, %c0_55] : memref<10x18x128xbf16, #tpu.memory_space<vmem>>, vector<8x16x128xbf16>
    %65 = vector.shape_cast %64 : vector<8x16x128xbf16> to vector<128x128xbf16>
    %c3 = arith.constant 3 : index
    %c0_56 = arith.constant 0 : index
    %c0_57 = arith.constant 0 : index
    %66 = vector.load %arg5[%c3, %c0_56, %c0_57] : memref<9x128x128xbf16, #tpu.memory_space<vmem>>, vector<1x128x128xbf16>
    %67 = vector.shape_cast %66 : vector<1x128x128xbf16> to vector<128x128xbf16>
    %cst_58 = arith.constant dense<0.000000e+00> : vector<128x128xf32>
    %68 = tpu.matmul %65, %67, %cst_58 {dimension_numbers = #tpu.dot_dimension_numbers<[1], [0], [0], [1], [0, 0, 1, 1], [], []>} : vector<128x128xbf16>, vector<128x128xbf16>, vector<128x128xf32> -> vector<128x128xf32>
    %69 = arith.addf %63, %68 : vector<128x128xf32>
    %c1_59 = arith.constant 1 : index
    %c1_60 = arith.constant 1 : index
    %c0_61 = arith.constant 0 : index
    %70 = vector.load %arg10[%c1_59, %c1_60, %c0_61] : memref<10x18x128xbf16, #tpu.memory_space<vmem>>, vector<8x16x128xbf16>
    %71 = vector.shape_cast %70 : vector<8x16x128xbf16> to vector<128x128xbf16>
    %c4 = arith.constant 4 : index
    %c0_62 = arith.constant 0 : index
    %c0_63 = arith.constant 0 : index
    %72 = vector.load %arg5[%c4, %c0_62, %c0_63] : memref<9x128x128xbf16, #tpu.memory_space<vmem>>, vector<1x128x128xbf16>
    %73 = vector.shape_cast %72 : vector<1x128x128xbf16> to vector<128x128xbf16>
    %cst_64 = arith.constant dense<0.000000e+00> : vector<128x128xf32>
    %74 = tpu.matmul %71, %73, %cst_64 {dimension_numbers = #tpu.dot_dimension_numbers<[1], [0], [0], [1], [0, 0, 1, 1], [], []>} : vector<128x128xbf16>, vector<128x128xbf16>, vector<128x128xf32> -> vector<128x128xf32>
    %75 = arith.addf %69, %74 : vector<128x128xf32>
    %c1_65 = arith.constant 1 : index
    %c2_66 = arith.constant 2 : index
    %c0_67 = arith.constant 0 : index
    %76 = vector.load %arg10[%c1_65, %c2_66, %c0_67] : memref<10x18x128xbf16, #tpu.memory_space<vmem>>, vector<8x16x128xbf16>
    %77 = vector.shape_cast %76 : vector<8x16x128xbf16> to vector<128x128xbf16>
    %c5 = arith.constant 5 : index
    %c0_68 = arith.constant 0 : index
    %c0_69 = arith.constant 0 : index
    %78 = vector.load %arg5[%c5, %c0_68, %c0_69] : memref<9x128x128xbf16, #tpu.memory_space<vmem>>, vector<1x128x128xbf16>
    %79 = vector.shape_cast %78 : vector<1x128x128xbf16> to vector<128x128xbf16>
    %cst_70 = arith.constant dense<0.000000e+00> : vector<128x128xf32>
    %80 = tpu.matmul %77, %79, %cst_70 {dimension_numbers = #tpu.dot_dimension_numbers<[1], [0], [0], [1], [0, 0, 1, 1], [], []>} : vector<128x128xbf16>, vector<128x128xbf16>, vector<128x128xf32> -> vector<128x128xf32>
    %81 = arith.addf %75, %80 : vector<128x128xf32>
    %c2_71 = arith.constant 2 : index
    %c0_72 = arith.constant 0 : index
    %c0_73 = arith.constant 0 : index
    %82 = vector.load %arg10[%c2_71, %c0_72, %c0_73] : memref<10x18x128xbf16, #tpu.memory_space<vmem>>, vector<8x16x128xbf16>
    %83 = vector.shape_cast %82 : vector<8x16x128xbf16> to vector<128x128xbf16>
    %c6 = arith.constant 6 : index
    %c0_74 = arith.constant 0 : index
    %c0_75 = arith.constant 0 : index
    %84 = vector.load %arg5[%c6, %c0_74, %c0_75] : memref<9x128x128xbf16, #tpu.memory_space<vmem>>, vector<1x128x128xbf16>
    %85 = vector.shape_cast %84 : vector<1x128x128xbf16> to vector<128x128xbf16>
    %cst_76 = arith.constant dense<0.000000e+00> : vector<128x128xf32>
    %86 = tpu.matmul %83, %85, %cst_76 {dimension_numbers = #tpu.dot_dimension_numbers<[1], [0], [0], [1], [0, 0, 1, 1], [], []>} : vector<128x128xbf16>, vector<128x128xbf16>, vector<128x128xf32> -> vector<128x128xf32>
    %87 = arith.addf %81, %86 : vector<128x128xf32>
    %c2_77 = arith.constant 2 : index
    %c1_78 = arith.constant 1 : index
    %c0_79 = arith.constant 0 : index
    %88 = vector.load %arg10[%c2_77, %c1_78, %c0_79] : memref<10x18x128xbf16, #tpu.memory_space<vmem>>, vector<8x16x128xbf16>
    %89 = vector.shape_cast %88 : vector<8x16x128xbf16> to vector<128x128xbf16>
    %c7 = arith.constant 7 : index
    %c0_80 = arith.constant 0 : index
    %c0_81 = arith.constant 0 : index
    %90 = vector.load %arg5[%c7, %c0_80, %c0_81] : memref<9x128x128xbf16, #tpu.memory_space<vmem>>, vector<1x128x128xbf16>
    %91 = vector.shape_cast %90 : vector<1x128x128xbf16> to vector<128x128xbf16>
    %cst_82 = arith.constant dense<0.000000e+00> : vector<128x128xf32>
    %92 = tpu.matmul %89, %91, %cst_82 {dimension_numbers = #tpu.dot_dimension_numbers<[1], [0], [0], [1], [0, 0, 1, 1], [], []>} : vector<128x128xbf16>, vector<128x128xbf16>, vector<128x128xf32> -> vector<128x128xf32>
    %93 = arith.addf %87, %92 : vector<128x128xf32>
    %c2_83 = arith.constant 2 : index
    %c2_84 = arith.constant 2 : index
    %c0_85 = arith.constant 0 : index
    %94 = vector.load %arg10[%c2_83, %c2_84, %c0_85] : memref<10x18x128xbf16, #tpu.memory_space<vmem>>, vector<8x16x128xbf16>
    %95 = vector.shape_cast %94 : vector<8x16x128xbf16> to vector<128x128xbf16>
    %c8 = arith.constant 8 : index
    %c0_86 = arith.constant 0 : index
    %c0_87 = arith.constant 0 : index
    %96 = vector.load %arg5[%c8, %c0_86, %c0_87] : memref<9x128x128xbf16, #tpu.memory_space<vmem>>, vector<1x128x128xbf16>
    %97 = vector.shape_cast %96 : vector<1x128x128xbf16> to vector<128x128xbf16>
    %cst_88 = arith.constant dense<0.000000e+00> : vector<128x128xf32>
    %98 = tpu.matmul %95, %97, %cst_88 {dimension_numbers = #tpu.dot_dimension_numbers<[1], [0], [0], [1], [0, 0, 1, 1], [], []>} : vector<128x128xbf16>, vector<128x128xbf16>, vector<128x128xf32> -> vector<128x128xf32>
    %99 = arith.addf %93, %98 : vector<128x128xf32>
    %100 = vector.shape_cast %99 : vector<128x128xf32> to vector<8x16x128xf32>
    %101 = arith.truncf %100 : vector<8x16x128xf32> to vector<8x16x128xbf16>
    %c0_89 = arith.constant 0 : index
    %c0_90 = arith.constant 0 : index
    %c0_91 = arith.constant 0 : index
    %c0_92 = arith.constant 0 : index
    %c0_93 = arith.constant 0 : index
    %102 = vector.load %arg8[%c0_89, %c0_90, %c0_91, %c0_92, %c0_93] : memref<1x1x8x16x128xbf16, #tpu.memory_space<vmem>>, vector<1x1x8x16x128xbf16>
    %103 = vector.shape_cast %102 : vector<1x1x8x16x128xbf16> to vector<8x16x128xbf16>
    %104 = vector.shape_cast %101 : vector<8x16x128xbf16> to vector<1x1x8x16x128xbf16>
    tpu.vector_store %arg8[%c0_89, %c0_90, %c0_91, %c0_92, %c0_93], %104 {strides = array<i32>} : memref<1x1x8x16x128xbf16, #tpu.memory_space<vmem>>, vector<1x1x8x16x128xbf16>,
    %cst_94 = arith.constant dense<0.000000e+00> : vector<128xf32>
    %105 = vector.multi_reduction <add>, %99, %cst_94 [0] : vector<128x128xf32> to vector<128xf32>
    %106 = vector.shape_cast %105 : vector<128xf32> to vector<1x128xf32>
    %107 = arith.mulf %99, %99 : vector<128x128xf32>
    %cst_95 = arith.constant dense<0.000000e+00> : vector<128xf32>
    %108 = vector.multi_reduction <add>, %107, %cst_95 [0] : vector<128x128xf32> to vector<128xf32>
    %109 = vector.shape_cast %108 : vector<128xf32> to vector<1x128xf32>
    %110 = tpu.concatenate %106, %109 in 0 : vector<1x128xf32>, vector<1x128xf32> -> vector<2x128xf32>
    %c0_96 = arith.constant 0 : index
    %c0_97 = arith.constant 0 : index
    %c0_98 = arith.constant 0 : index
    %c0_99 = arith.constant 0 : index
    %111 = vector.load %arg9[%c0_96, %c0_97, %c0_98, %c0_99] : memref<1x1x2x128xf32, #tpu.memory_space<vmem>>, vector<1x1x2x128xf32>
    %112 = vector.shape_cast %111 : vector<1x1x2x128xf32> to vector<2x128xf32>
    %113 = vector.shape_cast %110 : vector<2x128xf32> to vector<1x1x2x128xf32>
    tpu.vector_store %arg9[%c0_96, %c0_97, %c0_98, %c0_99], %113 {strides = array<i32>} : memref<1x1x2x128xf32, #tpu.memory_space<vmem>>, vector<1x1x2x128xf32>,
    return
  }
  func.func @transform_0(%arg0: i32, %arg1: i32) -> (i32, i32, i32, i32, i32) {
    %c0_i32 = arith.constant 0 : i32
    %c0_i32_0 = arith.constant 0 : i32
    %c0_i32_1 = arith.constant 0 : i32
    %c0_i32_2 = arith.constant 0 : i32
    return %arg0, %arg1, %c0_i32, %c0_i32_0, %c0_i32_1 : i32, i32, i32, i32, i32
  }
  func.func @transform_1(%arg0: i32, %arg1: i32) -> (i32, i32, i32, i32, i32) {
    %c1_i32 = arith.constant 1 : i32
    %0 = arith.subi %arg1, %c1_i32 : i32
    %c0_i32 = arith.constant 0 : i32
    %1 = arith.maxsi %0, %c0_i32 : i32
    %c7_i32 = arith.constant 7 : i32
    %c0_i32_0 = arith.constant 0 : i32
    %c0_i32_1 = arith.constant 0 : i32
    %c0_i32_2 = arith.constant 0 : i32
    return %arg0, %1, %c7_i32, %c0_i32_0, %c0_i32_1 : i32, i32, i32, i32, i32
  }
  func.func @transform_2(%arg0: i32, %arg1: i32) -> (i32, i32, i32, i32, i32) {
    %c1_i32 = arith.constant 1 : i32
    %0 = arith.addi %arg1, %c1_i32 : i32
    %c1_i32_0 = arith.constant 1 : i32
    %1 = arith.minsi %0, %c1_i32_0 : i32
    %c0_i32 = arith.constant 0 : i32
    %c0_i32_1 = arith.constant 0 : i32
    %c0_i32_2 = arith.constant 0 : i32
    %c0_i32_3 = arith.constant 0 : i32
    return %arg0, %1, %c0_i32, %c0_i32_1, %c0_i32_2 : i32, i32, i32, i32, i32
  }
  func.func @transform_3(%arg0: i32, %arg1: i32) -> (i32, i32, i32) {
    %c0_i32 = arith.constant 0 : i32
    %c0_i32_0 = arith.constant 0 : i32
    %c0_i32_1 = arith.constant 0 : i32
    %c0_i32_2 = arith.constant 0 : i32
    return %c0_i32, %c0_i32_0, %c0_i32_1 : i32, i32, i32
  }
  func.func @transform_4(%arg0: i32, %arg1: i32) -> (i32, i32) {
    %c0_i32 = arith.constant 0 : i32
    %c0_i32_0 = arith.constant 0 : i32
    %c0_i32_1 = arith.constant 0 : i32
    return %c0_i32, %c0_i32_0 : i32, i32
  }
  func.func @transform_5(%arg0: i32, %arg1: i32) -> (i32, i32) {
    %c0_i32 = arith.constant 0 : i32
    %c0_i32_0 = arith.constant 0 : i32
    %c0_i32_1 = arith.constant 0 : i32
    return %c0_i32, %c0_i32_0 : i32, i32
  }
  func.func @transform_6(%arg0: i32, %arg1: i32) -> (i32, i32, i32, i32, i32) {
    %c0_i32 = arith.constant 0 : i32
    %c0_i32_0 = arith.constant 0 : i32
    %c0_i32_1 = arith.constant 0 : i32
    %c0_i32_2 = arith.constant 0 : i32
    return %arg0, %arg1, %c0_i32, %c0_i32_0, %c0_i32_1 : i32, i32, i32, i32, i32
  }
  func.func @transform_7(%arg0: i32, %arg1: i32) -> (i32, i32, i32, i32) {
    %c0_i32 = arith.constant 0 : i32
    %c0_i32_0 = arith.constant 0 : i32
    %c0_i32_1 = arith.constant 0 : i32
    return %arg0, %arg1, %c0_i32, %c0_i32_0 : i32, i32, i32, i32
  }
}

</mosaic_0001>

<llo_original>
// kernel: _lambda_.5
$region0: #{_lambda_.5}
  #allocation0 [shape = 'u32[]', space=smem, size = 0x4, offset = 0x4, fixed_abs, tag = 'smem constant byte address 0x4 - core index']
  #allocation1 [shape = 'u32[144,128]{1,0:T(1,128)}', space=vmem, size = 0x12000, scoped, tag = 'internal scratch']
  %s0 = inlined_call_operand.vmem [shape: bf16[2,2,8,16,128], index: 0, kind: input, shape index: {}]
  %s1 = inlined_call_operand.vmem [shape: f32[1,128], index: 1, kind: input, shape index: {}]
  %s2 = inlined_call_operand.vmem [shape: f32[1,128], index: 2, kind: input, shape index: {}]
  %s3 = inlined_call_operand.vmem [shape: f32[2,2,8,16,128], index: 3, kind: output, shape index: {}]
  %s4 = sld [smem:[#allocation0]]
  $region45: #{_lambda_.5} parent=0
    _
  %s6 = ssub.s32 1, %s4
  %s7 = scalar_select 0, %s6, %s4
  loop: start=0, step=1, limit=6
  $region2: #{_lambda_.5} parent=0 // loop_pre_header
    _
  $region3: #{_lambda_.5} parent=0 // loop_header
    %s9 = sphi 0, %s13
    %p10 = scmp.ge.s32.totalorder %s9, 6
    %s16 = sphi 0, %s28
    %s17 = sphi 0, %s24
    %s18 = sphi 0, %s16
    %s19 = sphi 0, %s17
    %s20 = sphi 0, %s18
    %s21 = sphi 0, %s19
    %s33 = sphi 0, %s35
    %s36 = sphi 0, %s33
    %s37 = sphi 0, %s36
    %s53 = sphi 0, %s37
    %s57 = sphi 0, %s57
    %s59 = sphi 0, %s57
    %s60 = sphi 0, %s59
    %s74 = sphi 0, %s60
    %s78 = sphi 0, %s78
    %s80 = sphi 0, %s78
    %s81 = sphi 0, %s80
    %s95 = sphi 0, %s81
    %s103 = sphi 0, %s105
    %s106 = sphi 0, %s103
    %s107 = sphi 0, %s106
    %s123 = sphi 0, %s107
  $region4: #{_lambda_.5} parent=0 // loop_header_branch
    %12 = sbr.rel (%p10) target = $region8
  $region5: #{_lambda_.5} parent=0 // loop_body
    %s14 = ssub.s32 %s9, 1
    %s15 = ssub.s32 %s9, 2
    %s22 = sadd.s32 1, %s17
    %p23 = scmp.ge.s32.totalorder %s22, 2
    %s24 = scalar_select %p23, 0, %s22
    %s25 = sadd.s32 1, %s16
    %s26 = scalar_select %p23, %s25, %s16
    %p27 = scmp.ge.s32.totalorder %s26, 2
    %s28 = scalar_select %p27, 0, %s26
    %s29 = ssub.s32 %s16, %s28
    %s30 = ssub.s32 %s17, %s24
    %s31 = sor.u32 %s29, %s30
    %p32 = scmp.eq.s32.totalorder %s31, 0
    %s34 = sadd.s32 %s33, 1
    %s35 = scalar_select %p32, %s33, %s34
    %p38 = pneg %p32
    %p39 = scmp.eq.s32.totalorder %s9, 3
    %p40 = por %p38, %p39
    %p41 = scmp.ne.s32.totalorder %s33, %s36
    %p42 = scmp.eq.s32.totalorder %s9, 0
    %p43 = por %p41, %p42
    %p44 = scmp.ne.s32.totalorder %s33, %s36
    %p45 = scmp.eq.s32.totalorder %s14, 3
    %p46 = por %p44, %p45
    %p47 = scmp.ne.s32.totalorder %s36, %s37
    %p48 = scmp.eq.s32.totalorder %s14, 0
    %p49 = por %p47, %p48
    %p50 = scmp.ne.s32.totalorder %s36, %s37
    %p51 = scmp.eq.s32.totalorder %s15, 3
    %p52 = por %p50, %p51
    %p54 = scmp.ne.s32.totalorder %s37, %s53
    %p55 = scmp.eq.s32.totalorder %s15, 0
    %p56 = por %p54, %p55
    %s58 = sadd.s32 %s57, 1
    %p61 = scmp.eq.s32.totalorder %s9, 3
    %p62 = scmp.ne.s32.totalorder %s57, %s59
    %p63 = scmp.eq.s32.totalorder %s9, 0
    %p64 = por %p62, %p63
    %p65 = scmp.ne.s32.totalorder %s57, %s59
    %p66 = scmp.eq.s32.totalorder %s14, 3
    %p67 = por %p65, %p66
    %p68 = scmp.ne.s32.totalorder %s59, %s60
    %p69 = scmp.eq.s32.totalorder %s14, 0
    %p70 = por %p68, %p69
    %p71 = scmp.ne.s32.totalorder %s59, %s60
    %p72 = scmp.eq.s32.totalorder %s15, 3
    %p73 = por %p71, %p72
    %p75 = scmp.ne.s32.totalorder %s60, %s74
    %p76 = scmp.eq.s32.totalorder %s15, 0
    %p77 = por %p75, %p76
    %s79 = sadd.s32 %s78, 1
    %p82 = scmp.eq.s32.totalorder %s9, 3
    %p83 = scmp.ne.s32.totalorder %s78, %s80
    %p84 = scmp.eq.s32.totalorder %s9, 0
    %p85 = por %p83, %p84
    %p86 = scmp.ne.s32.totalorder %s78, %s80
    %p87 = scmp.eq.s32.totalorder %s14, 3
    %p88 = por %p86, %p87
    %p89 = scmp.ne.s32.totalorder %s80, %s81
    %p90 = scmp.eq.s32.totalorder %s14, 0
    %p91 = por %p89, %p90
    %p92 = scmp.ne.s32.totalorder %s80, %s81
    %p93 = scmp.eq.s32.totalorder %s15, 3
    %p94 = por %p92, %p93
    %p96 = scmp.ne.s32.totalorder %s81, %s95
    %p97 = scmp.eq.s32.totalorder %s15, 0
    %p98 = por %p96, %p97
    %s99 = ssub.s32 %s16, %s28
    %s100 = ssub.s32 %s17, %s24
    %s101 = sor.u32 %s99, %s100
    %p102 = scmp.eq.s32.totalorder %s101, 0
    %s104 = sadd.s32 %s103, 1
    %s105 = scalar_select %p102, %s103, %s104
    %p108 = pneg %p102
    %p109 = scmp.eq.s32.totalorder %s9, 3
    %p110 = por %p108, %p109
    %p111 = scmp.ne.s32.totalorder %s103, %s106
    %p112 = scmp.eq.s32.totalorder %s9, 0
    %p113 = por %p111, %p112
    %p114 = scmp.ne.s32.totalorder %s103, %s106
    %p115 = scmp.eq.s32.totalorder %s14, 3
    %p116 = por %p114, %p115
    %p117 = scmp.ne.s32.totalorder %s106, %s107
    %p118 = scmp.eq.s32.totalorder %s14, 0
    %p119 = por %p117, %p118
    %p120 = scmp.ne.s32.totalorder %s106, %s107
    %p121 = scmp.eq.s32.totalorder %s15, 3
    %p122 = por %p120, %p121
    %p124 = scmp.ne.s32.totalorder %s107, %s123
    %p125 = scmp.eq.s32.totalorder %s15, 0
    %p126 = por %p124, %p125
    %p127 = scmp.le.s32.totalorder 1, %s9
    %p128 = scmp.lt.s32.totalorder %s9, 5
    %p129 = pnand %p127, %p128
    %p130 = pneg %p129
    // Predicated region
    $region9: #{_lambda_.5} parent=5 // pred_check
      _
    $region10: #{_lambda_.5} parent=5 // pred_check_branch
      %132 = sbr.rel (%p129) target = $region12
    $region11: #{_lambda_.5} parent=5 // pred_region
      %s133 = ssub.s32 %s9, 1
      // Predicated region
      $region13: #{_lambda_.5} parent=11 // pred_check
        %p134 = pneg %p70
      $region14: #{_lambda_.5} parent=11 // pred_check_branch
        %136 = sbr.rel (%p134) target = $region16
      $region15: #{_lambda_.5} parent=11 // pred_region
        _
      $region16: #{_lambda_.5} parent=11 // pred_fallthru
        _
      // Predicated region
      $region17: #{_lambda_.5} parent=11 // pred_check
        %p137 = pneg %p91
      $region18: #{_lambda_.5} parent=11 // pred_check_branch
        %139 = sbr.rel (%p137) target = $region20
      $region19: #{_lambda_.5} parent=11 // pred_region
        _
      $region20: #{_lambda_.5} parent=11 // pred_fallthru
        _
    $region12: #{_lambda_.5} parent=5 // pred_fallthru
      _
    %p140 = scmp.lt.s32.totalorder %s9, 4
    // Predicated region
    $region21: #{_lambda_.5} parent=5 // pred_check
      %p141 = pneg %p140
    $region22: #{_lambda_.5} parent=5 // pred_check_branch
      %143 = sbr.rel (%p141) target = $region24
    $region23: #{_lambda_.5} parent=5 // pred_region
      // Predicated region
      $region25: #{_lambda_.5} parent=23 // pred_check
        %p144 = pneg %p43
      $region26: #{_lambda_.5} parent=23 // pred_check_branch
        %146 = sbr.rel (%p144) target = $region28
      $region27: #{_lambda_.5} parent=23 // pred_region
        %p147 = scmp.lt.s32.totalorder %s16, 1
        %s148 = scalar_select %p147, %s16, 1
        %p149 = scmp.lt.s32.totalorder %s17, 1
        %s150 = scalar_select %p149, %s17, 1
        %s151 = smul.addr %s150, 16
        %s152 = smul.addr %s148, 32
        %s153 = sadd.s32 %s151, %s152
        %s154 = smul.addr %s153, 4
        %s155 = scalar_lea.vmem %s0, %s154
      $region28: #{_lambda_.5} parent=23 // pred_fallthru
        _
    $region24: #{_lambda_.5} parent=5 // pred_fallthru
      _
    %p156 = scmp.le.s32.totalorder 1, %s9
    %p157 = scmp.lt.s32.totalorder %s9, 5
    %p158 = pnand %p156, %p157
    %p159 = pneg %p158
    // Predicated region
    $region29: #{_lambda_.5} parent=5 // pred_check
      _
    $region30: #{_lambda_.5} parent=5 // pred_check_branch
      %161 = sbr.rel (%p158) target = $region32
    $region31: #{_lambda_.5} parent=5 // pred_region
      %s162 = ssub.s32 %s9, 1
      %p163 = scmp.lt.s32.totalorder %s18, 1
      %s164 = scalar_select %p163, %s18, 1
      %p165 = scmp.lt.s32.totalorder %s19, 1
      %s166 = scalar_select %p165, %s19, 1
      %s167 = smul.addr %s166, 16
      %s168 = smul.addr %s164, 32
      %s169 = sadd.s32 %s167, %s168
      %s170 = smul.addr %s169, 4
      %s171 = scalar_lea.vmem %s0, %s170
      %p172 = pneg %p49
      %p173 = pneg %p46
      %p174 = pneg %p70
      %p175 = pneg %p67
      %p176 = pneg %p91
      %p177 = pneg %p88
      %p178 = pneg %p119
      %p179 = pneg %p116
      %p180 = scmp.lt.s32.totalorder %s18, 1
      %s181 = scalar_select %p180, %s18, 1
      %p182 = scmp.lt.s32.totalorder %s19, 1
      %s183 = scalar_select %p182, %s19, 1
      %s184 = smul.addr %s183, 16
      %s185 = smul.addr %s181, 32
      %s186 = sadd.s32 %s184, %s185
      %s187 = smul.addr %s186, 8
      %s188 = scalar_lea.vmem %s3, %s187
      %p189 = scmp.lt.s32.totalorder %s18, 1
      %s190 = scalar_select %p189, %s18, 1
      %p191 = scmp.lt.s32.totalorder %s19, 1
      %s192 = scalar_select %p191, %s19, 1
      %s193 = smul.addr %s192, 16
      %s194 = smul.addr %s190, 32
      %s195 = sadd.s32 %s193, %s194
      %s196 = smul.addr %s195, 4
      %s197 = scalar_lea.vmem %s0, %s196
      %p198 = scmp.lt.s32.totalorder %s18, 1
      %s199 = scalar_select %p198, %s18, 1
      %p200 = scmp.lt.s32.totalorder %s19, 1
      %s201 = scalar_select %p200, %s19, 1
      %s202 = smul.addr %s201, 16
      %s203 = smul.addr %s199, 32
      %s204 = sadd.s32 %s202, %s203
      %s205 = smul.addr %s204, 8
      %s206 = scalar_lea.vmem %s3, %s205
      %v207 = vld [vmem:[%s197] sm:$0xf]
      %v208 = vld [vmem:[%s197 + $0x4] sm:$0xf]
      %v209 = vld [vmem:[%s197 + $0x8] sm:$0xf]
      %v210 = vld [vmem:[%s197 + $0xc] sm:$0xf]
      %v211 = vld [vmem:[%s197 + $0x10] sm:$0xf]
      %v212 = vld [vmem:[%s197 + $0x14] sm:$0xf]
      %v213 = vld [vmem:[%s197 + $0x18] sm:$0xf]
      %v214 = vld [vmem:[%s197 + $0x1c] sm:$0xf]
      %v215 = vld [vmem:[%s197 + $0x20] sm:$0xf]
      %v216 = vld [vmem:[%s197 + $0x24] sm:$0xf]
      %v217 = vld [vmem:[%s197 + $0x28] sm:$0xf]
      %v218 = vld [vmem:[%s197 + $0x2c] sm:$0xf]
      %v219 = vld [vmem:[%s197 + $0x30] sm:$0xf]
      %v220 = vld [vmem:[%s197 + $0x34] sm:$0xf]
      %v221 = vld [vmem:[%s197 + $0x38] sm:$0xf]
      %v222 = vld [vmem:[%s197 + $0x3c] sm:$0xf]
      %v223 = vunpack.c.l.bf16 %v207
      %v224 = vunpack.c.l.bf16 %v208
      %v225 = vunpack.c.l.bf16 %v209
      %v226 = vunpack.c.l.bf16 %v210
      %v227 = vunpack.c.l.bf16 %v211
      %v228 = vunpack.c.l.bf16 %v212
      %v229 = vunpack.c.l.bf16 %v213
      %v230 = vunpack.c.l.bf16 %v214
      %v231 = vunpack.c.l.bf16 %v215
      %v232 = vunpack.c.l.bf16 %v216
      %v233 = vunpack.c.l.bf16 %v217
      %v234 = vunpack.c.l.bf16 %v218
      %v235 = vunpack.c.l.bf16 %v219
      %v236 = vunpack.c.l.bf16 %v220
      %v237 = vunpack.c.l.bf16 %v221
      %v238 = vunpack.c.l.bf16 %v222
      %v239 = vld [vmem:[%s1] sm:$0x1]
      %v240 = vld [vmem:[%s2] sm:$0x1]
      %v242 = vlaneseq
      %v243 = vshrl.u32 %v242, 7
      %v244 = vsub.s32 0, %v243
      %v245 = vrot.slane %v239, %v244
      %v247 = vmul.f32 %v223, %v245
      %v248 = vmul.f32 %v224, %v245
      %v249 = vmul.f32 %v225, %v245
      %v250 = vmul.f32 %v226, %v245
      %v251 = vmul.f32 %v227, %v245
      %v252 = vmul.f32 %v228, %v245
      %v253 = vmul.f32 %v229, %v245
      %v254 = vmul.f32 %v230, %v245
      %v255 = vmul.f32 %v231, %v245
      %v256 = vmul.f32 %v232, %v245
      %v257 = vmul.f32 %v233, %v245
      %v258 = vmul.f32 %v234, %v245
      %v259 = vmul.f32 %v235, %v245
      %v260 = vmul.f32 %v236, %v245
      %v261 = vmul.f32 %v237, %v245
      %v262 = vmul.f32 %v238, %v245
      %v264 = vlaneseq
      %v265 = vshrl.u32 %v264, 7
      %v266 = vsub.s32 0, %v265
      %v267 = vrot.slane %v240, %v266
      %v269 = vadd.f32 %v247, %v267
      %v270 = vadd.f32 %v248, %v267
      %v271 = vadd.f32 %v249, %v267
      %v272 = vadd.f32 %v250, %v267
      %v273 = vadd.f32 %v251, %v267
      %v274 = vadd.f32 %v252, %v267
      %v275 = vadd.f32 %v253, %v267
      %v276 = vadd.f32 %v254, %v267
      %v277 = vadd.f32 %v255, %v267
      %v278 = vadd.f32 %v256, %v267
      %v279 = vadd.f32 %v257, %v267
      %v280 = vadd.f32 %v258, %v267
      %v281 = vadd.f32 %v259, %v267
      %v282 = vadd.f32 %v260, %v267
      %v283 = vadd.f32 %v261, %v267
      %v284 = vadd.f32 %v262, %v267
      %v285 = vmax.f32 %v269, 0.0
      %v286 = vmax.f32 %v270, 0.0
      %v287 = vmax.f32 %v271, 0.0
      %v288 = vmax.f32 %v272, 0.0
      %v289 = vmax.f32 %v273, 0.0
      %v290 = vmax.f32 %v274, 0.0
      %v291 = vmax.f32 %v275, 0.0
      %v292 = vmax.f32 %v276, 0.0
      %v293 = vmax.f32 %v277, 0.0
      %v294 = vmax.f32 %v278, 0.0
      %v295 = vmax.f32 %v279, 0.0
      %v296 = vmax.f32 %v280, 0.0
      %v297 = vmax.f32 %v281, 0.0
      %v298 = vmax.f32 %v282, 0.0
      %v299 = vmax.f32 %v283, 0.0
      %v300 = vmax.f32 %v284, 0.0
      %301 = vst [vmem:[%s206] sm:$0xff] %v285
      %302 = vst [vmem:[%s206 + $0x8] sm:$0xff] %v286
      %303 = vst [vmem:[%s206 + $0x10] sm:$0xff] %v287
      %304 = vst [vmem:[%s206 + $0x18] sm:$0xff] %v288
      %305 = vst [vmem:[%s206 + $0x20] sm:$0xff] %v289
      %306 = vst [vmem:[%s206 + $0x28] sm:$0xff] %v290
      %307 = vst [vmem:[%s206 + $0x30] sm:$0xff] %v291
      %308 = vst [vmem:[%s206 + $0x38] sm:$0xff] %v292
      %309 = vst [vmem:[%s206 + $0x40] sm:$0xff] %v293
      %310 = vst [vmem:[%s206 + $0x48] sm:$0xff] %v294
      %311 = vst [vmem:[%s206 + $0x50] sm:$0xff] %v295
      %312 = vst [vmem:[%s206 + $0x58] sm:$0xff] %v296
      %313 = vst [vmem:[%s206 + $0x60] sm:$0xff] %v297
      %314 = vst [vmem:[%s206 + $0x68] sm:$0xff] %v298
      %315 = vst [vmem:[%s206 + $0x70] sm:$0xff] %v299
      %316 = vst [vmem:[%s206 + $0x78] sm:$0xff] %v300
      %p317 = scmp.lt.s32.totalorder %s18, 1
      %s318 = scalar_select %p317, %s18, 1
      %p319 = scmp.lt.s32.totalorder %s19, 1
      %s320 = scalar_select %p319, %s19, 1
      %s321 = smul.addr %s320, 16
      %s322 = smul.addr %s318, 32
      %s323 = sadd.s32 %s321, %s322
      %s324 = smul.addr %s323, 8
      %s325 = scalar_lea.vmem %s3, %s324
      // Predicated region
      $region33: #{_lambda_.5} parent=31 // pred_check
        %p326 = pneg %p116
      $region34: #{_lambda_.5} parent=31 // pred_check_branch
        %328 = sbr.rel (%p326) target = $region36
      $region35: #{_lambda_.5} parent=31 // pred_region
        _
      $region36: #{_lambda_.5} parent=31 // pred_fallthru
        _
    $region32: #{_lambda_.5} parent=5 // pred_fallthru
      _
    %p329 = scmp.le.s32.totalorder 2, %s9
    // Predicated region
    $region37: #{_lambda_.5} parent=5 // pred_check
      %p330 = pneg %p329
    $region38: #{_lambda_.5} parent=5 // pred_check_branch
      %332 = sbr.rel (%p330) target = $region40
    $region39: #{_lambda_.5} parent=5 // pred_region
      %s333 = ssub.s32 %s9, 2
      // Predicated region
      $region41: #{_lambda_.5} parent=39 // pred_check
        %p334 = pneg %p122
      $region42: #{_lambda_.5} parent=39 // pred_check_branch
        %336 = sbr.rel (%p334) target = $region44
      $region43: #{_lambda_.5} parent=39 // pred_region
        %p337 = scmp.lt.s32.totalorder %s20, 1
        %s338 = scalar_select %p337, %s20, 1
        %p339 = scmp.lt.s32.totalorder %s21, 1
        %s340 = scalar_select %p339, %s21, 1
        %s341 = smul.addr %s340, 16
        %s342 = smul.addr %s338, 32
        %s343 = sadd.s32 %s341, %s342
        %s344 = smul.addr %s343, 8
        %s345 = scalar_lea.vmem %s3, %s344
      $region44: #{_lambda_.5} parent=39 // pred_fallthru
        _
    $region40: #{_lambda_.5} parent=5 // pred_fallthru
      _
  $region6: #{_lambda_.5} parent=0 // loop_footer
    %s13 = sadd.s32 1, %s9
  $region7: #{_lambda_.5} parent=0 // loop_footer_branch
    %8 = sbr.rel target = $region3
  $region8: #{_lambda_.5} parent=0 // loop_exit
    _

// kernel: _lambda_.4
$region0: #{_lambda_.4}
  #allocation0 [shape = 'u32[]', space=smem, size = 0x4, offset = 0x4, fixed_abs, tag = 'smem constant byte address 0x4 - core index']
  #allocation1 [shape = 'u32[144,128]{1,0:T(1,128)}', space=vmem, size = 0x12000, scoped, tag = 'internal scratch']
  #allocation2 [shape = 'bf16[10,18,128]{2,1,0:T(8,128)(2,1)}', space=vmem, size = 0xf000, scoped, tag = 'scratch operand']
  %s0 = inlined_call_operand.vmem [shape: bf16[2,2,8,16,128], index: 0, kind: input, shape index: {}, may-alias: {0,1,2}]
  %s1 = inlined_call_operand.vmem [shape: bf16[2,2,8,16,128], index: 1, kind: input, shape index: {}, may-alias: {0,1,2}]
  %s2 = inlined_call_operand.vmem [shape: bf16[2,2,8,16,128], index: 2, kind: input, shape index: {}, may-alias: {0,1,2}]
  %s3 = inlined_call_operand.vmem [shape: bf16[9,128,128], index: 3, kind: input, shape index: {}]
  %s4 = inlined_call_operand.vmem [shape: f32[1,128], index: 4, kind: input, shape index: {}]
  %s5 = inlined_call_operand.vmem [shape: f32[1,128], index: 5, kind: input, shape index: {}]
  %s6 = inlined_call_operand.vmem [shape: bf16[2,2,8,16,128], index: 6, kind: output, shape index: {0}]
  %s7 = inlined_call_operand.vmem [shape: f32[2,2,2,128], index: 7, kind: output, shape index: {1}]
  %8 = xla_tuple %s6, %s7
  %s9 = sld [smem:[#allocation0]]
  $region65: #{_lambda_.4} parent=0
    _
  %s11 = ssub.s32 1, %s9
  %s12 = scalar_select 0, %s11, %s9
  loop: start=0, step=1, limit=6
  $region2: #{_lambda_.4} parent=0 // loop_pre_header
    _
  $region3: #{_lambda_.4} parent=0 // loop_header
    %s14 = sphi 0, %s18
    %p15 = scmp.ge.s32.totalorder %s14, 6
    %s21 = sphi 0, %s33
    %s22 = sphi 0, %s29
    %s23 = sphi 0, %s21
    %s24 = sphi 0, %s22
    %s25 = sphi 0, %s23
    %s26 = sphi 0, %s24
    %s38 = sphi 0, %s40
    %s41 = sphi 0, %s38
    %s42 = sphi 0, %s41
    %s58 = sphi 0, %s42
    %s72 = sphi 0, %s74
    %s75 = sphi 0, %s72
    %s76 = sphi 0, %s75
    %s92 = sphi 0, %s76
    %s106 = sphi 0, %s108
    %s109 = sphi 0, %s106
    %s110 = sphi 0, %s109
    %s126 = sphi 0, %s110
    %s130 = sphi 0, %s130
    %s132 = sphi 0, %s130
    %s133 = sphi 0, %s132
    %s147 = sphi 0, %s133
    %s151 = sphi 0, %s151
    %s153 = sphi 0, %s151
    %s154 = sphi 0, %s153
    %s168 = sphi 0, %s154
    %s172 = sphi 0, %s172
    %s174 = sphi 0, %s172
    %s175 = sphi 0, %s174
    %s189 = sphi 0, %s175
    %s197 = sphi 0, %s199
    %s200 = sphi 0, %s197
    %s201 = sphi 0, %s200
    %s217 = sphi 0, %s201
    %s225 = sphi 0, %s227
    %s228 = sphi 0, %s225
    %s229 = sphi 0, %s228
    %s245 = sphi 0, %s229
  $region4: #{_lambda_.4} parent=0 // loop_header_branch
    %17 = sbr.rel (%p15) target = $region8
  $region5: #{_lambda_.4} parent=0 // loop_body
    %s19 = ssub.s32 %s14, 1
    %s20 = ssub.s32 %s14, 2
    %s27 = sadd.s32 1, %s22
    %p28 = scmp.ge.s32.totalorder %s27, 2
    %s29 = scalar_select %p28, 0, %s27
    %s30 = sadd.s32 1, %s21
    %s31 = scalar_select %p28, %s30, %s21
    %p32 = scmp.ge.s32.totalorder %s31, 2
    %s33 = scalar_select %p32, 0, %s31
    %s34 = ssub.s32 %s21, %s33
    %s35 = ssub.s32 %s22, %s29
    %s36 = sor.u32 %s34, %s35
    %p37 = scmp.eq.s32.totalorder %s36, 0
    %s39 = sadd.s32 %s38, 1
    %s40 = scalar_select %p37, %s38, %s39
    %p43 = pneg %p37
    %p44 = scmp.eq.s32.totalorder %s14, 3
    %p45 = por %p43, %p44
    %p46 = scmp.ne.s32.totalorder %s38, %s41
    %p47 = scmp.eq.s32.totalorder %s14, 0
    %p48 = por %p46, %p47
    %p49 = scmp.ne.s32.totalorder %s38, %s41
    %p50 = scmp.eq.s32.totalorder %s19, 3
    %p51 = por %p49, %p50
    %p52 = scmp.ne.s32.totalorder %s41, %s42
    %p53 = scmp.eq.s32.totalorder %s19, 0
    %p54 = por %p52, %p53
    %p55 = scmp.ne.s32.totalorder %s41, %s42
    %p56 = scmp.eq.s32.totalorder %s20, 3
    %p57 = por %p55, %p56
    %p59 = scmp.ne.s32.totalorder %s42, %s58
    %p60 = scmp.eq.s32.totalorder %s20, 0
    %p61 = por %p59, %p60
    %s62 = ssub.s32 %s22, 1
    %p63 = scmp.gt.s32.totalorder %s62, 0
    %s64 = scalar_select %p63, %s62, 0
    %s65 = ssub.s32 %s29, 1
    %p66 = scmp.gt.s32.totalorder %s65, 0
    %s67 = scalar_select %p66, %s65, 0
    %s68 = ssub.s32 %s21, %s33
    %s69 = ssub.s32 %s64, %s67
    %s70 = sor.u32 %s68, %s69
    %p71 = scmp.eq.s32.totalorder %s70, 0
    %s73 = sadd.s32 %s72, 1
    %s74 = scalar_select %p71, %s72, %s73
    %p77 = pneg %p71
    %p78 = scmp.eq.s32.totalorder %s14, 3
    %p79 = por %p77, %p78
    %p80 = scmp.ne.s32.totalorder %s72, %s75
    %p81 = scmp.eq.s32.totalorder %s14, 0
    %p82 = por %p80, %p81
    %p83 = scmp.ne.s32.totalorder %s72, %s75
    %p84 = scmp.eq.s32.totalorder %s19, 3
    %p85 = por %p83, %p84
    %p86 = scmp.ne.s32.totalorder %s75, %s76
    %p87 = scmp.eq.s32.totalorder %s19, 0
    %p88 = por %p86, %p87
    %p89 = scmp.ne.s32.totalorder %s75, %s76
    %p90 = scmp.eq.s32.totalorder %s20, 3
    %p91 = por %p89, %p90
    %p93 = scmp.ne.s32.totalorder %s76, %s92
    %p94 = scmp.eq.s32.totalorder %s20, 0
    %p95 = por %p93, %p94
    %s96 = sadd.s32 %s22, 1
    %p97 = scmp.lt.s32.totalorder %s96, 1
    %s98 = scalar_select %p97, %s96, 1
    %s99 = sadd.s32 %s29, 1
    %p100 = scmp.lt.s32.totalorder %s99, 1
    %s101 = scalar_select %p100, %s99, 1
    %s102 = ssub.s32 %s21, %s33
    %s103 = ssub.s32 %s98, %s101
    %s104 = sor.u32 %s102, %s103
    %p105 = scmp.eq.s32.totalorder %s104, 0
    %s107 = sadd.s32 %s106, 1
    %s108 = scalar_select %p105, %s106, %s107
    %p111 = pneg %p105
    %p112 = scmp.eq.s32.totalorder %s14, 3
    %p113 = por %p111, %p112
    %p114 = scmp.ne.s32.totalorder %s106, %s109
    %p115 = scmp.eq.s32.totalorder %s14, 0
    %p116 = por %p114, %p115
    %p117 = scmp.ne.s32.totalorder %s106, %s109
    %p118 = scmp.eq.s32.totalorder %s19, 3
    %p119 = por %p117, %p118
    %p120 = scmp.ne.s32.totalorder %s109, %s110
    %p121 = scmp.eq.s32.totalorder %s19, 0
    %p122 = por %p120, %p121
    %p123 = scmp.ne.s32.totalorder %s109, %s110
    %p124 = scmp.eq.s32.totalorder %s20, 3
    %p125 = por %p123, %p124
    %p127 = scmp.ne.s32.totalorder %s110, %s126
    %p128 = scmp.eq.s32.totalorder %s20, 0
    %p129 = por %p127, %p128
    %s131 = sadd.s32 %s130, 1
    %p134 = scmp.eq.s32.totalorder %s14, 3
    %p135 = scmp.ne.s32.totalorder %s130, %s132
    %p136 = scmp.eq.s32.totalorder %s14, 0
    %p137 = por %p135, %p136
    %p138 = scmp.ne.s32.totalorder %s130, %s132
    %p139 = scmp.eq.s32.totalorder %s19, 3
    %p140 = por %p138, %p139
    %p141 = scmp.ne.s32.totalorder %s132, %s133
    %p142 = scmp.eq.s32.totalorder %s19, 0
    %p143 = por %p141, %p142
    %p144 = scmp.ne.s32.totalorder %s132, %s133
    %p145 = scmp.eq.s32.totalorder %s20, 3
    %p146 = por %p144, %p145
    %p148 = scmp.ne.s32.totalorder %s133, %s147
    %p149 = scmp.eq.s32.totalorder %s20, 0
    %p150 = por %p148, %p149
    %s152 = sadd.s32 %s151, 1
    %p155 = scmp.eq.s32.totalorder %s14, 3
    %p156 = scmp.ne.s32.totalorder %s151, %s153
    %p157 = scmp.eq.s32.totalorder %s14, 0
    %p158 = por %p156, %p157
    %p159 = scmp.ne.s32.totalorder %s151, %s153
    %p160 = scmp.eq.s32.totalorder %s19, 3
    %p161 = por %p159, %p160
    %p162 = scmp.ne.s32.totalorder %s153, %s154
    %p163 = scmp.eq.s32.totalorder %s19, 0
    %p164 = por %p162, %p163
    %p165 = scmp.ne.s32.totalorder %s153, %s154
    %p166 = scmp.eq.s32.totalorder %s20, 3
    %p167 = por %p165, %p166
    %p169 = scmp.ne.s32.totalorder %s154, %s168
    %p170 = scmp.eq.s32.totalorder %s20, 0
    %p171 = por %p169, %p170
    %s173 = sadd.s32 %s172, 1
    %p176 = scmp.eq.s32.totalorder %s14, 3
    %p177 = scmp.ne.s32.totalorder %s172, %s174
    %p178 = scmp.eq.s32.totalorder %s14, 0
    %p179 = por %p177, %p178
    %p180 = scmp.ne.s32.totalorder %s172, %s174
    %p181 = scmp.eq.s32.totalorder %s19, 3
    %p182 = por %p180, %p181
    %p183 = scmp.ne.s32.totalorder %s174, %s175
    %p184 = scmp.eq.s32.totalorder %s19, 0
    %p185 = por %p183, %p184
    %p186 = scmp.ne.s32.totalorder %s174, %s175
    %p187 = scmp.eq.s32.totalorder %s20, 3
    %p188 = por %p186, %p187
    %p190 = scmp.ne.s32.totalorder %s175, %s189
    %p191 = scmp.eq.s32.totalorder %s20, 0
    %p192 = por %p190, %p191
    %s193 = ssub.s32 %s21, %s33
    %s194 = ssub.s32 %s22, %s29
    %s195 = sor.u32 %s193, %s194
    %p196 = scmp.eq.s32.totalorder %s195, 0
    %s198 = sadd.s32 %s197, 1
    %s199 = scalar_select %p196, %s197, %s198
    %p202 = pneg %p196
    %p203 = scmp.eq.s32.totalorder %s14, 3
    %p204 = por %p202, %p203
    %p205 = scmp.ne.s32.totalorder %s197, %s200
    %p206 = scmp.eq.s32.totalorder %s14, 0
    %p207 = por %p205, %p206
    %p208 = scmp.ne.s32.totalorder %s197, %s200
    %p209 = scmp.eq.s32.totalorder %s19, 3
    %p210 = por %p208, %p209
    %p211 = scmp.ne.s32.totalorder %s200, %s201
    %p212 = scmp.eq.s32.totalorder %s19, 0
    %p213 = por %p211, %p212
    %p214 = scmp.ne.s32.totalorder %s200, %s201
    %p215 = scmp.eq.s32.totalorder %s20, 3
    %p216 = por %p214, %p215
    %p218 = scmp.ne.s32.totalorder %s201, %s217
    %p219 = scmp.eq.s32.totalorder %s20, 0
    %p220 = por %p218, %p219
    %s221 = ssub.s32 %s21, %s33
    %s222 = ssub.s32 %s22, %s29
    %s223 = sor.u32 %s221, %s222
    %p224 = scmp.eq.s32.totalorder %s223, 0
    %s226 = sadd.s32 %s225, 1
    %s227 = scalar_select %p224, %s225, %s226
    %p230 = pneg %p224
    %p231 = scmp.eq.s32.totalorder %s14, 3
    %p232 = por %p230, %p231
    %p233 = scmp.ne.s32.totalorder %s225, %s228
    %p234 = scmp.eq.s32.totalorder %s14, 0
    %p235 = por %p233, %p234
    %p236 = scmp.ne.s32.totalorder %s225, %s228
    %p237 = scmp.eq.s32.totalorder %s19, 3
    %p238 = por %p236, %p237
    %p239 = scmp.ne.s32.totalorder %s228, %s229
    %p240 = scmp.eq.s32.totalorder %s19, 0
    %p241 = por %p239, %p240
    %p242 = scmp.ne.s32.totalorder %s228, %s229
    %p243 = scmp.eq.s32.totalorder %s20, 3
    %p244 = por %p242, %p243
    %p246 = scmp.ne.s32.totalorder %s229, %s245
    %p247 = scmp.eq.s32.totalorder %s20, 0
    %p248 = por %p246, %p247
    %p249 = scmp.le.s32.totalorder 1, %s14
    %p250 = scmp.lt.s32.totalorder %s14, 5
    %p251 = pnand %p249, %p250
    %p252 = pneg %p251
    // Predicated region
    $region9: #{_lambda_.4} parent=5 // pred_check
      _
    $region10: #{_lambda_.4} parent=5 // pred_check_branch
      %254 = sbr.rel (%p251) target = $region12
    $region11: #{_lambda_.4} parent=5 // pred_region
      %s255 = ssub.s32 %s14, 1
      // Predicated region
      $region13: #{_lambda_.4} parent=11 // pred_check
        %p256 = pneg %p143
      $region14: #{_lambda_.4} parent=11 // pred_check_branch
        %258 = sbr.rel (%p256) target = $region16
      $region15: #{_lambda_.4} parent=11 // pred_region
        _
      $region16: #{_lambda_.4} parent=11 // pred_fallthru
        _
      // Predicated region
      $region17: #{_lambda_.4} parent=11 // pred_check
        %p259 = pneg %p164
      $region18: #{_lambda_.4} parent=11 // pred_check_branch
        %261 = sbr.rel (%p259) target = $region20
      $region19: #{_lambda_.4} parent=11 // pred_region
        _
      $region20: #{_lambda_.4} parent=11 // pred_fallthru
        _
      // Predicated region
      $region21: #{_lambda_.4} parent=11 // pred_check
        %p262 = pneg %p185
      $region22: #{_lambda_.4} parent=11 // pred_check_branch
        %264 = sbr.rel (%p262) target = $region24
      $region23: #{_lambda_.4} parent=11 // pred_region
        _
      $region24: #{_lambda_.4} parent=11 // pred_fallthru
        _
    $region12: #{_lambda_.4} parent=5 // pred_fallthru
      _
    %p265 = scmp.lt.s32.totalorder %s14, 4
    // Predicated region
    $region25: #{_lambda_.4} parent=5 // pred_check
      %p266 = pneg %p265
    $region26: #{_lambda_.4} parent=5 // pred_check_branch
      %268 = sbr.rel (%p266) target = $region28
    $region27: #{_lambda_.4} parent=5 // pred_region
      // Predicated region
      $region29: #{_lambda_.4} parent=27 // pred_check
        %p269 = pneg %p48
      $region30: #{_lambda_.4} parent=27 // pred_check_branch
        %271 = sbr.rel (%p269) target = $region32
      $region31: #{_lambda_.4} parent=27 // pred_region
        %p272 = scmp.lt.s32.totalorder %s21, 1
        %s273 = scalar_select %p272, %s21, 1
        %p274 = scmp.lt.s32.totalorder %s22, 1
        %s275 = scalar_select %p274, %s22, 1
        %s276 = smul.addr %s275, 16
        %s277 = smul.addr %s273, 32
        %s278 = sadd.s32 %s276, %s277
        %s279 = smul.addr %s278, 4
        %s280 = scalar_lea.vmem %s0, %s279
      $region32: #{_lambda_.4} parent=27 // pred_fallthru
        _
      // Predicated region
      $region33: #{_lambda_.4} parent=27 // pred_check
        %p281 = pneg %p82
      $region34: #{_lambda_.4} parent=27 // pred_check_branch
        %283 = sbr.rel (%p281) target = $region36
      $region35: #{_lambda_.4} parent=27 // pred_region
        %s284 = ssub.s32 %s22, 1
        %p285 = scmp.gt.s32.totalorder %s284, 0
        %s286 = scalar_select %p285, %s284, 0
        %p287 = scmp.lt.s32.totalorder %s21, 1
        %s288 = scalar_select %p287, %s21, 1
        %p289 = scmp.lt.s32.totalorder %s286, 1
        %s290 = scalar_select %p289, %s286, 1
        %s291 = smul.addr %s290, 16
        %s292 = sadd.s32 14, %s291
        %s293 = smul.addr %s288, 32
        %s294 = sadd.s32 %s292, %s293
        %s295 = smul.addr %s294, 4
        %s296 = scalar_lea.vmem %s1, %s295
        %s297 = ssub.s32 %s22, 1
        %p298 = scmp.gt.s32.totalorder %s297, 0
        %s299 = scalar_select %p298, %s297, 0
      $region36: #{_lambda_.4} parent=27 // pred_fallthru
        _
      // Predicated region
      $region37: #{_lambda_.4} parent=27 // pred_check
        %p300 = pneg %p116
      $region38: #{_lambda_.4} parent=27 // pred_check_branch
        %302 = sbr.rel (%p300) target = $region40
      $region39: #{_lambda_.4} parent=27 // pred_region
        %s303 = sadd.s32 %s22, 1
        %p304 = scmp.lt.s32.totalorder %s303, 1
        %s305 = scalar_select %p304, %s303, 1
        %p306 = scmp.lt.s32.totalorder %s21, 1
        %s307 = scalar_select %p306, %s21, 1
        %p308 = scmp.lt.s32.totalorder %s305, 1
        %s309 = scalar_select %p308, %s305, 1
        %s310 = smul.addr %s309, 16
        %s311 = smul.addr %s307, 32
        %s312 = sadd.s32 %s310, %s311
        %s313 = smul.addr %s312, 4
        %s314 = scalar_lea.vmem %s2, %s313
        %s315 = sadd.s32 %s22, 1
        %p316 = scmp.lt.s32.totalorder %s315, 1
        %s317 = scalar_select %p316, %s315, 1
      $region40: #{_lambda_.4} parent=27 // pred_fallthru
        _
    $region28: #{_lambda_.4} parent=5 // pred_fallthru
      _
    %p318 = scmp.le.s32.totalorder 1, %s14
    %p319 = scmp.lt.s32.totalorder %s14, 5
    %p320 = pnand %p318, %p319
    %p321 = pneg %p320
    // Predicated region
    $region41: #{_lambda_.4} parent=5 // pred_check
      _
    $region42: #{_lambda_.4} parent=5 // pred_check_branch
      %323 = sbr.rel (%p320) target = $region44
    $region43: #{_lambda_.4} parent=5 // pred_region
      %s324 = ssub.s32 %s14, 1
      %p325 = scmp.lt.s32.totalorder %s23, 1
      %s326 = scalar_select %p325, %s23, 1
      %p327 = scmp.lt.s32.totalorder %s24, 1
      %s328 = scalar_select %p327, %s24, 1
      %s329 = smul.addr %s328, 16
      %s330 = smul.addr %s326, 32
      %s331 = sadd.s32 %s329, %s330
      %s332 = smul.addr %s331, 4
      %s333 = scalar_lea.vmem %s0, %s332
      %p334 = pneg %p54
      %p335 = pneg %p51
      %s336 = ssub.s32 %s24, 1
      %p337 = scmp.gt.s32.totalorder %s336, 0
      %s338 = scalar_select %p337, %s336, 0
      %p339 = scmp.lt.s32.totalorder %s23, 1
      %s340 = scalar_select %p339, %s23, 1
      %p341 = scmp.lt.s32.totalorder %s338, 1
      %s342 = scalar_select %p341, %s338, 1
      %s343 = smul.addr %s342, 16
      %s344 = sadd.s32 14, %s343
      %s345 = smul.addr %s340, 32
      %s346 = sadd.s32 %s344, %s345
      %s347 = smul.addr %s346, 4
      %s348 = scalar_lea.vmem %s1, %s347
      %p349 = pneg %p88
      %p350 = pneg %p85
      %s351 = sadd.s32 %s24, 1
      %p352 = scmp.lt.s32.totalorder %s351, 1
      %s353 = scalar_select %p352, %s351, 1
      %p354 = scmp.lt.s32.totalorder %s23, 1
      %s355 = scalar_select %p354, %s23, 1
      %p356 = scmp.lt.s32.totalorder %s353, 1
      %s357 = scalar_select %p356, %s353, 1
      %s358 = smul.addr %s357, 16
      %s359 = smul.addr %s355, 32
      %s360 = sadd.s32 %s358, %s359
      %s361 = smul.addr %s360, 4
      %s362 = scalar_lea.vmem %s2, %s361
      %p363 = pneg %p122
      %p364 = pneg %p119
      %p365 = pneg %p143
      %p366 = pneg %p140
      %p367 = pneg %p164
      %p368 = pneg %p161
      %p369 = pneg %p185
      %p370 = pneg %p182
      %p371 = pneg %p213
      %p372 = pneg %p210
      %p373 = scmp.lt.s32.totalorder %s23, 1
      %s374 = scalar_select %p373, %s23, 1
      %p375 = scmp.lt.s32.totalorder %s24, 1
      %s376 = scalar_select %p375, %s24, 1
      %s377 = smul.addr %s376, 16
      %s378 = smul.addr %s374, 32
      %s379 = sadd.s32 %s377, %s378
      %s380 = smul.addr %s379, 4
      %s381 = scalar_lea.vmem %s6, %s380
      %p382 = pneg %p241
      %p383 = pneg %p238
      %p384 = scmp.lt.s32.totalorder %s23, 1
      %s385 = scalar_select %p384, %s23, 1
      %p386 = scmp.lt.s32.totalorder %s24, 1
      %s387 = scalar_select %p386, %s24, 1
      %s388 = smul.addr %s385, 2
      %s389 = sadd.s32 %s387, %s388
      %s390 = smul.addr %s389, 2
      %s391 = scalar_lea.vmem %s7, %s390
      %p392 = scmp.lt.s32.totalorder %s23, 1
      %s393 = scalar_select %p392, %s23, 1
      %p394 = scmp.lt.s32.totalorder %s24, 1
      %s395 = scalar_select %p394, %s24, 1
      %s396 = smul.addr %s395, 16
      %s397 = smul.addr %s393, 32
      %s398 = sadd.s32 %s396, %s397
      %s399 = smul.addr %s398, 4
      %s400 = scalar_lea.vmem %s0, %s399
      %s401 = ssub.s32 %s24, 1
      %p402 = scmp.gt.s32.totalorder %s401, 0
      %s403 = scalar_select %p402, %s401, 0
      %p404 = scmp.lt.s32.totalorder %s23, 1
      %s405 = scalar_select %p404, %s23, 1
      %p406 = scmp.lt.s32.totalorder %s403, 1
      %s407 = scalar_select %p406, %s403, 1
      %s408 = smul.addr %s407, 16
      %s409 = sadd.s32 14, %s408
      %s410 = smul.addr %s405, 32
      %s411 = sadd.s32 %s409, %s410
      %s412 = smul.addr %s411, 4
      %s413 = scalar_lea.vmem %s1, %s412
      %s414 = ssub.s32 %s24, 1
      %p415 = scmp.gt.s32.totalorder %s414, 0
      %s416 = scalar_select %p415, %s414, 0
      %s417 = sadd.s32 %s24, 1
      %p418 = scmp.lt.s32.totalorder %s417, 1
      %s419 = scalar_select %p418, %s417, 1
      %p420 = scmp.lt.s32.totalorder %s23, 1
      %s421 = scalar_select %p420, %s23, 1
      %p422 = scmp.lt.s32.totalorder %s419, 1
      %s423 = scalar_select %p422, %s419, 1
      %s424 = smul.addr %s423, 16
      %s425 = smul.addr %s421, 32
      %s426 = sadd.s32 %s424, %s425
      %s427 = smul.addr %s426, 4
      %s428 = scalar_lea.vmem %s2, %s427
      %s429 = sadd.s32 %s24, 1
      %p430 = scmp.lt.s32.totalorder %s429, 1
      %s431 = scalar_select %p430, %s429, 1
      %p432 = scmp.lt.s32.totalorder %s23, 1
      %s433 = scalar_select %p432, %s23, 1
      %p434 = scmp.lt.s32.totalorder %s24, 1
      %s435 = scalar_select %p434, %s24, 1
      %s436 = smul.addr %s435, 16
      %s437 = smul.addr %s433, 32
      %s438 = sadd.s32 %s436, %s437
      %s439 = smul.addr %s438, 4
      %s440 = scalar_lea.vmem %s6, %s439
      %p441 = scmp.lt.s32.totalorder %s23, 1
      %s442 = scalar_select %p441, %s23, 1
      %p443 = scmp.lt.s32.totalorder %s24, 1
      %s444 = scalar_select %p443, %s24, 1
      %s445 = smul.addr %s442, 2
      %s446 = sadd.s32 %s444, %s445
      %s447 = smul.addr %s446, 2
      %s448 = scalar_lea.vmem %s7, %s447
      %p450 = scmp.eq.s32.totalorder %s24, 0
      %p451 = scmp.eq.s32.totalorder %s24, 1
      %452 = vst [vmem:[#allocation2] sm:$0xf] 0
      %453 = vst [vmem:[#allocation2 + $0x4] sm:$0xf] 0
      %454 = vst [vmem:[#allocation2 + $0x8] sm:$0x1] 0
      %455 = vst [vmem:[#allocation2 + $0xc] sm:$0xf] 0
      %456 = vst [vmem:[#allocation2 + $0x10] sm:$0xf] 0
      %457 = vst [vmem:[#allocation2 + $0x14] sm:$0x1] 0
      %458 = vst [vmem:[#allocation2 + $0x18] sm:$0xf] 0
      %459 = vst [vmem:[#allocation2 + $0x1c] sm:$0xf] 0
      %460 = vst [vmem:[#allocation2 + $0x20] sm:$0x1] 0
      %461 = vst [vmem:[#allocation2 + $0x24] sm:$0xf] 0
      %462 = vst [vmem:[#allocation2 + $0x28] sm:$0xf] 0
      %463 = vst [vmem:[#allocation2 + $0x2c] sm:$0x1] 0
      %464 = vst [vmem:[#allocation2 + $0x30] sm:$0xf] 0
      %465 = vst [vmem:[#allocation2 + $0x34] sm:$0xf] 0
      %466 = vst [vmem:[#allocation2 + $0x38] sm:$0x1] 0
      %467 = vst [vmem:[#allocation2 + $0x3c] sm:$0xf] 0
      %468 = vst [vmem:[#allocation2 + $0x40] sm:$0xf] 0
      %469 = vst [vmem:[#allocation2 + $0x44] sm:$0x1] 0
      %470 = vst [vmem:[#allocation2 + $0x48] sm:$0xf] 0
      %471 = vst [vmem:[#allocation2 + $0x4c] sm:$0xf] 0
      %472 = vst [vmem:[#allocation2 + $0x50] sm:$0x1] 0
      %473 = vst [vmem:[#allocation2 + $0x54] sm:$0xf] 0
      %474 = vst [vmem:[#allocation2 + $0x58] sm:$0xf] 0
      %475 = vst [vmem:[#allocation2 + $0x5c] sm:$0x1] 0
      %476 = vst [vmem:[#allocation2 + $0x60] sm:$0xf] 0
      %477 = vst [vmem:[#allocation2 + $0x64] sm:$0xf] 0
      %478 = vst [vmem:[#allocation2 + $0x68] sm:$0x1] 0
      %479 = vst [vmem:[#allocation2 + $0x6c] sm:$0xf] 0
      %480 = vst [vmem:[#allocation2 + $0x70] sm:$0xf] 0
      %481 = vst [vmem:[#allocation2 + $0x74] sm:$0x1] 0
      %v482 = vld [vmem:[%s4] sm:$0x1]
      %v483 = vld [vmem:[%s5] sm:$0x1]
      %v484 = vld [vmem:[%s400] sm:$0xf]
      %v485 = vld [vmem:[%s400 + $0x4] sm:$0xf]
      %v486 = vld [vmem:[%s400 + $0x8] sm:$0xf]
      %v487 = vld [vmem:[%s400 + $0xc] sm:$0xf]
      %v488 = vld [vmem:[%s400 + $0x10] sm:$0xf]
      %v489 = vld [vmem:[%s400 + $0x14] sm:$0xf]
      %v490 = vld [vmem:[%s400 + $0x18] sm:$0xf]
      %v491 = vld [vmem:[%s400 + $0x1c] sm:$0xf]
      %v492 = vld [vmem:[%s400 + $0x20] sm:$0xf]
      %v493 = vld [vmem:[%s400 + $0x24] sm:$0xf]
      %v494 = vld [vmem:[%s400 + $0x28] sm:$0xf]
      %v495 = vld [vmem:[%s400 + $0x2c] sm:$0xf]
      %v496 = vld [vmem:[%s400 + $0x30] sm:$0xf]
      %v497 = vld [vmem:[%s400 + $0x34] sm:$0xf]
      %v498 = vld [vmem:[%s400 + $0x38] sm:$0xf]
      %v499 = vld [vmem:[%s400 + $0x3c] sm:$0xf]
      %v500 = vunpack.c.l.bf16 %v484
      %v501 = vunpack.c.l.bf16 %v485
      %v502 = vunpack.c.l.bf16 %v486
      %v503 = vunpack.c.l.bf16 %v487
      %v504 = vunpack.c.l.bf16 %v488
      %v505 = vunpack.c.l.bf16 %v489
      %v506 = vunpack.c.l.bf16 %v490
      %v507 = vunpack.c.l.bf16 %v491
      %v508 = vunpack.c.l.bf16 %v492
      %v509 = vunpack.c.l.bf16 %v493
      %v510 = vunpack.c.l.bf16 %v494
      %v511 = vunpack.c.l.bf16 %v495
      %v512 = vunpack.c.l.bf16 %v496
      %v513 = vunpack.c.l.bf16 %v497
      %v514 = vunpack.c.l.bf16 %v498
      %v515 = vunpack.c.l.bf16 %v499
      %v516 = vld [vmem:[%s413] sm:$0xf]
      %v517 = vld [vmem:[%s413 + $0x4] sm:$0xf]
      %v518 = vunpack.c.l.bf16 %v516
      %v519 = vunpack.c.l.bf16 %v517
      %v520 = vld [vmem:[%s428] sm:$0xf]
      %v521 = vld [vmem:[%s428 + $0x4] sm:$0xf]
      %v522 = vunpack.c.l.bf16 %v520
      %v523 = vunpack.c.l.bf16 %v521
      %v525 = vlaneseq
      %v526 = vshrl.u32 %v525, 7
      %v527 = vsub.s32 0, %v526
      %v528 = vrot.slane %v482, %v527
      %v530 = vmul.f32 %v500, %v528
      %v531 = vmul.f32 %v501, %v528
      %v532 = vmul.f32 %v502, %v528
      %v533 = vmul.f32 %v503, %v528
      %v534 = vmul.f32 %v504, %v528
      %v535 = vmul.f32 %v505, %v528
      %v536 = vmul.f32 %v506, %v528
      %v537 = vmul.f32 %v507, %v528
      %v538 = vmul.f32 %v508, %v528
      %v539 = vmul.f32 %v509, %v528
      %v540 = vmul.f32 %v510, %v528
      %v541 = vmul.f32 %v511, %v528
      %v542 = vmul.f32 %v512, %v528
      %v543 = vmul.f32 %v513, %v528
      %v544 = vmul.f32 %v514, %v528
      %v545 = vmul.f32 %v515, %v528
      %v547 = vlaneseq
      %v548 = vshrl.u32 %v547, 7
      %v549 = vsub.s32 0, %v548
      %v550 = vrot.slane %v483, %v549
      %v552 = vadd.f32 %v530, %v550
      %v553 = vadd.f32 %v531, %v550
      %v554 = vadd.f32 %v532, %v550
      %v555 = vadd.f32 %v533, %v550
      %v556 = vadd.f32 %v534, %v550
      %v557 = vadd.f32 %v535, %v550
      %v558 = vadd.f32 %v536, %v550
      %v559 = vadd.f32 %v537, %v550
      %v560 = vadd.f32 %v538, %v550
      %v561 = vadd.f32 %v539, %v550
      %v562 = vadd.f32 %v540, %v550
      %v563 = vadd.f32 %v541, %v550
      %v564 = vadd.f32 %v542, %v550
      %v565 = vadd.f32 %v543, %v550
      %v566 = vadd.f32 %v544, %v550
      %v567 = vadd.f32 %v545, %v550
      %v568 = vmax.f32 %v552, 0.0
      %v569 = vmax.f32 %v553, 0.0
      %v570 = vmax.f32 %v554, 0.0
      %v571 = vmax.f32 %v555, 0.0
      %v572 = vmax.f32 %v556, 0.0
      %v573 = vmax.f32 %v557, 0.0
      %v574 = vmax.f32 %v558, 0.0
      %v575 = vmax.f32 %v559, 0.0
      %v576 = vmax.f32 %v560, 0.0
      %v577 = vmax.f32 %v561, 0.0
      %v578 = vmax.f32 %v562, 0.0
      %v579 = vmax.f32 %v563, 0.0
      %v580 = vmax.f32 %v564, 0.0
      %v581 = vmax.f32 %v565, 0.0
      %v582 = vmax.f32 %v566, 0.0
      %v583 = vmax.f32 %v567, 0.0
      %v584 = vmul.f32 %v518, %v528
      %v585 = vmul.f32 %v519, %v528
      %v586 = vadd.f32 %v584, %v550
      %v587 = vadd.f32 %v585, %v550
      %v588 = vmax.f32 %v586, 0.0
      %v589 = vmax.f32 %v587, 0.0
      %v590 = vmul.f32 %v522, %v528
      %v591 = vmul.f32 %v523, %v528
      %v592 = vadd.f32 %v590, %v550
      %v593 = vadd.f32 %v591, %v550
      %v594 = vmax.f32 %v592, 0.0
      %v595 = vmax.f32 %v593, 0.0
      %s596 = scalar_select %p450, 1, 0
      %v597 = vstv %s596
      %vm598 = vcmp.eq.s32.totalorder %v597, 1
      %v599 = vsel %vm598, 0.0, %v588
      %v600 = vsel %vm598, 0.0, %v589
      %s601 = scalar_select %p451, 1, 0
      %v602 = vstv %s601
      %vm603 = vcmp.eq.s32.totalorder %v602, 1
      %v604 = vsel %vm603, 0.0, %v594
      %v605 = vsel %vm603, 0.0, %v595
      %v606 = vpack.c.bf16 %v569, %v568
      %v607 = vpack.c.bf16 %v571, %v570
      %v608 = vpack.c.bf16 %v573, %v572
      %v609 = vpack.c.bf16 %v575, %v574
      %v610 = vpack.c.bf16 %v577, %v576
      %v611 = vpack.c.bf16 %v579, %v578
      %v612 = vpack.c.bf16 %v581, %v580
      %v613 = vpack.c.bf16 %v583, %v582
      %v622 = vunpack.c.l.b16 %v606
      %v623 = vunpack.c.h.b16 %v606
      %v624 = vunpack.c.l.b16 %v607
      %v625 = vunpack.c.h.b16 %v607
      %v626 = vunpack.c.l.b16 %v608
      %v627 = vunpack.c.h.b16 %v608
      %v628 = vunpack.c.l.b16 %v609
      %v629 = vunpack.c.h.b16 %v609
      %v630 = vunpack.c.l.b16 %v610
      %v631 = vunpack.c.h.b16 %v610
      %v632 = vunpack.c.l.b16 %v611
      %v633 = vunpack.c.h.b16 %v611
      %v634 = vunpack.c.l.b16 %v612
      %v635 = vunpack.c.h.b16 %v612
      %v636 = vunpack.c.l.b16 %v613
      %v637 = vunpack.c.h.b16 %v613
      %v638 = vpack.c.b16 %v622, %v622
      %v639 = vpack.c.b16 %v623, %v623
      %v640 = vpack.c.b16 %v624, %v624
      %v641 = vpack.c.b16 %v625, %v625
      %v642 = vpack.c.b16 %v626, %v626
      %v643 = vpack.c.b16 %v627, %v627
      %v644 = vpack.c.b16 %v628, %v628
      %v645 = vpack.c.b16 %v629, %v629
      %v646 = vpack.c.b16 %v630, %v630
      %v647 = vpack.c.b16 %v631, %v631
      %v648 = vpack.c.b16 %v632, %v632
      %v649 = vpack.c.b16 %v633, %v633
      %v650 = vpack.c.b16 %v634, %v634
      %v651 = vpack.c.b16 %v635, %v635
      %v652 = vpack.c.b16 %v636, %v636
      %v653 = vpack.c.b16 %v637, %v637
      %vm654 = vsmask.f32 256
      %vm655 = vsmask.f32 4368
      %vm656 = vmor %vm654, %vm655
      %v658 = vshrl.u32 %v638, 16
      %v660 = vrot.slane %v658, 7
      %v661 = vshll.u32 %v638, 16
      %v663 = vor.u32 %v660, %v661
      %v664 = vrot.slane %v660, 4
      %v666 = vshrl.u32 %v639, 16
      %v668 = vrot.slane %v666, 7
      %v669 = vshll.u32 %v639, 16
      %v671 = vor.u32 %v668, %v669
      %v672 = vsel %vm656, %v664, %v671
      %v673 = vrot.slane %v668, 4
      %v675 = vshrl.u32 %v640, 16
      %v677 = vrot.slane %v675, 7
      %v678 = vshll.u32 %v640, 16
      %v680 = vor.u32 %v677, %v678
      %v681 = vrot.slane %v677, 4
      %v683 = vshrl.u32 %v641, 16
      %v685 = vrot.slane %v683, 7
      %v686 = vshll.u32 %v641, 16
      %v688 = vor.u32 %v685, %v686
      %v689 = vsel %vm656, %v681, %v688
      %v690 = vrot.slane %v685, 4
      %v692 = vshrl.u32 %v642, 16
      %v694 = vrot.slane %v692, 7
      %v695 = vshll.u32 %v642, 16
      %v697 = vor.u32 %v694, %v695
      %v698 = vrot.slane %v694, 4
      %v700 = vshrl.u32 %v643, 16
      %v702 = vrot.slane %v700, 7
      %v703 = vshll.u32 %v643, 16
      %v705 = vor.u32 %v702, %v703
      %v706 = vsel %vm656, %v698, %v705
      %v707 = vrot.slane %v702, 4
      %v709 = vshrl.u32 %v644, 16
      %v711 = vrot.slane %v709, 7
      %v712 = vshll.u32 %v644, 16
      %v714 = vor.u32 %v711, %v712
      %v715 = vrot.slane %v711, 4
      %v717 = vshrl.u32 %v645, 16
      %v719 = vrot.slane %v717, 7
      %v720 = vshll.u32 %v645, 16
      %v722 = vor.u32 %v719, %v720
      %v723 = vsel %vm656, %v715, %v722
      %v724 = vrot.slane %v719, 4
      %v726 = vshrl.u32 %v646, 16
      %v728 = vrot.slane %v726, 7
      %v729 = vshll.u32 %v646, 16
      %v731 = vor.u32 %v728, %v729
      %v732 = vrot.slane %v728, 4
      %v734 = vshrl.u32 %v647, 16
      %v736 = vrot.slane %v734, 7
      %v737 = vshll.u32 %v647, 16
      %v739 = vor.u32 %v736, %v737
      %v740 = vsel %vm656, %v732, %v739
      %v741 = vrot.slane %v736, 4
      %v743 = vshrl.u32 %v648, 16
      %v745 = vrot.slane %v743, 7
      %v746 = vshll.u32 %v648, 16
      %v748 = vor.u32 %v745, %v746
      %v749 = vrot.slane %v745, 4
      %v751 = vshrl.u32 %v649, 16
      %v753 = vrot.slane %v751, 7
      %v754 = vshll.u32 %v649, 16
      %v756 = vor.u32 %v753, %v754
      %v757 = vsel %vm656, %v749, %v756
      %v758 = vrot.slane %v753, 4
      %v760 = vshrl.u32 %v650, 16
      %v762 = vrot.slane %v760, 7
      %v763 = vshll.u32 %v650, 16
      %v765 = vor.u32 %v762, %v763
      %v766 = vrot.slane %v762, 4
      %v768 = vshrl.u32 %v651, 16
      %v770 = vrot.slane %v768, 7
      %v771 = vshll.u32 %v651, 16
      %v773 = vor.u32 %v770, %v771
      %v774 = vsel %vm656, %v766, %v773
      %v775 = vrot.slane %v770, 4
      %v777 = vshrl.u32 %v652, 16
      %v779 = vrot.slane %v777, 7
      %v780 = vshll.u32 %v652, 16
      %v782 = vor.u32 %v779, %v780
      %v783 = vrot.slane %v779, 4
      %v785 = vshrl.u32 %v653, 16
      %v787 = vrot.slane %v785, 7
      %v788 = vshll.u32 %v653, 16
      %v790 = vor.u32 %v787, %v788
      %v791 = vsel %vm656, %v783, %v790
      %v792 = vrot.slane %v787, 4
      %s817 = scalar_lea.vmem [#allocation2], 12
      %vm818 = vcmask 1043456
      %vm819 = vsmask.f32 7938
      %vm820 = vmand %vm818, %vm819
      %v821 = vld [vmem:[%s817] sm:$0xf]
      %v822 = vsel %vm820, %v663, %v821
      %823 = vst [vmem:[%s817] sm:$0xf] %v822
      %824 = vst [vmem:[%s817 + $0x4] sm:$0xf] %v672
      %vm825 = vcmask 1040384
      %vm826 = vmand %vm825, %vm654
      %v827 = vld [vmem:[%s817 + $0x8] sm:$0x1]
      %v828 = vsel %vm826, %v673, %v827
      %829 = vst [vmem:[%s817 + $0x8] sm:$0x1] %v828
      %v830 = vld [vmem:[%s817 + $0xc] sm:$0xf]
      %v831 = vsel %vm820, %v680, %v830
      %832 = vst [vmem:[%s817 + $0xc] sm:$0xf] %v831
      %833 = vst [vmem:[%s817 + $0x10] sm:$0xf] %v689
      %v834 = vld [vmem:[%s817 + $0x14] sm:$0x1]
      %v835 = vsel %vm826, %v690, %v834
      %836 = vst [vmem:[%s817 + $0x14] sm:$0x1] %v835
      %v837 = vld [vmem:[%s817 + $0x18] sm:$0xf]
      %v838 = vsel %vm820, %v697, %v837
      %839 = vst [vmem:[%s817 + $0x18] sm:$0xf] %v838
      %840 = vst [vmem:[%s817 + $0x1c] sm:$0xf] %v706
      %v841 = vld [vmem:[%s817 + $0x20] sm:$0x1]
      %v842 = vsel %vm826, %v707, %v841
      %843 = vst [vmem:[%s817 + $0x20] sm:$0x1] %v842
      %v844 = vld [vmem:[%s817 + $0x24] sm:$0xf]
      %v845 = vsel %vm820, %v714, %v844
      %846 = vst [vmem:[%s817 + $0x24] sm:$0xf] %v845
      %847 = vst [vmem:[%s817 + $0x28] sm:$0xf] %v723
      %v848 = vld [vmem:[%s817 + $0x2c] sm:$0x1]
      %v849 = vsel %vm826, %v724, %v848
      %850 = vst [vmem:[%s817 + $0x2c] sm:$0x1] %v849
      %v851 = vld [vmem:[%s817 + $0x30] sm:$0xf]
      %v852 = vsel %vm820, %v731, %v851
      %853 = vst [vmem:[%s817 + $0x30] sm:$0xf] %v852
      %854 = vst [vmem:[%s817 + $0x34] sm:$0xf] %v740
      %v855 = vld [vmem:[%s817 + $0x38] sm:$0x1]
      %v856 = vsel %vm826, %v741, %v855
      %857 = vst [vmem:[%s817 + $0x38] sm:$0x1] %v856
      %v858 = vld [vmem:[%s817 + $0x3c] sm:$0xf]
      %v859 = vsel %vm820, %v748, %v858
      %860 = vst [vmem:[%s817 + $0x3c] sm:$0xf] %v859
      %861 = vst [vmem:[%s817 + $0x40] sm:$0xf] %v757
      %v862 = vld [vmem:[%s817 + $0x44] sm:$0x1]
      %v863 = vsel %vm826, %v758, %v862
      %864 = vst [vmem:[%s817 + $0x44] sm:$0x1] %v863
      %v865 = vld [vmem:[%s817 + $0x48] sm:$0xf]
      %v866 = vsel %vm820, %v765, %v865
      %867 = vst [vmem:[%s817 + $0x48] sm:$0xf] %v866
      %868 = vst [vmem:[%s817 + $0x4c] sm:$0xf] %v774
      %v869 = vld [vmem:[%s817 + $0x50] sm:$0x1]
      %v870 = vsel %vm826, %v775, %v869
      %871 = vst [vmem:[%s817 + $0x50] sm:$0x1] %v870
      %v872 = vld [vmem:[%s817 + $0x54] sm:$0xf]
      %v873 = vsel %vm820, %v782, %v872
      %874 = vst [vmem:[%s817 + $0x54] sm:$0xf] %v873
      %875 = vst [vmem:[%s817 + $0x58] sm:$0xf] %v791
      %v876 = vld [vmem:[%s817 + $0x5c] sm:$0x1]
      %v877 = vsel %vm826, %v792, %v876
      %878 = vst [vmem:[%s817 + $0x5c] sm:$0x1] %v877
      %v879 = vpack.c.bf16 %v600, %v599
      %v881 = vunpack.c.l.b16 %v879
      %v882 = vunpack.c.h.b16 %v879
      %v883 = vpack.c.b16 %v881, %v881
      %v884 = vpack.c.b16 %v882, %v882
      %v886 = vshrl.u32 %v883, 16
      %v888 = vrot.slane %v886, 7
      %v889 = vshll.u32 %v883, 16
      %v891 = vor.u32 %v888, %v889
      %v892 = vrot.slane %v888, 4
      %v894 = vshrl.u32 %v884, 16
      %v896 = vrot.slane %v894, 7
      %v897 = vshll.u32 %v884, 16
      %v899 = vor.u32 %v896, %v897
      %v900 = vsel %vm656, %v892, %v899
      %v901 = vrot.slane %v896, 4
      %v905 = vld [vmem:[#allocation2] sm:$0xf]
      %v906 = vsel %vm820, %v891, %v905
      %907 = vst [vmem:[#allocation2] sm:$0xf] %v906
      %908 = vst [vmem:[#allocation2 + $0x4] sm:$0xf] %v900
      %v909 = vld [vmem:[#allocation2 + $0x8] sm:$0x1]
      %v910 = vsel %vm826, %v901, %v909
      %911 = vst [vmem:[#allocation2 + $0x8] sm:$0x1] %v910
      %v912 = vpack.c.bf16 %v605, %v604
      %v914 = vunpack.c.l.b16 %v912
      %v915 = vunpack.c.h.b16 %v912
      %v916 = vpack.c.b16 %v914, %v914
      %v917 = vpack.c.b16 %v915, %v915
      %v919 = vshrl.u32 %v916, 16
      %v921 = vrot.slane %v919, 7
      %v922 = vshll.u32 %v916, 16
      %v924 = vor.u32 %v921, %v922
      %v925 = vrot.slane %v921, 4
      %v927 = vshrl.u32 %v917, 16
      %v929 = vrot.slane %v927, 7
      %v930 = vshll.u32 %v917, 16
      %v932 = vor.u32 %v929, %v930
      %v933 = vsel %vm656, %v925, %v932
      %v934 = vrot.slane %v929, 4
      %s938 = scalar_lea.vmem [#allocation2], 108
      %v939 = vld [vmem:[%s938] sm:$0xf]
      %v940 = vsel %vm820, %v924, %v939
      %941 = vst [vmem:[%s938] sm:$0xf] %v940
      %942 = vst [vmem:[%s938 + $0x4] sm:$0xf] %v933
      %v943 = vld [vmem:[%s938 + $0x8] sm:$0x1]
      %v944 = vsel %vm826, %v934, %v943
      %945 = vst [vmem:[%s938 + $0x8] sm:$0x1] %v944
      %v946 = vld [vmem:[#allocation2] sm:$0xf]
      %v947 = vld [vmem:[#allocation2 + $0x4] sm:$0xf]
      %v948 = vld [vmem:[#allocation2 + $0xc] sm:$0xf]
      %v949 = vld [vmem:[#allocation2 + $0x10] sm:$0xf]
      %v950 = vld [vmem:[#allocation2 + $0x18] sm:$0xf]
      %v951 = vld [vmem:[#allocation2 + $0x1c] sm:$0xf]
      %v952 = vld [vmem:[#allocation2 + $0x24] sm:$0xf]
      %v953 = vld [vmem:[#allocation2 + $0x28] sm:$0xf]
      %v954 = vld [vmem:[#allocation2 + $0x30] sm:$0xf]
      %v955 = vld [vmem:[#allocation2 + $0x34] sm:$0xf]
      %v956 = vld [vmem:[#allocation2 + $0x3c] sm:$0xf]
      %v957 = vld [vmem:[#allocation2 + $0x40] sm:$0xf]
      %v958 = vld [vmem:[#allocation2 + $0x48] sm:$0xf]
      %v959 = vld [vmem:[#allocation2 + $0x4c] sm:$0xf]
      %v960 = vld [vmem:[#allocation2 + $0x54] sm:$0xf]
      %v961 = vld [vmem:[#allocation2 + $0x58] sm:$0xf]
      %v962 = vld [vmem:[%s3] sm:$0xf]
      %v963 = vld [vmem:[%s3 + $0x4] sm:$0xf]
      %v964 = vld [vmem:[%s3 + $0x8] sm:$0xf]
      %v965 = vld [vmem:[%s3 + $0xc] sm:$0xf]
      %v966 = vld [vmem:[%s3 + $0x10] sm:$0xf]
      %v967 = vld [vmem:[%s3 + $0x14] sm:$0xf]
      %v968 = vld [vmem:[%s3 + $0x18] sm:$0xf]
      %v969 = vld [vmem:[%s3 + $0x1c] sm:$0xf]
      %v970 = vld [vmem:[%s3 + $0x20] sm:$0xf]
      %v971 = vld [vmem:[%s3 + $0x24] sm:$0xf]
      %v972 = vld [vmem:[%s3 + $0x28] sm:$0xf]
      %v973 = vld [vmem:[%s3 + $0x2c] sm:$0xf]
      %v974 = vld [vmem:[%s3 + $0x30] sm:$0xf]
      %v975 = vld [vmem:[%s3 + $0x34] sm:$0xf]
      %v976 = vld [vmem:[%s3 + $0x38] sm:$0xf]
      %v977 = vld [vmem:[%s3 + $0x3c] sm:$0xf]
      %v978 = vld [vmem:[#allocation2 + $0x8] sm:$0x1]
      %v979 = vld [vmem:[#allocation2 + $0x14] sm:$0x1]
      %v980 = vld [vmem:[#allocation2 + $0x20] sm:$0x1]
      %v981 = vld [vmem:[#allocation2 + $0x2c] sm:$0x1]
      %v982 = vld [vmem:[#allocation2 + $0x38] sm:$0x1]
      %v983 = vld [vmem:[#allocation2 + $0x44] sm:$0x1]
      %v984 = vld [vmem:[#allocation2 + $0x50] sm:$0x1]
      %v985 = vld [vmem:[#allocation2 + $0x5c] sm:$0x1]
      %vm986 = vsmask.f32 3328
      %vm987 = vsmask.f32 7440
      %vm988 = vmor %vm986, %vm987
      %v990 = vshrl.u32 %v946, 16
      %v992 = vrot.slane %v990, 4
      %v993 = vshll.u32 %v946, 16
      %v995 = vrot.slane %v993, 5
      %v996 = vor.u32 %v992, %v995
      %v997 = vrot.slane %v996, 4
      %v999 = vshll.u32 %v947, 16
      %v1001 = vrot.slane %v999, 5
      %v1002 = vsel %vm988, %v997, %v1001
      %v1003 = vshrl.u32 %v947, 16
      %v1005 = vrot.slane %v1003, 4
      %v1006 = vor.u32 %v1005, %v1001
      %v1007 = vrot.slane %v1006, 4
      %v1009 = vshll.u32 %v978, 16
      %v1011 = vrot.slane %v1009, 5
      %v1012 = vsel %vm988, %v1007, %v1011
      %v1014 = vshrl.u32 %v948, 16
      %v1016 = vrot.slane %v1014, 4
      %v1017 = vshll.u32 %v948, 16
      %v1019 = vrot.slane %v1017, 5
      %v1020 = vor.u32 %v1016, %v1019
      %v1021 = vrot.slane %v1020, 4
      %v1023 = vshll.u32 %v949, 16
      %v1025 = vrot.slane %v1023, 5
      %v1026 = vsel %vm988, %v1021, %v1025
      %v1027 = vshrl.u32 %v949, 16
      %v1029 = vrot.slane %v1027, 4
      %v1030 = vor.u32 %v1029, %v1025
      %v1031 = vrot.slane %v1030, 4
      %v1033 = vshll.u32 %v979, 16
      %v1035 = vrot.slane %v1033, 5
      %v1036 = vsel %vm988, %v1031, %v1035
      %v1038 = vshrl.u32 %v950, 16
      %v1040 = vrot.slane %v1038, 4
      %v1041 = vshll.u32 %v950, 16
      %v1043 = vrot.slane %v1041, 5
      %v1044 = vor.u32 %v1040, %v1043
      %v1045 = vrot.slane %v1044, 4
      %v1047 = vshll.u32 %v951, 16
      %v1049 = vrot.slane %v1047, 5
      %v1050 = vsel %vm988, %v1045, %v1049
      %v1051 = vshrl.u32 %v951, 16
      %v1053 = vrot.slane %v1051, 4
      %v1054 = vor.u32 %v1053, %v1049
      %v1055 = vrot.slane %v1054, 4
      %v1057 = vshll.u32 %v980, 16
      %v1059 = vrot.slane %v1057, 5
      %v1060 = vsel %vm988, %v1055, %v1059
      %v1062 = vshrl.u32 %v952, 16
      %v1064 = vrot.slane %v1062, 4
      %v1065 = vshll.u32 %v952, 16
      %v1067 = vrot.slane %v1065, 5
      %v1068 = vor.u32 %v1064, %v1067
      %v1069 = vrot.slane %v1068, 4
      %v1071 = vshll.u32 %v953, 16
      %v1073 = vrot.slane %v1071, 5
      %v1074 = vsel %vm988, %v1069, %v1073
      %v1075 = vshrl.u32 %v953, 16
      %v1077 = vrot.slane %v1075, 4
      %v1078 = vor.u32 %v1077, %v1073
      %v1079 = vrot.slane %v1078, 4
      %v1081 = vshll.u32 %v981, 16
      %v1083 = vrot.slane %v1081, 5
      %v1084 = vsel %vm988, %v1079, %v1083
      %v1086 = vshrl.u32 %v954, 16
      %v1088 = vrot.slane %v1086, 4
      %v1089 = vshll.u32 %v954, 16
      %v1091 = vrot.slane %v1089, 5
      %v1092 = vor.u32 %v1088, %v1091
      %v1093 = vrot.slane %v1092, 4
      %v1095 = vshll.u32 %v955, 16
      %v1097 = vrot.slane %v1095, 5
      %v1098 = vsel %vm988, %v1093, %v1097
      %v1099 = vshrl.u32 %v955, 16
      %v1101 = vrot.slane %v1099, 4
      %v1102 = vor.u32 %v1101, %v1097
      %v1103 = vrot.slane %v1102, 4
      %v1105 = vshll.u32 %v982, 16
      %v1107 = vrot.slane %v1105, 5
      %v1108 = vsel %vm988, %v1103, %v1107
      %v1110 = vshrl.u32 %v956, 16
      %v1112 = vrot.slane %v1110, 4
      %v1113 = vshll.u32 %v956, 16
      %v1115 = vrot.slane %v1113, 5
      %v1116 = vor.u32 %v1112, %v1115
      %v1117 = vrot.slane %v1116, 4
      %v1119 = vshll.u32 %v957, 16
      %v1121 = vrot.slane %v1119, 5
      %v1122 = vsel %vm988, %v1117, %v1121
      %v1123 = vshrl.u32 %v957, 16
      %v1125 = vrot.slane %v1123, 4
      %v1126 = vor.u32 %v1125, %v1121
      %v1127 = vrot.slane %v1126, 4
      %v1129 = vshll.u32 %v983, 16
      %v1131 = vrot.slane %v1129, 5
      %v1132 = vsel %vm988, %v1127, %v1131
      %v1134 = vshrl.u32 %v958, 16
      %v1136 = vrot.slane %v1134, 4
      %v1137 = vshll.u32 %v958, 16
      %v1139 = vrot.slane %v1137, 5
      %v1140 = vor.u32 %v1136, %v1139
      %v1141 = vrot.slane %v1140, 4
      %v1143 = vshll.u32 %v959, 16
      %v1145 = vrot.slane %v1143, 5
      %v1146 = vsel %vm988, %v1141, %v1145
      %v1147 = vshrl.u32 %v959, 16
      %v1149 = vrot.slane %v1147, 4
      %v1150 = vor.u32 %v1149, %v1145
      %v1151 = vrot.slane %v1150, 4
      %v1153 = vshll.u32 %v984, 16
      %v1155 = vrot.slane %v1153, 5
      %v1156 = vsel %vm988, %v1151, %v1155
      %v1158 = vshrl.u32 %v960, 16
      %v1160 = vrot.slane %v1158, 4
      %v1161 = vshll.u32 %v960, 16
      %v1163 = vrot.slane %v1161, 5
      %v1164 = vor.u32 %v1160, %v1163
      %v1165 = vrot.slane %v1164, 4
      %v1167 = vshll.u32 %v961, 16
      %v1169 = vrot.slane %v1167, 5
      %v1170 = vsel %vm988, %v1165, %v1169
      %v1171 = vshrl.u32 %v961, 16
      %v1173 = vrot.slane %v1171, 4
      %v1174 = vor.u32 %v1173, %v1169
      %v1175 = vrot.slane %v1174, 4
      %v1177 = vshll.u32 %v985, 16
      %v1179 = vrot.slane %v1177, 5
      %v1180 = vsel %vm988, %v1175, %v1179
      %s1181 = scalar_lea.vmem %s3, 64
      %v1182 = vld [vmem:[%s1181] sm:$0xf]
      %v1183 = vld [vmem:[%s1181 + $0x4] sm:$0xf]
      %v1184 = vld [vmem:[%s1181 + $0x8] sm:$0xf]
      %v1185 = vld [vmem:[%s1181 + $0xc] sm:$0xf]
      %v1186 = vld [vmem:[%s1181 + $0x10] sm:$0xf]
      %v1187 = vld [vmem:[%s1181 + $0x14] sm:$0xf]
      %v1188 = vld [vmem:[%s1181 + $0x18] sm:$0xf]
      %v1189 = vld [vmem:[%s1181 + $0x1c] sm:$0xf]
      %v1190 = vld [vmem:[%s1181 + $0x20] sm:$0xf]
      %v1191 = vld [vmem:[%s1181 + $0x24] sm:$0xf]
      %v1192 = vld [vmem:[%s1181 + $0x28] sm:$0xf]
      %v1193 = vld [vmem:[%s1181 + $0x2c] sm:$0xf]
      %v1194 = vld [vmem:[%s1181 + $0x30] sm:$0xf]
      %v1195 = vld [vmem:[%s1181 + $0x34] sm:$0xf]
      %v1196 = vld [vmem:[%s1181 + $0x38] sm:$0xf]
      %v1197 = vld [vmem:[%s1181 + $0x3c] sm:$0xf]
      %v1198 = vunpack.c.l.b16 %v1002
      %v1199 = vunpack.c.l.b16 %v1012
      %v1200 = vunpack.c.l.b16 %v1026
      %v1201 = vunpack.c.l.b16 %v1036
      %v1202 = vunpack.c.l.b16 %v1050
      %v1203 = vunpack.c.l.b16 %v1060
      %v1204 = vunpack.c.l.b16 %v1074
      %v1205 = vunpack.c.l.b16 %v1084
      %v1206 = vunpack.c.l.b16 %v1098
      %v1207 = vunpack.c.l.b16 %v1108
      %v1208 = vunpack.c.l.b16 %v1122
      %v1209 = vunpack.c.l.b16 %v1132
      %v1210 = vunpack.c.l.b16 %v1146
      %v1211 = vunpack.c.l.b16 %v1156
      %v1212 = vunpack.c.l.b16 %v1170
      %v1213 = vunpack.c.l.b16 %v1180
      %v1214 = vpack.c.b16 %v1199, %v1198
      %v1215 = vpack.c.b16 %v1201, %v1200
      %v1216 = vpack.c.b16 %v1203, %v1202
      %v1217 = vpack.c.b16 %v1205, %v1204
      %v1218 = vpack.c.b16 %v1207, %v1206
      %v1219 = vpack.c.b16 %v1209, %v1208
      %v1220 = vpack.c.b16 %v1211, %v1210
      %v1221 = vpack.c.b16 %v1213, %v1212
      %v1246 = vunpack.c.l.b16 %v1182
      %v1247 = vunpack.c.l.b16 %v1183
      %v1248 = vunpack.c.l.b16 %v1184
      %v1249 = vunpack.c.l.b16 %v1185
      %v1250 = vunpack.c.l.b16 %v1186
      %v1251 = vunpack.c.l.b16 %v1187
      %v1252 = vunpack.c.l.b16 %v1188
      %v1253 = vunpack.c.l.b16 %v1189
      %v1254 = vunpack.c.l.b16 %v1190
      %v1255 = vunpack.c.l.b16 %v1191
      %v1256 = vunpack.c.l.b16 %v1192
      %v1257 = vunpack.c.l.b16 %v1193
      %v1258 = vunpack.c.l.b16 %v1194
      %v1259 = vunpack.c.l.b16 %v1195
      %v1260 = vunpack.c.l.b16 %v1196
      %v1261 = vunpack.c.l.b16 %v1197
      %v1262 = vpack.c.b16 %v1247, %v1246
      %v1263 = vpack.c.b16 %v1249, %v1248
      %v1264 = vpack.c.b16 %v1251, %v1250
      %v1265 = vpack.c.b16 %v1253, %v1252
      %v1266 = vpack.c.b16 %v1255, %v1254
      %v1267 = vpack.c.b16 %v1257, %v1256
      %v1268 = vpack.c.b16 %v1259, %v1258
      %v1269 = vpack.c.b16 %v1261, %v1260
      %1278 = vmatprep.subr.bf16.mxu0 0
      %1279 = vmatpush1.bf16.msra.mxu0 %v1269
      %1280 = vmatprep.subr.bf16.mxu0 0
      %1281 = vmatpush1.bf16.msra.mxu0 %v1268
      %1282 = vmatprep.subr.bf16.mxu0 0
      %1283 = vmatpush1.bf16.msra.mxu0 %v1267
      %1284 = vmatprep.subr.bf16.mxu0 0
      %1285 = vmatpush1.bf16.msra.mxu0 %v1266
      %1286 = vmatprep.subr.bf16.mxu0 0
      %1287 = vmatpush1.bf16.msra.mxu0 %v1265
      %1288 = vmatprep.subr.bf16.mxu0 0
      %1289 = vmatpush1.bf16.msra.mxu0 %v1264
      %1290 = vmatprep.subr.bf16.mxu0 0
      %1291 = vmatpush1.bf16.msra.mxu0 %v1263
      %1292 = vmatprep.subr.bf16.mxu0 0
      %1293 = vmatpush1.bf16.msra.mxu0 %v1262
      %1294 = vmatprep.subr.bf16.mxu0 0
      %1295 = vmatpush2.bf16.msra.mxu0 0
      %1296 = vmatprep.subr.bf16.mxu0 0
      %1297 = vmatpush2.bf16.msra.mxu0 0
      %1298 = vmatprep.subr.bf16.mxu0 0
      %1299 = vmatpush2.bf16.msra.mxu0 0
      %1300 = vmatprep.subr.bf16.mxu0 0
      %1301 = vmatpush2.bf16.msra.mxu0 0
      %1302 = vmatprep.subr.bf16.mxu0 0
      %1303 = vmatpush2.bf16.msra.mxu0 0
      %1304 = vmatprep.subr.bf16.mxu0 0
      %1305 = vmatpush2.bf16.msra.mxu0 0
      %1306 = vmatprep.subr.bf16.mxu0 0
      %1307 = vmatpush2.bf16.msra.mxu0 0
      %1308 = vmatprep.subr.bf16.mxu0 0
      %1309 = vmatpush2.bf16.msra.mxu0 0
      %1310 = vmatprep.mubr.bf16.mxu0 0
      %1311 = vmatmul.mubr.bf16.gmra.mxu0 %v1214
      %v1312 = vpop.f32.mrf.mxu0
      %v1313 = vadd.f32 0.0, %v1312
      %v1314 = vpop.f32.mrf.mxu0
      %v1315 = vpop.f32.mrf.mxu0
      %v1316 = vadd.f32 0.0, %v1315
      %v1317 = vpop.f32.mrf.mxu0
      %1318 = vmatprep.mubr.bf16.mxu0 0
      %1319 = vmatmul.mubr.bf16.gmra.mxu0 %v1215
      %v1320 = vpop.f32.mrf.mxu0
      %v1321 = vadd.f32 0.0, %v1320
      %v1322 = vpop.f32.mrf.mxu0
      %v1323 = vpop.f32.mrf.mxu0
      %v1324 = vadd.f32 0.0, %v1323
      %v1325 = vpop.f32.mrf.mxu0
      %1326 = vmatprep.mubr.bf16.mxu0 0
      %1327 = vmatmul.mubr.bf16.gmra.mxu0 %v1216
      %v1328 = vpop.f32.mrf.mxu0
      %v1329 = vadd.f32 0.0, %v1328
      %v1330 = vpop.f32.mrf.mxu0
      %v1331 = vpop.f32.mrf.mxu0
      %v1332 = vadd.f32 0.0, %v1331
      %v1333 = vpop.f32.mrf.mxu0
      %1334 = vmatprep.mubr.bf16.mxu0 0
      %1335 = vmatmul.mubr.bf16.gmra.mxu0 %v1217
      %v1336 = vpop.f32.mrf.mxu0
      %v1337 = vadd.f32 0.0, %v1336
      %v1338 = vpop.f32.mrf.mxu0
      %v1339 = vpop.f32.mrf.mxu0
      %v1340 = vadd.f32 0.0, %v1339
      %v1341 = vpop.f32.mrf.mxu0
      %1342 = vmatprep.mubr.bf16.mxu0 0
      %1343 = vmatmul.mubr.bf16.gmra.mxu0 %v1218
      %v1344 = vpop.f32.mrf.mxu0
      %v1345 = vadd.f32 0.0, %v1344
      %v1346 = vpop.f32.mrf.mxu0
      %v1347 = vpop.f32.mrf.mxu0
      %v1348 = vadd.f32 0.0, %v1347
      %v1349 = vpop.f32.mrf.mxu0
      %1350 = vmatprep.mubr.bf16.mxu0 0
      %1351 = vmatmul.mubr.bf16.gmra.mxu0 %v1219
      %v1352 = vpop.f32.mrf.mxu0
      %v1353 = vadd.f32 0.0, %v1352
      %v1354 = vpop.f32.mrf.mxu0
      %v1355 = vpop.f32.mrf.mxu0
      %v1356 = vadd.f32 0.0, %v1355
      %v1357 = vpop.f32.mrf.mxu0
      %1358 = vmatprep.mubr.bf16.mxu0 0
      %1359 = vmatmul.mubr.bf16.gmra.mxu0 %v1220
      %v1360 = vpop.f32.mrf.mxu0
      %v1361 = vadd.f32 0.0, %v1360
      %v1362 = vpop.f32.mrf.mxu0
      %v1363 = vpop.f32.mrf.mxu0
      %v1364 = vadd.f32 0.0, %v1363
      %v1365 = vpop.f32.mrf.mxu0
      %1366 = vmatprep.mubr.bf16.mxu0 0
      %1367 = vmatmul.mubr.bf16.gmra.mxu0 %v1221
      %v1368 = vpop.f32.mrf.mxu0
      %v1369 = vadd.f32 0.0, %v1368
      %v1370 = vpop.f32.mrf.mxu0
      %v1371 = vpop.f32.mrf.mxu0
      %v1372 = vadd.f32 0.0, %v1371
      %v1373 = vpop.f32.mrf.mxu0
      %1374 = vdwg.mxu0
      %v1391 = vunpack.c.l.b16 %v946
      %v1392 = vunpack.c.l.b16 %v947
      %v1393 = vunpack.c.l.b16 %v948
      %v1394 = vunpack.c.l.b16 %v949
      %v1395 = vunpack.c.l.b16 %v950
      %v1396 = vunpack.c.l.b16 %v951
      %v1397 = vunpack.c.l.b16 %v952
      %v1398 = vunpack.c.l.b16 %v953
      %v1399 = vunpack.c.l.b16 %v954
      %v1400 = vunpack.c.l.b16 %v955
      %v1401 = vunpack.c.l.b16 %v956
      %v1402 = vunpack.c.l.b16 %v957
      %v1403 = vunpack.c.l.b16 %v958
      %v1404 = vunpack.c.l.b16 %v959
      %v1405 = vunpack.c.l.b16 %v960
      %v1406 = vunpack.c.l.b16 %v961
      %v1407 = vpack.c.b16 %v1392, %v1391
      %v1408 = vpack.c.b16 %v1394, %v1393
      %v1409 = vpack.c.b16 %v1396, %v1395
      %v1410 = vpack.c.b16 %v1398, %v1397
      %v1411 = vpack.c.b16 %v1400, %v1399
      %v1412 = vpack.c.b16 %v1402, %v1401
      %v1413 = vpack.c.b16 %v1404, %v1403
      %v1414 = vpack.c.b16 %v1406, %v1405
      %v1439 = vunpack.c.l.b16 %v962
      %v1440 = vunpack.c.l.b16 %v963
      %v1441 = vunpack.c.l.b16 %v964
      %v1442 = vunpack.c.l.b16 %v965
      %v1443 = vunpack.c.l.b16 %v966
      %v1444 = vunpack.c.l.b16 %v967
      %v1445 = vunpack.c.l.b16 %v968
      %v1446 = vunpack.c.l.b16 %v969
      %v1447 = vunpack.c.l.b16 %v970
      %v1448 = vunpack.c.l.b16 %v971
      %v1449 = vunpack.c.l.b16 %v972
      %v1450 = vunpack.c.l.b16 %v973
      %v1451 = vunpack.c.l.b16 %v974
      %v1452 = vunpack.c.l.b16 %v975
      %v1453 = vunpack.c.l.b16 %v976
      %v1454 = vunpack.c.l.b16 %v977
      %v1455 = vpack.c.b16 %v1440, %v1439
      %v1456 = vpack.c.b16 %v1442, %v1441
      %v1457 = vpack.c.b16 %v1444, %v1443
      %v1458 = vpack.c.b16 %v1446, %v1445
      %v1459 = vpack.c.b16 %v1448, %v1447
      %v1460 = vpack.c.b16 %v1450, %v1449
      %v1461 = vpack.c.b16 %v1452, %v1451
      %v1462 = vpack.c.b16 %v1454, %v1453
      %1471 = vmatprep.subr.bf16.mxu0 0
      %1472 = vmatpush1.bf16.msra.mxu0 %v1462
      %1473 = vmatprep.subr.bf16.mxu0 0
      %1474 = vmatpush1.bf16.msra.mxu0 %v1461
      %1475 = vmatprep.subr.bf16.mxu0 0
      %1476 = vmatpush1.bf16.msra.mxu0 %v1460
      %1477 = vmatprep.subr.bf16.mxu0 0
      %1478 = vmatpush1.bf16.msra.mxu0 %v1459
      %1479 = vmatprep.subr.bf16.mxu0 0
      %1480 = vmatpush1.bf16.msra.mxu0 %v1458
      %1481 = vmatprep.subr.bf16.mxu0 0
      %1482 = vmatpush1.bf16.msra.mxu0 %v1457
      %1483 = vmatprep.subr.bf16.mxu0 0
      %1484 = vmatpush1.bf16.msra.mxu0 %v1456
      %1485 = vmatprep.subr.bf16.mxu0 0
      %1486 = vmatpush1.bf16.msra.mxu0 %v1455
      %1487 = vmatprep.subr.bf16.mxu0 0
      %1488 = vmatpush2.bf16.msra.mxu0 0
      %1489 = vmatprep.subr.bf16.mxu0 0
      %1490 = vmatpush2.bf16.msra.mxu0 0
      %1491 = vmatprep.subr.bf16.mxu0 0
      %1492 = vmatpush2.bf16.msra.mxu0 0
      %1493 = vmatprep.subr.bf16.mxu0 0
      %1494 = vmatpush2.bf16.msra.mxu0 0
      %1495 = vmatprep.subr.bf16.mxu0 0
      %1496 = vmatpush2.bf16.msra.mxu0 0
      %1497 = vmatprep.subr.bf16.mxu0 0
      %1498 = vmatpush2.bf16.msra.mxu0 0
      %1499 = vmatprep.subr.bf16.mxu0 0
      %1500 = vmatpush2.bf16.msra.mxu0 0
      %1501 = vmatprep.subr.bf16.mxu0 0
      %1502 = vmatpush2.bf16.msra.mxu0 0
      %1503 = vmatprep.mubr.bf16.mxu0 0
      %1504 = vmatmul.mubr.bf16.gmra.mxu0 %v1407
      %v1505 = vpop.f32.mrf.mxu0
      %v1506 = vadd.f32 %v1313, %v1505
      %v1507 = vpop.f32.mrf.mxu0
      %v1508 = vpop.f32.mrf.mxu0
      %v1509 = vadd.f32 %v1316, %v1508
      %v1510 = vpop.f32.mrf.mxu0
      %1511 = vmatprep.mubr.bf16.mxu0 0
      %1512 = vmatmul.mubr.bf16.gmra.mxu0 %v1408
      %v1513 = vpop.f32.mrf.mxu0
      %v1514 = vadd.f32 %v1321, %v1513
      %v1515 = vpop.f32.mrf.mxu0
      %v1516 = vpop.f32.mrf.mxu0
      %v1517 = vadd.f32 %v1324, %v1516
      %v1518 = vpop.f32.mrf.mxu0
      %1519 = vmatprep.mubr.bf16.mxu0 0
      %1520 = vmatmul.mubr.bf16.gmra.mxu0 %v1409
      %v1521 = vpop.f32.mrf.mxu0
      %v1522 = vadd.f32 %v1329, %v1521
      %v1523 = vpop.f32.mrf.mxu0
      %v1524 = vpop.f32.mrf.mxu0
      %v1525 = vadd.f32 %v1332, %v1524
      %v1526 = vpop.f32.mrf.mxu0
      %1527 = vmatprep.mubr.bf16.mxu0 0
      %1528 = vmatmul.mubr.bf16.gmra.mxu0 %v1410
      %v1529 = vpop.f32.mrf.mxu0
      %v1530 = vadd.f32 %v1337, %v1529
      %v1531 = vpop.f32.mrf.mxu0
      %v1532 = vpop.f32.mrf.mxu0
      %v1533 = vadd.f32 %v1340, %v1532
      %v1534 = vpop.f32.mrf.mxu0
      %1535 = vmatprep.mubr.bf16.mxu0 0
      %1536 = vmatmul.mubr.bf16.gmra.mxu0 %v1411
      %v1537 = vpop.f32.mrf.mxu0
      %v1538 = vadd.f32 %v1345, %v1537
      %v1539 = vpop.f32.mrf.mxu0
      %v1540 = vpop.f32.mrf.mxu0
      %v1541 = vadd.f32 %v1348, %v1540
      %v1542 = vpop.f32.mrf.mxu0
      %1543 = vmatprep.mubr.bf16.mxu0 0
      %1544 = vmatmul.mubr.bf16.gmra.mxu0 %v1412
      %v1545 = vpop.f32.mrf.mxu0
      %v1546 = vadd.f32 %v1353, %v1545
      %v1547 = vpop.f32.mrf.mxu0
      %v1548 = vpop.f32.mrf.mxu0
      %v1549 = vadd.f32 %v1356, %v1548
      %v1550 = vpop.f32.mrf.mxu0
      %1551 = vmatprep.mubr.bf16.mxu0 0
      %1552 = vmatmul.mubr.bf16.gmra.mxu0 %v1413
      %v1553 = vpop.f32.mrf.mxu0
      %v1554 = vadd.f32 %v1361, %v1553
      %v1555 = vpop.f32.mrf.mxu0
      %v1556 = vpop.f32.mrf.mxu0
      %v1557 = vadd.f32 %v1364, %v1556
      %v1558 = vpop.f32.mrf.mxu0
      %1559 = vmatprep.mubr.bf16.mxu0 0
      %1560 = vmatmul.mubr.bf16.gmra.mxu0 %v1414
      %v1561 = vpop.f32.mrf.mxu0
      %v1562 = vadd.f32 %v1369, %v1561
      %v1563 = vpop.f32.mrf.mxu0
      %v1564 = vpop.f32.mrf.mxu0
      %v1565 = vadd.f32 %v1372, %v1564
      %v1566 = vpop.f32.mrf.mxu0
      %1567 = vdwg.mxu0
      %v1568 = vld [vmem:[#allocation2] sm:$0xe]
      %v1569 = vld [vmem:[#allocation2 + $0xc] sm:$0xe]
      %v1570 = vld [vmem:[#allocation2 + $0x18] sm:$0xe]
      %v1571 = vld [vmem:[#allocation2 + $0x24] sm:$0xe]
      %v1572 = vld [vmem:[#allocation2 + $0x30] sm:$0xe]
      %v1573 = vld [vmem:[#allocation2 + $0x3c] sm:$0xe]
      %v1574 = vld [vmem:[#allocation2 + $0x48] sm:$0xe]
      %v1575 = vld [vmem:[#allocation2 + $0x54] sm:$0xe]
      %vm1592 = vcmask 1042432
      %vm1593 = vcmask 1046532
      %vm1594 = vmor %vm1592, %vm1593
      %v1595 = vrot.slane %v1568, 5
      %v1596 = vrot.slane %v1595, 4
      %v1597 = vrot.slane %v947, 5
      %v1598 = vsel %vm1594, %v1596, %v1597
      %v1599 = vrot.slane %v1597, 4
      %v1600 = vrot.slane %v978, 5
      %v1601 = vsel %vm1594, %v1599, %v1600
      %v1602 = vrot.slane %v1569, 5
      %v1603 = vrot.slane %v1602, 4
      %v1604 = vrot.slane %v949, 5
      %v1605 = vsel %vm1594, %v1603, %v1604
      %v1606 = vrot.slane %v1604, 4
      %v1607 = vrot.slane %v979, 5
      %v1608 = vsel %vm1594, %v1606, %v1607
      %v1609 = vrot.slane %v1570, 5
      %v1610 = vrot.slane %v1609, 4
      %v1611 = vrot.slane %v951, 5
      %v1612 = vsel %vm1594, %v1610, %v1611
      %v1613 = vrot.slane %v1611, 4
      %v1614 = vrot.slane %v980, 5
      %v1615 = vsel %vm1594, %v1613, %v1614
      %v1616 = vrot.slane %v1571, 5
      %v1617 = vrot.slane %v1616, 4
      %v1618 = vrot.slane %v953, 5
      %v1619 = vsel %vm1594, %v1617, %v1618
      %v1620 = vrot.slane %v1618, 4
      %v1621 = vrot.slane %v981, 5
      %v1622 = vsel %vm1594, %v1620, %v1621
      %v1623 = vrot.slane %v1572, 5
      %v1624 = vrot.slane %v1623, 4
      %v1625 = vrot.slane %v955, 5
      %v1626 = vsel %vm1594, %v1624, %v1625
      %v1627 = vrot.slane %v1625, 4
      %v1628 = vrot.slane %v982, 5
      %v1629 = vsel %vm1594, %v1627, %v1628
      %v1630 = vrot.slane %v1573, 5
      %v1631 = vrot.slane %v1630, 4
      %v1632 = vrot.slane %v957, 5
      %v1633 = vsel %vm1594, %v1631, %v1632
      %v1634 = vrot.slane %v1632, 4
      %v1635 = vrot.slane %v983, 5
      %v1636 = vsel %vm1594, %v1634, %v1635
      %v1637 = vrot.slane %v1574, 5
      %v1638 = vrot.slane %v1637, 4
      %v1639 = vrot.slane %v959, 5
      %v1640 = vsel %vm1594, %v1638, %v1639
      %v1641 = vrot.slane %v1639, 4
      %v1642 = vrot.slane %v984, 5
      %v1643 = vsel %vm1594, %v1641, %v1642
      %v1644 = vrot.slane %v1575, 5
      %v1645 = vrot.slane %v1644, 4
      %v1646 = vrot.slane %v961, 5
      %v1647 = vsel %vm1594, %v1645, %v1646
      %v1648 = vrot.slane %v1646, 4
      %v1649 = vrot.slane %v985, 5
      %v1650 = vsel %vm1594, %v1648, %v1649
      %s1651 = scalar_lea.vmem %s3, 128
      %v1652 = vld [vmem:[%s1651] sm:$0xf]
      %v1653 = vld [vmem:[%s1651 + $0x4] sm:$0xf]
      %v1654 = vld [vmem:[%s1651 + $0x8] sm:$0xf]
      %v1655 = vld [vmem:[%s1651 + $0xc] sm:$0xf]
      %v1656 = vld [vmem:[%s1651 + $0x10] sm:$0xf]
      %v1657 = vld [vmem:[%s1651 + $0x14] sm:$0xf]
      %v1658 = vld [vmem:[%s1651 + $0x18] sm:$0xf]
      %v1659 = vld [vmem:[%s1651 + $0x1c] sm:$0xf]
      %v1660 = vld [vmem:[%s1651 + $0x20] sm:$0xf]
      %v1661 = vld [vmem:[%s1651 + $0x24] sm:$0xf]
      %v1662 = vld [vmem:[%s1651 + $0x28] sm:$0xf]
      %v1663 = vld [vmem:[%s1651 + $0x2c] sm:$0xf]
      %v1664 = vld [vmem:[%s1651 + $0x30] sm:$0xf]
      %v1665 = vld [vmem:[%s1651 + $0x34] sm:$0xf]
      %v1666 = vld [vmem:[%s1651 + $0x38] sm:$0xf]
      %v1667 = vld [vmem:[%s1651 + $0x3c] sm:$0xf]
      %v1668 = vunpack.c.l.b16 %v1598
      %v1669 = vunpack.c.l.b16 %v1601
      %v1670 = vunpack.c.l.b16 %v1605
      %v1671 = vunpack.c.l.b16 %v1608
      %v1672 = vunpack.c.l.b16 %v1612
      %v1673 = vunpack.c.l.b16 %v1615
      %v1674 = vunpack.c.l.b16 %v1619
      %v1675 = vunpack.c.l.b16 %v1622
      %v1676 = vunpack.c.l.b16 %v1626
      %v1677 = vunpack.c.l.b16 %v1629
      %v1678 = vunpack.c.l.b16 %v1633
      %v1679 = vunpack.c.l.b16 %v1636
      %v1680 = vunpack.c.l.b16 %v1640
      %v1681 = vunpack.c.l.b16 %v1643
      %v1682 = vunpack.c.l.b16 %v1647
      %v1683 = vunpack.c.l.b16 %v1650
      %v1684 = vpack.c.b16 %v1669, %v1668
      %v1685 = vpack.c.b16 %v1671, %v1670
      %v1686 = vpack.c.b16 %v1673, %v1672
      %v1687 = vpack.c.b16 %v1675, %v1674
      %v1688 = vpack.c.b16 %v1677, %v1676
      %v1689 = vpack.c.b16 %v1679, %v1678
      %v1690 = vpack.c.b16 %v1681, %v1680
      %v1691 = vpack.c.b16 %v1683, %v1682
      %v1716 = vunpack.c.l.b16 %v1652
      %v1717 = vunpack.c.l.b16 %v1653
      %v1718 = vunpack.c.l.b16 %v1654
      %v1719 = vunpack.c.l.b16 %v1655
      %v1720 = vunpack.c.l.b16 %v1656
      %v1721 = vunpack.c.l.b16 %v1657
      %v1722 = vunpack.c.l.b16 %v1658
      %v1723 = vunpack.c.l.b16 %v1659
      %v1724 = vunpack.c.l.b16 %v1660
      %v1725 = vunpack.c.l.b16 %v1661
      %v1726 = vunpack.c.l.b16 %v1662
      %v1727 = vunpack.c.l.b16 %v1663
      %v1728 = vunpack.c.l.b16 %v1664
      %v1729 = vunpack.c.l.b16 %v1665
      %v1730 = vunpack.c.l.b16 %v1666
      %v1731 = vunpack.c.l.b16 %v1667
      %v1732 = vpack.c.b16 %v1717, %v1716
      %v1733 = vpack.c.b16 %v1719, %v1718
      %v1734 = vpack.c.b16 %v1721, %v1720
      %v1735 = vpack.c.b16 %v1723, %v1722
      %v1736 = vpack.c.b16 %v1725, %v1724
      %v1737 = vpack.c.b16 %v1727, %v1726
      %v1738 = vpack.c.b16 %v1729, %v1728
      %v1739 = vpack.c.b16 %v1731, %v1730
      %1748 = vmatprep.subr.bf16.mxu0 0
      %1749 = vmatpush1.bf16.msra.mxu0 %v1739
      %1750 = vmatprep.subr.bf16.mxu0 0
      %1751 = vmatpush1.bf16.msra.mxu0 %v1738
      %1752 = vmatprep.subr.bf16.mxu0 0
      %1753 = vmatpush1.bf16.msra.mxu0 %v1737
      %1754 = vmatprep.subr.bf16.mxu0 0
      %1755 = vmatpush1.bf16.msra.mxu0 %v1736
      %1756 = vmatprep.subr.bf16.mxu0 0
      %1757 = vmatpush1.bf16.msra.mxu0 %v1735
      %1758 = vmatprep.subr.bf16.mxu0 0
      %1759 = vmatpush1.bf16.msra.mxu0 %v1734
      %1760 = vmatprep.subr.bf16.mxu0 0
      %1761 = vmatpush1.bf16.msra.mxu0 %v1733
      %1762 = vmatprep.subr.bf16.mxu0 0
      %1763 = vmatpush1.bf16.msra.mxu0 %v1732
      %1764 = vmatprep.subr.bf16.mxu0 0
      %1765 = vmatpush2.bf16.msra.mxu0 0
      %1766 = vmatprep.subr.bf16.mxu0 0
      %1767 = vmatpush2.bf16.msra.mxu0 0
      %1768 = vmatprep.subr.bf16.mxu0 0
      %1769 = vmatpush2.bf16.msra.mxu0 0
      %1770 = vmatprep.subr.bf16.mxu0 0
      %1771 = vmatpush2.bf16.msra.mxu0 0
      %1772 = vmatprep.subr.bf16.mxu0 0
      %1773 = vmatpush2.bf16.msra.mxu0 0
      %1774 = vmatprep.subr.bf16.mxu0 0
      %1775 = vmatpush2.bf16.msra.mxu0 0
      %1776 = vmatprep.subr.bf16.mxu0 0
      %1777 = vmatpush2.bf16.msra.mxu0 0
      %1778 = vmatprep.subr.bf16.mxu0 0
      %1779 = vmatpush2.bf16.msra.mxu0 0
      %1780 = vmatprep.mubr.bf16.mxu0 0
      %1781 = vmatmul.mubr.bf16.gmra.mxu0 %v1684
      %v1782 = vpop.f32.mrf.mxu0
      %v1783 = vadd.f32 0.0, %v1782
      %v1784 = vpop.f32.mrf.mxu0
      %v1785 = vpop.f32.mrf.mxu0
      %v1786 = vadd.f32 0.0, %v1785
      %v1787 = vpop.f32.mrf.mxu0
      %1788 = vmatprep.mubr.bf16.mxu0 0
      %1789 = vmatmul.mubr.bf16.gmra.mxu0 %v1685
      %v1790 = vpop.f32.mrf.mxu0
      %v1791 = vadd.f32 0.0, %v1790
      %v1792 = vpop.f32.mrf.mxu0
      %v1793 = vpop.f32.mrf.mxu0
      %v1794 = vadd.f32 0.0, %v1793
      %v1795 = vpop.f32.mrf.mxu0
      %1796 = vmatprep.mubr.bf16.mxu0 0
      %1797 = vmatmul.mubr.bf16.gmra.mxu0 %v1686
      %v1798 = vpop.f32.mrf.mxu0
      %v1799 = vadd.f32 0.0, %v1798
      %v1800 = vpop.f32.mrf.mxu0
      %v1801 = vpop.f32.mrf.mxu0
      %v1802 = vadd.f32 0.0, %v1801
      %v1803 = vpop.f32.mrf.mxu0
      %1804 = vmatprep.mubr.bf16.mxu0 0
      %1805 = vmatmul.mubr.bf16.gmra.mxu0 %v1687
      %v1806 = vpop.f32.mrf.mxu0
      %v1807 = vadd.f32 0.0, %v1806
      %v1808 = vpop.f32.mrf.mxu0
      %v1809 = vpop.f32.mrf.mxu0
      %v1810 = vadd.f32 0.0, %v1809
      %v1811 = vpop.f32.mrf.mxu0
      %1812 = vmatprep.mubr.bf16.mxu0 0
      %1813 = vmatmul.mubr.bf16.gmra.mxu0 %v1688
      %v1814 = vpop.f32.mrf.mxu0
      %v1815 = vadd.f32 0.0, %v1814
      %v1816 = vpop.f32.mrf.mxu0
      %v1817 = vpop.f32.mrf.mxu0
      %v1818 = vadd.f32 0.0, %v1817
      %v1819 = vpop.f32.mrf.mxu0
      %1820 = vmatprep.mubr.bf16.mxu0 0
      %1821 = vmatmul.mubr.bf16.gmra.mxu0 %v1689
      %v1822 = vpop.f32.mrf.mxu0
      %v1823 = vadd.f32 0.0, %v1822
      %v1824 = vpop.f32.mrf.mxu0
      %v1825 = vpop.f32.mrf.mxu0
      %v1826 = vadd.f32 0.0, %v1825
      %v1827 = vpop.f32.mrf.mxu0
      %1828 = vmatprep.mubr.bf16.mxu0 0
      %1829 = vmatmul.mubr.bf16.gmra.mxu0 %v1690
      %v1830 = vpop.f32.mrf.mxu0
      %v1831 = vadd.f32 0.0, %v1830
      %v1832 = vpop.f32.mrf.mxu0
      %v1833 = vpop.f32.mrf.mxu0
      %v1834 = vadd.f32 0.0, %v1833
      %v1835 = vpop.f32.mrf.mxu0
      %1836 = vmatprep.mubr.bf16.mxu0 0
      %1837 = vmatmul.mubr.bf16.gmra.mxu0 %v1691
      %v1838 = vpop.f32.mrf.mxu0
      %v1839 = vadd.f32 0.0, %v1838
      %v1840 = vpop.f32.mrf.mxu0
      %v1841 = vpop.f32.mrf.mxu0
      %v1842 = vadd.f32 0.0, %v1841
      %v1843 = vpop.f32.mrf.mxu0
      %1844 = vdwg.mxu0
      %v1845 = vadd.f32 %v1506, %v1783
      %v1846 = vadd.f32 %v1509, %v1786
      %v1847 = vadd.f32 %v1514, %v1791
      %v1848 = vadd.f32 %v1517, %v1794
      %v1849 = vadd.f32 %v1522, %v1799
      %v1850 = vadd.f32 %v1525, %v1802
      %v1851 = vadd.f32 %v1530, %v1807
      %v1852 = vadd.f32 %v1533, %v1810
      %v1853 = vadd.f32 %v1538, %v1815
      %v1854 = vadd.f32 %v1541, %v1818
      %v1855 = vadd.f32 %v1546, %v1823
      %v1856 = vadd.f32 %v1549, %v1826
      %v1857 = vadd.f32 %v1554, %v1831
      %v1858 = vadd.f32 %v1557, %v1834
      %v1859 = vadd.f32 %v1562, %v1839
      %v1860 = vadd.f32 %v1565, %v1842
      %v1861 = vld [vmem:[%s817] sm:$0xf]
      %v1862 = vld [vmem:[%s817 + $0x4] sm:$0xf]
      %v1863 = vld [vmem:[%s817 + $0xc] sm:$0xf]
      %v1864 = vld [vmem:[%s817 + $0x10] sm:$0xf]
      %v1865 = vld [vmem:[%s817 + $0x18] sm:$0xf]
      %v1866 = vld [vmem:[%s817 + $0x1c] sm:$0xf]
      %v1867 = vld [vmem:[%s817 + $0x24] sm:$0xf]
      %v1868 = vld [vmem:[%s817 + $0x28] sm:$0xf]
      %v1869 = vld [vmem:[%s817 + $0x30] sm:$0xf]
      %v1870 = vld [vmem:[%s817 + $0x34] sm:$0xf]
      %v1871 = vld [vmem:[%s817 + $0x3c] sm:$0xf]
      %v1872 = vld [vmem:[%s817 + $0x40] sm:$0xf]
      %v1873 = vld [vmem:[%s817 + $0x48] sm:$0xf]
      %v1874 = vld [vmem:[%s817 + $0x4c] sm:$0xf]
      %v1875 = vld [vmem:[%s817 + $0x54] sm:$0xf]
      %v1876 = vld [vmem:[%s817 + $0x58] sm:$0xf]
      %s1877 = scalar_lea.vmem %s3, 192
      %v1878 = vld [vmem:[%s1877] sm:$0xf]
      %v1879 = vld [vmem:[%s1877 + $0x4] sm:$0xf]
      %v1880 = vld [vmem:[%s1877 + $0x8] sm:$0xf]
      %v1881 = vld [vmem:[%s1877 + $0xc] sm:$0xf]
      %v1882 = vld [vmem:[%s1877 + $0x10] sm:$0xf]
      %v1883 = vld [vmem:[%s1877 + $0x14] sm:$0xf]
      %v1884 = vld [vmem:[%s1877 + $0x18] sm:$0xf]
      %v1885 = vld [vmem:[%s1877 + $0x1c] sm:$0xf]
      %v1886 = vld [vmem:[%s1877 + $0x20] sm:$0xf]
      %v1887 = vld [vmem:[%s1877 + $0x24] sm:$0xf]
      %v1888 = vld [vmem:[%s1877 + $0x28] sm:$0xf]
      %v1889 = vld [vmem:[%s1877 + $0x2c] sm:$0xf]
      %v1890 = vld [vmem:[%s1877 + $0x30] sm:$0xf]
      %v1891 = vld [vmem:[%s1877 + $0x34] sm:$0xf]
      %v1892 = vld [vmem:[%s1877 + $0x38] sm:$0xf]
      %v1893 = vld [vmem:[%s1877 + $0x3c] sm:$0xf]
      %v1910 = vunpack.c.l.b16 %v1861
      %v1911 = vunpack.c.l.b16 %v1862
      %v1912 = vunpack.c.l.b16 %v1863
      %v1913 = vunpack.c.l.b16 %v1864
      %v1914 = vunpack.c.l.b16 %v1865
      %v1915 = vunpack.c.l.b16 %v1866
      %v1916 = vunpack.c.l.b16 %v1867
      %v1917 = vunpack.c.l.b16 %v1868
      %v1918 = vunpack.c.l.b16 %v1869
      %v1919 = vunpack.c.l.b16 %v1870
      %v1920 = vunpack.c.l.b16 %v1871
      %v1921 = vunpack.c.l.b16 %v1872
      %v1922 = vunpack.c.l.b16 %v1873
      %v1923 = vunpack.c.l.b16 %v1874
      %v1924 = vunpack.c.l.b16 %v1875
      %v1925 = vunpack.c.l.b16 %v1876
      %v1926 = vpack.c.b16 %v1911, %v1910
      %v1927 = vpack.c.b16 %v1913, %v1912
      %v1928 = vpack.c.b16 %v1915, %v1914
      %v1929 = vpack.c.b16 %v1917, %v1916
      %v1930 = vpack.c.b16 %v1919, %v1918
      %v1931 = vpack.c.b16 %v1921, %v1920
      %v1932 = vpack.c.b16 %v1923, %v1922
      %v1933 = vpack.c.b16 %v1925, %v1924
      %v1958 = vunpack.c.l.b16 %v1878
      %v1959 = vunpack.c.l.b16 %v1879
      %v1960 = vunpack.c.l.b16 %v1880
      %v1961 = vunpack.c.l.b16 %v1881
      %v1962 = vunpack.c.l.b16 %v1882
      %v1963 = vunpack.c.l.b16 %v1883
      %v1964 = vunpack.c.l.b16 %v1884
      %v1965 = vunpack.c.l.b16 %v1885
      %v1966 = vunpack.c.l.b16 %v1886
      %v1967 = vunpack.c.l.b16 %v1887
      %v1968 = vunpack.c.l.b16 %v1888
      %v1969 = vunpack.c.l.b16 %v1889
      %v1970 = vunpack.c.l.b16 %v1890
      %v1971 = vunpack.c.l.b16 %v1891
      %v1972 = vunpack.c.l.b16 %v1892
      %v1973 = vunpack.c.l.b16 %v1893
      %v1974 = vpack.c.b16 %v1959, %v1958
      %v1975 = vpack.c.b16 %v1961, %v1960
      %v1976 = vpack.c.b16 %v1963, %v1962
      %v1977 = vpack.c.b16 %v1965, %v1964
      %v1978 = vpack.c.b16 %v1967, %v1966
      %v1979 = vpack.c.b16 %v1969, %v1968
      %v1980 = vpack.c.b16 %v1971, %v1970
      %v1981 = vpack.c.b16 %v1973, %v1972
      %1990 = vmatprep.subr.bf16.mxu0 0
      %1991 = vmatpush1.bf16.msra.mxu0 %v1981
      %1992 = vmatprep.subr.bf16.mxu0 0
      %1993 = vmatpush1.bf16.msra.mxu0 %v1980
      %1994 = vmatprep.subr.bf16.mxu0 0
      %1995 = vmatpush1.bf16.msra.mxu0 %v1979
      %1996 = vmatprep.subr.bf16.mxu0 0
      %1997 = vmatpush1.bf16.msra.mxu0 %v1978
      %1998 = vmatprep.subr.bf16.mxu0 0
      %1999 = vmatpush1.bf16.msra.mxu0 %v1977
      %2000 = vmatprep.subr.bf16.mxu0 0
      %2001 = vmatpush1.bf16.msra.mxu0 %v1976
      %2002 = vmatprep.subr.bf16.mxu0 0
      %2003 = vmatpush1.bf16.msra.mxu0 %v1975
      %2004 = vmatprep.subr.bf16.mxu0 0
      %2005 = vmatpush1.bf16.msra.mxu0 %v1974
      %2006 = vmatprep.subr.bf16.mxu0 0
      %2007 = vmatpush2.bf16.msra.mxu0 0
      %2008 = vmatprep.subr.bf16.mxu0 0
      %2009 = vmatpush2.bf16.msra.mxu0 0
      %2010 = vmatprep.subr.bf16.mxu0 0
      %2011 = vmatpush2.bf16.msra.mxu0 0
      %2012 = vmatprep.subr.bf16.mxu0 0
      %2013 = vmatpush2.bf16.msra.mxu0 0
      %2014 = vmatprep.subr.bf16.mxu0 0
      %2015 = vmatpush2.bf16.msra.mxu0 0
      %2016 = vmatprep.subr.bf16.mxu0 0
      %2017 = vmatpush2.bf16.msra.mxu0 0
      %2018 = vmatprep.subr.bf16.mxu0 0
      %2019 = vmatpush2.bf16.msra.mxu0 0
      %2020 = vmatprep.subr.bf16.mxu0 0
      %2021 = vmatpush2.bf16.msra.mxu0 0
      %2022 = vmatprep.mubr.bf16.mxu0 0
      %2023 = vmatmul.mubr.bf16.gmra.mxu0 %v1926
      %v2024 = vpop.f32.mrf.mxu0
      %v2025 = vadd.f32 0.0, %v2024
      %v2026 = vpop.f32.mrf.mxu0
      %v2027 = vpop.f32.mrf.mxu0
      %v2028 = vadd.f32 0.0, %v2027
      %v2029 = vpop.f32.mrf.mxu0
      %2030 = vmatprep.mubr.bf16.mxu0 0
      %2031 = vmatmul.mubr.bf16.gmra.mxu0 %v1927
      %v2032 = vpop.f32.mrf.mxu0
      %v2033 = vadd.f32 0.0, %v2032
      %v2034 = vpop.f32.mrf.mxu0
      %v2035 = vpop.f32.mrf.mxu0
      %v2036 = vadd.f32 0.0, %v2035
      %v2037 = vpop.f32.mrf.mxu0
      %2038 = vmatprep.mubr.bf16.mxu0 0
      %2039 = vmatmul.mubr.bf16.gmra.mxu0 %v1928
      %v2040 = vpop.f32.mrf.mxu0
      %v2041 = vadd.f32 0.0, %v2040
      %v2042 = vpop.f32.mrf.mxu0
      %v2043 = vpop.f32.mrf.mxu0
      %v2044 = vadd.f32 0.0, %v2043
      %v2045 = vpop.f32.mrf.mxu0
      %2046 = vmatprep.mubr.bf16.mxu0 0
      %2047 = vmatmul.mubr.bf16.gmra.mxu0 %v1929
      %v2048 = vpop.f32.mrf.mxu0
      %v2049 = vadd.f32 0.0, %v2048
      %v2050 = vpop.f32.mrf.mxu0
      %v2051 = vpop.f32.mrf.mxu0
      %v2052 = vadd.f32 0.0, %v2051
      %v2053 = vpop.f32.mrf.mxu0
      %2054 = vmatprep.mubr.bf16.mxu0 0
      %2055 = vmatmul.mubr.bf16.gmra.mxu0 %v1930
      %v2056 = vpop.f32.mrf.mxu0
      %v2057 = vadd.f32 0.0, %v2056
      %v2058 = vpop.f32.mrf.mxu0
      %v2059 = vpop.f32.mrf.mxu0
      %v2060 = vadd.f32 0.0, %v2059
      %v2061 = vpop.f32.mrf.mxu0
      %2062 = vmatprep.mubr.bf16.mxu0 0
      %2063 = vmatmul.mubr.bf16.gmra.mxu0 %v1931
      %v2064 = vpop.f32.mrf.mxu0
      %v2065 = vadd.f32 0.0, %v2064
      %v2066 = vpop.f32.mrf.mxu0
      %v2067 = vpop.f32.mrf.mxu0
      %v2068 = vadd.f32 0.0, %v2067
      %v2069 = vpop.f32.mrf.mxu0
      %2070 = vmatprep.mubr.bf16.mxu0 0
      %2071 = vmatmul.mubr.bf16.gmra.mxu0 %v1932
      %v2072 = vpop.f32.mrf.mxu0
      %v2073 = vadd.f32 0.0, %v2072
      %v2074 = vpop.f32.mrf.mxu0
      %v2075 = vpop.f32.mrf.mxu0
      %v2076 = vadd.f32 0.0, %v2075
      %v2077 = vpop.f32.mrf.mxu0
      %2078 = vmatprep.mubr.bf16.mxu0 0
      %2079 = vmatmul.mubr.bf16.gmra.mxu0 %v1933
      %v2080 = vpop.f32.mrf.mxu0
      %v2081 = vadd.f32 0.0, %v2080
      %v2082 = vpop.f32.mrf.mxu0
      %v2083 = vpop.f32.mrf.mxu0
      %v2084 = vadd.f32 0.0, %v2083
      %v2085 = vpop.f32.mrf.mxu0
      %2086 = vdwg.mxu0
      %v2087 = vadd.f32 %v1845, %v2025
      %v2088 = vadd.f32 %v1846, %v2028
      %v2089 = vadd.f32 %v1847, %v2033
      %v2090 = vadd.f32 %v1848, %v2036
      %v2091 = vadd.f32 %v1849, %v2041
      %v2092 = vadd.f32 %v1850, %v2044
      %v2093 = vadd.f32 %v1851, %v2049
      %v2094 = vadd.f32 %v1852, %v2052
      %v2095 = vadd.f32 %v1853, %v2057
      %v2096 = vadd.f32 %v1854, %v2060
      %v2097 = vadd.f32 %v1855, %v2065
      %v2098 = vadd.f32 %v1856, %v2068
      %v2099 = vadd.f32 %v1857, %v2073
      %v2100 = vadd.f32 %v1858, %v2076
      %v2101 = vadd.f32 %v1859, %v2081
      %v2102 = vadd.f32 %v1860, %v2084
      %v2103 = vld [vmem:[%s817] sm:$0xf]
      %v2104 = vld [vmem:[%s817 + $0x4] sm:$0xf]
      %v2105 = vld [vmem:[%s817 + $0x8] sm:$0x1]
      %v2106 = vld [vmem:[%s817 + $0xc] sm:$0xf]
      %v2107 = vld [vmem:[%s817 + $0x10] sm:$0xf]
      %v2108 = vld [vmem:[%s817 + $0x14] sm:$0x1]
      %v2109 = vld [vmem:[%s817 + $0x18] sm:$0xf]
      %v2110 = vld [vmem:[%s817 + $0x1c] sm:$0xf]
      %v2111 = vld [vmem:[%s817 + $0x20] sm:$0x1]
      %v2112 = vld [vmem:[%s817 + $0x24] sm:$0xf]
      %v2113 = vld [vmem:[%s817 + $0x28] sm:$0xf]
      %v2114 = vld [vmem:[%s817 + $0x2c] sm:$0x1]
      %v2115 = vld [vmem:[%s817 + $0x30] sm:$0xf]
      %v2116 = vld [vmem:[%s817 + $0x34] sm:$0xf]
      %v2117 = vld [vmem:[%s817 + $0x38] sm:$0x1]
      %v2118 = vld [vmem:[%s817 + $0x3c] sm:$0xf]
      %v2119 = vld [vmem:[%s817 + $0x40] sm:$0xf]
      %v2120 = vld [vmem:[%s817 + $0x44] sm:$0x1]
      %v2121 = vld [vmem:[%s817 + $0x48] sm:$0xf]
      %v2122 = vld [vmem:[%s817 + $0x4c] sm:$0xf]
      %v2123 = vld [vmem:[%s817 + $0x50] sm:$0x1]
      %v2124 = vld [vmem:[%s817 + $0x54] sm:$0xf]
      %v2125 = vld [vmem:[%s817 + $0x58] sm:$0xf]
      %v2126 = vld [vmem:[%s817 + $0x5c] sm:$0x1]
      %v2128 = vshrl.u32 %v2103, 16
      %v2130 = vrot.slane %v2128, 4
      %v2131 = vshll.u32 %v2103, 16
      %v2133 = vrot.slane %v2131, 5
      %v2134 = vor.u32 %v2130, %v2133
      %v2135 = vrot.slane %v2134, 4
      %v2137 = vshll.u32 %v2104, 16
      %v2139 = vrot.slane %v2137, 5
      %v2140 = vsel %vm988, %v2135, %v2139
      %v2141 = vshrl.u32 %v2104, 16
      %v2143 = vrot.slane %v2141, 4
      %v2144 = vor.u32 %v2143, %v2139
      %v2145 = vrot.slane %v2144, 4
      %v2147 = vshll.u32 %v2105, 16
      %v2149 = vrot.slane %v2147, 5
      %v2150 = vsel %vm988, %v2145, %v2149
      %v2152 = vshrl.u32 %v2106, 16
      %v2154 = vrot.slane %v2152, 4
      %v2155 = vshll.u32 %v2106, 16
      %v2157 = vrot.slane %v2155, 5
      %v2158 = vor.u32 %v2154, %v2157
      %v2159 = vrot.slane %v2158, 4
      %v2161 = vshll.u32 %v2107, 16
      %v2163 = vrot.slane %v2161, 5
      %v2164 = vsel %vm988, %v2159, %v2163
      %v2165 = vshrl.u32 %v2107, 16
      %v2167 = vrot.slane %v2165, 4
      %v2168 = vor.u32 %v2167, %v2163
      %v2169 = vrot.slane %v2168, 4
      %v2171 = vshll.u32 %v2108, 16
      %v2173 = vrot.slane %v2171, 5
      %v2174 = vsel %vm988, %v2169, %v2173
      %v2176 = vshrl.u32 %v2109, 16
      %v2178 = vrot.slane %v2176, 4
      %v2179 = vshll.u32 %v2109, 16
      %v2181 = vrot.slane %v2179, 5
      %v2182 = vor.u32 %v2178, %v2181
      %v2183 = vrot.slane %v2182, 4
      %v2185 = vshll.u32 %v2110, 16
      %v2187 = vrot.slane %v2185, 5
      %v2188 = vsel %vm988, %v2183, %v2187
      %v2189 = vshrl.u32 %v2110, 16
      %v2191 = vrot.slane %v2189, 4
      %v2192 = vor.u32 %v2191, %v2187
      %v2193 = vrot.slane %v2192, 4
      %v2195 = vshll.u32 %v2111, 16
      %v2197 = vrot.slane %v2195, 5
      %v2198 = vsel %vm988, %v2193, %v2197
      %v2200 = vshrl.u32 %v2112, 16
      %v2202 = vrot.slane %v2200, 4
      %v2203 = vshll.u32 %v2112, 16
      %v2205 = vrot.slane %v2203, 5
      %v2206 = vor.u32 %v2202, %v2205
      %v2207 = vrot.slane %v2206, 4
      %v2209 = vshll.u32 %v2113, 16
      %v2211 = vrot.slane %v2209, 5
      %v2212 = vsel %vm988, %v2207, %v2211
      %v2213 = vshrl.u32 %v2113, 16
      %v2215 = vrot.slane %v2213, 4
      %v2216 = vor.u32 %v2215, %v2211
      %v2217 = vrot.slane %v2216, 4
      %v2219 = vshll.u32 %v2114, 16
      %v2221 = vrot.slane %v2219, 5
      %v2222 = vsel %vm988, %v2217, %v2221
      %v2224 = vshrl.u32 %v2115, 16
      %v2226 = vrot.slane %v2224, 4
      %v2227 = vshll.u32 %v2115, 16
      %v2229 = vrot.slane %v2227, 5
      %v2230 = vor.u32 %v2226, %v2229
      %v2231 = vrot.slane %v2230, 4
      %v2233 = vshll.u32 %v2116, 16
      %v2235 = vrot.slane %v2233, 5
      %v2236 = vsel %vm988, %v2231, %v2235
      %v2237 = vshrl.u32 %v2116, 16
      %v2239 = vrot.slane %v2237, 4
      %v2240 = vor.u32 %v2239, %v2235
      %v2241 = vrot.slane %v2240, 4
      %v2243 = vshll.u32 %v2117, 16
      %v2245 = vrot.slane %v2243, 5
      %v2246 = vsel %vm988, %v2241, %v2245
      %v2248 = vshrl.u32 %v2118, 16
      %v2250 = vrot.slane %v2248, 4
      %v2251 = vshll.u32 %v2118, 16
      %v2253 = vrot.slane %v2251, 5
      %v2254 = vor.u32 %v2250, %v2253
      %v2255 = vrot.slane %v2254, 4
      %v2257 = vshll.u32 %v2119, 16
      %v2259 = vrot.slane %v2257, 5
      %v2260 = vsel %vm988, %v2255, %v2259
      %v2261 = vshrl.u32 %v2119, 16
      %v2263 = vrot.slane %v2261, 4
      %v2264 = vor.u32 %v2263, %v2259
      %v2265 = vrot.slane %v2264, 4
      %v2267 = vshll.u32 %v2120, 16
      %v2269 = vrot.slane %v2267, 5
      %v2270 = vsel %vm988, %v2265, %v2269
      %v2272 = vshrl.u32 %v2121, 16
      %v2274 = vrot.slane %v2272, 4
      %v2275 = vshll.u32 %v2121, 16
      %v2277 = vrot.slane %v2275, 5
      %v2278 = vor.u32 %v2274, %v2277
      %v2279 = vrot.slane %v2278, 4
      %v2281 = vshll.u32 %v2122, 16
      %v2283 = vrot.slane %v2281, 5
      %v2284 = vsel %vm988, %v2279, %v2283
      %v2285 = vshrl.u32 %v2122, 16
      %v2287 = vrot.slane %v2285, 4
      %v2288 = vor.u32 %v2287, %v2283
      %v2289 = vrot.slane %v2288, 4
      %v2291 = vshll.u32 %v2123, 16
      %v2293 = vrot.slane %v2291, 5
      %v2294 = vsel %vm988, %v2289, %v2293
      %v2296 = vshrl.u32 %v2124, 16
      %v2298 = vrot.slane %v2296, 4
      %v2299 = vshll.u32 %v2124, 16
      %v2301 = vrot.slane %v2299, 5
      %v2302 = vor.u32 %v2298, %v2301
      %v2303 = vrot.slane %v2302, 4
      %v2305 = vshll.u32 %v2125, 16
      %v2307 = vrot.slane %v2305, 5
      %v2308 = vsel %vm988, %v2303, %v2307
      %v2309 = vshrl.u32 %v2125, 16
      %v2311 = vrot.slane %v2309, 4
      %v2312 = vor.u32 %v2311, %v2307
      %v2313 = vrot.slane %v2312, 4
      %v2315 = vshll.u32 %v2126, 16
      %v2317 = vrot.slane %v2315, 5
      %v2318 = vsel %vm988, %v2313, %v2317
      %s2319 = scalar_lea.vmem %s3, 256
      %v2320 = vld [vmem:[%s2319] sm:$0xf]
      %v2321 = vld [vmem:[%s2319 + $0x4] sm:$0xf]
      %v2322 = vld [vmem:[%s2319 + $0x8] sm:$0xf]
      %v2323 = vld [vmem:[%s2319 + $0xc] sm:$0xf]
      %v2324 = vld [vmem:[%s2319 + $0x10] sm:$0xf]
      %v2325 = vld [vmem:[%s2319 + $0x14] sm:$0xf]
      %v2326 = vld [vmem:[%s2319 + $0x18] sm:$0xf]
      %v2327 = vld [vmem:[%s2319 + $0x1c] sm:$0xf]
      %v2328 = vld [vmem:[%s2319 + $0x20] sm:$0xf]
      %v2329 = vld [vmem:[%s2319 + $0x24] sm:$0xf]
      %v2330 = vld [vmem:[%s2319 + $0x28] sm:$0xf]
      %v2331 = vld [vmem:[%s2319 + $0x2c] sm:$0xf]
      %v2332 = vld [vmem:[%s2319 + $0x30] sm:$0xf]
      %v2333 = vld [vmem:[%s2319 + $0x34] sm:$0xf]
      %v2334 = vld [vmem:[%s2319 + $0x38] sm:$0xf]
      %v2335 = vld [vmem:[%s2319 + $0x3c] sm:$0xf]
      %v2336 = vunpack.c.l.b16 %v2140
      %v2337 = vunpack.c.l.b16 %v2150
      %v2338 = vunpack.c.l.b16 %v2164
      %v2339 = vunpack.c.l.b16 %v2174
      %v2340 = vunpack.c.l.b16 %v2188
      %v2341 = vunpack.c.l.b16 %v2198
      %v2342 = vunpack.c.l.b16 %v2212
      %v2343 = vunpack.c.l.b16 %v2222
      %v2344 = vunpack.c.l.b16 %v2236
      %v2345 = vunpack.c.l.b16 %v2246
      %v2346 = vunpack.c.l.b16 %v2260
      %v2347 = vunpack.c.l.b16 %v2270
      %v2348 = vunpack.c.l.b16 %v2284
      %v2349 = vunpack.c.l.b16 %v2294
      %v2350 = vunpack.c.l.b16 %v2308
      %v2351 = vunpack.c.l.b16 %v2318
      %v2352 = vpack.c.b16 %v2337, %v2336
      %v2353 = vpack.c.b16 %v2339, %v2338
      %v2354 = vpack.c.b16 %v2341, %v2340
      %v2355 = vpack.c.b16 %v2343, %v2342
      %v2356 = vpack.c.b16 %v2345, %v2344
      %v2357 = vpack.c.b16 %v2347, %v2346
      %v2358 = vpack.c.b16 %v2349, %v2348
      %v2359 = vpack.c.b16 %v2351, %v2350
      %v2384 = vunpack.c.l.b16 %v2320
      %v2385 = vunpack.c.l.b16 %v2321
      %v2386 = vunpack.c.l.b16 %v2322
      %v2387 = vunpack.c.l.b16 %v2323
      %v2388 = vunpack.c.l.b16 %v2324
      %v2389 = vunpack.c.l.b16 %v2325
      %v2390 = vunpack.c.l.b16 %v2326
      %v2391 = vunpack.c.l.b16 %v2327
      %v2392 = vunpack.c.l.b16 %v2328
      %v2393 = vunpack.c.l.b16 %v2329
      %v2394 = vunpack.c.l.b16 %v2330
      %v2395 = vunpack.c.l.b16 %v2331
      %v2396 = vunpack.c.l.b16 %v2332
      %v2397 = vunpack.c.l.b16 %v2333
      %v2398 = vunpack.c.l.b16 %v2334
      %v2399 = vunpack.c.l.b16 %v2335
      %v2400 = vpack.c.b16 %v2385, %v2384
      %v2401 = vpack.c.b16 %v2387, %v2386
      %v2402 = vpack.c.b16 %v2389, %v2388
      %v2403 = vpack.c.b16 %v2391, %v2390
      %v2404 = vpack.c.b16 %v2393, %v2392
      %v2405 = vpack.c.b16 %v2395, %v2394
      %v2406 = vpack.c.b16 %v2397, %v2396
      %v2407 = vpack.c.b16 %v2399, %v2398
      %2416 = vmatprep.subr.bf16.mxu0 0
      %2417 = vmatpush1.bf16.msra.mxu0 %v2407
      %2418 = vmatprep.subr.bf16.mxu0 0
      %2419 = vmatpush1.bf16.msra.mxu0 %v2406
      %2420 = vmatprep.subr.bf16.mxu0 0
      %2421 = vmatpush1.bf16.msra.mxu0 %v2405
      %2422 = vmatprep.subr.bf16.mxu0 0
      %2423 = vmatpush1.bf16.msra.mxu0 %v2404
      %2424 = vmatprep.subr.bf16.mxu0 0
      %2425 = vmatpush1.bf16.msra.mxu0 %v2403
      %2426 = vmatprep.subr.bf16.mxu0 0
      %2427 = vmatpush1.bf16.msra.mxu0 %v2402
      %2428 = vmatprep.subr.bf16.mxu0 0
      %2429 = vmatpush1.bf16.msra.mxu0 %v2401
      %2430 = vmatprep.subr.bf16.mxu0 0
      %2431 = vmatpush1.bf16.msra.mxu0 %v2400
      %2432 = vmatprep.subr.bf16.mxu0 0
      %2433 = vmatpush2.bf16.msra.mxu0 0
      %2434 = vmatprep.subr.bf16.mxu0 0
      %2435 = vmatpush2.bf16.msra.mxu0 0
      %2436 = vmatprep.subr.bf16.mxu0 0
      %2437 = vmatpush2.bf16.msra.mxu0 0
      %2438 = vmatprep.subr.bf16.mxu0 0
      %2439 = vmatpush2.bf16.msra.mxu0 0
      %2440 = vmatprep.subr.bf16.mxu0 0
      %2441 = vmatpush2.bf16.msra.mxu0 0
      %2442 = vmatprep.subr.bf16.mxu0 0
      %2443 = vmatpush2.bf16.msra.mxu0 0
      %2444 = vmatprep.subr.bf16.mxu0 0
      %2445 = vmatpush2.bf16.msra.mxu0 0
      %2446 = vmatprep.subr.bf16.mxu0 0
      %2447 = vmatpush2.bf16.msra.mxu0 0
      %2448 = vmatprep.mubr.bf16.mxu0 0
      %2449 = vmatmul.mubr.bf16.gmra.mxu0 %v2352
      %v2450 = vpop.f32.mrf.mxu0
      %v2451 = vadd.f32 0.0, %v2450
      %v2452 = vpop.f32.mrf.mxu0
      %v2453 = vpop.f32.mrf.mxu0
      %v2454 = vadd.f32 0.0, %v2453
      %v2455 = vpop.f32.mrf.mxu0
      %2456 = vmatprep.mubr.bf16.mxu0 0
      %2457 = vmatmul.mubr.bf16.gmra.mxu0 %v2353
      %v2458 = vpop.f32.mrf.mxu0
      %v2459 = vadd.f32 0.0, %v2458
      %v2460 = vpop.f32.mrf.mxu0
      %v2461 = vpop.f32.mrf.mxu0
      %v2462 = vadd.f32 0.0, %v2461
      %v2463 = vpop.f32.mrf.mxu0
      %2464 = vmatprep.mubr.bf16.mxu0 0
      %2465 = vmatmul.mubr.bf16.gmra.mxu0 %v2354
      %v2466 = vpop.f32.mrf.mxu0
      %v2467 = vadd.f32 0.0, %v2466
      %v2468 = vpop.f32.mrf.mxu0
      %v2469 = vpop.f32.mrf.mxu0
      %v2470 = vadd.f32 0.0, %v2469
      %v2471 = vpop.f32.mrf.mxu0
      %2472 = vmatprep.mubr.bf16.mxu0 0
      %2473 = vmatmul.mubr.bf16.gmra.mxu0 %v2355
      %v2474 = vpop.f32.mrf.mxu0
      %v2475 = vadd.f32 0.0, %v2474
      %v2476 = vpop.f32.mrf.mxu0
      %v2477 = vpop.f32.mrf.mxu0
      %v2478 = vadd.f32 0.0, %v2477
      %v2479 = vpop.f32.mrf.mxu0
      %2480 = vmatprep.mubr.bf16.mxu0 0
      %2481 = vmatmul.mubr.bf16.gmra.mxu0 %v2356
      %v2482 = vpop.f32.mrf.mxu0
      %v2483 = vadd.f32 0.0, %v2482
      %v2484 = vpop.f32.mrf.mxu0
      %v2485 = vpop.f32.mrf.mxu0
      %v2486 = vadd.f32 0.0, %v2485
      %v2487 = vpop.f32.mrf.mxu0
      %2488 = vmatprep.mubr.bf16.mxu0 0
      %2489 = vmatmul.mubr.bf16.gmra.mxu0 %v2357
      %v2490 = vpop.f32.mrf.mxu0
      %v2491 = vadd.f32 0.0, %v2490
      %v2492 = vpop.f32.mrf.mxu0
      %v2493 = vpop.f32.mrf.mxu0
      %v2494 = vadd.f32 0.0, %v2493
      %v2495 = vpop.f32.mrf.mxu0
      %2496 = vmatprep.mubr.bf16.mxu0 0
      %2497 = vmatmul.mubr.bf16.gmra.mxu0 %v2358
      %v2498 = vpop.f32.mrf.mxu0
      %v2499 = vadd.f32 0.0, %v2498
      %v2500 = vpop.f32.mrf.mxu0
      %v2501 = vpop.f32.mrf.mxu0
      %v2502 = vadd.f32 0.0, %v2501
      %v2503 = vpop.f32.mrf.mxu0
      %2504 = vmatprep.mubr.bf16.mxu0 0
      %2505 = vmatmul.mubr.bf16.gmra.mxu0 %v2359
      %v2506 = vpop.f32.mrf.mxu0
      %v2507 = vadd.f32 0.0, %v2506
      %v2508 = vpop.f32.mrf.mxu0
      %v2509 = vpop.f32.mrf.mxu0
      %v2510 = vadd.f32 0.0, %v2509
      %v2511 = vpop.f32.mrf.mxu0
      %2512 = vdwg.mxu0
      %v2513 = vadd.f32 %v2087, %v2451
      %v2514 = vadd.f32 %v2088, %v2454
      %v2515 = vadd.f32 %v2089, %v2459
      %v2516 = vadd.f32 %v2090, %v2462
      %v2517 = vadd.f32 %v2091, %v2467
      %v2518 = vadd.f32 %v2092, %v2470
      %v2519 = vadd.f32 %v2093, %v2475
      %v2520 = vadd.f32 %v2094, %v2478
      %v2521 = vadd.f32 %v2095, %v2483
      %v2522 = vadd.f32 %v2096, %v2486
      %v2523 = vadd.f32 %v2097, %v2491
      %v2524 = vadd.f32 %v2098, %v2494
      %v2525 = vadd.f32 %v2099, %v2499
      %v2526 = vadd.f32 %v2100, %v2502
      %v2527 = vadd.f32 %v2101, %v2507
      %v2528 = vadd.f32 %v2102, %v2510
      %v2529 = vld [vmem:[%s817] sm:$0xe]
      %v2530 = vld [vmem:[%s817 + $0xc] sm:$0xe]
      %v2531 = vld [vmem:[%s817 + $0x18] sm:$0xe]
      %v2532 = vld [vmem:[%s817 + $0x24] sm:$0xe]
      %v2533 = vld [vmem:[%s817 + $0x30] sm:$0xe]
      %v2534 = vld [vmem:[%s817 + $0x3c] sm:$0xe]
      %v2535 = vld [vmem:[%s817 + $0x48] sm:$0xe]
      %v2536 = vld [vmem:[%s817 + $0x54] sm:$0xe]
      %v2561 = vrot.slane %v2529, 5
      %v2562 = vrot.slane %v2561, 4
      %v2563 = vrot.slane %v2104, 5
      %v2564 = vsel %vm1594, %v2562, %v2563
      %v2565 = vrot.slane %v2563, 4
      %v2566 = vrot.slane %v2105, 5
      %v2567 = vsel %vm1594, %v2565, %v2566
      %v2568 = vrot.slane %v2530, 5
      %v2569 = vrot.slane %v2568, 4
      %v2570 = vrot.slane %v2107, 5
      %v2571 = vsel %vm1594, %v2569, %v2570
      %v2572 = vrot.slane %v2570, 4
      %v2573 = vrot.slane %v2108, 5
      %v2574 = vsel %vm1594, %v2572, %v2573
      %v2575 = vrot.slane %v2531, 5
      %v2576 = vrot.slane %v2575, 4
      %v2577 = vrot.slane %v2110, 5
      %v2578 = vsel %vm1594, %v2576, %v2577
      %v2579 = vrot.slane %v2577, 4
      %v2580 = vrot.slane %v2111, 5
      %v2581 = vsel %vm1594, %v2579, %v2580
      %v2582 = vrot.slane %v2532, 5
      %v2583 = vrot.slane %v2582, 4
      %v2584 = vrot.slane %v2113, 5
      %v2585 = vsel %vm1594, %v2583, %v2584
      %v2586 = vrot.slane %v2584, 4
      %v2587 = vrot.slane %v2114, 5
      %v2588 = vsel %vm1594, %v2586, %v2587
      %v2589 = vrot.slane %v2533, 5
      %v2590 = vrot.slane %v2589, 4
      %v2591 = vrot.slane %v2116, 5
      %v2592 = vsel %vm1594, %v2590, %v2591
      %v2593 = vrot.slane %v2591, 4
      %v2594 = vrot.slane %v2117, 5
      %v2595 = vsel %vm1594, %v2593, %v2594
      %v2596 = vrot.slane %v2534, 5
      %v2597 = vrot.slane %v2596, 4
      %v2598 = vrot.slane %v2119, 5
      %v2599 = vsel %vm1594, %v2597, %v2598
      %v2600 = vrot.slane %v2598, 4
      %v2601 = vrot.slane %v2120, 5
      %v2602 = vsel %vm1594, %v2600, %v2601
      %v2603 = vrot.slane %v2535, 5
      %v2604 = vrot.slane %v2603, 4
      %v2605 = vrot.slane %v2122, 5
      %v2606 = vsel %vm1594, %v2604, %v2605
      %v2607 = vrot.slane %v2605, 4
      %v2608 = vrot.slane %v2123, 5
      %v2609 = vsel %vm1594, %v2607, %v2608
      %v2610 = vrot.slane %v2536, 5
      %v2611 = vrot.slane %v2610, 4
      %v2612 = vrot.slane %v2125, 5
      %v2613 = vsel %vm1594, %v2611, %v2612
      %v2614 = vrot.slane %v2612, 4
      %v2615 = vrot.slane %v2126, 5
      %v2616 = vsel %vm1594, %v2614, %v2615
      %s2617 = scalar_lea.vmem %s3, 320
      %v2618 = vld [vmem:[%s2617] sm:$0xf]
      %v2619 = vld [vmem:[%s2617 + $0x4] sm:$0xf]
      %v2620 = vld [vmem:[%s2617 + $0x8] sm:$0xf]
      %v2621 = vld [vmem:[%s2617 + $0xc] sm:$0xf]
      %v2622 = vld [vmem:[%s2617 + $0x10] sm:$0xf]
      %v2623 = vld [vmem:[%s2617 + $0x14] sm:$0xf]
      %v2624 = vld [vmem:[%s2617 + $0x18] sm:$0xf]
      %v2625 = vld [vmem:[%s2617 + $0x1c] sm:$0xf]
      %v2626 = vld [vmem:[%s2617 + $0x20] sm:$0xf]
      %v2627 = vld [vmem:[%s2617 + $0x24] sm:$0xf]
      %v2628 = vld [vmem:[%s2617 + $0x28] sm:$0xf]
      %v2629 = vld [vmem:[%s2617 + $0x2c] sm:$0xf]
      %v2630 = vld [vmem:[%s2617 + $0x30] sm:$0xf]
      %v2631 = vld [vmem:[%s2617 + $0x34] sm:$0xf]
      %v2632 = vld [vmem:[%s2617 + $0x38] sm:$0xf]
      %v2633 = vld [vmem:[%s2617 + $0x3c] sm:$0xf]
      %v2634 = vunpack.c.l.b16 %v2564
      %v2635 = vunpack.c.l.b16 %v2567
      %v2636 = vunpack.c.l.b16 %v2571
      %v2637 = vunpack.c.l.b16 %v2574
      %v2638 = vunpack.c.l.b16 %v2578
      %v2639 = vunpack.c.l.b16 %v2581
      %v2640 = vunpack.c.l.b16 %v2585
      %v2641 = vunpack.c.l.b16 %v2588
      %v2642 = vunpack.c.l.b16 %v2592
      %v2643 = vunpack.c.l.b16 %v2595
      %v2644 = vunpack.c.l.b16 %v2599
      %v2645 = vunpack.c.l.b16 %v2602
      %v2646 = vunpack.c.l.b16 %v2606
      %v2647 = vunpack.c.l.b16 %v2609
      %v2648 = vunpack.c.l.b16 %v2613
      %v2649 = vunpack.c.l.b16 %v2616
      %v2650 = vpack.c.b16 %v2635, %v2634
      %v2651 = vpack.c.b16 %v2637, %v2636
      %v2652 = vpack.c.b16 %v2639, %v2638
      %v2653 = vpack.c.b16 %v2641, %v2640
      %v2654 = vpack.c.b16 %v2643, %v2642
      %v2655 = vpack.c.b16 %v2645, %v2644
      %v2656 = vpack.c.b16 %v2647, %v2646
      %v2657 = vpack.c.b16 %v2649, %v2648
      %v2682 = vunpack.c.l.b16 %v2618
      %v2683 = vunpack.c.l.b16 %v2619
      %v2684 = vunpack.c.l.b16 %v2620
      %v2685 = vunpack.c.l.b16 %v2621
      %v2686 = vunpack.c.l.b16 %v2622
      %v2687 = vunpack.c.l.b16 %v2623
      %v2688 = vunpack.c.l.b16 %v2624
      %v2689 = vunpack.c.l.b16 %v2625
      %v2690 = vunpack.c.l.b16 %v2626
      %v2691 = vunpack.c.l.b16 %v2627
      %v2692 = vunpack.c.l.b16 %v2628
      %v2693 = vunpack.c.l.b16 %v2629
      %v2694 = vunpack.c.l.b16 %v2630
      %v2695 = vunpack.c.l.b16 %v2631
      %v2696 = vunpack.c.l.b16 %v2632
      %v2697 = vunpack.c.l.b16 %v2633
      %v2698 = vpack.c.b16 %v2683, %v2682
      %v2699 = vpack.c.b16 %v2685, %v2684
      %v2700 = vpack.c.b16 %v2687, %v2686
      %v2701 = vpack.c.b16 %v2689, %v2688
      %v2702 = vpack.c.b16 %v2691, %v2690
      %v2703 = vpack.c.b16 %v2693, %v2692
      %v2704 = vpack.c.b16 %v2695, %v2694
      %v2705 = vpack.c.b16 %v2697, %v2696
      %2714 = vmatprep.subr.bf16.mxu0 0
      %2715 = vmatpush1.bf16.msra.mxu0 %v2705
      %2716 = vmatprep.subr.bf16.mxu0 0
      %2717 = vmatpush1.bf16.msra.mxu0 %v2704
      %2718 = vmatprep.subr.bf16.mxu0 0
      %2719 = vmatpush1.bf16.msra.mxu0 %v2703
      %2720 = vmatprep.subr.bf16.mxu0 0
      %2721 = vmatpush1.bf16.msra.mxu0 %v2702
      %2722 = vmatprep.subr.bf16.mxu0 0
      %2723 = vmatpush1.bf16.msra.mxu0 %v2701
      %2724 = vmatprep.subr.bf16.mxu0 0
      %2725 = vmatpush1.bf16.msra.mxu0 %v2700
      %2726 = vmatprep.subr.bf16.mxu0 0
      %2727 = vmatpush1.bf16.msra.mxu0 %v2699
      %2728 = vmatprep.subr.bf16.mxu0 0
      %2729 = vmatpush1.bf16.msra.mxu0 %v2698
      %2730 = vmatprep.subr.bf16.mxu0 0
      %2731 = vmatpush2.bf16.msra.mxu0 0
      %2732 = vmatprep.subr.bf16.mxu0 0
      %2733 = vmatpush2.bf16.msra.mxu0 0
      %2734 = vmatprep.subr.bf16.mxu0 0
      %2735 = vmatpush2.bf16.msra.mxu0 0
      %2736 = vmatprep.subr.bf16.mxu0 0
      %2737 = vmatpush2.bf16.msra.mxu0 0
      %2738 = vmatprep.subr.bf16.mxu0 0
      %2739 = vmatpush2.bf16.msra.mxu0 0
      %2740 = vmatprep.subr.bf16.mxu0 0
      %2741 = vmatpush2.bf16.msra.mxu0 0
      %2742 = vmatprep.subr.bf16.mxu0 0
      %2743 = vmatpush2.bf16.msra.mxu0 0
      %2744 = vmatprep.subr.bf16.mxu0 0
      %2745 = vmatpush2.bf16.msra.mxu0 0
      %2746 = vmatprep.mubr.bf16.mxu0 0
      %2747 = vmatmul.mubr.bf16.gmra.mxu0 %v2650
      %v2748 = vpop.f32.mrf.mxu0
      %v2749 = vadd.f32 0.0, %v2748
      %v2750 = vpop.f32.mrf.mxu0
      %v2751 = vpop.f32.mrf.mxu0
      %v2752 = vadd.f32 0.0, %v2751
      %v2753 = vpop.f32.mrf.mxu0
      %2754 = vmatprep.mubr.bf16.mxu0 0
      %2755 = vmatmul.mubr.bf16.gmra.mxu0 %v2651
      %v2756 = vpop.f32.mrf.mxu0
      %v2757 = vadd.f32 0.0, %v2756
      %v2758 = vpop.f32.mrf.mxu0
      %v2759 = vpop.f32.mrf.mxu0
      %v2760 = vadd.f32 0.0, %v2759
      %v2761 = vpop.f32.mrf.mxu0
      %2762 = vmatprep.mubr.bf16.mxu0 0
      %2763 = vmatmul.mubr.bf16.gmra.mxu0 %v2652
      %v2764 = vpop.f32.mrf.mxu0
      %v2765 = vadd.f32 0.0, %v2764
      %v2766 = vpop.f32.mrf.mxu0
      %v2767 = vpop.f32.mrf.mxu0
      %v2768 = vadd.f32 0.0, %v2767
      %v2769 = vpop.f32.mrf.mxu0
      %2770 = vmatprep.mubr.bf16.mxu0 0
      %2771 = vmatmul.mubr.bf16.gmra.mxu0 %v2653
      %v2772 = vpop.f32.mrf.mxu0
      %v2773 = vadd.f32 0.0, %v2772
      %v2774 = vpop.f32.mrf.mxu0
      %v2775 = vpop.f32.mrf.mxu0
      %v2776 = vadd.f32 0.0, %v2775
      %v2777 = vpop.f32.mrf.mxu0
      %2778 = vmatprep.mubr.bf16.mxu0 0
      %2779 = vmatmul.mubr.bf16.gmra.mxu0 %v2654
      %v2780 = vpop.f32.mrf.mxu0
      %v2781 = vadd.f32 0.0, %v2780
      %v2782 = vpop.f32.mrf.mxu0
      %v2783 = vpop.f32.mrf.mxu0
      %v2784 = vadd.f32 0.0, %v2783
      %v2785 = vpop.f32.mrf.mxu0
      %2786 = vmatprep.mubr.bf16.mxu0 0
      %2787 = vmatmul.mubr.bf16.gmra.mxu0 %v2655
      %v2788 = vpop.f32.mrf.mxu0
      %v2789 = vadd.f32 0.0, %v2788
      %v2790 = vpop.f32.mrf.mxu0
      %v2791 = vpop.f32.mrf.mxu0
      %v2792 = vadd.f32 0.0, %v2791
      %v2793 = vpop.f32.mrf.mxu0
      %2794 = vmatprep.mubr.bf16.mxu0 0
      %2795 = vmatmul.mubr.bf16.gmra.mxu0 %v2656
      %v2796 = vpop.f32.mrf.mxu0
      %v2797 = vadd.f32 0.0, %v2796
      %v2798 = vpop.f32.mrf.mxu0
      %v2799 = vpop.f32.mrf.mxu0
      %v2800 = vadd.f32 0.0, %v2799
      %v2801 = vpop.f32.mrf.mxu0
      %2802 = vmatprep.mubr.bf16.mxu0 0
      %2803 = vmatmul.mubr.bf16.gmra.mxu0 %v2657
      %v2804 = vpop.f32.mrf.mxu0
      %v2805 = vadd.f32 0.0, %v2804
      %v2806 = vpop.f32.mrf.mxu0
      %v2807 = vpop.f32.mrf.mxu0
      %v2808 = vadd.f32 0.0, %v2807
      %v2809 = vpop.f32.mrf.mxu0
      %2810 = vdwg.mxu0
      %v2811 = vadd.f32 %v2513, %v2749
      %v2812 = vadd.f32 %v2514, %v2752
      %v2813 = vadd.f32 %v2515, %v2757
      %v2814 = vadd.f32 %v2516, %v2760
      %v2815 = vadd.f32 %v2517, %v2765
      %v2816 = vadd.f32 %v2518, %v2768
      %v2817 = vadd.f32 %v2519, %v2773
      %v2818 = vadd.f32 %v2520, %v2776
      %v2819 = vadd.f32 %v2521, %v2781
      %v2820 = vadd.f32 %v2522, %v2784
      %v2821 = vadd.f32 %v2523, %v2789
      %v2822 = vadd.f32 %v2524, %v2792
      %v2823 = vadd.f32 %v2525, %v2797
      %v2824 = vadd.f32 %v2526, %v2800
      %v2825 = vadd.f32 %v2527, %v2805
      %v2826 = vadd.f32 %v2528, %v2808
      %s2827 = scalar_lea.vmem [#allocation2], 24
      %v2828 = vld [vmem:[%s2827] sm:$0xf]
      %v2829 = vld [vmem:[%s2827 + $0x4] sm:$0xf]
      %v2830 = vld [vmem:[%s2827 + $0xc] sm:$0xf]
      %v2831 = vld [vmem:[%s2827 + $0x10] sm:$0xf]
      %v2832 = vld [vmem:[%s2827 + $0x18] sm:$0xf]
      %v2833 = vld [vmem:[%s2827 + $0x1c] sm:$0xf]
      %v2834 = vld [vmem:[%s2827 + $0x24] sm:$0xf]
      %v2835 = vld [vmem:[%s2827 + $0x28] sm:$0xf]
      %v2836 = vld [vmem:[%s2827 + $0x30] sm:$0xf]
      %v2837 = vld [vmem:[%s2827 + $0x34] sm:$0xf]
      %v2838 = vld [vmem:[%s2827 + $0x3c] sm:$0xf]
      %v2839 = vld [vmem:[%s2827 + $0x40] sm:$0xf]
      %v2840 = vld [vmem:[%s2827 + $0x48] sm:$0xf]
      %v2841 = vld [vmem:[%s2827 + $0x4c] sm:$0xf]
      %v2842 = vld [vmem:[%s2827 + $0x54] sm:$0xf]
      %v2843 = vld [vmem:[%s2827 + $0x58] sm:$0xf]
      %s2844 = scalar_lea.vmem %s3, 384
      %v2845 = vld [vmem:[%s2844] sm:$0xf]
      %v2846 = vld [vmem:[%s2844 + $0x4] sm:$0xf]
      %v2847 = vld [vmem:[%s2844 + $0x8] sm:$0xf]
      %v2848 = vld [vmem:[%s2844 + $0xc] sm:$0xf]
      %v2849 = vld [vmem:[%s2844 + $0x10] sm:$0xf]
      %v2850 = vld [vmem:[%s2844 + $0x14] sm:$0xf]
      %v2851 = vld [vmem:[%s2844 + $0x18] sm:$0xf]
      %v2852 = vld [vmem:[%s2844 + $0x1c] sm:$0xf]
      %v2853 = vld [vmem:[%s2844 + $0x20] sm:$0xf]
      %v2854 = vld [vmem:[%s2844 + $0x24] sm:$0xf]
      %v2855 = vld [vmem:[%s2844 + $0x28] sm:$0xf]
      %v2856 = vld [vmem:[%s2844 + $0x2c] sm:$0xf]
      %v2857 = vld [vmem:[%s2844 + $0x30] sm:$0xf]
      %v2858 = vld [vmem:[%s2844 + $0x34] sm:$0xf]
      %v2859 = vld [vmem:[%s2844 + $0x38] sm:$0xf]
      %v2860 = vld [vmem:[%s2844 + $0x3c] sm:$0xf]
      %v2877 = vunpack.c.l.b16 %v2828
      %v2878 = vunpack.c.l.b16 %v2829
      %v2879 = vunpack.c.l.b16 %v2830
      %v2880 = vunpack.c.l.b16 %v2831
      %v2881 = vunpack.c.l.b16 %v2832
      %v2882 = vunpack.c.l.b16 %v2833
      %v2883 = vunpack.c.l.b16 %v2834
      %v2884 = vunpack.c.l.b16 %v2835
      %v2885 = vunpack.c.l.b16 %v2836
      %v2886 = vunpack.c.l.b16 %v2837
      %v2887 = vunpack.c.l.b16 %v2838
      %v2888 = vunpack.c.l.b16 %v2839
      %v2889 = vunpack.c.l.b16 %v2840
      %v2890 = vunpack.c.l.b16 %v2841
      %v2891 = vunpack.c.l.b16 %v2842
      %v2892 = vunpack.c.l.b16 %v2843
      %v2893 = vpack.c.b16 %v2878, %v2877
      %v2894 = vpack.c.b16 %v2880, %v2879
      %v2895 = vpack.c.b16 %v2882, %v2881
      %v2896 = vpack.c.b16 %v2884, %v2883
      %v2897 = vpack.c.b16 %v2886, %v2885
      %v2898 = vpack.c.b16 %v2888, %v2887
      %v2899 = vpack.c.b16 %v2890, %v2889
      %v2900 = vpack.c.b16 %v2892, %v2891
      %v2925 = vunpack.c.l.b16 %v2845
      %v2926 = vunpack.c.l.b16 %v2846
      %v2927 = vunpack.c.l.b16 %v2847
      %v2928 = vunpack.c.l.b16 %v2848
      %v2929 = vunpack.c.l.b16 %v2849
      %v2930 = vunpack.c.l.b16 %v2850
      %v2931 = vunpack.c.l.b16 %v2851
      %v2932 = vunpack.c.l.b16 %v2852
      %v2933 = vunpack.c.l.b16 %v2853
      %v2934 = vunpack.c.l.b16 %v2854
      %v2935 = vunpack.c.l.b16 %v2855
      %v2936 = vunpack.c.l.b16 %v2856
      %v2937 = vunpack.c.l.b16 %v2857
      %v2938 = vunpack.c.l.b16 %v2858
      %v2939 = vunpack.c.l.b16 %v2859
      %v2940 = vunpack.c.l.b16 %v2860
      %v2941 = vpack.c.b16 %v2926, %v2925
      %v2942 = vpack.c.b16 %v2928, %v2927
      %v2943 = vpack.c.b16 %v2930, %v2929
      %v2944 = vpack.c.b16 %v2932, %v2931
      %v2945 = vpack.c.b16 %v2934, %v2933
      %v2946 = vpack.c.b16 %v2936, %v2935
      %v2947 = vpack.c.b16 %v2938, %v2937
      %v2948 = vpack.c.b16 %v2940, %v2939
      %2957 = vmatprep.subr.bf16.mxu0 0
      %2958 = vmatpush1.bf16.msra.mxu0 %v2948
      %2959 = vmatprep.subr.bf16.mxu0 0
      %2960 = vmatpush1.bf16.msra.mxu0 %v2947
      %2961 = vmatprep.subr.bf16.mxu0 0
      %2962 = vmatpush1.bf16.msra.mxu0 %v2946
      %2963 = vmatprep.subr.bf16.mxu0 0
      %2964 = vmatpush1.bf16.msra.mxu0 %v2945
      %2965 = vmatprep.subr.bf16.mxu0 0
      %2966 = vmatpush1.bf16.msra.mxu0 %v2944
      %2967 = vmatprep.subr.bf16.mxu0 0
      %2968 = vmatpush1.bf16.msra.mxu0 %v2943
      %2969 = vmatprep.subr.bf16.mxu0 0
      %2970 = vmatpush1.bf16.msra.mxu0 %v2942
      %2971 = vmatprep.subr.bf16.mxu0 0
      %2972 = vmatpush1.bf16.msra.mxu0 %v2941
      %2973 = vmatprep.subr.bf16.mxu0 0
      %2974 = vmatpush2.bf16.msra.mxu0 0
      %2975 = vmatprep.subr.bf16.mxu0 0
      %2976 = vmatpush2.bf16.msra.mxu0 0
      %2977 = vmatprep.subr.bf16.mxu0 0
      %2978 = vmatpush2.bf16.msra.mxu0 0
      %2979 = vmatprep.subr.bf16.mxu0 0
      %2980 = vmatpush2.bf16.msra.mxu0 0
      %2981 = vmatprep.subr.bf16.mxu0 0
      %2982 = vmatpush2.bf16.msra.mxu0 0
      %2983 = vmatprep.subr.bf16.mxu0 0
      %2984 = vmatpush2.bf16.msra.mxu0 0
      %2985 = vmatprep.subr.bf16.mxu0 0
      %2986 = vmatpush2.bf16.msra.mxu0 0
      %2987 = vmatprep.subr.bf16.mxu0 0
      %2988 = vmatpush2.bf16.msra.mxu0 0
      %2989 = vmatprep.mubr.bf16.mxu0 0
      %2990 = vmatmul.mubr.bf16.gmra.mxu0 %v2893
      %v2991 = vpop.f32.mrf.mxu0
      %v2992 = vadd.f32 0.0, %v2991
      %v2993 = vpop.f32.mrf.mxu0
      %v2994 = vpop.f32.mrf.mxu0
      %v2995 = vadd.f32 0.0, %v2994
      %v2996 = vpop.f32.mrf.mxu0
      %2997 = vmatprep.mubr.bf16.mxu0 0
      %2998 = vmatmul.mubr.bf16.gmra.mxu0 %v2894
      %v2999 = vpop.f32.mrf.mxu0
      %v3000 = vadd.f32 0.0, %v2999
      %v3001 = vpop.f32.mrf.mxu0
      %v3002 = vpop.f32.mrf.mxu0
      %v3003 = vadd.f32 0.0, %v3002
      %v3004 = vpop.f32.mrf.mxu0
      %3005 = vmatprep.mubr.bf16.mxu0 0
      %3006 = vmatmul.mubr.bf16.gmra.mxu0 %v2895
      %v3007 = vpop.f32.mrf.mxu0
      %v3008 = vadd.f32 0.0, %v3007
      %v3009 = vpop.f32.mrf.mxu0
      %v3010 = vpop.f32.mrf.mxu0
      %v3011 = vadd.f32 0.0, %v3010
      %v3012 = vpop.f32.mrf.mxu0
      %3013 = vmatprep.mubr.bf16.mxu0 0
      %3014 = vmatmul.mubr.bf16.gmra.mxu0 %v2896
      %v3015 = vpop.f32.mrf.mxu0
      %v3016 = vadd.f32 0.0, %v3015
      %v3017 = vpop.f32.mrf.mxu0
      %v3018 = vpop.f32.mrf.mxu0
      %v3019 = vadd.f32 0.0, %v3018
      %v3020 = vpop.f32.mrf.mxu0
      %3021 = vmatprep.mubr.bf16.mxu0 0
      %3022 = vmatmul.mubr.bf16.gmra.mxu0 %v2897
      %v3023 = vpop.f32.mrf.mxu0
      %v3024 = vadd.f32 0.0, %v3023
      %v3025 = vpop.f32.mrf.mxu0
      %v3026 = vpop.f32.mrf.mxu0
      %v3027 = vadd.f32 0.0, %v3026
      %v3028 = vpop.f32.mrf.mxu0
      %3029 = vmatprep.mubr.bf16.mxu0 0
      %3030 = vmatmul.mubr.bf16.gmra.mxu0 %v2898
      %v3031 = vpop.f32.mrf.mxu0
      %v3032 = vadd.f32 0.0, %v3031
      %v3033 = vpop.f32.mrf.mxu0
      %v3034 = vpop.f32.mrf.mxu0
      %v3035 = vadd.f32 0.0, %v3034
      %v3036 = vpop.f32.mrf.mxu0
      %3037 = vmatprep.mubr.bf16.mxu0 0
      %3038 = vmatmul.mubr.bf16.gmra.mxu0 %v2899
      %v3039 = vpop.f32.mrf.mxu0
      %v3040 = vadd.f32 0.0, %v3039
      %v3041 = vpop.f32.mrf.mxu0
      %v3042 = vpop.f32.mrf.mxu0
      %v3043 = vadd.f32 0.0, %v3042
      %v3044 = vpop.f32.mrf.mxu0
      %3045 = vmatprep.mubr.bf16.mxu0 0
      %3046 = vmatmul.mubr.bf16.gmra.mxu0 %v2900
      %v3047 = vpop.f32.mrf.mxu0
      %v3048 = vadd.f32 0.0, %v3047
      %v3049 = vpop.f32.mrf.mxu0
      %v3050 = vpop.f32.mrf.mxu0
      %v3051 = vadd.f32 0.0, %v3050
      %v3052 = vpop.f32.mrf.mxu0
      %3053 = vdwg.mxu0
      %v3054 = vadd.f32 %v2811, %v2992
      %v3055 = vadd.f32 %v2812, %v2995
      %v3056 = vadd.f32 %v2813, %v3000
      %v3057 = vadd.f32 %v2814, %v3003
      %v3058 = vadd.f32 %v2815, %v3008
      %v3059 = vadd.f32 %v2816, %v3011
      %v3060 = vadd.f32 %v2817, %v3016
      %v3061 = vadd.f32 %v2818, %v3019
      %v3062 = vadd.f32 %v2819, %v3024
      %v3063 = vadd.f32 %v2820, %v3027
      %v3064 = vadd.f32 %v2821, %v3032
      %v3065 = vadd.f32 %v2822, %v3035
      %v3066 = vadd.f32 %v2823, %v3040
      %v3067 = vadd.f32 %v2824, %v3043
      %v3068 = vadd.f32 %v2825, %v3048
      %v3069 = vadd.f32 %v2826, %v3051
      %v3070 = vld [vmem:[%s2827] sm:$0xf]
      %v3071 = vld [vmem:[%s2827 + $0x4] sm:$0xf]
      %v3072 = vld [vmem:[%s2827 + $0x8] sm:$0x1]
      %v3073 = vld [vmem:[%s2827 + $0xc] sm:$0xf]
      %v3074 = vld [vmem:[%s2827 + $0x10] sm:$0xf]
      %v3075 = vld [vmem:[%s2827 + $0x14] sm:$0x1]
      %v3076 = vld [vmem:[%s2827 + $0x18] sm:$0xf]
      %v3077 = vld [vmem:[%s2827 + $0x1c] sm:$0xf]
      %v3078 = vld [vmem:[%s2827 + $0x20] sm:$0x1]
      %v3079 = vld [vmem:[%s2827 + $0x24] sm:$0xf]
      %v3080 = vld [vmem:[%s2827 + $0x28] sm:$0xf]
      %v3081 = vld [vmem:[%s2827 + $0x2c] sm:$0x1]
      %v3082 = vld [vmem:[%s2827 + $0x30] sm:$0xf]
      %v3083 = vld [vmem:[%s2827 + $0x34] sm:$0xf]
      %v3084 = vld [vmem:[%s2827 + $0x38] sm:$0x1]
      %v3085 = vld [vmem:[%s2827 + $0x3c] sm:$0xf]
      %v3086 = vld [vmem:[%s2827 + $0x40] sm:$0xf]
      %v3087 = vld [vmem:[%s2827 + $0x44] sm:$0x1]
      %v3088 = vld [vmem:[%s2827 + $0x48] sm:$0xf]
      %v3089 = vld [vmem:[%s2827 + $0x4c] sm:$0xf]
      %v3090 = vld [vmem:[%s2827 + $0x50] sm:$0x1]
      %v3091 = vld [vmem:[%s2827 + $0x54] sm:$0xf]
      %v3092 = vld [vmem:[%s2827 + $0x58] sm:$0xf]
      %v3093 = vld [vmem:[%s2827 + $0x5c] sm:$0x1]
      %v3095 = vshrl.u32 %v3070, 16
      %v3097 = vrot.slane %v3095, 4
      %v3098 = vshll.u32 %v3070, 16
      %v3100 = vrot.slane %v3098, 5
      %v3101 = vor.u32 %v3097, %v3100
      %v3102 = vrot.slane %v3101, 4
      %v3104 = vshll.u32 %v3071, 16
      %v3106 = vrot.slane %v3104, 5
      %v3107 = vsel %vm988, %v3102, %v3106
      %v3108 = vshrl.u32 %v3071, 16
      %v3110 = vrot.slane %v3108, 4
      %v3111 = vor.u32 %v3110, %v3106
      %v3112 = vrot.slane %v3111, 4
      %v3114 = vshll.u32 %v3072, 16
      %v3116 = vrot.slane %v3114, 5
      %v3117 = vsel %vm988, %v3112, %v3116
      %v3119 = vshrl.u32 %v3073, 16
      %v3121 = vrot.slane %v3119, 4
      %v3122 = vshll.u32 %v3073, 16
      %v3124 = vrot.slane %v3122, 5
      %v3125 = vor.u32 %v3121, %v3124
      %v3126 = vrot.slane %v3125, 4
      %v3128 = vshll.u32 %v3074, 16
      %v3130 = vrot.slane %v3128, 5
      %v3131 = vsel %vm988, %v3126, %v3130
      %v3132 = vshrl.u32 %v3074, 16
      %v3134 = vrot.slane %v3132, 4
      %v3135 = vor.u32 %v3134, %v3130
      %v3136 = vrot.slane %v3135, 4
      %v3138 = vshll.u32 %v3075, 16
      %v3140 = vrot.slane %v3138, 5
      %v3141 = vsel %vm988, %v3136, %v3140
      %v3143 = vshrl.u32 %v3076, 16
      %v3145 = vrot.slane %v3143, 4
      %v3146 = vshll.u32 %v3076, 16
      %v3148 = vrot.slane %v3146, 5
      %v3149 = vor.u32 %v3145, %v3148
      %v3150 = vrot.slane %v3149, 4
      %v3152 = vshll.u32 %v3077, 16
      %v3154 = vrot.slane %v3152, 5
      %v3155 = vsel %vm988, %v3150, %v3154
      %v3156 = vshrl.u32 %v3077, 16
      %v3158 = vrot.slane %v3156, 4
      %v3159 = vor.u32 %v3158, %v3154
      %v3160 = vrot.slane %v3159, 4
      %v3162 = vshll.u32 %v3078, 16
      %v3164 = vrot.slane %v3162, 5
      %v3165 = vsel %vm988, %v3160, %v3164
      %v3167 = vshrl.u32 %v3079, 16
      %v3169 = vrot.slane %v3167, 4
      %v3170 = vshll.u32 %v3079, 16
      %v3172 = vrot.slane %v3170, 5
      %v3173 = vor.u32 %v3169, %v3172
      %v3174 = vrot.slane %v3173, 4
      %v3176 = vshll.u32 %v3080, 16
      %v3178 = vrot.slane %v3176, 5
      %v3179 = vsel %vm988, %v3174, %v3178
      %v3180 = vshrl.u32 %v3080, 16
      %v3182 = vrot.slane %v3180, 4
      %v3183 = vor.u32 %v3182, %v3178
      %v3184 = vrot.slane %v3183, 4
      %v3186 = vshll.u32 %v3081, 16
      %v3188 = vrot.slane %v3186, 5
      %v3189 = vsel %vm988, %v3184, %v3188
      %v3191 = vshrl.u32 %v3082, 16
      %v3193 = vrot.slane %v3191, 4
      %v3194 = vshll.u32 %v3082, 16
      %v3196 = vrot.slane %v3194, 5
      %v3197 = vor.u32 %v3193, %v3196
      %v3198 = vrot.slane %v3197, 4
      %v3200 = vshll.u32 %v3083, 16
      %v3202 = vrot.slane %v3200, 5
      %v3203 = vsel %vm988, %v3198, %v3202
      %v3204 = vshrl.u32 %v3083, 16
      %v3206 = vrot.slane %v3204, 4
      %v3207 = vor.u32 %v3206, %v3202
      %v3208 = vrot.slane %v3207, 4
      %v3210 = vshll.u32 %v3084, 16
      %v3212 = vrot.slane %v3210, 5
      %v3213 = vsel %vm988, %v3208, %v3212
      %v3215 = vshrl.u32 %v3085, 16
      %v3217 = vrot.slane %v3215, 4
      %v3218 = vshll.u32 %v3085, 16
      %v3220 = vrot.slane %v3218, 5
      %v3221 = vor.u32 %v3217, %v3220
      %v3222 = vrot.slane %v3221, 4
      %v3224 = vshll.u32 %v3086, 16
      %v3226 = vrot.slane %v3224, 5
      %v3227 = vsel %vm988, %v3222, %v3226
      %v3228 = vshrl.u32 %v3086, 16
      %v3230 = vrot.slane %v3228, 4
      %v3231 = vor.u32 %v3230, %v3226
      %v3232 = vrot.slane %v3231, 4
      %v3234 = vshll.u32 %v3087, 16
      %v3236 = vrot.slane %v3234, 5
      %v3237 = vsel %vm988, %v3232, %v3236
      %v3239 = vshrl.u32 %v3088, 16
      %v3241 = vrot.slane %v3239, 4
      %v3242 = vshll.u32 %v3088, 16
      %v3244 = vrot.slane %v3242, 5
      %v3245 = vor.u32 %v3241, %v3244
      %v3246 = vrot.slane %v3245, 4
      %v3248 = vshll.u32 %v3089, 16
      %v3250 = vrot.slane %v3248, 5
      %v3251 = vsel %vm988, %v3246, %v3250
      %v3252 = vshrl.u32 %v3089, 16
      %v3254 = vrot.slane %v3252, 4
      %v3255 = vor.u32 %v3254, %v3250
      %v3256 = vrot.slane %v3255, 4
      %v3258 = vshll.u32 %v3090, 16
      %v3260 = vrot.slane %v3258, 5
      %v3261 = vsel %vm988, %v3256, %v3260
      %v3263 = vshrl.u32 %v3091, 16
      %v3265 = vrot.slane %v3263, 4
      %v3266 = vshll.u32 %v3091, 16
      %v3268 = vrot.slane %v3266, 5
      %v3269 = vor.u32 %v3265, %v3268
      %v3270 = vrot.slane %v3269, 4
      %v3272 = vshll.u32 %v3092, 16
      %v3274 = vrot.slane %v3272, 5
      %v3275 = vsel %vm988, %v3270, %v3274
      %v3276 = vshrl.u32 %v3092, 16
      %v3278 = vrot.slane %v3276, 4
      %v3279 = vor.u32 %v3278, %v3274
      %v3280 = vrot.slane %v3279, 4
      %v3282 = vshll.u32 %v3093, 16
      %v3284 = vrot.slane %v3282, 5
      %v3285 = vsel %vm988, %v3280, %v3284
      %s3286 = scalar_lea.vmem %s3, 448
      %v3287 = vld [vmem:[%s3286] sm:$0xf]
      %v3288 = vld [vmem:[%s3286 + $0x4] sm:$0xf]
      %v3289 = vld [vmem:[%s3286 + $0x8] sm:$0xf]
      %v3290 = vld [vmem:[%s3286 + $0xc] sm:$0xf]
      %v3291 = vld [vmem:[%s3286 + $0x10] sm:$0xf]
      %v3292 = vld [vmem:[%s3286 + $0x14] sm:$0xf]
      %v3293 = vld [vmem:[%s3286 + $0x18] sm:$0xf]
      %v3294 = vld [vmem:[%s3286 + $0x1c] sm:$0xf]
      %v3295 = vld [vmem:[%s3286 + $0x20] sm:$0xf]
      %v3296 = vld [vmem:[%s3286 + $0x24] sm:$0xf]
      %v3297 = vld [vmem:[%s3286 + $0x28] sm:$0xf]
      %v3298 = vld [vmem:[%s3286 + $0x2c] sm:$0xf]
      %v3299 = vld [vmem:[%s3286 + $0x30] sm:$0xf]
      %v3300 = vld [vmem:[%s3286 + $0x34] sm:$0xf]
      %v3301 = vld [vmem:[%s3286 + $0x38] sm:$0xf]
      %v3302 = vld [vmem:[%s3286 + $0x3c] sm:$0xf]
      %v3303 = vunpack.c.l.b16 %v3107
      %v3304 = vunpack.c.l.b16 %v3117
      %v3305 = vunpack.c.l.b16 %v3131
      %v3306 = vunpack.c.l.b16 %v3141
      %v3307 = vunpack.c.l.b16 %v3155
      %v3308 = vunpack.c.l.b16 %v3165
      %v3309 = vunpack.c.l.b16 %v3179
      %v3310 = vunpack.c.l.b16 %v3189
      %v3311 = vunpack.c.l.b16 %v3203
      %v3312 = vunpack.c.l.b16 %v3213
      %v3313 = vunpack.c.l.b16 %v3227
      %v3314 = vunpack.c.l.b16 %v3237
      %v3315 = vunpack.c.l.b16 %v3251
      %v3316 = vunpack.c.l.b16 %v3261
      %v3317 = vunpack.c.l.b16 %v3275
      %v3318 = vunpack.c.l.b16 %v3285
      %v3319 = vpack.c.b16 %v3304, %v3303
      %v3320 = vpack.c.b16 %v3306, %v3305
      %v3321 = vpack.c.b16 %v3308, %v3307
      %v3322 = vpack.c.b16 %v3310, %v3309
      %v3323 = vpack.c.b16 %v3312, %v3311
      %v3324 = vpack.c.b16 %v3314, %v3313
      %v3325 = vpack.c.b16 %v3316, %v3315
      %v3326 = vpack.c.b16 %v3318, %v3317
      %v3351 = vunpack.c.l.b16 %v3287
      %v3352 = vunpack.c.l.b16 %v3288
      %v3353 = vunpack.c.l.b16 %v3289
      %v3354 = vunpack.c.l.b16 %v3290
      %v3355 = vunpack.c.l.b16 %v3291
      %v3356 = vunpack.c.l.b16 %v3292
      %v3357 = vunpack.c.l.b16 %v3293
      %v3358 = vunpack.c.l.b16 %v3294
      %v3359 = vunpack.c.l.b16 %v3295
      %v3360 = vunpack.c.l.b16 %v3296
      %v3361 = vunpack.c.l.b16 %v3297
      %v3362 = vunpack.c.l.b16 %v3298
      %v3363 = vunpack.c.l.b16 %v3299
      %v3364 = vunpack.c.l.b16 %v3300
      %v3365 = vunpack.c.l.b16 %v3301
      %v3366 = vunpack.c.l.b16 %v3302
      %v3367 = vpack.c.b16 %v3352, %v3351
      %v3368 = vpack.c.b16 %v3354, %v3353
      %v3369 = vpack.c.b16 %v3356, %v3355
      %v3370 = vpack.c.b16 %v3358, %v3357
      %v3371 = vpack.c.b16 %v3360, %v3359
      %v3372 = vpack.c.b16 %v3362, %v3361
      %v3373 = vpack.c.b16 %v3364, %v3363
      %v3374 = vpack.c.b16 %v3366, %v3365
      %3383 = vmatprep.subr.bf16.mxu0 0
      %3384 = vmatpush1.bf16.msra.mxu0 %v3374
      %3385 = vmatprep.subr.bf16.mxu0 0
      %3386 = vmatpush1.bf16.msra.mxu0 %v3373
      %3387 = vmatprep.subr.bf16.mxu0 0
      %3388 = vmatpush1.bf16.msra.mxu0 %v3372
      %3389 = vmatprep.subr.bf16.mxu0 0
      %3390 = vmatpush1.bf16.msra.mxu0 %v3371
      %3391 = vmatprep.subr.bf16.mxu0 0
      %3392 = vmatpush1.bf16.msra.mxu0 %v3370
      %3393 = vmatprep.subr.bf16.mxu0 0
      %3394 = vmatpush1.bf16.msra.mxu0 %v3369
      %3395 = vmatprep.subr.bf16.mxu0 0
      %3396 = vmatpush1.bf16.msra.mxu0 %v3368
      %3397 = vmatprep.subr.bf16.mxu0 0
      %3398 = vmatpush1.bf16.msra.mxu0 %v3367
      %3399 = vmatprep.subr.bf16.mxu0 0
      %3400 = vmatpush2.bf16.msra.mxu0 0
      %3401 = vmatprep.subr.bf16.mxu0 0
      %3402 = vmatpush2.bf16.msra.mxu0 0
      %3403 = vmatprep.subr.bf16.mxu0 0
      %3404 = vmatpush2.bf16.msra.mxu0 0
      %3405 = vmatprep.subr.bf16.mxu0 0
      %3406 = vmatpush2.bf16.msra.mxu0 0
      %3407 = vmatprep.subr.bf16.mxu0 0
      %3408 = vmatpush2.bf16.msra.mxu0 0
      %3409 = vmatprep.subr.bf16.mxu0 0
      %3410 = vmatpush2.bf16.msra.mxu0 0
      %3411 = vmatprep.subr.bf16.mxu0 0
      %3412 = vmatpush2.bf16.msra.mxu0 0
      %3413 = vmatprep.subr.bf16.mxu0 0
      %3414 = vmatpush2.bf16.msra.mxu0 0
      %3415 = vmatprep.mubr.bf16.mxu0 0
      %3416 = vmatmul.mubr.bf16.gmra.mxu0 %v3319
      %v3417 = vpop.f32.mrf.mxu0
      %v3418 = vadd.f32 0.0, %v3417
      %v3419 = vpop.f32.mrf.mxu0
      %v3420 = vpop.f32.mrf.mxu0
      %v3421 = vadd.f32 0.0, %v3420
      %v3422 = vpop.f32.mrf.mxu0
      %3423 = vmatprep.mubr.bf16.mxu0 0
      %3424 = vmatmul.mubr.bf16.gmra.mxu0 %v3320
      %v3425 = vpop.f32.mrf.mxu0
      %v3426 = vadd.f32 0.0, %v3425
      %v3427 = vpop.f32.mrf.mxu0
      %v3428 = vpop.f32.mrf.mxu0
      %v3429 = vadd.f32 0.0, %v3428
      %v3430 = vpop.f32.mrf.mxu0
      %3431 = vmatprep.mubr.bf16.mxu0 0
      %3432 = vmatmul.mubr.bf16.gmra.mxu0 %v3321
      %v3433 = vpop.f32.mrf.mxu0
      %v3434 = vadd.f32 0.0, %v3433
      %v3435 = vpop.f32.mrf.mxu0
      %v3436 = vpop.f32.mrf.mxu0
      %v3437 = vadd.f32 0.0, %v3436
      %v3438 = vpop.f32.mrf.mxu0
      %3439 = vmatprep.mubr.bf16.mxu0 0
      %3440 = vmatmul.mubr.bf16.gmra.mxu0 %v3322
      %v3441 = vpop.f32.mrf.mxu0
      %v3442 = vadd.f32 0.0, %v3441
      %v3443 = vpop.f32.mrf.mxu0
      %v3444 = vpop.f32.mrf.mxu0
      %v3445 = vadd.f32 0.0, %v3444
      %v3446 = vpop.f32.mrf.mxu0
      %3447 = vmatprep.mubr.bf16.mxu0 0
      %3448 = vmatmul.mubr.bf16.gmra.mxu0 %v3323
      %v3449 = vpop.f32.mrf.mxu0
      %v3450 = vadd.f32 0.0, %v3449
      %v3451 = vpop.f32.mrf.mxu0
      %v3452 = vpop.f32.mrf.mxu0
      %v3453 = vadd.f32 0.0, %v3452
      %v3454 = vpop.f32.mrf.mxu0
      %3455 = vmatprep.mubr.bf16.mxu0 0
      %3456 = vmatmul.mubr.bf16.gmra.mxu0 %v3324
      %v3457 = vpop.f32.mrf.mxu0
      %v3458 = vadd.f32 0.0, %v3457
      %v3459 = vpop.f32.mrf.mxu0
      %v3460 = vpop.f32.mrf.mxu0
      %v3461 = vadd.f32 0.0, %v3460
      %v3462 = vpop.f32.mrf.mxu0
      %3463 = vmatprep.mubr.bf16.mxu0 0
      %3464 = vmatmul.mubr.bf16.gmra.mxu0 %v3325
      %v3465 = vpop.f32.mrf.mxu0
      %v3466 = vadd.f32 0.0, %v3465
      %v3467 = vpop.f32.mrf.mxu0
      %v3468 = vpop.f32.mrf.mxu0
      %v3469 = vadd.f32 0.0, %v3468
      %v3470 = vpop.f32.mrf.mxu0
      %3471 = vmatprep.mubr.bf16.mxu0 0
      %3472 = vmatmul.mubr.bf16.gmra.mxu0 %v3326
      %v3473 = vpop.f32.mrf.mxu0
      %v3474 = vadd.f32 0.0, %v3473
      %v3475 = vpop.f32.mrf.mxu0
      %v3476 = vpop.f32.mrf.mxu0
      %v3477 = vadd.f32 0.0, %v3476
      %v3478 = vpop.f32.mrf.mxu0
      %3479 = vdwg.mxu0
      %v3480 = vadd.f32 %v3054, %v3418
      %v3481 = vadd.f32 %v3055, %v3421
      %v3482 = vadd.f32 %v3056, %v3426
      %v3483 = vadd.f32 %v3057, %v3429
      %v3484 = vadd.f32 %v3058, %v3434
      %v3485 = vadd.f32 %v3059, %v3437
      %v3486 = vadd.f32 %v3060, %v3442
      %v3487 = vadd.f32 %v3061, %v3445
      %v3488 = vadd.f32 %v3062, %v3450
      %v3489 = vadd.f32 %v3063, %v3453
      %v3490 = vadd.f32 %v3064, %v3458
      %v3491 = vadd.f32 %v3065, %v3461
      %v3492 = vadd.f32 %v3066, %v3466
      %v3493 = vadd.f32 %v3067, %v3469
      %v3494 = vadd.f32 %v3068, %v3474
      %v3495 = vadd.f32 %v3069, %v3477
      %v3496 = vld [vmem:[%s2827] sm:$0xe]
      %v3497 = vld [vmem:[%s2827 + $0xc] sm:$0xe]
      %v3498 = vld [vmem:[%s2827 + $0x18] sm:$0xe]
      %v3499 = vld [vmem:[%s2827 + $0x24] sm:$0xe]
      %v3500 = vld [vmem:[%s2827 + $0x30] sm:$0xe]
      %v3501 = vld [vmem:[%s2827 + $0x3c] sm:$0xe]
      %v3502 = vld [vmem:[%s2827 + $0x48] sm:$0xe]
      %v3503 = vld [vmem:[%s2827 + $0x54] sm:$0xe]
      %v3528 = vrot.slane %v3496, 5
      %v3529 = vrot.slane %v3528, 4
      %v3530 = vrot.slane %v3071, 5
      %v3531 = vsel %vm1594, %v3529, %v3530
      %v3532 = vrot.slane %v3530, 4
      %v3533 = vrot.slane %v3072, 5
      %v3534 = vsel %vm1594, %v3532, %v3533
      %v3535 = vrot.slane %v3497, 5
      %v3536 = vrot.slane %v3535, 4
      %v3537 = vrot.slane %v3074, 5
      %v3538 = vsel %vm1594, %v3536, %v3537
      %v3539 = vrot.slane %v3537, 4
      %v3540 = vrot.slane %v3075, 5
      %v3541 = vsel %vm1594, %v3539, %v3540
      %v3542 = vrot.slane %v3498, 5
      %v3543 = vrot.slane %v3542, 4
      %v3544 = vrot.slane %v3077, 5
      %v3545 = vsel %vm1594, %v3543, %v3544
      %v3546 = vrot.slane %v3544, 4
      %v3547 = vrot.slane %v3078, 5
      %v3548 = vsel %vm1594, %v3546, %v3547
      %v3549 = vrot.slane %v3499, 5
      %v3550 = vrot.slane %v3549, 4
      %v3551 = vrot.slane %v3080, 5
      %v3552 = vsel %vm1594, %v3550, %v3551
      %v3553 = vrot.slane %v3551, 4
      %v3554 = vrot.slane %v3081, 5
      %v3555 = vsel %vm1594, %v3553, %v3554
      %v3556 = vrot.slane %v3500, 5
      %v3557 = vrot.slane %v3556, 4
      %v3558 = vrot.slane %v3083, 5
      %v3559 = vsel %vm1594, %v3557, %v3558
      %v3560 = vrot.slane %v3558, 4
      %v3561 = vrot.slane %v3084, 5
      %v3562 = vsel %vm1594, %v3560, %v3561
      %v3563 = vrot.slane %v3501, 5
      %v3564 = vrot.slane %v3563, 4
      %v3565 = vrot.slane %v3086, 5
      %v3566 = vsel %vm1594, %v3564, %v3565
      %v3567 = vrot.slane %v3565, 4
      %v3568 = vrot.slane %v3087, 5
      %v3569 = vsel %vm1594, %v3567, %v3568
      %v3570 = vrot.slane %v3502, 5
      %v3571 = vrot.slane %v3570, 4
      %v3572 = vrot.slane %v3089, 5
      %v3573 = vsel %vm1594, %v3571, %v3572
      %v3574 = vrot.slane %v3572, 4
      %v3575 = vrot.slane %v3090, 5
      %v3576 = vsel %vm1594, %v3574, %v3575
      %v3577 = vrot.slane %v3503, 5
      %v3578 = vrot.slane %v3577, 4
      %v3579 = vrot.slane %v3092, 5
      %v3580 = vsel %vm1594, %v3578, %v3579
      %v3581 = vrot.slane %v3579, 4
      %v3582 = vrot.slane %v3093, 5
      %v3583 = vsel %vm1594, %v3581, %v3582
      %s3584 = scalar_lea.vmem %s3, 512
      %v3585 = vld [vmem:[%s3584] sm:$0xf]
      %v3586 = vld [vmem:[%s3584 + $0x4] sm:$0xf]
      %v3587 = vld [vmem:[%s3584 + $0x8] sm:$0xf]
      %v3588 = vld [vmem:[%s3584 + $0xc] sm:$0xf]
      %v3589 = vld [vmem:[%s3584 + $0x10] sm:$0xf]
      %v3590 = vld [vmem:[%s3584 + $0x14] sm:$0xf]
      %v3591 = vld [vmem:[%s3584 + $0x18] sm:$0xf]
      %v3592 = vld [vmem:[%s3584 + $0x1c] sm:$0xf]
      %v3593 = vld [vmem:[%s3584 + $0x20] sm:$0xf]
      %v3594 = vld [vmem:[%s3584 + $0x24] sm:$0xf]
      %v3595 = vld [vmem:[%s3584 + $0x28] sm:$0xf]
      %v3596 = vld [vmem:[%s3584 + $0x2c] sm:$0xf]
      %v3597 = vld [vmem:[%s3584 + $0x30] sm:$0xf]
      %v3598 = vld [vmem:[%s3584 + $0x34] sm:$0xf]
      %v3599 = vld [vmem:[%s3584 + $0x38] sm:$0xf]
      %v3600 = vld [vmem:[%s3584 + $0x3c] sm:$0xf]
      %v3601 = vunpack.c.l.b16 %v3531
      %v3602 = vunpack.c.l.b16 %v3534
      %v3603 = vunpack.c.l.b16 %v3538
      %v3604 = vunpack.c.l.b16 %v3541
      %v3605 = vunpack.c.l.b16 %v3545
      %v3606 = vunpack.c.l.b16 %v3548
      %v3607 = vunpack.c.l.b16 %v3552
      %v3608 = vunpack.c.l.b16 %v3555
      %v3609 = vunpack.c.l.b16 %v3559
      %v3610 = vunpack.c.l.b16 %v3562
      %v3611 = vunpack.c.l.b16 %v3566
      %v3612 = vunpack.c.l.b16 %v3569
      %v3613 = vunpack.c.l.b16 %v3573
      %v3614 = vunpack.c.l.b16 %v3576
      %v3615 = vunpack.c.l.b16 %v3580
      %v3616 = vunpack.c.l.b16 %v3583
      %v3617 = vpack.c.b16 %v3602, %v3601
      %v3618 = vpack.c.b16 %v3604, %v3603
      %v3619 = vpack.c.b16 %v3606, %v3605
      %v3620 = vpack.c.b16 %v3608, %v3607
      %v3621 = vpack.c.b16 %v3610, %v3609
      %v3622 = vpack.c.b16 %v3612, %v3611
      %v3623 = vpack.c.b16 %v3614, %v3613
      %v3624 = vpack.c.b16 %v3616, %v3615
      %v3649 = vunpack.c.l.b16 %v3585
      %v3650 = vunpack.c.l.b16 %v3586
      %v3651 = vunpack.c.l.b16 %v3587
      %v3652 = vunpack.c.l.b16 %v3588
      %v3653 = vunpack.c.l.b16 %v3589
      %v3654 = vunpack.c.l.b16 %v3590
      %v3655 = vunpack.c.l.b16 %v3591
      %v3656 = vunpack.c.l.b16 %v3592
      %v3657 = vunpack.c.l.b16 %v3593
      %v3658 = vunpack.c.l.b16 %v3594
      %v3659 = vunpack.c.l.b16 %v3595
      %v3660 = vunpack.c.l.b16 %v3596
      %v3661 = vunpack.c.l.b16 %v3597
      %v3662 = vunpack.c.l.b16 %v3598
      %v3663 = vunpack.c.l.b16 %v3599
      %v3664 = vunpack.c.l.b16 %v3600
      %v3665 = vpack.c.b16 %v3650, %v3649
      %v3666 = vpack.c.b16 %v3652, %v3651
      %v3667 = vpack.c.b16 %v3654, %v3653
      %v3668 = vpack.c.b16 %v3656, %v3655
      %v3669 = vpack.c.b16 %v3658, %v3657
      %v3670 = vpack.c.b16 %v3660, %v3659
      %v3671 = vpack.c.b16 %v3662, %v3661
      %v3672 = vpack.c.b16 %v3664, %v3663
      %3681 = vmatprep.subr.bf16.mxu0 0
      %3682 = vmatpush1.bf16.msra.mxu0 %v3672
      %3683 = vmatprep.subr.bf16.mxu0 0
      %3684 = vmatpush1.bf16.msra.mxu0 %v3671
      %3685 = vmatprep.subr.bf16.mxu0 0
      %3686 = vmatpush1.bf16.msra.mxu0 %v3670
      %3687 = vmatprep.subr.bf16.mxu0 0
      %3688 = vmatpush1.bf16.msra.mxu0 %v3669
      %3689 = vmatprep.subr.bf16.mxu0 0
      %3690 = vmatpush1.bf16.msra.mxu0 %v3668
      %3691 = vmatprep.subr.bf16.mxu0 0
      %3692 = vmatpush1.bf16.msra.mxu0 %v3667
      %3693 = vmatprep.subr.bf16.mxu0 0
      %3694 = vmatpush1.bf16.msra.mxu0 %v3666
      %3695 = vmatprep.subr.bf16.mxu0 0
      %3696 = vmatpush1.bf16.msra.mxu0 %v3665
      %3697 = vmatprep.subr.bf16.mxu0 0
      %3698 = vmatpush2.bf16.msra.mxu0 0
      %3699 = vmatprep.subr.bf16.mxu0 0
      %3700 = vmatpush2.bf16.msra.mxu0 0
      %3701 = vmatprep.subr.bf16.mxu0 0
      %3702 = vmatpush2.bf16.msra.mxu0 0
      %3703 = vmatprep.subr.bf16.mxu0 0
      %3704 = vmatpush2.bf16.msra.mxu0 0
      %3705 = vmatprep.subr.bf16.mxu0 0
      %3706 = vmatpush2.bf16.msra.mxu0 0
      %3707 = vmatprep.subr.bf16.mxu0 0
      %3708 = vmatpush2.bf16.msra.mxu0 0
      %3709 = vmatprep.subr.bf16.mxu0 0
      %3710 = vmatpush2.bf16.msra.mxu0 0
      %3711 = vmatprep.subr.bf16.mxu0 0
      %3712 = vmatpush2.bf16.msra.mxu0 0
      %3713 = vmatprep.mubr.bf16.mxu0 0
      %3714 = vmatmul.mubr.bf16.gmra.mxu0 %v3617
      %v3715 = vpop.f32.mrf.mxu0
      %v3716 = vadd.f32 0.0, %v3715
      %v3717 = vpop.f32.mrf.mxu0
      %v3718 = vpop.f32.mrf.mxu0
      %v3719 = vadd.f32 0.0, %v3718
      %v3720 = vpop.f32.mrf.mxu0
      %3721 = vmatprep.mubr.bf16.mxu0 0
      %3722 = vmatmul.mubr.bf16.gmra.mxu0 %v3618
      %v3723 = vpop.f32.mrf.mxu0
      %v3724 = vadd.f32 0.0, %v3723
      %v3725 = vpop.f32.mrf.mxu0
      %v3726 = vpop.f32.mrf.mxu0
      %v3727 = vadd.f32 0.0, %v3726
      %v3728 = vpop.f32.mrf.mxu0
      %3729 = vmatprep.mubr.bf16.mxu0 0
      %3730 = vmatmul.mubr.bf16.gmra.mxu0 %v3619
      %v3731 = vpop.f32.mrf.mxu0
      %v3732 = vadd.f32 0.0, %v3731
      %v3733 = vpop.f32.mrf.mxu0
      %v3734 = vpop.f32.mrf.mxu0
      %v3735 = vadd.f32 0.0, %v3734
      %v3736 = vpop.f32.mrf.mxu0
      %3737 = vmatprep.mubr.bf16.mxu0 0
      %3738 = vmatmul.mubr.bf16.gmra.mxu0 %v3620
      %v3739 = vpop.f32.mrf.mxu0
      %v3740 = vadd.f32 0.0, %v3739
      %v3741 = vpop.f32.mrf.mxu0
      %v3742 = vpop.f32.mrf.mxu0
      %v3743 = vadd.f32 0.0, %v3742
      %v3744 = vpop.f32.mrf.mxu0
      %3745 = vmatprep.mubr.bf16.mxu0 0
      %3746 = vmatmul.mubr.bf16.gmra.mxu0 %v3621
      %v3747 = vpop.f32.mrf.mxu0
      %v3748 = vadd.f32 0.0, %v3747
      %v3749 = vpop.f32.mrf.mxu0
      %v3750 = vpop.f32.mrf.mxu0
      %v3751 = vadd.f32 0.0, %v3750
      %v3752 = vpop.f32.mrf.mxu0
      %3753 = vmatprep.mubr.bf16.mxu0 0
      %3754 = vmatmul.mubr.bf16.gmra.mxu0 %v3622
      %v3755 = vpop.f32.mrf.mxu0
      %v3756 = vadd.f32 0.0, %v3755
      %v3757 = vpop.f32.mrf.mxu0
      %v3758 = vpop.f32.mrf.mxu0
      %v3759 = vadd.f32 0.0, %v3758
      %v3760 = vpop.f32.mrf.mxu0
      %3761 = vmatprep.mubr.bf16.mxu0 0
      %3762 = vmatmul.mubr.bf16.gmra.mxu0 %v3623
      %v3763 = vpop.f32.mrf.mxu0
      %v3764 = vadd.f32 0.0, %v3763
      %v3765 = vpop.f32.mrf.mxu0
      %v3766 = vpop.f32.mrf.mxu0
      %v3767 = vadd.f32 0.0, %v3766
      %v3768 = vpop.f32.mrf.mxu0
      %3769 = vmatprep.mubr.bf16.mxu0 0
      %3770 = vmatmul.mubr.bf16.gmra.mxu0 %v3624
      %v3771 = vpop.f32.mrf.mxu0
      %v3772 = vadd.f32 0.0, %v3771
      %v3773 = vpop.f32.mrf.mxu0
      %v3774 = vpop.f32.mrf.mxu0
      %v3775 = vadd.f32 0.0, %v3774
      %v3776 = vpop.f32.mrf.mxu0
      %3777 = vdwg.mxu0
      %v3778 = vadd.f32 %v3480, %v3716
      %v3779 = vadd.f32 %v3481, %v3719
      %v3780 = vadd.f32 %v3482, %v3724
      %v3781 = vadd.f32 %v3483, %v3727
      %v3782 = vadd.f32 %v3484, %v3732
      %v3783 = vadd.f32 %v3485, %v3735
      %v3784 = vadd.f32 %v3486, %v3740
      %v3785 = vadd.f32 %v3487, %v3743
      %v3786 = vadd.f32 %v3488, %v3748
      %v3787 = vadd.f32 %v3489, %v3751
      %v3788 = vadd.f32 %v3490, %v3756
      %v3789 = vadd.f32 %v3491, %v3759
      %v3790 = vadd.f32 %v3492, %v3764
      %v3791 = vadd.f32 %v3493, %v3767
      %v3792 = vadd.f32 %v3494, %v3772
      %v3793 = vadd.f32 %v3495, %v3775
      %v3794 = vpack.c.bf16 %v3779, %v3778
      %v3795 = vpack.c.bf16 %v3781, %v3780
      %v3796 = vpack.c.bf16 %v3783, %v3782
      %v3797 = vpack.c.bf16 %v3785, %v3784
      %v3798 = vpack.c.bf16 %v3787, %v3786
      %v3799 = vpack.c.bf16 %v3789, %v3788
      %v3800 = vpack.c.bf16 %v3791, %v3790
      %v3801 = vpack.c.bf16 %v3793, %v3792
      %v3810 = vunpack.c.l.b16 %v3794
      %v3811 = vunpack.c.h.b16 %v3794
      %v3812 = vunpack.c.l.b16 %v3795
      %v3813 = vunpack.c.h.b16 %v3795
      %v3814 = vunpack.c.l.b16 %v3796
      %v3815 = vunpack.c.h.b16 %v3796
      %v3816 = vunpack.c.l.b16 %v3797
      %v3817 = vunpack.c.h.b16 %v3797
      %v3818 = vunpack.c.l.b16 %v3798
      %v3819 = vunpack.c.h.b16 %v3798
      %v3820 = vunpack.c.l.b16 %v3799
      %v3821 = vunpack.c.h.b16 %v3799
      %v3822 = vunpack.c.l.b16 %v3800
      %v3823 = vunpack.c.h.b16 %v3800
      %v3824 = vunpack.c.l.b16 %v3801
      %v3825 = vunpack.c.h.b16 %v3801
      %v3826 = vpack.c.b16 %v3810, %v3810
      %v3827 = vpack.c.b16 %v3811, %v3811
      %v3828 = vpack.c.b16 %v3812, %v3812
      %v3829 = vpack.c.b16 %v3813, %v3813
      %v3830 = vpack.c.b16 %v3814, %v3814
      %v3831 = vpack.c.b16 %v3815, %v3815
      %v3832 = vpack.c.b16 %v3816, %v3816
      %v3833 = vpack.c.b16 %v3817, %v3817
      %v3834 = vpack.c.b16 %v3818, %v3818
      %v3835 = vpack.c.b16 %v3819, %v3819
      %v3836 = vpack.c.b16 %v3820, %v3820
      %v3837 = vpack.c.b16 %v3821, %v3821
      %v3838 = vpack.c.b16 %v3822, %v3822
      %v3839 = vpack.c.b16 %v3823, %v3823
      %v3840 = vpack.c.b16 %v3824, %v3824
      %v3841 = vpack.c.b16 %v3825, %v3825
      %3858 = vst [vmem:[%s440] sm:$0xf] %v3826
      %3859 = vst [vmem:[%s440 + $0x4] sm:$0xf] %v3827
      %3860 = vst [vmem:[%s440 + $0x8] sm:$0xf] %v3828
      %3861 = vst [vmem:[%s440 + $0xc] sm:$0xf] %v3829
      %3862 = vst [vmem:[%s440 + $0x10] sm:$0xf] %v3830
      %3863 = vst [vmem:[%s440 + $0x14] sm:$0xf] %v3831
      %3864 = vst [vmem:[%s440 + $0x18] sm:$0xf] %v3832
      %3865 = vst [vmem:[%s440 + $0x1c] sm:$0xf] %v3833
      %3866 = vst [vmem:[%s440 + $0x20] sm:$0xf] %v3834
      %3867 = vst [vmem:[%s440 + $0x24] sm:$0xf] %v3835
      %3868 = vst [vmem:[%s440 + $0x28] sm:$0xf] %v3836
      %3869 = vst [vmem:[%s440 + $0x2c] sm:$0xf] %v3837
      %3870 = vst [vmem:[%s440 + $0x30] sm:$0xf] %v3838
      %3871 = vst [vmem:[%s440 + $0x34] sm:$0xf] %v3839
      %3872 = vst [vmem:[%s440 + $0x38] sm:$0xf] %v3840
      %3873 = vst [vmem:[%s440 + $0x3c] sm:$0xf] %v3841
      %v3874 = vadd.f32 %v3778, %v3779
      %v3875 = vadd.f32 %v3874, %v3780
      %v3876 = vadd.f32 %v3875, %v3781
      %v3877 = vadd.f32 %v3876, %v3782
      %v3878 = vadd.f32 %v3877, %v3783
      %v3879 = vadd.f32 %v3878, %v3784
      %v3880 = vadd.f32 %v3879, %v3785
      %v3881 = vadd.f32 %v3880, %v3786
      %v3882 = vadd.f32 %v3881, %v3787
      %v3883 = vadd.f32 %v3882, %v3788
      %v3884 = vadd.f32 %v3883, %v3789
      %v3885 = vadd.f32 %v3884, %v3790
      %v3886 = vadd.f32 %v3885, %v3791
      %v3887 = vadd.f32 %v3886, %v3792
      %v3888 = vadd.f32 %v3887, %v3793
      %v3889 = vrot.slane %v3888, 4
      %v3890 = vadd.f32 %v3888, %v3889
      %v3891 = vrot.slane %v3890, 2
      %v3892 = vadd.f32 %v3890, %v3891
      %v3893 = vrot.slane %v3892, 1
      %v3894 = vadd.f32 %v3892, %v3893
      %v3895 = vmul.f32 %v3778, %v3778
      %v3896 = vmul.f32 %v3779, %v3779
      %v3897 = vmul.f32 %v3780, %v3780
      %v3898 = vmul.f32 %v3781, %v3781
      %v3899 = vmul.f32 %v3782, %v3782
      %v3900 = vmul.f32 %v3783, %v3783
      %v3901 = vmul.f32 %v3784, %v3784
      %v3902 = vmul.f32 %v3785, %v3785
      %v3903 = vmul.f32 %v3786, %v3786
      %v3904 = vmul.f32 %v3787, %v3787
      %v3905 = vmul.f32 %v3788, %v3788
      %v3906 = vmul.f32 %v3789, %v3789
      %v3907 = vmul.f32 %v3790, %v3790
      %v3908 = vmul.f32 %v3791, %v3791
      %v3909 = vmul.f32 %v3792, %v3792
      %v3910 = vmul.f32 %v3793, %v3793
      %v3911 = vadd.f32 %v3895, %v3896
      %v3912 = vadd.f32 %v3911, %v3897
      %v3913 = vadd.f32 %v3912, %v3898
      %v3914 = vadd.f32 %v3913, %v3899
      %v3915 = vadd.f32 %v3914, %v3900
      %v3916 = vadd.f32 %v3915, %v3901
      %v3917 = vadd.f32 %v3916, %v3902
      %v3918 = vadd.f32 %v3917, %v3903
      %v3919 = vadd.f32 %v3918, %v3904
      %v3920 = vadd.f32 %v3919, %v3905
      %v3921 = vadd.f32 %v3920, %v3906
      %v3922 = vadd.f32 %v3921, %v3907
      %v3923 = vadd.f32 %v3922, %v3908
      %v3924 = vadd.f32 %v3923, %v3909
      %v3925 = vadd.f32 %v3924, %v3910
      %v3926 = vrot.slane %v3925, 4
      %v3927 = vadd.f32 %v3925, %v3926
      %v3928 = vrot.slane %v3927, 2
      %v3929 = vadd.f32 %v3927, %v3928
      %v3930 = vrot.slane %v3929, 1
      %v3931 = vadd.f32 %v3929, %v3930
      %vm3932 = vcmask 1040384
      %v3933 = vsel %vm3932, %v3894, %v3931
      %3934 = vst [vmem:[%s448] sm:$0x3] %v3933
      %p3935 = scmp.lt.s32.totalorder %s23, 1
      %s3936 = scalar_select %p3935, %s23, 1
      %p3937 = scmp.lt.s32.totalorder %s24, 1
      %s3938 = scalar_select %p3937, %s24, 1
      %s3939 = smul.addr %s3938, 16
      %s3940 = smul.addr %s3936, 32
      %s3941 = sadd.s32 %s3939, %s3940
      %s3942 = smul.addr %s3941, 4
      %s3943 = scalar_lea.vmem %s6, %s3942
      %p3944 = scmp.lt.s32.totalorder %s23, 1
      %s3945 = scalar_select %p3944, %s23, 1
      %p3946 = scmp.lt.s32.totalorder %s24, 1
      %s3947 = scalar_select %p3946, %s24, 1
      %s3948 = smul.addr %s3945, 2
      %s3949 = sadd.s32 %s3947, %s3948
      %s3950 = smul.addr %s3949, 2
      %s3951 = scalar_lea.vmem %s7, %s3950
      // Predicated region
      $region45: #{_lambda_.4} parent=43 // pred_check
        %p3952 = pneg %p210
      $region46: #{_lambda_.4} parent=43 // pred_check_branch
        %3954 = sbr.rel (%p3952) target = $region48
      $region47: #{_lambda_.4} parent=43 // pred_region
        _
      $region48: #{_lambda_.4} parent=43 // pred_fallthru
        _
      // Predicated region
      $region49: #{_lambda_.4} parent=43 // pred_check
        %p3955 = pneg %p238
      $region50: #{_lambda_.4} parent=43 // pred_check_branch
        %3957 = sbr.rel (%p3955) target = $region52
      $region51: #{_lambda_.4} parent=43 // pred_region
        _
      $region52: #{_lambda_.4} parent=43 // pred_fallthru
        _
    $region44: #{_lambda_.4} parent=5 // pred_fallthru
      _
    %p3958 = scmp.le.s32.totalorder 2, %s14
    // Predicated region
    $region53: #{_lambda_.4} parent=5 // pred_check
      %p3959 = pneg %p3958
    $region54: #{_lambda_.4} parent=5 // pred_check_branch
      %3961 = sbr.rel (%p3959) target = $region56
    $region55: #{_lambda_.4} parent=5 // pred_region
      %s3962 = ssub.s32 %s14, 2
      // Predicated region
      $region57: #{_lambda_.4} parent=55 // pred_check
        %p3963 = pneg %p216
      $region58: #{_lambda_.4} parent=55 // pred_check_branch
        %3965 = sbr.rel (%p3963) target = $region60
      $region59: #{_lambda_.4} parent=55 // pred_region
        %p3966 = scmp.lt.s32.totalorder %s25, 1
        %s3967 = scalar_select %p3966, %s25, 1
        %p3968 = scmp.lt.s32.totalorder %s26, 1
        %s3969 = scalar_select %p3968, %s26, 1
        %s3970 = smul.addr %s3969, 16
        %s3971 = smul.addr %s3967, 32
        %s3972 = sadd.s32 %s3970, %s3971
        %s3973 = smul.addr %s3972, 4
        %s3974 = scalar_lea.vmem %s6, %s3973
      $region60: #{_lambda_.4} parent=55 // pred_fallthru
        _
      // Predicated region
      $region61: #{_lambda_.4} parent=55 // pred_check
        %p3975 = pneg %p244
      $region62: #{_lambda_.4} parent=55 // pred_check_branch
        %3977 = sbr.rel (%p3975) target = $region64
      $region63: #{_lambda_.4} parent=55 // pred_region
        %p3978 = scmp.lt.s32.totalorder %s25, 1
        %s3979 = scalar_select %p3978, %s25, 1
        %p3980 = scmp.lt.s32.totalorder %s26, 1
        %s3981 = scalar_select %p3980, %s26, 1
        %s3982 = smul.addr %s3979, 2
        %s3983 = sadd.s32 %s3981, %s3982
        %s3984 = smul.addr %s3983, 2
        %s3985 = scalar_lea.vmem %s7, %s3984
      $region64: #{_lambda_.4} parent=55 // pred_fallthru
        _
    $region56: #{_lambda_.4} parent=5 // pred_fallthru
      _
  $region6: #{_lambda_.4} parent=0 // loop_footer
    %s18 = sadd.s32 1, %s14
  $region7: #{_lambda_.4} parent=0 // loop_footer_branch
    %13 = sbr.rel target = $region3
  $region8: #{_lambda_.4} parent=0 // loop_exit
    _

// kernel: _lambda_.3
$region0: #{_lambda_.3}
  #allocation0 [shape = 'u32[]', space=smem, size = 0x4, offset = 0x4, fixed_abs, tag = 'smem constant byte address 0x4 - core index']
  #allocation1 [shape = 'u32[144,128]{1,0:T(1,128)}', space=vmem, size = 0x12000, scoped, tag = 'internal scratch']
  #allocation2 [shape = 'bf16[10,18,128]{2,1,0:T(8,128)(2,1)}', space=vmem, size = 0xf000, scoped, tag = 'scratch operand']
  %s0 = inlined_call_operand.vmem [shape: f32[2,2,8,16,4], index: 0, kind: input, shape index: {}, may-alias: {0,1,2}]
  %s1 = inlined_call_operand.vmem [shape: f32[2,2,8,16,4], index: 1, kind: input, shape index: {}, may-alias: {0,1,2}]
  %s2 = inlined_call_operand.vmem [shape: f32[2,2,8,16,4], index: 2, kind: input, shape index: {}, may-alias: {0,1,2}]
  %s3 = inlined_call_operand.vmem [shape: f32[2,2,8,16,4], index: 3, kind: input, shape index: {}, may-alias: {3,4,5}]
  %s4 = inlined_call_operand.vmem [shape: f32[2,2,8,16,4], index: 4, kind: input, shape index: {}, may-alias: {3,4,5}]
  %s5 = inlined_call_operand.vmem [shape: f32[2,2,8,16,4], index: 5, kind: input, shape index: {}, may-alias: {3,4,5}]
  %s6 = inlined_call_operand.vmem [shape: bf16[9,128,128], index: 6, kind: input, shape index: {}]
  %s7 = inlined_call_operand.vmem [shape: f32[1,128], index: 7, kind: input, shape index: {}, may-alias: {7,8}]
  %s8 = inlined_call_operand.vmem [shape: f32[1,128], index: 8, kind: input, shape index: {}, may-alias: {7,8}]
  %s9 = inlined_call_operand.vmem [shape: bf16[2,2,8,16,128], index: 9, kind: output, shape index: {0}]
  %s10 = inlined_call_operand.vmem [shape: f32[2,2,2,128], index: 10, kind: output, shape index: {1}]
  %11 = xla_tuple %s9, %s10
  %s12 = sld [smem:[#allocation0]]
  $region77: #{_lambda_.3} parent=0
    _
  %s14 = ssub.s32 1, %s12
  %s15 = scalar_select 0, %s14, %s12
  loop: start=0, step=1, limit=6
  $region2: #{_lambda_.3} parent=0 // loop_pre_header
    _
  $region3: #{_lambda_.3} parent=0 // loop_header
    %s17 = sphi 0, %s21
    %p18 = scmp.ge.s32.totalorder %s17, 6
    %s24 = sphi 0, %s36
    %s25 = sphi 0, %s32
    %s26 = sphi 0, %s24
    %s27 = sphi 0, %s25
    %s28 = sphi 0, %s26
    %s29 = sphi 0, %s27
    %s41 = sphi 0, %s43
    %s44 = sphi 0, %s41
    %s45 = sphi 0, %s44
    %s61 = sphi 0, %s45
    %s75 = sphi 0, %s77
    %s78 = sphi 0, %s75
    %s79 = sphi 0, %s78
    %s95 = sphi 0, %s79
    %s109 = sphi 0, %s111
    %s112 = sphi 0, %s109
    %s113 = sphi 0, %s112
    %s129 = sphi 0, %s113
    %s137 = sphi 0, %s139
    %s140 = sphi 0, %s137
    %s141 = sphi 0, %s140
    %s157 = sphi 0, %s141
    %s171 = sphi 0, %s173
    %s174 = sphi 0, %s171
    %s175 = sphi 0, %s174
    %s191 = sphi 0, %s175
    %s205 = sphi 0, %s207
    %s208 = sphi 0, %s205
    %s209 = sphi 0, %s208
    %s225 = sphi 0, %s209
    %s229 = sphi 0, %s229
    %s231 = sphi 0, %s229
    %s232 = sphi 0, %s231
    %s246 = sphi 0, %s232
    %s250 = sphi 0, %s250
    %s252 = sphi 0, %s250
    %s253 = sphi 0, %s252
    %s267 = sphi 0, %s253
    %s271 = sphi 0, %s271
    %s273 = sphi 0, %s271
    %s274 = sphi 0, %s273
    %s288 = sphi 0, %s274
    %s296 = sphi 0, %s298
    %s299 = sphi 0, %s296
    %s300 = sphi 0, %s299
    %s316 = sphi 0, %s300
    %s324 = sphi 0, %s326
    %s327 = sphi 0, %s324
    %s328 = sphi 0, %s327
    %s344 = sphi 0, %s328
  $region4: #{_lambda_.3} parent=0 // loop_header_branch
    %20 = sbr.rel (%p18) target = $region8
  $region5: #{_lambda_.3} parent=0 // loop_body
    %s22 = ssub.s32 %s17, 1
    %s23 = ssub.s32 %s17, 2
    %s30 = sadd.s32 1, %s25
    %p31 = scmp.ge.s32.totalorder %s30, 2
    %s32 = scalar_select %p31, 0, %s30
    %s33 = sadd.s32 1, %s24
    %s34 = scalar_select %p31, %s33, %s24
    %p35 = scmp.ge.s32.totalorder %s34, 2
    %s36 = scalar_select %p35, 0, %s34
    %s37 = ssub.s32 %s24, %s36
    %s38 = ssub.s32 %s25, %s32
    %s39 = sor.u32 %s37, %s38
    %p40 = scmp.eq.s32.totalorder %s39, 0
    %s42 = sadd.s32 %s41, 1
    %s43 = scalar_select %p40, %s41, %s42
    %p46 = pneg %p40
    %p47 = scmp.eq.s32.totalorder %s17, 3
    %p48 = por %p46, %p47
    %p49 = scmp.ne.s32.totalorder %s41, %s44
    %p50 = scmp.eq.s32.totalorder %s17, 0
    %p51 = por %p49, %p50
    %p52 = scmp.ne.s32.totalorder %s41, %s44
    %p53 = scmp.eq.s32.totalorder %s22, 3
    %p54 = por %p52, %p53
    %p55 = scmp.ne.s32.totalorder %s44, %s45
    %p56 = scmp.eq.s32.totalorder %s22, 0
    %p57 = por %p55, %p56
    %p58 = scmp.ne.s32.totalorder %s44, %s45
    %p59 = scmp.eq.s32.totalorder %s23, 3
    %p60 = por %p58, %p59
    %p62 = scmp.ne.s32.totalorder %s45, %s61
    %p63 = scmp.eq.s32.totalorder %s23, 0
    %p64 = por %p62, %p63
    %s65 = ssub.s32 %s25, 1
    %p66 = scmp.gt.s32.totalorder %s65, 0
    %s67 = scalar_select %p66, %s65, 0
    %s68 = ssub.s32 %s32, 1
    %p69 = scmp.gt.s32.totalorder %s68, 0
    %s70 = scalar_select %p69, %s68, 0
    %s71 = ssub.s32 %s24, %s36
    %s72 = ssub.s32 %s67, %s70
    %s73 = sor.u32 %s71, %s72
    %p74 = scmp.eq.s32.totalorder %s73, 0
    %s76 = sadd.s32 %s75, 1
    %s77 = scalar_select %p74, %s75, %s76
    %p80 = pneg %p74
    %p81 = scmp.eq.s32.totalorder %s17, 3
    %p82 = por %p80, %p81
    %p83 = scmp.ne.s32.totalorder %s75, %s78
    %p84 = scmp.eq.s32.totalorder %s17, 0
    %p85 = por %p83, %p84
    %p86 = scmp.ne.s32.totalorder %s75, %s78
    %p87 = scmp.eq.s32.totalorder %s22, 3
    %p88 = por %p86, %p87
    %p89 = scmp.ne.s32.totalorder %s78, %s79
    %p90 = scmp.eq.s32.totalorder %s22, 0
    %p91 = por %p89, %p90
    %p92 = scmp.ne.s32.totalorder %s78, %s79
    %p93 = scmp.eq.s32.totalorder %s23, 3
    %p94 = por %p92, %p93
    %p96 = scmp.ne.s32.totalorder %s79, %s95
    %p97 = scmp.eq.s32.totalorder %s23, 0
    %p98 = por %p96, %p97
    %s99 = sadd.s32 %s25, 1
    %p100 = scmp.lt.s32.totalorder %s99, 1
    %s101 = scalar_select %p100, %s99, 1
    %s102 = sadd.s32 %s32, 1
    %p103 = scmp.lt.s32.totalorder %s102, 1
    %s104 = scalar_select %p103, %s102, 1
    %s105 = ssub.s32 %s24, %s36
    %s106 = ssub.s32 %s101, %s104
    %s107 = sor.u32 %s105, %s106
    %p108 = scmp.eq.s32.totalorder %s107, 0
    %s110 = sadd.s32 %s109, 1
    %s111 = scalar_select %p108, %s109, %s110
    %p114 = pneg %p108
    %p115 = scmp.eq.s32.totalorder %s17, 3
    %p116 = por %p114, %p115
    %p117 = scmp.ne.s32.totalorder %s109, %s112
    %p118 = scmp.eq.s32.totalorder %s17, 0
    %p119 = por %p117, %p118
    %p120 = scmp.ne.s32.totalorder %s109, %s112
    %p121 = scmp.eq.s32.totalorder %s22, 3
    %p122 = por %p120, %p121
    %p123 = scmp.ne.s32.totalorder %s112, %s113
    %p124 = scmp.eq.s32.totalorder %s22, 0
    %p125 = por %p123, %p124
    %p126 = scmp.ne.s32.totalorder %s112, %s113
    %p127 = scmp.eq.s32.totalorder %s23, 3
    %p128 = por %p126, %p127
    %p130 = scmp.ne.s32.totalorder %s113, %s129
    %p131 = scmp.eq.s32.totalorder %s23, 0
    %p132 = por %p130, %p131
    %s133 = ssub.s32 %s24, %s36
    %s134 = ssub.s32 %s25, %s32
    %s135 = sor.u32 %s133, %s134
    %p136 = scmp.eq.s32.totalorder %s135, 0
    %s138 = sadd.s32 %s137, 1
    %s139 = scalar_select %p136, %s137, %s138
    %p142 = pneg %p136
    %p143 = scmp.eq.s32.totalorder %s17, 3
    %p144 = por %p142, %p143
    %p145 = scmp.ne.s32.totalorder %s137, %s140
    %p146 = scmp.eq.s32.totalorder %s17, 0
    %p147 = por %p145, %p146
    %p148 = scmp.ne.s32.totalorder %s137, %s140
    %p149 = scmp.eq.s32.totalorder %s22, 3
    %p150 = por %p148, %p149
    %p151 = scmp.ne.s32.totalorder %s140, %s141
    %p152 = scmp.eq.s32.totalorder %s22, 0
    %p153 = por %p151, %p152
    %p154 = scmp.ne.s32.totalorder %s140, %s141
    %p155 = scmp.eq.s32.totalorder %s23, 3
    %p156 = por %p154, %p155
    %p158 = scmp.ne.s32.totalorder %s141, %s157
    %p159 = scmp.eq.s32.totalorder %s23, 0
    %p160 = por %p158, %p159
    %s161 = ssub.s32 %s25, 1
    %p162 = scmp.gt.s32.totalorder %s161, 0
    %s163 = scalar_select %p162, %s161, 0
    %s164 = ssub.s32 %s32, 1
    %p165 = scmp.gt.s32.totalorder %s164, 0
    %s166 = scalar_select %p165, %s164, 0
    %s167 = ssub.s32 %s24, %s36
    %s168 = ssub.s32 %s163, %s166
    %s169 = sor.u32 %s167, %s168
    %p170 = scmp.eq.s32.totalorder %s169, 0
    %s172 = sadd.s32 %s171, 1
    %s173 = scalar_select %p170, %s171, %s172
    %p176 = pneg %p170
    %p177 = scmp.eq.s32.totalorder %s17, 3
    %p178 = por %p176, %p177
    %p179 = scmp.ne.s32.totalorder %s171, %s174
    %p180 = scmp.eq.s32.totalorder %s17, 0
    %p181 = por %p179, %p180
    %p182 = scmp.ne.s32.totalorder %s171, %s174
    %p183 = scmp.eq.s32.totalorder %s22, 3
    %p184 = por %p182, %p183
    %p185 = scmp.ne.s32.totalorder %s174, %s175
    %p186 = scmp.eq.s32.totalorder %s22, 0
    %p187 = por %p185, %p186
    %p188 = scmp.ne.s32.totalorder %s174, %s175
    %p189 = scmp.eq.s32.totalorder %s23, 3
    %p190 = por %p188, %p189
    %p192 = scmp.ne.s32.totalorder %s175, %s191
    %p193 = scmp.eq.s32.totalorder %s23, 0
    %p194 = por %p192, %p193
    %s195 = sadd.s32 %s25, 1
    %p196 = scmp.lt.s32.totalorder %s195, 1
    %s197 = scalar_select %p196, %s195, 1
    %s198 = sadd.s32 %s32, 1
    %p199 = scmp.lt.s32.totalorder %s198, 1
    %s200 = scalar_select %p199, %s198, 1
    %s201 = ssub.s32 %s24, %s36
    %s202 = ssub.s32 %s197, %s200
    %s203 = sor.u32 %s201, %s202
    %p204 = scmp.eq.s32.totalorder %s203, 0
    %s206 = sadd.s32 %s205, 1
    %s207 = scalar_select %p204, %s205, %s206
    %p210 = pneg %p204
    %p211 = scmp.eq.s32.totalorder %s17, 3
    %p212 = por %p210, %p211
    %p213 = scmp.ne.s32.totalorder %s205, %s208
    %p214 = scmp.eq.s32.totalorder %s17, 0
    %p215 = por %p213, %p214
    %p216 = scmp.ne.s32.totalorder %s205, %s208
    %p217 = scmp.eq.s32.totalorder %s22, 3
    %p218 = por %p216, %p217
    %p219 = scmp.ne.s32.totalorder %s208, %s209
    %p220 = scmp.eq.s32.totalorder %s22, 0
    %p221 = por %p219, %p220
    %p222 = scmp.ne.s32.totalorder %s208, %s209
    %p223 = scmp.eq.s32.totalorder %s23, 3
    %p224 = por %p222, %p223
    %p226 = scmp.ne.s32.totalorder %s209, %s225
    %p227 = scmp.eq.s32.totalorder %s23, 0
    %p228 = por %p226, %p227
    %s230 = sadd.s32 %s229, 1
    %p233 = scmp.eq.s32.totalorder %s17, 3
    %p234 = scmp.ne.s32.totalorder %s229, %s231
    %p235 = scmp.eq.s32.totalorder %s17, 0
    %p236 = por %p234, %p235
    %p237 = scmp.ne.s32.totalorder %s229, %s231
    %p238 = scmp.eq.s32.totalorder %s22, 3
    %p239 = por %p237, %p238
    %p240 = scmp.ne.s32.totalorder %s231, %s232
    %p241 = scmp.eq.s32.totalorder %s22, 0
    %p242 = por %p240, %p241
    %p243 = scmp.ne.s32.totalorder %s231, %s232
    %p244 = scmp.eq.s32.totalorder %s23, 3
    %p245 = por %p243, %p244
    %p247 = scmp.ne.s32.totalorder %s232, %s246
    %p248 = scmp.eq.s32.totalorder %s23, 0
    %p249 = por %p247, %p248
    %s251 = sadd.s32 %s250, 1
    %p254 = scmp.eq.s32.totalorder %s17, 3
    %p255 = scmp.ne.s32.totalorder %s250, %s252
    %p256 = scmp.eq.s32.totalorder %s17, 0
    %p257 = por %p255, %p256
    %p258 = scmp.ne.s32.totalorder %s250, %s252
    %p259 = scmp.eq.s32.totalorder %s22, 3
    %p260 = por %p258, %p259
    %p261 = scmp.ne.s32.totalorder %s252, %s253
    %p262 = scmp.eq.s32.totalorder %s22, 0
    %p263 = por %p261, %p262
    %p264 = scmp.ne.s32.totalorder %s252, %s253
    %p265 = scmp.eq.s32.totalorder %s23, 3
    %p266 = por %p264, %p265
    %p268 = scmp.ne.s32.totalorder %s253, %s267
    %p269 = scmp.eq.s32.totalorder %s23, 0
    %p270 = por %p268, %p269
    %s272 = sadd.s32 %s271, 1
    %p275 = scmp.eq.s32.totalorder %s17, 3
    %p276 = scmp.ne.s32.totalorder %s271, %s273
    %p277 = scmp.eq.s32.totalorder %s17, 0
    %p278 = por %p276, %p277
    %p279 = scmp.ne.s32.totalorder %s271, %s273
    %p280 = scmp.eq.s32.totalorder %s22, 3
    %p281 = por %p279, %p280
    %p282 = scmp.ne.s32.totalorder %s273, %s274
    %p283 = scmp.eq.s32.totalorder %s22, 0
    %p284 = por %p282, %p283
    %p285 = scmp.ne.s32.totalorder %s273, %s274
    %p286 = scmp.eq.s32.totalorder %s23, 3
    %p287 = por %p285, %p286
    %p289 = scmp.ne.s32.totalorder %s274, %s288
    %p290 = scmp.eq.s32.totalorder %s23, 0
    %p291 = por %p289, %p290
    %s292 = ssub.s32 %s24, %s36
    %s293 = ssub.s32 %s25, %s32
    %s294 = sor.u32 %s292, %s293
    %p295 = scmp.eq.s32.totalorder %s294, 0
    %s297 = sadd.s32 %s296, 1
    %s298 = scalar_select %p295, %s296, %s297
    %p301 = pneg %p295
    %p302 = scmp.eq.s32.totalorder %s17, 3
    %p303 = por %p301, %p302
    %p304 = scmp.ne.s32.totalorder %s296, %s299
    %p305 = scmp.eq.s32.totalorder %s17, 0
    %p306 = por %p304, %p305
    %p307 = scmp.ne.s32.totalorder %s296, %s299
    %p308 = scmp.eq.s32.totalorder %s22, 3
    %p309 = por %p307, %p308
    %p310 = scmp.ne.s32.totalorder %s299, %s300
    %p311 = scmp.eq.s32.totalorder %s22, 0
    %p312 = por %p310, %p311
    %p313 = scmp.ne.s32.totalorder %s299, %s300
    %p314 = scmp.eq.s32.totalorder %s23, 3
    %p315 = por %p313, %p314
    %p317 = scmp.ne.s32.totalorder %s300, %s316
    %p318 = scmp.eq.s32.totalorder %s23, 0
    %p319 = por %p317, %p318
    %s320 = ssub.s32 %s24, %s36
    %s321 = ssub.s32 %s25, %s32
    %s322 = sor.u32 %s320, %s321
    %p323 = scmp.eq.s32.totalorder %s322, 0
    %s325 = sadd.s32 %s324, 1
    %s326 = scalar_select %p323, %s324, %s325
    %p329 = pneg %p323
    %p330 = scmp.eq.s32.totalorder %s17, 3
    %p331 = por %p329, %p330
    %p332 = scmp.ne.s32.totalorder %s324, %s327
    %p333 = scmp.eq.s32.totalorder %s17, 0
    %p334 = por %p332, %p333
    %p335 = scmp.ne.s32.totalorder %s324, %s327
    %p336 = scmp.eq.s32.totalorder %s22, 3
    %p337 = por %p335, %p336
    %p338 = scmp.ne.s32.totalorder %s327, %s328
    %p339 = scmp.eq.s32.totalorder %s22, 0
    %p340 = por %p338, %p339
    %p341 = scmp.ne.s32.totalorder %s327, %s328
    %p342 = scmp.eq.s32.totalorder %s23, 3
    %p343 = por %p341, %p342
    %p345 = scmp.ne.s32.totalorder %s328, %s344
    %p346 = scmp.eq.s32.totalorder %s23, 0
    %p347 = por %p345, %p346
    %p348 = scmp.le.s32.totalorder 1, %s17
    %p349 = scmp.lt.s32.totalorder %s17, 5
    %p350 = pnand %p348, %p349
    %p351 = pneg %p350
    // Predicated region
    $region9: #{_lambda_.3} parent=5 // pred_check
      _
    $region10: #{_lambda_.3} parent=5 // pred_check_branch
      %353 = sbr.rel (%p350) target = $region12
    $region11: #{_lambda_.3} parent=5 // pred_region
      %s354 = ssub.s32 %s17, 1
      // Predicated region
      $region13: #{_lambda_.3} parent=11 // pred_check
        %p355 = pneg %p242
      $region14: #{_lambda_.3} parent=11 // pred_check_branch
        %357 = sbr.rel (%p355) target = $region16
      $region15: #{_lambda_.3} parent=11 // pred_region
        _
      $region16: #{_lambda_.3} parent=11 // pred_fallthru
        _
      // Predicated region
      $region17: #{_lambda_.3} parent=11 // pred_check
        %p358 = pneg %p263
      $region18: #{_lambda_.3} parent=11 // pred_check_branch
        %360 = sbr.rel (%p358) target = $region20
      $region19: #{_lambda_.3} parent=11 // pred_region
        _
      $region20: #{_lambda_.3} parent=11 // pred_fallthru
        _
      // Predicated region
      $region21: #{_lambda_.3} parent=11 // pred_check
        %p361 = pneg %p284
      $region22: #{_lambda_.3} parent=11 // pred_check_branch
        %363 = sbr.rel (%p361) target = $region24
      $region23: #{_lambda_.3} parent=11 // pred_region
        _
      $region24: #{_lambda_.3} parent=11 // pred_fallthru
        _
    $region12: #{_lambda_.3} parent=5 // pred_fallthru
      _
    %p364 = scmp.lt.s32.totalorder %s17, 4
    // Predicated region
    $region25: #{_lambda_.3} parent=5 // pred_check
      %p365 = pneg %p364
    $region26: #{_lambda_.3} parent=5 // pred_check_branch
      %367 = sbr.rel (%p365) target = $region28
    $region27: #{_lambda_.3} parent=5 // pred_region
      // Predicated region
      $region29: #{_lambda_.3} parent=27 // pred_check
        %p368 = pneg %p51
      $region30: #{_lambda_.3} parent=27 // pred_check_branch
        %370 = sbr.rel (%p368) target = $region32
      $region31: #{_lambda_.3} parent=27 // pred_region
        %p371 = scmp.lt.s32.totalorder %s24, 1
        %s372 = scalar_select %p371, %s24, 1
        %p373 = scmp.lt.s32.totalorder %s25, 1
        %s374 = scalar_select %p373, %s25, 1
        %s375 = smul.addr %s374, 16
        %s376 = smul.addr %s372, 32
        %s377 = sadd.s32 %s375, %s376
        %s378 = smul.addr %s377, 8
        %s379 = scalar_lea.vmem %s0, %s378
      $region32: #{_lambda_.3} parent=27 // pred_fallthru
        _
      // Predicated region
      $region33: #{_lambda_.3} parent=27 // pred_check
        %p380 = pneg %p85
      $region34: #{_lambda_.3} parent=27 // pred_check_branch
        %382 = sbr.rel (%p380) target = $region36
      $region35: #{_lambda_.3} parent=27 // pred_region
        %s383 = ssub.s32 %s25, 1
        %p384 = scmp.gt.s32.totalorder %s383, 0
        %s385 = scalar_select %p384, %s383, 0
        %p386 = scmp.lt.s32.totalorder %s24, 1
        %s387 = scalar_select %p386, %s24, 1
        %p388 = scmp.lt.s32.totalorder %s385, 1
        %s389 = scalar_select %p388, %s385, 1
        %s390 = smul.addr %s389, 16
        %s391 = sadd.s32 14, %s390
        %s392 = smul.addr %s387, 32
        %s393 = sadd.s32 %s391, %s392
        %s394 = smul.addr %s393, 8
        %s395 = scalar_lea.vmem %s1, %s394
        %s396 = ssub.s32 %s25, 1
        %p397 = scmp.gt.s32.totalorder %s396, 0
        %s398 = scalar_select %p397, %s396, 0
      $region36: #{_lambda_.3} parent=27 // pred_fallthru
        _
      // Predicated region
      $region37: #{_lambda_.3} parent=27 // pred_check
        %p399 = pneg %p119
      $region38: #{_lambda_.3} parent=27 // pred_check_branch
        %401 = sbr.rel (%p399) target = $region40
      $region39: #{_lambda_.3} parent=27 // pred_region
        %s402 = sadd.s32 %s25, 1
        %p403 = scmp.lt.s32.totalorder %s402, 1
        %s404 = scalar_select %p403, %s402, 1
        %p405 = scmp.lt.s32.totalorder %s24, 1
        %s406 = scalar_select %p405, %s24, 1
        %p407 = scmp.lt.s32.totalorder %s404, 1
        %s408 = scalar_select %p407, %s404, 1
        %s409 = smul.addr %s408, 16
        %s410 = smul.addr %s406, 32
        %s411 = sadd.s32 %s409, %s410
        %s412 = smul.addr %s411, 8
        %s413 = scalar_lea.vmem %s2, %s412
        %s414 = sadd.s32 %s25, 1
        %p415 = scmp.lt.s32.totalorder %s414, 1
        %s416 = scalar_select %p415, %s414, 1
      $region40: #{_lambda_.3} parent=27 // pred_fallthru
        _
      // Predicated region
      $region41: #{_lambda_.3} parent=27 // pred_check
        %p417 = pneg %p147
      $region42: #{_lambda_.3} parent=27 // pred_check_branch
        %419 = sbr.rel (%p417) target = $region44
      $region43: #{_lambda_.3} parent=27 // pred_region
        %p420 = scmp.lt.s32.totalorder %s24, 1
        %s421 = scalar_select %p420, %s24, 1
        %p422 = scmp.lt.s32.totalorder %s25, 1
        %s423 = scalar_select %p422, %s25, 1
        %s424 = smul.addr %s423, 16
        %s425 = smul.addr %s421, 32
        %s426 = sadd.s32 %s424, %s425
        %s427 = smul.addr %s426, 8
        %s428 = scalar_lea.vmem %s3, %s427
      $region44: #{_lambda_.3} parent=27 // pred_fallthru
        _
      // Predicated region
      $region45: #{_lambda_.3} parent=27 // pred_check
        %p429 = pneg %p181
      $region46: #{_lambda_.3} parent=27 // pred_check_branch
        %431 = sbr.rel (%p429) target = $region48
      $region47: #{_lambda_.3} parent=27 // pred_region
        %s432 = ssub.s32 %s25, 1
        %p433 = scmp.gt.s32.totalorder %s432, 0
        %s434 = scalar_select %p433, %s432, 0
        %p435 = scmp.lt.s32.totalorder %s24, 1
        %s436 = scalar_select %p435, %s24, 1
        %p437 = scmp.lt.s32.totalorder %s434, 1
        %s438 = scalar_select %p437, %s434, 1
        %s439 = smul.addr %s438, 16
        %s440 = sadd.s32 14, %s439
        %s441 = smul.addr %s436, 32
        %s442 = sadd.s32 %s440, %s441
        %s443 = smul.addr %s442, 8
        %s444 = scalar_lea.vmem %s4, %s443
        %s445 = ssub.s32 %s25, 1
        %p446 = scmp.gt.s32.totalorder %s445, 0
        %s447 = scalar_select %p446, %s445, 0
      $region48: #{_lambda_.3} parent=27 // pred_fallthru
        _
      // Predicated region
      $region49: #{_lambda_.3} parent=27 // pred_check
        %p448 = pneg %p215
      $region50: #{_lambda_.3} parent=27 // pred_check_branch
        %450 = sbr.rel (%p448) target = $region52
      $region51: #{_lambda_.3} parent=27 // pred_region
        %s451 = sadd.s32 %s25, 1
        %p452 = scmp.lt.s32.totalorder %s451, 1
        %s453 = scalar_select %p452, %s451, 1
        %p454 = scmp.lt.s32.totalorder %s24, 1
        %s455 = scalar_select %p454, %s24, 1
        %p456 = scmp.lt.s32.totalorder %s453, 1
        %s457 = scalar_select %p456, %s453, 1
        %s458 = smul.addr %s457, 16
        %s459 = smul.addr %s455, 32
        %s460 = sadd.s32 %s458, %s459
        %s461 = smul.addr %s460, 8
        %s462 = scalar_lea.vmem %s5, %s461
        %s463 = sadd.s32 %s25, 1
        %p464 = scmp.lt.s32.totalorder %s463, 1
        %s465 = scalar_select %p464, %s463, 1
      $region52: #{_lambda_.3} parent=27 // pred_fallthru
        _
    $region28: #{_lambda_.3} parent=5 // pred_fallthru
      _
    %p466 = scmp.le.s32.totalorder 1, %s17
    %p467 = scmp.lt.s32.totalorder %s17, 5
    %p468 = pnand %p466, %p467
    %p469 = pneg %p468
    // Predicated region
    $region53: #{_lambda_.3} parent=5 // pred_check
      _
    $region54: #{_lambda_.3} parent=5 // pred_check_branch
      %471 = sbr.rel (%p468) target = $region56
    $region55: #{_lambda_.3} parent=5 // pred_region
      %s472 = ssub.s32 %s17, 1
      %p473 = scmp.lt.s32.totalorder %s26, 1
      %s474 = scalar_select %p473, %s26, 1
      %p475 = scmp.lt.s32.totalorder %s27, 1
      %s476 = scalar_select %p475, %s27, 1
      %s477 = smul.addr %s476, 16
      %s478 = smul.addr %s474, 32
      %s479 = sadd.s32 %s477, %s478
      %s480 = smul.addr %s479, 8
      %s481 = scalar_lea.vmem %s0, %s480
      %p482 = pneg %p57
      %p483 = pneg %p54
      %s484 = ssub.s32 %s27, 1
      %p485 = scmp.gt.s32.totalorder %s484, 0
      %s486 = scalar_select %p485, %s484, 0
      %p487 = scmp.lt.s32.totalorder %s26, 1
      %s488 = scalar_select %p487, %s26, 1
      %p489 = scmp.lt.s32.totalorder %s486, 1
      %s490 = scalar_select %p489, %s486, 1
      %s491 = smul.addr %s490, 16
      %s492 = sadd.s32 14, %s491
      %s493 = smul.addr %s488, 32
      %s494 = sadd.s32 %s492, %s493
      %s495 = smul.addr %s494, 8
      %s496 = scalar_lea.vmem %s1, %s495
      %p497 = pneg %p91
      %p498 = pneg %p88
      %s499 = sadd.s32 %s27, 1
      %p500 = scmp.lt.s32.totalorder %s499, 1
      %s501 = scalar_select %p500, %s499, 1
      %p502 = scmp.lt.s32.totalorder %s26, 1
      %s503 = scalar_select %p502, %s26, 1
      %p504 = scmp.lt.s32.totalorder %s501, 1
      %s505 = scalar_select %p504, %s501, 1
      %s506 = smul.addr %s505, 16
      %s507 = smul.addr %s503, 32
      %s508 = sadd.s32 %s506, %s507
      %s509 = smul.addr %s508, 8
      %s510 = scalar_lea.vmem %s2, %s509
      %p511 = pneg %p125
      %p512 = pneg %p122
      %p513 = scmp.lt.s32.totalorder %s26, 1
      %s514 = scalar_select %p513, %s26, 1
      %p515 = scmp.lt.s32.totalorder %s27, 1
      %s516 = scalar_select %p515, %s27, 1
      %s517 = smul.addr %s516, 16
      %s518 = smul.addr %s514, 32
      %s519 = sadd.s32 %s517, %s518
      %s520 = smul.addr %s519, 8
      %s521 = scalar_lea.vmem %s3, %s520
      %p522 = pneg %p153
      %p523 = pneg %p150
      %s524 = ssub.s32 %s27, 1
      %p525 = scmp.gt.s32.totalorder %s524, 0
      %s526 = scalar_select %p525, %s524, 0
      %p527 = scmp.lt.s32.totalorder %s26, 1
      %s528 = scalar_select %p527, %s26, 1
      %p529 = scmp.lt.s32.totalorder %s526, 1
      %s530 = scalar_select %p529, %s526, 1
      %s531 = smul.addr %s530, 16
      %s532 = sadd.s32 14, %s531
      %s533 = smul.addr %s528, 32
      %s534 = sadd.s32 %s532, %s533
      %s535 = smul.addr %s534, 8
      %s536 = scalar_lea.vmem %s4, %s535
      %p537 = pneg %p187
      %p538 = pneg %p184
      %s539 = sadd.s32 %s27, 1
      %p540 = scmp.lt.s32.totalorder %s539, 1
      %s541 = scalar_select %p540, %s539, 1
      %p542 = scmp.lt.s32.totalorder %s26, 1
      %s543 = scalar_select %p542, %s26, 1
      %p544 = scmp.lt.s32.totalorder %s541, 1
      %s545 = scalar_select %p544, %s541, 1
      %s546 = smul.addr %s545, 16
      %s547 = smul.addr %s543, 32
      %s548 = sadd.s32 %s546, %s547
      %s549 = smul.addr %s548, 8
      %s550 = scalar_lea.vmem %s5, %s549
      %p551 = pneg %p221
      %p552 = pneg %p218
      %p553 = pneg %p242
      %p554 = pneg %p239
      %p555 = pneg %p263
      %p556 = pneg %p260
      %p557 = pneg %p284
      %p558 = pneg %p281
      %p559 = pneg %p312
      %p560 = pneg %p309
      %p561 = scmp.lt.s32.totalorder %s26, 1
      %s562 = scalar_select %p561, %s26, 1
      %p563 = scmp.lt.s32.totalorder %s27, 1
      %s564 = scalar_select %p563, %s27, 1
      %s565 = smul.addr %s564, 16
      %s566 = smul.addr %s562, 32
      %s567 = sadd.s32 %s565, %s566
      %s568 = smul.addr %s567, 4
      %s569 = scalar_lea.vmem %s9, %s568
      %p570 = pneg %p340
      %p571 = pneg %p337
      %p572 = scmp.lt.s32.totalorder %s26, 1
      %s573 = scalar_select %p572, %s26, 1
      %p574 = scmp.lt.s32.totalorder %s27, 1
      %s575 = scalar_select %p574, %s27, 1
      %s576 = smul.addr %s573, 2
      %s577 = sadd.s32 %s575, %s576
      %s578 = smul.addr %s577, 2
      %s579 = scalar_lea.vmem %s10, %s578
      %p580 = scmp.lt.s32.totalorder %s26, 1
      %s581 = scalar_select %p580, %s26, 1
      %p582 = scmp.lt.s32.totalorder %s27, 1
      %s583 = scalar_select %p582, %s27, 1
      %s584 = smul.addr %s583, 16
      %s585 = smul.addr %s581, 32
      %s586 = sadd.s32 %s584, %s585
      %s587 = smul.addr %s586, 8
      %s588 = scalar_lea.vmem %s0, %s587
      %s589 = ssub.s32 %s27, 1
      %p590 = scmp.gt.s32.totalorder %s589, 0
      %s591 = scalar_select %p590, %s589, 0
      %p592 = scmp.lt.s32.totalorder %s26, 1
      %s593 = scalar_select %p592, %s26, 1
      %p594 = scmp.lt.s32.totalorder %s591, 1
      %s595 = scalar_select %p594, %s591, 1
      %s596 = smul.addr %s595, 16
      %s597 = sadd.s32 14, %s596
      %s598 = smul.addr %s593, 32
      %s599 = sadd.s32 %s597, %s598
      %s600 = smul.addr %s599, 8
      %s601 = scalar_lea.vmem %s1, %s600
      %s602 = ssub.s32 %s27, 1
      %p603 = scmp.gt.s32.totalorder %s602, 0
      %s604 = scalar_select %p603, %s602, 0
      %s605 = sadd.s32 %s27, 1
      %p606 = scmp.lt.s32.totalorder %s605, 1
      %s607 = scalar_select %p606, %s605, 1
      %p608 = scmp.lt.s32.totalorder %s26, 1
      %s609 = scalar_select %p608, %s26, 1
      %p610 = scmp.lt.s32.totalorder %s607, 1
      %s611 = scalar_select %p610, %s607, 1
      %s612 = smul.addr %s611, 16
      %s613 = smul.addr %s609, 32
      %s614 = sadd.s32 %s612, %s613
      %s615 = smul.addr %s614, 8
      %s616 = scalar_lea.vmem %s2, %s615
      %s617 = sadd.s32 %s27, 1
      %p618 = scmp.lt.s32.totalorder %s617, 1
      %s619 = scalar_select %p618, %s617, 1
      %p620 = scmp.lt.s32.totalorder %s26, 1
      %s621 = scalar_select %p620, %s26, 1
      %p622 = scmp.lt.s32.totalorder %s27, 1
      %s623 = scalar_select %p622, %s27, 1
      %s624 = smul.addr %s623, 16
      %s625 = smul.addr %s621, 32
      %s626 = sadd.s32 %s624, %s625
      %s627 = smul.addr %s626, 8
      %s628 = scalar_lea.vmem %s3, %s627
      %s629 = ssub.s32 %s27, 1
      %p630 = scmp.gt.s32.totalorder %s629, 0
      %s631 = scalar_select %p630, %s629, 0
      %p632 = scmp.lt.s32.totalorder %s26, 1
      %s633 = scalar_select %p632, %s26, 1
      %p634 = scmp.lt.s32.totalorder %s631, 1
      %s635 = scalar_select %p634, %s631, 1
      %s636 = smul.addr %s635, 16
      %s637 = sadd.s32 14, %s636
      %s638 = smul.addr %s633, 32
      %s639 = sadd.s32 %s637, %s638
      %s640 = smul.addr %s639, 8
      %s641 = scalar_lea.vmem %s4, %s640
      %s642 = ssub.s32 %s27, 1
      %p643 = scmp.gt.s32.totalorder %s642, 0
      %s644 = scalar_select %p643, %s642, 0
      %s645 = sadd.s32 %s27, 1
      %p646 = scmp.lt.s32.totalorder %s645, 1
      %s647 = scalar_select %p646, %s645, 1
      %p648 = scmp.lt.s32.totalorder %s26, 1
      %s649 = scalar_select %p648, %s26, 1
      %p650 = scmp.lt.s32.totalorder %s647, 1
      %s651 = scalar_select %p650, %s647, 1
      %s652 = smul.addr %s651, 16
      %s653 = smul.addr %s649, 32
      %s654 = sadd.s32 %s652, %s653
      %s655 = smul.addr %s654, 8
      %s656 = scalar_lea.vmem %s5, %s655
      %s657 = sadd.s32 %s27, 1
      %p658 = scmp.lt.s32.totalorder %s657, 1
      %s659 = scalar_select %p658, %s657, 1
      %p660 = scmp.lt.s32.totalorder %s26, 1
      %s661 = scalar_select %p660, %s26, 1
      %p662 = scmp.lt.s32.totalorder %s27, 1
      %s663 = scalar_select %p662, %s27, 1
      %s664 = smul.addr %s663, 16
      %s665 = smul.addr %s661, 32
      %s666 = sadd.s32 %s664, %s665
      %s667 = smul.addr %s666, 4
      %s668 = scalar_lea.vmem %s9, %s667
      %p669 = scmp.lt.s32.totalorder %s26, 1
      %s670 = scalar_select %p669, %s26, 1
      %p671 = scmp.lt.s32.totalorder %s27, 1
      %s672 = scalar_select %p671, %s27, 1
      %s673 = smul.addr %s670, 2
      %s674 = sadd.s32 %s672, %s673
      %s675 = smul.addr %s674, 2
      %s676 = scalar_lea.vmem %s10, %s675
      %p678 = scmp.eq.s32.totalorder %s27, 0
      %p679 = scmp.eq.s32.totalorder %s27, 1
      %680 = vst [vmem:[#allocation2] sm:$0xf] 0
      %681 = vst [vmem:[#allocation2 + $0x4] sm:$0xf] 0
      %682 = vst [vmem:[#allocation2 + $0x8] sm:$0x1] 0
      %683 = vst [vmem:[#allocation2 + $0xc] sm:$0xf] 0
      %684 = vst [vmem:[#allocation2 + $0x10] sm:$0xf] 0
      %685 = vst [vmem:[#allocation2 + $0x14] sm:$0x1] 0
      %686 = vst [vmem:[#allocation2 + $0x18] sm:$0xf] 0
      %687 = vst [vmem:[#allocation2 + $0x1c] sm:$0xf] 0
      %688 = vst [vmem:[#allocation2 + $0x20] sm:$0x1] 0
      %689 = vst [vmem:[#allocation2 + $0x24] sm:$0xf] 0
      %690 = vst [vmem:[#allocation2 + $0x28] sm:$0xf] 0
      %691 = vst [vmem:[#allocation2 + $0x2c] sm:$0x1] 0
      %692 = vst [vmem:[#allocation2 + $0x30] sm:$0xf] 0
      %693 = vst [vmem:[#allocation2 + $0x34] sm:$0xf] 0
      %694 = vst [vmem:[#allocation2 + $0x38] sm:$0x1] 0
      %695 = vst [vmem:[#allocation2 + $0x3c] sm:$0xf] 0
      %696 = vst [vmem:[#allocation2 + $0x40] sm:$0xf] 0
      %697 = vst [vmem:[#allocation2 + $0x44] sm:$0x1] 0
      %698 = vst [vmem:[#allocation2 + $0x48] sm:$0xf] 0
      %699 = vst [vmem:[#allocation2 + $0x4c] sm:$0xf] 0
      %700 = vst [vmem:[#allocation2 + $0x50] sm:$0x1] 0
      %701 = vst [vmem:[#allocation2 + $0x54] sm:$0xf] 0
      %702 = vst [vmem:[#allocation2 + $0x58] sm:$0xf] 0
      %703 = vst [vmem:[#allocation2 + $0x5c] sm:$0x1] 0
      %704 = vst [vmem:[#allocation2 + $0x60] sm:$0xf] 0
      %705 = vst [vmem:[#allocation2 + $0x64] sm:$0xf] 0
      %706 = vst [vmem:[#allocation2 + $0x68] sm:$0x1] 0
      %707 = vst [vmem:[#allocation2 + $0x6c] sm:$0xf] 0
      %708 = vst [vmem:[#allocation2 + $0x70] sm:$0xf] 0
      %709 = vst [vmem:[#allocation2 + $0x74] sm:$0x1] 0
      %v710 = vld [vmem:[%s588] sm:$0xff]
      %v711 = vld [vmem:[%s588 + $0x8] sm:$0xff]
      %v712 = vld [vmem:[%s588 + $0x10] sm:$0xff]
      %v713 = vld [vmem:[%s588 + $0x18] sm:$0xff]
      %v714 = vld [vmem:[%s588 + $0x20] sm:$0xff]
      %v715 = vld [vmem:[%s588 + $0x28] sm:$0xff]
      %v716 = vld [vmem:[%s588 + $0x30] sm:$0xff]
      %v717 = vld [vmem:[%s588 + $0x38] sm:$0xff]
      %v718 = vld [vmem:[%s588 + $0x40] sm:$0xff]
      %v719 = vld [vmem:[%s588 + $0x48] sm:$0xff]
      %v720 = vld [vmem:[%s588 + $0x50] sm:$0xff]
      %v721 = vld [vmem:[%s588 + $0x58] sm:$0xff]
      %v722 = vld [vmem:[%s588 + $0x60] sm:$0xff]
      %v723 = vld [vmem:[%s588 + $0x68] sm:$0xff]
      %v724 = vld [vmem:[%s588 + $0x70] sm:$0xff]
      %v725 = vld [vmem:[%s588 + $0x78] sm:$0xff]
      %v726 = vld [vmem:[%s601] sm:$0xff]
      %v727 = vld [vmem:[%s601 + $0x8] sm:$0xff]
      %v728 = vld [vmem:[%s616] sm:$0xff]
      %v729 = vld [vmem:[%s616 + $0x8] sm:$0xff]
      %s730 = scalar_select %p678, 1, 0
      %v731 = vstv %s730
      %vm732 = vcmp.eq.s32.totalorder %v731, 1
      %v733 = vsel %vm732, 0.0, %v726
      %v734 = vsel %vm732, 0.0, %v727
      %s735 = scalar_select %p679, 1, 0
      %v736 = vstv %s735
      %vm737 = vcmp.eq.s32.totalorder %v736, 1
      %v738 = vsel %vm737, 0.0, %v728
      %v739 = vsel %vm737, 0.0, %v729
      %v740 = vpack.c.bf16 %v711, %v710
      %v741 = vpack.c.bf16 %v713, %v712
      %v742 = vpack.c.bf16 %v715, %v714
      %v743 = vpack.c.bf16 %v717, %v716
      %v744 = vpack.c.bf16 %v719, %v718
      %v745 = vpack.c.bf16 %v721, %v720
      %v746 = vpack.c.bf16 %v723, %v722
      %v747 = vpack.c.bf16 %v725, %v724
      %v756 = vunpack.c.l.b16 %v740
      %v757 = vunpack.c.h.b16 %v740
      %v758 = vunpack.c.l.b16 %v741
      %v759 = vunpack.c.h.b16 %v741
      %v760 = vunpack.c.l.b16 %v742
      %v761 = vunpack.c.h.b16 %v742
      %v762 = vunpack.c.l.b16 %v743
      %v763 = vunpack.c.h.b16 %v743
      %v764 = vunpack.c.l.b16 %v744
      %v765 = vunpack.c.h.b16 %v744
      %v766 = vunpack.c.l.b16 %v745
      %v767 = vunpack.c.h.b16 %v745
      %v768 = vunpack.c.l.b16 %v746
      %v769 = vunpack.c.h.b16 %v746
      %v770 = vunpack.c.l.b16 %v747
      %v771 = vunpack.c.h.b16 %v747
      %v772 = vpack.c.b16 %v756, %v756
      %v773 = vpack.c.b16 %v757, %v757
      %v774 = vpack.c.b16 %v758, %v758
      %v775 = vpack.c.b16 %v759, %v759
      %v776 = vpack.c.b16 %v760, %v760
      %v777 = vpack.c.b16 %v761, %v761
      %v778 = vpack.c.b16 %v762, %v762
      %v779 = vpack.c.b16 %v763, %v763
      %v780 = vpack.c.b16 %v764, %v764
      %v781 = vpack.c.b16 %v765, %v765
      %v782 = vpack.c.b16 %v766, %v766
      %v783 = vpack.c.b16 %v767, %v767
      %v784 = vpack.c.b16 %v768, %v768
      %v785 = vpack.c.b16 %v769, %v769
      %v786 = vpack.c.b16 %v770, %v770
      %v787 = vpack.c.b16 %v771, %v771
      %vm788 = vsmask.f32 256
      %vm789 = vsmask.f32 4368
      %vm790 = vmor %vm788, %vm789
      %v792 = vshrl.u32 %v772, 16
      %v794 = vrot.slane %v792, 7
      %v795 = vshll.u32 %v772, 16
      %v797 = vor.u32 %v794, %v795
      %v798 = vrot.slane %v794, 4
      %v800 = vshrl.u32 %v773, 16
      %v802 = vrot.slane %v800, 7
      %v803 = vshll.u32 %v773, 16
      %v805 = vor.u32 %v802, %v803
      %v806 = vsel %vm790, %v798, %v805
      %v807 = vrot.slane %v802, 4
      %v809 = vshrl.u32 %v774, 16
      %v811 = vrot.slane %v809, 7
      %v812 = vshll.u32 %v774, 16
      %v814 = vor.u32 %v811, %v812
      %v815 = vrot.slane %v811, 4
      %v817 = vshrl.u32 %v775, 16
      %v819 = vrot.slane %v817, 7
      %v820 = vshll.u32 %v775, 16
      %v822 = vor.u32 %v819, %v820
      %v823 = vsel %vm790, %v815, %v822
      %v824 = vrot.slane %v819, 4
      %v826 = vshrl.u32 %v776, 16
      %v828 = vrot.slane %v826, 7
      %v829 = vshll.u32 %v776, 16
      %v831 = vor.u32 %v828, %v829
      %v832 = vrot.slane %v828, 4
      %v834 = vshrl.u32 %v777, 16
      %v836 = vrot.slane %v834, 7
      %v837 = vshll.u32 %v777, 16
      %v839 = vor.u32 %v836, %v837
      %v840 = vsel %vm790, %v832, %v839
      %v841 = vrot.slane %v836, 4
      %v843 = vshrl.u32 %v778, 16
      %v845 = vrot.slane %v843, 7
      %v846 = vshll.u32 %v778, 16
      %v848 = vor.u32 %v845, %v846
      %v849 = vrot.slane %v845, 4
      %v851 = vshrl.u32 %v779, 16
      %v853 = vrot.slane %v851, 7
      %v854 = vshll.u32 %v779, 16
      %v856 = vor.u32 %v853, %v854
      %v857 = vsel %vm790, %v849, %v856
      %v858 = vrot.slane %v853, 4
      %v860 = vshrl.u32 %v780, 16
      %v862 = vrot.slane %v860, 7
      %v863 = vshll.u32 %v780, 16
      %v865 = vor.u32 %v862, %v863
      %v866 = vrot.slane %v862, 4
      %v868 = vshrl.u32 %v781, 16
      %v870 = vrot.slane %v868, 7
      %v871 = vshll.u32 %v781, 16
      %v873 = vor.u32 %v870, %v871
      %v874 = vsel %vm790, %v866, %v873
      %v875 = vrot.slane %v870, 4
      %v877 = vshrl.u32 %v782, 16
      %v879 = vrot.slane %v877, 7
      %v880 = vshll.u32 %v782, 16
      %v882 = vor.u32 %v879, %v880
      %v883 = vrot.slane %v879, 4
      %v885 = vshrl.u32 %v783, 16
      %v887 = vrot.slane %v885, 7
      %v888 = vshll.u32 %v783, 16
      %v890 = vor.u32 %v887, %v888
      %v891 = vsel %vm790, %v883, %v890
      %v892 = vrot.slane %v887, 4
      %v894 = vshrl.u32 %v784, 16
      %v896 = vrot.slane %v894, 7
      %v897 = vshll.u32 %v784, 16
      %v899 = vor.u32 %v896, %v897
      %v900 = vrot.slane %v896, 4
      %v902 = vshrl.u32 %v785, 16
      %v904 = vrot.slane %v902, 7
      %v905 = vshll.u32 %v785, 16
      %v907 = vor.u32 %v904, %v905
      %v908 = vsel %vm790, %v900, %v907
      %v909 = vrot.slane %v904, 4
      %v911 = vshrl.u32 %v786, 16
      %v913 = vrot.slane %v911, 7
      %v914 = vshll.u32 %v786, 16
      %v916 = vor.u32 %v913, %v914
      %v917 = vrot.slane %v913, 4
      %v919 = vshrl.u32 %v787, 16
      %v921 = vrot.slane %v919, 7
      %v922 = vshll.u32 %v787, 16
      %v924 = vor.u32 %v921, %v922
      %v925 = vsel %vm790, %v917, %v924
      %v926 = vrot.slane %v921, 4
      %s951 = scalar_lea.vmem [#allocation2], 12
      %vm952 = vcmask 27648
      %vm953 = vsmask.f32 7938
      %vm954 = vmand %vm952, %vm953
      %v955 = vld [vmem:[%s951] sm:$0xf]
      %v956 = vsel %vm954, %v797, %v955
      %957 = vst [vmem:[%s951] sm:$0xf] %v956
      %vm958 = vcmask 27648
      %959 = vst.msk [vmem:[%s951 + $0x4] sm:$0xf] %vm958, %v806
      %vm960 = vcmask 24576
      %vm961 = vmand %vm960, %vm788
      %v962 = vld [vmem:[%s951 + $0x8] sm:$0x1]
      %v963 = vsel %vm961, %v807, %v962
      %964 = vst [vmem:[%s951 + $0x8] sm:$0x1] %v963
      %v965 = vld [vmem:[%s951 + $0xc] sm:$0xf]
      %v966 = vsel %vm954, %v814, %v965
      %967 = vst [vmem:[%s951 + $0xc] sm:$0xf] %v966
      %968 = vst.msk [vmem:[%s951 + $0x10] sm:$0xf] %vm958, %v823
      %v969 = vld [vmem:[%s951 + $0x14] sm:$0x1]
      %v970 = vsel %vm961, %v824, %v969
      %971 = vst [vmem:[%s951 + $0x14] sm:$0x1] %v970
      %v972 = vld [vmem:[%s951 + $0x18] sm:$0xf]
      %v973 = vsel %vm954, %v831, %v972
      %974 = vst [vmem:[%s951 + $0x18] sm:$0xf] %v973
      %975 = vst.msk [vmem:[%s951 + $0x1c] sm:$0xf] %vm958, %v840
      %v976 = vld [vmem:[%s951 + $0x20] sm:$0x1]
      %v977 = vsel %vm961, %v841, %v976
      %978 = vst [vmem:[%s951 + $0x20] sm:$0x1] %v977
      %v979 = vld [vmem:[%s951 + $0x24] sm:$0xf]
      %v980 = vsel %vm954, %v848, %v979
      %981 = vst [vmem:[%s951 + $0x24] sm:$0xf] %v980
      %982 = vst.msk [vmem:[%s951 + $0x28] sm:$0xf] %vm958, %v857
      %v983 = vld [vmem:[%s951 + $0x2c] sm:$0x1]
      %v984 = vsel %vm961, %v858, %v983
      %985 = vst [vmem:[%s951 + $0x2c] sm:$0x1] %v984
      %v986 = vld [vmem:[%s951 + $0x30] sm:$0xf]
      %v987 = vsel %vm954, %v865, %v986
      %988 = vst [vmem:[%s951 + $0x30] sm:$0xf] %v987
      %989 = vst.msk [vmem:[%s951 + $0x34] sm:$0xf] %vm958, %v874
      %v990 = vld [vmem:[%s951 + $0x38] sm:$0x1]
      %v991 = vsel %vm961, %v875, %v990
      %992 = vst [vmem:[%s951 + $0x38] sm:$0x1] %v991
      %v993 = vld [vmem:[%s951 + $0x3c] sm:$0xf]
      %v994 = vsel %vm954, %v882, %v993
      %995 = vst [vmem:[%s951 + $0x3c] sm:$0xf] %v994
      %996 = vst.msk [vmem:[%s951 + $0x40] sm:$0xf] %vm958, %v891
      %v997 = vld [vmem:[%s951 + $0x44] sm:$0x1]
      %v998 = vsel %vm961, %v892, %v997
      %999 = vst [vmem:[%s951 + $0x44] sm:$0x1] %v998
      %v1000 = vld [vmem:[%s951 + $0x48] sm:$0xf]
      %v1001 = vsel %vm954, %v899, %v1000
      %1002 = vst [vmem:[%s951 + $0x48] sm:$0xf] %v1001
      %1003 = vst.msk [vmem:[%s951 + $0x4c] sm:$0xf] %vm958, %v908
      %v1004 = vld [vmem:[%s951 + $0x50] sm:$0x1]
      %v1005 = vsel %vm961, %v909, %v1004
      %1006 = vst [vmem:[%s951 + $0x50] sm:$0x1] %v1005
      %v1007 = vld [vmem:[%s951 + $0x54] sm:$0xf]
      %v1008 = vsel %vm954, %v916, %v1007
      %1009 = vst [vmem:[%s951 + $0x54] sm:$0xf] %v1008
      %1010 = vst.msk [vmem:[%s951 + $0x58] sm:$0xf] %vm958, %v925
      %v1011 = vld [vmem:[%s951 + $0x5c] sm:$0x1]
      %v1012 = vsel %vm961, %v926, %v1011
      %1013 = vst [vmem:[%s951 + $0x5c] sm:$0x1] %v1012
      %v1014 = vpack.c.bf16 %v734, %v733
      %v1016 = vunpack.c.l.b16 %v1014
      %v1017 = vunpack.c.h.b16 %v1014
      %v1018 = vpack.c.b16 %v1016, %v1016
      %v1019 = vpack.c.b16 %v1017, %v1017
      %v1021 = vshrl.u32 %v1018, 16
      %v1023 = vrot.slane %v1021, 7
      %v1024 = vshll.u32 %v1018, 16
      %v1026 = vor.u32 %v1023, %v1024
      %v1027 = vrot.slane %v1023, 4
      %v1029 = vshrl.u32 %v1019, 16
      %v1031 = vrot.slane %v1029, 7
      %v1032 = vshll.u32 %v1019, 16
      %v1034 = vor.u32 %v1031, %v1032
      %v1035 = vsel %vm790, %v1027, %v1034
      %v1036 = vrot.slane %v1031, 4
      %v1040 = vld [vmem:[#allocation2] sm:$0xf]
      %v1041 = vsel %vm954, %v1026, %v1040
      %1042 = vst [vmem:[#allocation2] sm:$0xf] %v1041
      %1043 = vst.msk [vmem:[#allocation2 + $0x4] sm:$0xf] %vm958, %v1035
      %v1044 = vld [vmem:[#allocation2 + $0x8] sm:$0x1]
      %v1045 = vsel %vm961, %v1036, %v1044
      %1046 = vst [vmem:[#allocation2 + $0x8] sm:$0x1] %v1045
      %v1047 = vpack.c.bf16 %v739, %v738
      %v1049 = vunpack.c.l.b16 %v1047
      %v1050 = vunpack.c.h.b16 %v1047
      %v1051 = vpack.c.b16 %v1049, %v1049
      %v1052 = vpack.c.b16 %v1050, %v1050
      %v1054 = vshrl.u32 %v1051, 16
      %v1056 = vrot.slane %v1054, 7
      %v1057 = vshll.u32 %v1051, 16
      %v1059 = vor.u32 %v1056, %v1057
      %v1060 = vrot.slane %v1056, 4
      %v1062 = vshrl.u32 %v1052, 16
      %v1064 = vrot.slane %v1062, 7
      %v1065 = vshll.u32 %v1052, 16
      %v1067 = vor.u32 %v1064, %v1065
      %v1068 = vsel %vm790, %v1060, %v1067
      %v1069 = vrot.slane %v1064, 4
      %s1073 = scalar_lea.vmem [#allocation2], 108
      %v1074 = vld [vmem:[%s1073] sm:$0xf]
      %v1075 = vsel %vm954, %v1059, %v1074
      %1076 = vst [vmem:[%s1073] sm:$0xf] %v1075
      %1077 = vst.msk [vmem:[%s1073 + $0x4] sm:$0xf] %vm958, %v1068
      %v1078 = vld [vmem:[%s1073 + $0x8] sm:$0x1]
      %v1079 = vsel %vm961, %v1069, %v1078
      %1080 = vst [vmem:[%s1073 + $0x8] sm:$0x1] %v1079
      %v1081 = vld [vmem:[%s628] sm:$0xff]
      %v1082 = vld [vmem:[%s628 + $0x8] sm:$0xff]
      %v1083 = vld [vmem:[%s628 + $0x10] sm:$0xff]
      %v1084 = vld [vmem:[%s628 + $0x18] sm:$0xff]
      %v1085 = vld [vmem:[%s628 + $0x20] sm:$0xff]
      %v1086 = vld [vmem:[%s628 + $0x28] sm:$0xff]
      %v1087 = vld [vmem:[%s628 + $0x30] sm:$0xff]
      %v1088 = vld [vmem:[%s628 + $0x38] sm:$0xff]
      %v1089 = vld [vmem:[%s628 + $0x40] sm:$0xff]
      %v1090 = vld [vmem:[%s628 + $0x48] sm:$0xff]
      %v1091 = vld [vmem:[%s628 + $0x50] sm:$0xff]
      %v1092 = vld [vmem:[%s628 + $0x58] sm:$0xff]
      %v1093 = vld [vmem:[%s628 + $0x60] sm:$0xff]
      %v1094 = vld [vmem:[%s628 + $0x68] sm:$0xff]
      %v1095 = vld [vmem:[%s628 + $0x70] sm:$0xff]
      %v1096 = vld [vmem:[%s628 + $0x78] sm:$0xff]
      %v1097 = vld [vmem:[%s641] sm:$0xff]
      %v1098 = vld [vmem:[%s641 + $0x8] sm:$0xff]
      %v1099 = vld [vmem:[%s656] sm:$0xff]
      %v1100 = vld [vmem:[%s656 + $0x8] sm:$0xff]
      %v1101 = vsel %vm732, 0.0, %v1097
      %v1102 = vsel %vm732, 0.0, %v1098
      %v1103 = vsel %vm737, 0.0, %v1099
      %v1104 = vsel %vm737, 0.0, %v1100
      %v1105 = vpack.c.bf16 %v1082, %v1081
      %v1106 = vpack.c.bf16 %v1084, %v1083
      %v1107 = vpack.c.bf16 %v1086, %v1085
      %v1108 = vpack.c.bf16 %v1088, %v1087
      %v1109 = vpack.c.bf16 %v1090, %v1089
      %v1110 = vpack.c.bf16 %v1092, %v1091
      %v1111 = vpack.c.bf16 %v1094, %v1093
      %v1112 = vpack.c.bf16 %v1096, %v1095
      %v1121 = vunpack.c.l.b16 %v1105
      %v1122 = vunpack.c.h.b16 %v1105
      %v1123 = vunpack.c.l.b16 %v1106
      %v1124 = vunpack.c.h.b16 %v1106
      %v1125 = vunpack.c.l.b16 %v1107
      %v1126 = vunpack.c.h.b16 %v1107
      %v1127 = vunpack.c.l.b16 %v1108
      %v1128 = vunpack.c.h.b16 %v1108
      %v1129 = vunpack.c.l.b16 %v1109
      %v1130 = vunpack.c.h.b16 %v1109
      %v1131 = vunpack.c.l.b16 %v1110
      %v1132 = vunpack.c.h.b16 %v1110
      %v1133 = vunpack.c.l.b16 %v1111
      %v1134 = vunpack.c.h.b16 %v1111
      %v1135 = vunpack.c.l.b16 %v1112
      %v1136 = vunpack.c.h.b16 %v1112
      %v1137 = vpack.c.b16 %v1121, %v1121
      %v1138 = vpack.c.b16 %v1122, %v1122
      %v1139 = vpack.c.b16 %v1123, %v1123
      %v1140 = vpack.c.b16 %v1124, %v1124
      %v1141 = vpack.c.b16 %v1125, %v1125
      %v1142 = vpack.c.b16 %v1126, %v1126
      %v1143 = vpack.c.b16 %v1127, %v1127
      %v1144 = vpack.c.b16 %v1128, %v1128
      %v1145 = vpack.c.b16 %v1129, %v1129
      %v1146 = vpack.c.b16 %v1130, %v1130
      %v1147 = vpack.c.b16 %v1131, %v1131
      %v1148 = vpack.c.b16 %v1132, %v1132
      %v1149 = vpack.c.b16 %v1133, %v1133
      %v1150 = vpack.c.b16 %v1134, %v1134
      %v1151 = vpack.c.b16 %v1135, %v1135
      %v1152 = vpack.c.b16 %v1136, %v1136
      %v1154 = vshrl.u32 %v1137, 16
      %v1156 = vrot.slane %v1154, 7
      %v1157 = vshll.u32 %v1137, 16
      %v1159 = vor.u32 %v1156, %v1157
      %v1160 = vrot.slane %v1156, 4
      %v1162 = vshrl.u32 %v1138, 16
      %v1164 = vrot.slane %v1162, 7
      %v1165 = vshll.u32 %v1138, 16
      %v1167 = vor.u32 %v1164, %v1165
      %v1168 = vsel %vm790, %v1160, %v1167
      %v1169 = vrot.slane %v1164, 4
      %v1171 = vshrl.u32 %v1139, 16
      %v1173 = vrot.slane %v1171, 7
      %v1174 = vshll.u32 %v1139, 16
      %v1176 = vor.u32 %v1173, %v1174
      %v1177 = vrot.slane %v1173, 4
      %v1179 = vshrl.u32 %v1140, 16
      %v1181 = vrot.slane %v1179, 7
      %v1182 = vshll.u32 %v1140, 16
      %v1184 = vor.u32 %v1181, %v1182
      %v1185 = vsel %vm790, %v1177, %v1184
      %v1186 = vrot.slane %v1181, 4
      %v1188 = vshrl.u32 %v1141, 16
      %v1190 = vrot.slane %v1188, 7
      %v1191 = vshll.u32 %v1141, 16
      %v1193 = vor.u32 %v1190, %v1191
      %v1194 = vrot.slane %v1190, 4
      %v1196 = vshrl.u32 %v1142, 16
      %v1198 = vrot.slane %v1196, 7
      %v1199 = vshll.u32 %v1142, 16
      %v1201 = vor.u32 %v1198, %v1199
      %v1202 = vsel %vm790, %v1194, %v1201
      %v1203 = vrot.slane %v1198, 4
      %v1205 = vshrl.u32 %v1143, 16
      %v1207 = vrot.slane %v1205, 7
      %v1208 = vshll.u32 %v1143, 16
      %v1210 = vor.u32 %v1207, %v1208
      %v1211 = vrot.slane %v1207, 4
      %v1213 = vshrl.u32 %v1144, 16
      %v1215 = vrot.slane %v1213, 7
      %v1216 = vshll.u32 %v1144, 16
      %v1218 = vor.u32 %v1215, %v1216
      %v1219 = vsel %vm790, %v1211, %v1218
      %v1220 = vrot.slane %v1215, 4
      %v1222 = vshrl.u32 %v1145, 16
      %v1224 = vrot.slane %v1222, 7
      %v1225 = vshll.u32 %v1145, 16
      %v1227 = vor.u32 %v1224, %v1225
      %v1228 = vrot.slane %v1224, 4
      %v1230 = vshrl.u32 %v1146, 16
      %v1232 = vrot.slane %v1230, 7
      %v1233 = vshll.u32 %v1146, 16
      %v1235 = vor.u32 %v1232, %v1233
      %v1236 = vsel %vm790, %v1228, %v1235
      %v1237 = vrot.slane %v1232, 4
      %v1239 = vshrl.u32 %v1147, 16
      %v1241 = vrot.slane %v1239, 7
      %v1242 = vshll.u32 %v1147, 16
      %v1244 = vor.u32 %v1241, %v1242
      %v1245 = vrot.slane %v1241, 4
      %v1247 = vshrl.u32 %v1148, 16
      %v1249 = vrot.slane %v1247, 7
      %v1250 = vshll.u32 %v1148, 16
      %v1252 = vor.u32 %v1249, %v1250
      %v1253 = vsel %vm790, %v1245, %v1252
      %v1254 = vrot.slane %v1249, 4
      %v1256 = vshrl.u32 %v1149, 16
      %v1258 = vrot.slane %v1256, 7
      %v1259 = vshll.u32 %v1149, 16
      %v1261 = vor.u32 %v1258, %v1259
      %v1262 = vrot.slane %v1258, 4
      %v1264 = vshrl.u32 %v1150, 16
      %v1266 = vrot.slane %v1264, 7
      %v1267 = vshll.u32 %v1150, 16
      %v1269 = vor.u32 %v1266, %v1267
      %v1270 = vsel %vm790, %v1262, %v1269
      %v1271 = vrot.slane %v1266, 4
      %v1273 = vshrl.u32 %v1151, 16
      %v1275 = vrot.slane %v1273, 7
      %v1276 = vshll.u32 %v1151, 16
      %v1278 = vor.u32 %v1275, %v1276
      %v1279 = vrot.slane %v1275, 4
      %v1281 = vshrl.u32 %v1152, 16
      %v1283 = vrot.slane %v1281, 7
      %v1284 = vshll.u32 %v1152, 16
      %v1286 = vor.u32 %v1283, %v1284
      %v1287 = vsel %vm790, %v1279, %v1286
      %v1288 = vrot.slane %v1283, 4
      %1289 = vrot.lane.b32.xlu0 %v1159, 4
      %v1290 = vpop.permute.xlu0 %1289
      %1291 = vrot.lane.b32.xlu0 %v1168, 4
      %v1292 = vpop.permute.xlu0 %1291
      %1293 = vrot.lane.b32.xlu0 %v1169, 4
      %v1294 = vpop.permute.xlu0 %1293
      %1295 = vrot.lane.b32.xlu0 %v1176, 4
      %v1296 = vpop.permute.xlu0 %1295
      %1297 = vrot.lane.b32.xlu0 %v1185, 4
      %v1298 = vpop.permute.xlu0 %1297
      %1299 = vrot.lane.b32.xlu0 %v1186, 4
      %v1300 = vpop.permute.xlu0 %1299
      %1301 = vrot.lane.b32.xlu0 %v1193, 4
      %v1302 = vpop.permute.xlu0 %1301
      %1303 = vrot.lane.b32.xlu0 %v1202, 4
      %v1304 = vpop.permute.xlu0 %1303
      %1305 = vrot.lane.b32.xlu0 %v1203, 4
      %v1306 = vpop.permute.xlu0 %1305
      %1307 = vrot.lane.b32.xlu0 %v1210, 4
      %v1308 = vpop.permute.xlu0 %1307
      %1309 = vrot.lane.b32.xlu0 %v1219, 4
      %v1310 = vpop.permute.xlu0 %1309
      %1311 = vrot.lane.b32.xlu0 %v1220, 4
      %v1312 = vpop.permute.xlu0 %1311
      %1313 = vrot.lane.b32.xlu0 %v1227, 4
      %v1314 = vpop.permute.xlu0 %1313
      %1315 = vrot.lane.b32.xlu0 %v1236, 4
      %v1316 = vpop.permute.xlu0 %1315
      %1317 = vrot.lane.b32.xlu0 %v1237, 4
      %v1318 = vpop.permute.xlu0 %1317
      %1319 = vrot.lane.b32.xlu0 %v1244, 4
      %v1320 = vpop.permute.xlu0 %1319
      %1321 = vrot.lane.b32.xlu0 %v1253, 4
      %v1322 = vpop.permute.xlu0 %1321
      %1323 = vrot.lane.b32.xlu0 %v1254, 4
      %v1324 = vpop.permute.xlu0 %1323
      %1325 = vrot.lane.b32.xlu0 %v1261, 4
      %v1326 = vpop.permute.xlu0 %1325
      %1327 = vrot.lane.b32.xlu0 %v1270, 4
      %v1328 = vpop.permute.xlu0 %1327
      %1329 = vrot.lane.b32.xlu0 %v1271, 4
      %v1330 = vpop.permute.xlu0 %1329
      %1331 = vrot.lane.b32.xlu0 %v1278, 4
      %v1332 = vpop.permute.xlu0 %1331
      %1333 = vrot.lane.b32.xlu0 %v1287, 4
      %v1334 = vpop.permute.xlu0 %1333
      %1335 = vrot.lane.b32.xlu0 %v1288, 4
      %v1336 = vpop.permute.xlu0 %1335
      %vm1361 = vcmask 60448
      %vm1362 = vmand %vm1361, %vm953
      %v1363 = vld [vmem:[%s951] sm:$0xf]
      %v1364 = vsel %vm1362, %v1290, %v1363
      %1365 = vst [vmem:[%s951] sm:$0xf] %v1364
      %vm1366 = vcmask 60448
      %1367 = vst.msk [vmem:[%s951 + $0x4] sm:$0xf] %vm1366, %v1292
      %vm1368 = vcmask 57376
      %vm1369 = vmand %vm1368, %vm788
      %v1370 = vld [vmem:[%s951 + $0x8] sm:$0x1]
      %v1371 = vsel %vm1369, %v1294, %v1370
      %1372 = vst [vmem:[%s951 + $0x8] sm:$0x1] %v1371
      %v1373 = vld [vmem:[%s951 + $0xc] sm:$0xf]
      %v1374 = vsel %vm1362, %v1296, %v1373
      %1375 = vst [vmem:[%s951 + $0xc] sm:$0xf] %v1374
      %1376 = vst.msk [vmem:[%s951 + $0x10] sm:$0xf] %vm1366, %v1298
      %v1377 = vld [vmem:[%s951 + $0x14] sm:$0x1]
      %v1378 = vsel %vm1369, %v1300, %v1377
      %1379 = vst [vmem:[%s951 + $0x14] sm:$0x1] %v1378
      %v1380 = vld [vmem:[%s951 + $0x18] sm:$0xf]
      %v1381 = vsel %vm1362, %v1302, %v1380
      %1382 = vst [vmem:[%s951 + $0x18] sm:$0xf] %v1381
      %1383 = vst.msk [vmem:[%s951 + $0x1c] sm:$0xf] %vm1366, %v1304
      %v1384 = vld [vmem:[%s951 + $0x20] sm:$0x1]
      %v1385 = vsel %vm1369, %v1306, %v1384
      %1386 = vst [vmem:[%s951 + $0x20] sm:$0x1] %v1385
      %v1387 = vld [vmem:[%s951 + $0x24] sm:$0xf]
      %v1388 = vsel %vm1362, %v1308, %v1387
      %1389 = vst [vmem:[%s951 + $0x24] sm:$0xf] %v1388
      %1390 = vst.msk [vmem:[%s951 + $0x28] sm:$0xf] %vm1366, %v1310
      %v1391 = vld [vmem:[%s951 + $0x2c] sm:$0x1]
      %v1392 = vsel %vm1369, %v1312, %v1391
      %1393 = vst [vmem:[%s951 + $0x2c] sm:$0x1] %v1392
      %v1394 = vld [vmem:[%s951 + $0x30] sm:$0xf]
      %v1395 = vsel %vm1362, %v1314, %v1394
      %1396 = vst [vmem:[%s951 + $0x30] sm:$0xf] %v1395
      %1397 = vst.msk [vmem:[%s951 + $0x34] sm:$0xf] %vm1366, %v1316
      %v1398 = vld [vmem:[%s951 + $0x38] sm:$0x1]
      %v1399 = vsel %vm1369, %v1318, %v1398
      %1400 = vst [vmem:[%s951 + $0x38] sm:$0x1] %v1399
      %v1401 = vld [vmem:[%s951 + $0x3c] sm:$0xf]
      %v1402 = vsel %vm1362, %v1320, %v1401
      %1403 = vst [vmem:[%s951 + $0x3c] sm:$0xf] %v1402
      %1404 = vst.msk [vmem:[%s951 + $0x40] sm:$0xf] %vm1366, %v1322
      %v1405 = vld [vmem:[%s951 + $0x44] sm:$0x1]
      %v1406 = vsel %vm1369, %v1324, %v1405
      %1407 = vst [vmem:[%s951 + $0x44] sm:$0x1] %v1406
      %v1408 = vld [vmem:[%s951 + $0x48] sm:$0xf]
      %v1409 = vsel %vm1362, %v1326, %v1408
      %1410 = vst [vmem:[%s951 + $0x48] sm:$0xf] %v1409
      %1411 = vst.msk [vmem:[%s951 + $0x4c] sm:$0xf] %vm1366, %v1328
      %v1412 = vld [vmem:[%s951 + $0x50] sm:$0x1]
      %v1413 = vsel %vm1369, %v1330, %v1412
      %1414 = vst [vmem:[%s951 + $0x50] sm:$0x1] %v1413
      %v1415 = vld [vmem:[%s951 + $0x54] sm:$0xf]
      %v1416 = vsel %vm1362, %v1332, %v1415
      %1417 = vst [vmem:[%s951 + $0x54] sm:$0xf] %v1416
      %1418 = vst.msk [vmem:[%s951 + $0x58] sm:$0xf] %vm1366, %v1334
      %v1419 = vld [vmem:[%s951 + $0x5c] sm:$0x1]
      %v1420 = vsel %vm1369, %v1336, %v1419
      %1421 = vst [vmem:[%s951 + $0x5c] sm:$0x1] %v1420
      %v1422 = vpack.c.bf16 %v1102, %v1101
      %v1424 = vunpack.c.l.b16 %v1422
      %v1425 = vunpack.c.h.b16 %v1422
      %v1426 = vpack.c.b16 %v1424, %v1424
      %v1427 = vpack.c.b16 %v1425, %v1425
      %v1429 = vshrl.u32 %v1426, 16
      %v1431 = vrot.slane %v1429, 7
      %v1432 = vshll.u32 %v1426, 16
      %v1434 = vor.u32 %v1431, %v1432
      %v1435 = vrot.slane %v1431, 4
      %v1437 = vshrl.u32 %v1427, 16
      %v1439 = vrot.slane %v1437, 7
      %v1440 = vshll.u32 %v1427, 16
      %v1442 = vor.u32 %v1439, %v1440
      %v1443 = vsel %vm790, %v1435, %v1442
      %v1444 = vrot.slane %v1439, 4
      %1445 = vrot.lane.b32.xlu0 %v1434, 4
      %v1446 = vpop.permute.xlu0 %1445
      %1447 = vrot.lane.b32.xlu0 %v1443, 4
      %v1448 = vpop.permute.xlu0 %1447
      %1449 = vrot.lane.b32.xlu0 %v1444, 4
      %v1450 = vpop.permute.xlu0 %1449
      %v1454 = vld [vmem:[#allocation2] sm:$0xf]
      %v1455 = vsel %vm1362, %v1446, %v1454
      %1456 = vst [vmem:[#allocation2] sm:$0xf] %v1455
      %1457 = vst.msk [vmem:[#allocation2 + $0x4] sm:$0xf] %vm1366, %v1448
      %v1458 = vld [vmem:[#allocation2 + $0x8] sm:$0x1]
      %v1459 = vsel %vm1369, %v1450, %v1458
      %1460 = vst [vmem:[#allocation2 + $0x8] sm:$0x1] %v1459
      %v1461 = vpack.c.bf16 %v1104, %v1103
      %v1463 = vunpack.c.l.b16 %v1461
      %v1464 = vunpack.c.h.b16 %v1461
      %v1465 = vpack.c.b16 %v1463, %v1463
      %v1466 = vpack.c.b16 %v1464, %v1464
      %v1468 = vshrl.u32 %v1465, 16
      %v1470 = vrot.slane %v1468, 7
      %v1471 = vshll.u32 %v1465, 16
      %v1473 = vor.u32 %v1470, %v1471
      %v1474 = vrot.slane %v1470, 4
      %v1476 = vshrl.u32 %v1466, 16
      %v1478 = vrot.slane %v1476, 7
      %v1479 = vshll.u32 %v1466, 16
      %v1481 = vor.u32 %v1478, %v1479
      %v1482 = vsel %vm790, %v1474, %v1481
      %v1483 = vrot.slane %v1478, 4
      %1484 = vrot.lane.b32.xlu0 %v1473, 4
      %v1485 = vpop.permute.xlu0 %1484
      %1486 = vrot.lane.b32.xlu0 %v1482, 4
      %v1487 = vpop.permute.xlu0 %1486
      %1488 = vrot.lane.b32.xlu0 %v1483, 4
      %v1489 = vpop.permute.xlu0 %1488
      %v1493 = vld [vmem:[%s1073] sm:$0xf]
      %v1494 = vsel %vm1362, %v1485, %v1493
      %1495 = vst [vmem:[%s1073] sm:$0xf] %v1494
      %1496 = vst.msk [vmem:[%s1073 + $0x4] sm:$0xf] %vm1366, %v1487
      %v1497 = vld [vmem:[%s1073 + $0x8] sm:$0x1]
      %v1498 = vsel %vm1369, %v1489, %v1497
      %1499 = vst [vmem:[%s1073 + $0x8] sm:$0x1] %v1498
      %v1500 = vld [vmem:[#allocation2] sm:$0xf]
      %v1501 = vld [vmem:[#allocation2 + $0x4] sm:$0xf]
      %v1502 = vld [vmem:[#allocation2 + $0xc] sm:$0xf]
      %v1503 = vld [vmem:[#allocation2 + $0x10] sm:$0xf]
      %v1504 = vld [vmem:[#allocation2 + $0x18] sm:$0xf]
      %v1505 = vld [vmem:[#allocation2 + $0x1c] sm:$0xf]
      %v1506 = vld [vmem:[#allocation2 + $0x24] sm:$0xf]
      %v1507 = vld [vmem:[#allocation2 + $0x28] sm:$0xf]
      %v1508 = vld [vmem:[#allocation2 + $0x30] sm:$0xf]
      %v1509 = vld [vmem:[#allocation2 + $0x34] sm:$0xf]
      %v1510 = vld [vmem:[#allocation2 + $0x3c] sm:$0xf]
      %v1511 = vld [vmem:[#allocation2 + $0x40] sm:$0xf]
      %v1512 = vld [vmem:[#allocation2 + $0x48] sm:$0xf]
      %v1513 = vld [vmem:[#allocation2 + $0x4c] sm:$0xf]
      %v1514 = vld [vmem:[#allocation2 + $0x54] sm:$0xf]
      %v1515 = vld [vmem:[#allocation2 + $0x58] sm:$0xf]
      %v1516 = vld [vmem:[%s6] sm:$0xf]
      %v1517 = vld [vmem:[%s6 + $0x4] sm:$0xf]
      %v1518 = vld [vmem:[%s6 + $0x8] sm:$0xf]
      %v1519 = vld [vmem:[%s6 + $0xc] sm:$0xf]
      %v1520 = vld [vmem:[%s6 + $0x10] sm:$0xf]
      %v1521 = vld [vmem:[%s6 + $0x14] sm:$0xf]
      %v1522 = vld [vmem:[%s6 + $0x18] sm:$0xf]
      %v1523 = vld [vmem:[%s6 + $0x1c] sm:$0xf]
      %v1524 = vld [vmem:[%s6 + $0x20] sm:$0xf]
      %v1525 = vld [vmem:[%s6 + $0x24] sm:$0xf]
      %v1526 = vld [vmem:[%s6 + $0x28] sm:$0xf]
      %v1527 = vld [vmem:[%s6 + $0x2c] sm:$0xf]
      %v1528 = vld [vmem:[%s6 + $0x30] sm:$0xf]
      %v1529 = vld [vmem:[%s6 + $0x34] sm:$0xf]
      %v1530 = vld [vmem:[%s6 + $0x38] sm:$0xf]
      %v1531 = vld [vmem:[%s6 + $0x3c] sm:$0xf]
      %v1532 = vld [vmem:[#allocation2 + $0x8] sm:$0x1]
      %v1533 = vld [vmem:[#allocation2 + $0x14] sm:$0x1]
      %v1534 = vld [vmem:[#allocation2 + $0x20] sm:$0x1]
      %v1535 = vld [vmem:[#allocation2 + $0x2c] sm:$0x1]
      %v1536 = vld [vmem:[#allocation2 + $0x38] sm:$0x1]
      %v1537 = vld [vmem:[#allocation2 + $0x44] sm:$0x1]
      %v1538 = vld [vmem:[#allocation2 + $0x50] sm:$0x1]
      %v1539 = vld [vmem:[#allocation2 + $0x5c] sm:$0x1]
      %vm1540 = vsmask.f32 3328
      %vm1541 = vsmask.f32 7440
      %vm1542 = vmor %vm1540, %vm1541
      %v1544 = vshrl.u32 %v1500, 16
      %v1546 = vrot.slane %v1544, 4
      %v1547 = vshll.u32 %v1500, 16
      %v1549 = vrot.slane %v1547, 5
      %v1550 = vor.u32 %v1546, %v1549
      %v1551 = vrot.slane %v1550, 4
      %v1553 = vshll.u32 %v1501, 16
      %v1555 = vrot.slane %v1553, 5
      %v1556 = vsel %vm1542, %v1551, %v1555
      %v1557 = vshrl.u32 %v1501, 16
      %v1559 = vrot.slane %v1557, 4
      %v1560 = vor.u32 %v1559, %v1555
      %v1561 = vrot.slane %v1560, 4
      %v1563 = vshll.u32 %v1532, 16
      %v1565 = vrot.slane %v1563, 5
      %v1566 = vsel %vm1542, %v1561, %v1565
      %v1568 = vshrl.u32 %v1502, 16
      %v1570 = vrot.slane %v1568, 4
      %v1571 = vshll.u32 %v1502, 16
      %v1573 = vrot.slane %v1571, 5
      %v1574 = vor.u32 %v1570, %v1573
      %v1575 = vrot.slane %v1574, 4
      %v1577 = vshll.u32 %v1503, 16
      %v1579 = vrot.slane %v1577, 5
      %v1580 = vsel %vm1542, %v1575, %v1579
      %v1581 = vshrl.u32 %v1503, 16
      %v1583 = vrot.slane %v1581, 4
      %v1584 = vor.u32 %v1583, %v1579
      %v1585 = vrot.slane %v1584, 4
      %v1587 = vshll.u32 %v1533, 16
      %v1589 = vrot.slane %v1587, 5
      %v1590 = vsel %vm1542, %v1585, %v1589
      %v1592 = vshrl.u32 %v1504, 16
      %v1594 = vrot.slane %v1592, 4
      %v1595 = vshll.u32 %v1504, 16
      %v1597 = vrot.slane %v1595, 5
      %v1598 = vor.u32 %v1594, %v1597
      %v1599 = vrot.slane %v1598, 4
      %v1601 = vshll.u32 %v1505, 16
      %v1603 = vrot.slane %v1601, 5
      %v1604 = vsel %vm1542, %v1599, %v1603
      %v1605 = vshrl.u32 %v1505, 16
      %v1607 = vrot.slane %v1605, 4
      %v1608 = vor.u32 %v1607, %v1603
      %v1609 = vrot.slane %v1608, 4
      %v1611 = vshll.u32 %v1534, 16
      %v1613 = vrot.slane %v1611, 5
      %v1614 = vsel %vm1542, %v1609, %v1613
      %v1616 = vshrl.u32 %v1506, 16
      %v1618 = vrot.slane %v1616, 4
      %v1619 = vshll.u32 %v1506, 16
      %v1621 = vrot.slane %v1619, 5
      %v1622 = vor.u32 %v1618, %v1621
      %v1623 = vrot.slane %v1622, 4
      %v1625 = vshll.u32 %v1507, 16
      %v1627 = vrot.slane %v1625, 5
      %v1628 = vsel %vm1542, %v1623, %v1627
      %v1629 = vshrl.u32 %v1507, 16
      %v1631 = vrot.slane %v1629, 4
      %v1632 = vor.u32 %v1631, %v1627
      %v1633 = vrot.slane %v1632, 4
      %v1635 = vshll.u32 %v1535, 16
      %v1637 = vrot.slane %v1635, 5
      %v1638 = vsel %vm1542, %v1633, %v1637
      %v1640 = vshrl.u32 %v1508, 16
      %v1642 = vrot.slane %v1640, 4
      %v1643 = vshll.u32 %v1508, 16
      %v1645 = vrot.slane %v1643, 5
      %v1646 = vor.u32 %v1642, %v1645
      %v1647 = vrot.slane %v1646, 4
      %v1649 = vshll.u32 %v1509, 16
      %v1651 = vrot.slane %v1649, 5
      %v1652 = vsel %vm1542, %v1647, %v1651
      %v1653 = vshrl.u32 %v1509, 16
      %v1655 = vrot.slane %v1653, 4
      %v1656 = vor.u32 %v1655, %v1651
      %v1657 = vrot.slane %v1656, 4
      %v1659 = vshll.u32 %v1536, 16
      %v1661 = vrot.slane %v1659, 5
      %v1662 = vsel %vm1542, %v1657, %v1661
      %v1664 = vshrl.u32 %v1510, 16
      %v1666 = vrot.slane %v1664, 4
      %v1667 = vshll.u32 %v1510, 16
      %v1669 = vrot.slane %v1667, 5
      %v1670 = vor.u32 %v1666, %v1669
      %v1671 = vrot.slane %v1670, 4
      %v1673 = vshll.u32 %v1511, 16
      %v1675 = vrot.slane %v1673, 5
      %v1676 = vsel %vm1542, %v1671, %v1675
      %v1677 = vshrl.u32 %v1511, 16
      %v1679 = vrot.slane %v1677, 4
      %v1680 = vor.u32 %v1679, %v1675
      %v1681 = vrot.slane %v1680, 4
      %v1683 = vshll.u32 %v1537, 16
      %v1685 = vrot.slane %v1683, 5
      %v1686 = vsel %vm1542, %v1681, %v1685
      %v1688 = vshrl.u32 %v1512, 16
      %v1690 = vrot.slane %v1688, 4
      %v1691 = vshll.u32 %v1512, 16
      %v1693 = vrot.slane %v1691, 5
      %v1694 = vor.u32 %v1690, %v1693
      %v1695 = vrot.slane %v1694, 4
      %v1697 = vshll.u32 %v1513, 16
      %v1699 = vrot.slane %v1697, 5
      %v1700 = vsel %vm1542, %v1695, %v1699
      %v1701 = vshrl.u32 %v1513, 16
      %v1703 = vrot.slane %v1701, 4
      %v1704 = vor.u32 %v1703, %v1699
      %v1705 = vrot.slane %v1704, 4
      %v1707 = vshll.u32 %v1538, 16
      %v1709 = vrot.slane %v1707, 5
      %v1710 = vsel %vm1542, %v1705, %v1709
      %v1712 = vshrl.u32 %v1514, 16
      %v1714 = vrot.slane %v1712, 4
      %v1715 = vshll.u32 %v1514, 16
      %v1717 = vrot.slane %v1715, 5
      %v1718 = vor.u32 %v1714, %v1717
      %v1719 = vrot.slane %v1718, 4
      %v1721 = vshll.u32 %v1515, 16
      %v1723 = vrot.slane %v1721, 5
      %v1724 = vsel %vm1542, %v1719, %v1723
      %v1725 = vshrl.u32 %v1515, 16
      %v1727 = vrot.slane %v1725, 4
      %v1728 = vor.u32 %v1727, %v1723
      %v1729 = vrot.slane %v1728, 4
      %v1731 = vshll.u32 %v1539, 16
      %v1733 = vrot.slane %v1731, 5
      %v1734 = vsel %vm1542, %v1729, %v1733
      %s1735 = scalar_lea.vmem %s6, 64
      %v1736 = vld [vmem:[%s1735] sm:$0xf]
      %v1737 = vld [vmem:[%s1735 + $0x4] sm:$0xf]
      %v1738 = vld [vmem:[%s1735 + $0x8] sm:$0xf]
      %v1739 = vld [vmem:[%s1735 + $0xc] sm:$0xf]
      %v1740 = vld [vmem:[%s1735 + $0x10] sm:$0xf]
      %v1741 = vld [vmem:[%s1735 + $0x14] sm:$0xf]
      %v1742 = vld [vmem:[%s1735 + $0x18] sm:$0xf]
      %v1743 = vld [vmem:[%s1735 + $0x1c] sm:$0xf]
      %v1744 = vld [vmem:[%s1735 + $0x20] sm:$0xf]
      %v1745 = vld [vmem:[%s1735 + $0x24] sm:$0xf]
      %v1746 = vld [vmem:[%s1735 + $0x28] sm:$0xf]
      %v1747 = vld [vmem:[%s1735 + $0x2c] sm:$0xf]
      %v1748 = vld [vmem:[%s1735 + $0x30] sm:$0xf]
      %v1749 = vld [vmem:[%s1735 + $0x34] sm:$0xf]
      %v1750 = vld [vmem:[%s1735 + $0x38] sm:$0xf]
      %v1751 = vld [vmem:[%s1735 + $0x3c] sm:$0xf]
      %v1752 = vunpack.c.l.b16 %v1556
      %v1753 = vunpack.c.l.b16 %v1566
      %v1754 = vunpack.c.l.b16 %v1580
      %v1755 = vunpack.c.l.b16 %v1590
      %v1756 = vunpack.c.l.b16 %v1604
      %v1757 = vunpack.c.l.b16 %v1614
      %v1758 = vunpack.c.l.b16 %v1628
      %v1759 = vunpack.c.l.b16 %v1638
      %v1760 = vunpack.c.l.b16 %v1652
      %v1761 = vunpack.c.l.b16 %v1662
      %v1762 = vunpack.c.l.b16 %v1676
      %v1763 = vunpack.c.l.b16 %v1686
      %v1764 = vunpack.c.l.b16 %v1700
      %v1765 = vunpack.c.l.b16 %v1710
      %v1766 = vunpack.c.l.b16 %v1724
      %v1767 = vunpack.c.l.b16 %v1734
      %v1768 = vpack.c.b16 %v1753, %v1752
      %v1769 = vpack.c.b16 %v1755, %v1754
      %v1770 = vpack.c.b16 %v1757, %v1756
      %v1771 = vpack.c.b16 %v1759, %v1758
      %v1772 = vpack.c.b16 %v1761, %v1760
      %v1773 = vpack.c.b16 %v1763, %v1762
      %v1774 = vpack.c.b16 %v1765, %v1764
      %v1775 = vpack.c.b16 %v1767, %v1766
      %v1800 = vunpack.c.l.b16 %v1736
      %v1801 = vunpack.c.l.b16 %v1737
      %v1802 = vunpack.c.l.b16 %v1738
      %v1803 = vunpack.c.l.b16 %v1739
      %v1804 = vunpack.c.l.b16 %v1740
      %v1805 = vunpack.c.l.b16 %v1741
      %v1806 = vunpack.c.l.b16 %v1742
      %v1807 = vunpack.c.l.b16 %v1743
      %v1808 = vunpack.c.l.b16 %v1744
      %v1809 = vunpack.c.l.b16 %v1745
      %v1810 = vunpack.c.l.b16 %v1746
      %v1811 = vunpack.c.l.b16 %v1747
      %v1812 = vunpack.c.l.b16 %v1748
      %v1813 = vunpack.c.l.b16 %v1749
      %v1814 = vunpack.c.l.b16 %v1750
      %v1815 = vunpack.c.l.b16 %v1751
      %v1816 = vpack.c.b16 %v1801, %v1800
      %v1817 = vpack.c.b16 %v1803, %v1802
      %v1818 = vpack.c.b16 %v1805, %v1804
      %v1819 = vpack.c.b16 %v1807, %v1806
      %v1820 = vpack.c.b16 %v1809, %v1808
      %v1821 = vpack.c.b16 %v1811, %v1810
      %v1822 = vpack.c.b16 %v1813, %v1812
      %v1823 = vpack.c.b16 %v1815, %v1814
      %1832 = vmatprep.subr.bf16.mxu0 0
      %1833 = vmatpush1.bf16.msra.mxu0 %v1823
      %1834 = vmatprep.subr.bf16.mxu0 0
      %1835 = vmatpush1.bf16.msra.mxu0 %v1822
      %1836 = vmatprep.subr.bf16.mxu0 0
      %1837 = vmatpush1.bf16.msra.mxu0 %v1821
      %1838 = vmatprep.subr.bf16.mxu0 0
      %1839 = vmatpush1.bf16.msra.mxu0 %v1820
      %1840 = vmatprep.subr.bf16.mxu0 0
      %1841 = vmatpush1.bf16.msra.mxu0 %v1819
      %1842 = vmatprep.subr.bf16.mxu0 0
      %1843 = vmatpush1.bf16.msra.mxu0 %v1818
      %1844 = vmatprep.subr.bf16.mxu0 0
      %1845 = vmatpush1.bf16.msra.mxu0 %v1817
      %1846 = vmatprep.subr.bf16.mxu0 0
      %1847 = vmatpush1.bf16.msra.mxu0 %v1816
      %1848 = vmatprep.subr.bf16.mxu0 0
      %1849 = vmatpush2.bf16.msra.mxu0 0
      %1850 = vmatprep.subr.bf16.mxu0 0
      %1851 = vmatpush2.bf16.msra.mxu0 0
      %1852 = vmatprep.subr.bf16.mxu0 0
      %1853 = vmatpush2.bf16.msra.mxu0 0
      %1854 = vmatprep.subr.bf16.mxu0 0
      %1855 = vmatpush2.bf16.msra.mxu0 0
      %1856 = vmatprep.subr.bf16.mxu0 0
      %1857 = vmatpush2.bf16.msra.mxu0 0
      %1858 = vmatprep.subr.bf16.mxu0 0
      %1859 = vmatpush2.bf16.msra.mxu0 0
      %1860 = vmatprep.subr.bf16.mxu0 0
      %1861 = vmatpush2.bf16.msra.mxu0 0
      %1862 = vmatprep.subr.bf16.mxu0 0
      %1863 = vmatpush2.bf16.msra.mxu0 0
      %1864 = vmatprep.mubr.bf16.mxu0 0
      %1865 = vmatmul.mubr.bf16.gmra.mxu0 %v1768
      %v1866 = vpop.f32.mrf.mxu0
      %v1867 = vadd.f32 0.0, %v1866
      %v1868 = vpop.f32.mrf.mxu0
      %v1869 = vpop.f32.mrf.mxu0
      %v1870 = vadd.f32 0.0, %v1869
      %v1871 = vpop.f32.mrf.mxu0
      %1872 = vmatprep.mubr.bf16.mxu0 0
      %1873 = vmatmul.mubr.bf16.gmra.mxu0 %v1769
      %v1874 = vpop.f32.mrf.mxu0
      %v1875 = vadd.f32 0.0, %v1874
      %v1876 = vpop.f32.mrf.mxu0
      %v1877 = vpop.f32.mrf.mxu0
      %v1878 = vadd.f32 0.0, %v1877
      %v1879 = vpop.f32.mrf.mxu0
      %1880 = vmatprep.mubr.bf16.mxu0 0
      %1881 = vmatmul.mubr.bf16.gmra.mxu0 %v1770
      %v1882 = vpop.f32.mrf.mxu0
      %v1883 = vadd.f32 0.0, %v1882
      %v1884 = vpop.f32.mrf.mxu0
      %v1885 = vpop.f32.mrf.mxu0
      %v1886 = vadd.f32 0.0, %v1885
      %v1887 = vpop.f32.mrf.mxu0
      %1888 = vmatprep.mubr.bf16.mxu0 0
      %1889 = vmatmul.mubr.bf16.gmra.mxu0 %v1771
      %v1890 = vpop.f32.mrf.mxu0
      %v1891 = vadd.f32 0.0, %v1890
      %v1892 = vpop.f32.mrf.mxu0
      %v1893 = vpop.f32.mrf.mxu0
      %v1894 = vadd.f32 0.0, %v1893
      %v1895 = vpop.f32.mrf.mxu0
      %1896 = vmatprep.mubr.bf16.mxu0 0
      %1897 = vmatmul.mubr.bf16.gmra.mxu0 %v1772
      %v1898 = vpop.f32.mrf.mxu0
      %v1899 = vadd.f32 0.0, %v1898
      %v1900 = vpop.f32.mrf.mxu0
      %v1901 = vpop.f32.mrf.mxu0
      %v1902 = vadd.f32 0.0, %v1901
      %v1903 = vpop.f32.mrf.mxu0
      %1904 = vmatprep.mubr.bf16.mxu0 0
      %1905 = vmatmul.mubr.bf16.gmra.mxu0 %v1773
      %v1906 = vpop.f32.mrf.mxu0
      %v1907 = vadd.f32 0.0, %v1906
      %v1908 = vpop.f32.mrf.mxu0
      %v1909 = vpop.f32.mrf.mxu0
      %v1910 = vadd.f32 0.0, %v1909
      %v1911 = vpop.f32.mrf.mxu0
      %1912 = vmatprep.mubr.bf16.mxu0 0
      %1913 = vmatmul.mubr.bf16.gmra.mxu0 %v1774
      %v1914 = vpop.f32.mrf.mxu0
      %v1915 = vadd.f32 0.0, %v1914
      %v1916 = vpop.f32.mrf.mxu0
      %v1917 = vpop.f32.mrf.mxu0
      %v1918 = vadd.f32 0.0, %v1917
      %v1919 = vpop.f32.mrf.mxu0
      %1920 = vmatprep.mubr.bf16.mxu0 0
      %1921 = vmatmul.mubr.bf16.gmra.mxu0 %v1775
      %v1922 = vpop.f32.mrf.mxu0
      %v1923 = vadd.f32 0.0, %v1922
      %v1924 = vpop.f32.mrf.mxu0
      %v1925 = vpop.f32.mrf.mxu0
      %v1926 = vadd.f32 0.0, %v1925
      %v1927 = vpop.f32.mrf.mxu0
      %1928 = vdwg.mxu0
      %v1945 = vunpack.c.l.b16 %v1500
      %v1946 = vunpack.c.l.b16 %v1501
      %v1947 = vunpack.c.l.b16 %v1502
      %v1948 = vunpack.c.l.b16 %v1503
      %v1949 = vunpack.c.l.b16 %v1504
      %v1950 = vunpack.c.l.b16 %v1505
      %v1951 = vunpack.c.l.b16 %v1506
      %v1952 = vunpack.c.l.b16 %v1507
      %v1953 = vunpack.c.l.b16 %v1508
      %v1954 = vunpack.c.l.b16 %v1509
      %v1955 = vunpack.c.l.b16 %v1510
      %v1956 = vunpack.c.l.b16 %v1511
      %v1957 = vunpack.c.l.b16 %v1512
      %v1958 = vunpack.c.l.b16 %v1513
      %v1959 = vunpack.c.l.b16 %v1514
      %v1960 = vunpack.c.l.b16 %v1515
      %v1961 = vpack.c.b16 %v1946, %v1945
      %v1962 = vpack.c.b16 %v1948, %v1947
      %v1963 = vpack.c.b16 %v1950, %v1949
      %v1964 = vpack.c.b16 %v1952, %v1951
      %v1965 = vpack.c.b16 %v1954, %v1953
      %v1966 = vpack.c.b16 %v1956, %v1955
      %v1967 = vpack.c.b16 %v1958, %v1957
      %v1968 = vpack.c.b16 %v1960, %v1959
      %v1993 = vunpack.c.l.b16 %v1516
      %v1994 = vunpack.c.l.b16 %v1517
      %v1995 = vunpack.c.l.b16 %v1518
      %v1996 = vunpack.c.l.b16 %v1519
      %v1997 = vunpack.c.l.b16 %v1520
      %v1998 = vunpack.c.l.b16 %v1521
      %v1999 = vunpack.c.l.b16 %v1522
      %v2000 = vunpack.c.l.b16 %v1523
      %v2001 = vunpack.c.l.b16 %v1524
      %v2002 = vunpack.c.l.b16 %v1525
      %v2003 = vunpack.c.l.b16 %v1526
      %v2004 = vunpack.c.l.b16 %v1527
      %v2005 = vunpack.c.l.b16 %v1528
      %v2006 = vunpack.c.l.b16 %v1529
      %v2007 = vunpack.c.l.b16 %v1530
      %v2008 = vunpack.c.l.b16 %v1531
      %v2009 = vpack.c.b16 %v1994, %v1993
      %v2010 = vpack.c.b16 %v1996, %v1995
      %v2011 = vpack.c.b16 %v1998, %v1997
      %v2012 = vpack.c.b16 %v2000, %v1999
      %v2013 = vpack.c.b16 %v2002, %v2001
      %v2014 = vpack.c.b16 %v2004, %v2003
      %v2015 = vpack.c.b16 %v2006, %v2005
      %v2016 = vpack.c.b16 %v2008, %v2007
      %2025 = vmatprep.subr.bf16.mxu0 0
      %2026 = vmatpush1.bf16.msra.mxu0 %v2016
      %2027 = vmatprep.subr.bf16.mxu0 0
      %2028 = vmatpush1.bf16.msra.mxu0 %v2015
      %2029 = vmatprep.subr.bf16.mxu0 0
      %2030 = vmatpush1.bf16.msra.mxu0 %v2014
      %2031 = vmatprep.subr.bf16.mxu0 0
      %2032 = vmatpush1.bf16.msra.mxu0 %v2013
      %2033 = vmatprep.subr.bf16.mxu0 0
      %2034 = vmatpush1.bf16.msra.mxu0 %v2012
      %2035 = vmatprep.subr.bf16.mxu0 0
      %2036 = vmatpush1.bf16.msra.mxu0 %v2011
      %2037 = vmatprep.subr.bf16.mxu0 0
      %2038 = vmatpush1.bf16.msra.mxu0 %v2010
      %2039 = vmatprep.subr.bf16.mxu0 0
      %2040 = vmatpush1.bf16.msra.mxu0 %v2009
      %2041 = vmatprep.subr.bf16.mxu0 0
      %2042 = vmatpush2.bf16.msra.mxu0 0
      %2043 = vmatprep.subr.bf16.mxu0 0
      %2044 = vmatpush2.bf16.msra.mxu0 0
      %2045 = vmatprep.subr.bf16.mxu0 0
      %2046 = vmatpush2.bf16.msra.mxu0 0
      %2047 = vmatprep.subr.bf16.mxu0 0
      %2048 = vmatpush2.bf16.msra.mxu0 0
      %2049 = vmatprep.subr.bf16.mxu0 0
      %2050 = vmatpush2.bf16.msra.mxu0 0
      %2051 = vmatprep.subr.bf16.mxu0 0
      %2052 = vmatpush2.bf16.msra.mxu0 0
      %2053 = vmatprep.subr.bf16.mxu0 0
      %2054 = vmatpush2.bf16.msra.mxu0 0
      %2055 = vmatprep.subr.bf16.mxu0 0
      %2056 = vmatpush2.bf16.msra.mxu0 0
      %2057 = vmatprep.mubr.bf16.mxu0 0
      %2058 = vmatmul.mubr.bf16.gmra.mxu0 %v1961
      %v2059 = vpop.f32.mrf.mxu0
      %v2060 = vadd.f32 %v1867, %v2059
      %v2061 = vpop.f32.mrf.mxu0
      %v2062 = vpop.f32.mrf.mxu0
      %v2063 = vadd.f32 %v1870, %v2062
      %v2064 = vpop.f32.mrf.mxu0
      %2065 = vmatprep.mubr.bf16.mxu0 0
      %2066 = vmatmul.mubr.bf16.gmra.mxu0 %v1962
      %v2067 = vpop.f32.mrf.mxu0
      %v2068 = vadd.f32 %v1875, %v2067
      %v2069 = vpop.f32.mrf.mxu0
      %v2070 = vpop.f32.mrf.mxu0
      %v2071 = vadd.f32 %v1878, %v2070
      %v2072 = vpop.f32.mrf.mxu0
      %2073 = vmatprep.mubr.bf16.mxu0 0
      %2074 = vmatmul.mubr.bf16.gmra.mxu0 %v1963
      %v2075 = vpop.f32.mrf.mxu0
      %v2076 = vadd.f32 %v1883, %v2075
      %v2077 = vpop.f32.mrf.mxu0
      %v2078 = vpop.f32.mrf.mxu0
      %v2079 = vadd.f32 %v1886, %v2078
      %v2080 = vpop.f32.mrf.mxu0
      %2081 = vmatprep.mubr.bf16.mxu0 0
      %2082 = vmatmul.mubr.bf16.gmra.mxu0 %v1964
      %v2083 = vpop.f32.mrf.mxu0
      %v2084 = vadd.f32 %v1891, %v2083
      %v2085 = vpop.f32.mrf.mxu0
      %v2086 = vpop.f32.mrf.mxu0
      %v2087 = vadd.f32 %v1894, %v2086
      %v2088 = vpop.f32.mrf.mxu0
      %2089 = vmatprep.mubr.bf16.mxu0 0
      %2090 = vmatmul.mubr.bf16.gmra.mxu0 %v1965
      %v2091 = vpop.f32.mrf.mxu0
      %v2092 = vadd.f32 %v1899, %v2091
      %v2093 = vpop.f32.mrf.mxu0
      %v2094 = vpop.f32.mrf.mxu0
      %v2095 = vadd.f32 %v1902, %v2094
      %v2096 = vpop.f32.mrf.mxu0
      %2097 = vmatprep.mubr.bf16.mxu0 0
      %2098 = vmatmul.mubr.bf16.gmra.mxu0 %v1966
      %v2099 = vpop.f32.mrf.mxu0
      %v2100 = vadd.f32 %v1907, %v2099
      %v2101 = vpop.f32.mrf.mxu0
      %v2102 = vpop.f32.mrf.mxu0
      %v2103 = vadd.f32 %v1910, %v2102
      %v2104 = vpop.f32.mrf.mxu0
      %2105 = vmatprep.mubr.bf16.mxu0 0
      %2106 = vmatmul.mubr.bf16.gmra.mxu0 %v1967
      %v2107 = vpop.f32.mrf.mxu0
      %v2108 = vadd.f32 %v1915, %v2107
      %v2109 = vpop.f32.mrf.mxu0
      %v2110 = vpop.f32.mrf.mxu0
      %v2111 = vadd.f32 %v1918, %v2110
      %v2112 = vpop.f32.mrf.mxu0
      %2113 = vmatprep.mubr.bf16.mxu0 0
      %2114 = vmatmul.mubr.bf16.gmra.mxu0 %v1968
      %v2115 = vpop.f32.mrf.mxu0
      %v2116 = vadd.f32 %v1923, %v2115
      %v2117 = vpop.f32.mrf.mxu0
      %v2118 = vpop.f32.mrf.mxu0
      %v2119 = vadd.f32 %v1926, %v2118
      %v2120 = vpop.f32.mrf.mxu0
      %2121 = vdwg.mxu0
      %v2122 = vld [vmem:[#allocation2] sm:$0xe]
      %v2123 = vld [vmem:[#allocation2 + $0xc] sm:$0xe]
      %v2124 = vld [vmem:[#allocation2 + $0x18] sm:$0xe]
      %v2125 = vld [vmem:[#allocation2 + $0x24] sm:$0xe]
      %v2126 = vld [vmem:[#allocation2 + $0x30] sm:$0xe]
      %v2127 = vld [vmem:[#allocation2 + $0x3c] sm:$0xe]
      %v2128 = vld [vmem:[#allocation2 + $0x48] sm:$0xe]
      %v2129 = vld [vmem:[#allocation2 + $0x54] sm:$0xe]
      %vm2146 = vcmask 1042432
      %vm2147 = vcmask 1046532
      %vm2148 = vmor %vm2146, %vm2147
      %v2149 = vrot.slane %v2122, 5
      %v2150 = vrot.slane %v2149, 4
      %v2151 = vrot.slane %v1501, 5
      %v2152 = vsel %vm2148, %v2150, %v2151
      %v2153 = vrot.slane %v2151, 4
      %v2154 = vrot.slane %v1532, 5
      %v2155 = vsel %vm2148, %v2153, %v2154
      %v2156 = vrot.slane %v2123, 5
      %v2157 = vrot.slane %v2156, 4
      %v2158 = vrot.slane %v1503, 5
      %v2159 = vsel %vm2148, %v2157, %v2158
      %v2160 = vrot.slane %v2158, 4
      %v2161 = vrot.slane %v1533, 5
      %v2162 = vsel %vm2148, %v2160, %v2161
      %v2163 = vrot.slane %v2124, 5
      %v2164 = vrot.slane %v2163, 4
      %v2165 = vrot.slane %v1505, 5
      %v2166 = vsel %vm2148, %v2164, %v2165
      %v2167 = vrot.slane %v2165, 4
      %v2168 = vrot.slane %v1534, 5
      %v2169 = vsel %vm2148, %v2167, %v2168
      %v2170 = vrot.slane %v2125, 5
      %v2171 = vrot.slane %v2170, 4
      %v2172 = vrot.slane %v1507, 5
      %v2173 = vsel %vm2148, %v2171, %v2172
      %v2174 = vrot.slane %v2172, 4
      %v2175 = vrot.slane %v1535, 5
      %v2176 = vsel %vm2148, %v2174, %v2175
      %v2177 = vrot.slane %v2126, 5
      %v2178 = vrot.slane %v2177, 4
      %v2179 = vrot.slane %v1509, 5
      %v2180 = vsel %vm2148, %v2178, %v2179
      %v2181 = vrot.slane %v2179, 4
      %v2182 = vrot.slane %v1536, 5
      %v2183 = vsel %vm2148, %v2181, %v2182
      %v2184 = vrot.slane %v2127, 5
      %v2185 = vrot.slane %v2184, 4
      %v2186 = vrot.slane %v1511, 5
      %v2187 = vsel %vm2148, %v2185, %v2186
      %v2188 = vrot.slane %v2186, 4
      %v2189 = vrot.slane %v1537, 5
      %v2190 = vsel %vm2148, %v2188, %v2189
      %v2191 = vrot.slane %v2128, 5
      %v2192 = vrot.slane %v2191, 4
      %v2193 = vrot.slane %v1513, 5
      %v2194 = vsel %vm2148, %v2192, %v2193
      %v2195 = vrot.slane %v2193, 4
      %v2196 = vrot.slane %v1538, 5
      %v2197 = vsel %vm2148, %v2195, %v2196
      %v2198 = vrot.slane %v2129, 5
      %v2199 = vrot.slane %v2198, 4
      %v2200 = vrot.slane %v1515, 5
      %v2201 = vsel %vm2148, %v2199, %v2200
      %v2202 = vrot.slane %v2200, 4
      %v2203 = vrot.slane %v1539, 5
      %v2204 = vsel %vm2148, %v2202, %v2203
      %s2205 = scalar_lea.vmem %s6, 128
      %v2206 = vld [vmem:[%s2205] sm:$0xf]
      %v2207 = vld [vmem:[%s2205 + $0x4] sm:$0xf]
      %v2208 = vld [vmem:[%s2205 + $0x8] sm:$0xf]
      %v2209 = vld [vmem:[%s2205 + $0xc] sm:$0xf]
      %v2210 = vld [vmem:[%s2205 + $0x10] sm:$0xf]
      %v2211 = vld [vmem:[%s2205 + $0x14] sm:$0xf]
      %v2212 = vld [vmem:[%s2205 + $0x18] sm:$0xf]
      %v2213 = vld [vmem:[%s2205 + $0x1c] sm:$0xf]
      %v2214 = vld [vmem:[%s2205 + $0x20] sm:$0xf]
      %v2215 = vld [vmem:[%s2205 + $0x24] sm:$0xf]
      %v2216 = vld [vmem:[%s2205 + $0x28] sm:$0xf]
      %v2217 = vld [vmem:[%s2205 + $0x2c] sm:$0xf]
      %v2218 = vld [vmem:[%s2205 + $0x30] sm:$0xf]
      %v2219 = vld [vmem:[%s2205 + $0x34] sm:$0xf]
      %v2220 = vld [vmem:[%s2205 + $0x38] sm:$0xf]
      %v2221 = vld [vmem:[%s2205 + $0x3c] sm:$0xf]
      %v2222 = vunpack.c.l.b16 %v2152
      %v2223 = vunpack.c.l.b16 %v2155
      %v2224 = vunpack.c.l.b16 %v2159
      %v2225 = vunpack.c.l.b16 %v2162
      %v2226 = vunpack.c.l.b16 %v2166
      %v2227 = vunpack.c.l.b16 %v2169
      %v2228 = vunpack.c.l.b16 %v2173
      %v2229 = vunpack.c.l.b16 %v2176
      %v2230 = vunpack.c.l.b16 %v2180
      %v2231 = vunpack.c.l.b16 %v2183
      %v2232 = vunpack.c.l.b16 %v2187
      %v2233 = vunpack.c.l.b16 %v2190
      %v2234 = vunpack.c.l.b16 %v2194
      %v2235 = vunpack.c.l.b16 %v2197
      %v2236 = vunpack.c.l.b16 %v2201
      %v2237 = vunpack.c.l.b16 %v2204
      %v2238 = vpack.c.b16 %v2223, %v2222
      %v2239 = vpack.c.b16 %v2225, %v2224
      %v2240 = vpack.c.b16 %v2227, %v2226
      %v2241 = vpack.c.b16 %v2229, %v2228
      %v2242 = vpack.c.b16 %v2231, %v2230
      %v2243 = vpack.c.b16 %v2233, %v2232
      %v2244 = vpack.c.b16 %v2235, %v2234
      %v2245 = vpack.c.b16 %v2237, %v2236
      %v2270 = vunpack.c.l.b16 %v2206
      %v2271 = vunpack.c.l.b16 %v2207
      %v2272 = vunpack.c.l.b16 %v2208
      %v2273 = vunpack.c.l.b16 %v2209
      %v2274 = vunpack.c.l.b16 %v2210
      %v2275 = vunpack.c.l.b16 %v2211
      %v2276 = vunpack.c.l.b16 %v2212
      %v2277 = vunpack.c.l.b16 %v2213
      %v2278 = vunpack.c.l.b16 %v2214
      %v2279 = vunpack.c.l.b16 %v2215
      %v2280 = vunpack.c.l.b16 %v2216
      %v2281 = vunpack.c.l.b16 %v2217
      %v2282 = vunpack.c.l.b16 %v2218
      %v2283 = vunpack.c.l.b16 %v2219
      %v2284 = vunpack.c.l.b16 %v2220
      %v2285 = vunpack.c.l.b16 %v2221
      %v2286 = vpack.c.b16 %v2271, %v2270
      %v2287 = vpack.c.b16 %v2273, %v2272
      %v2288 = vpack.c.b16 %v2275, %v2274
      %v2289 = vpack.c.b16 %v2277, %v2276
      %v2290 = vpack.c.b16 %v2279, %v2278
      %v2291 = vpack.c.b16 %v2281, %v2280
      %v2292 = vpack.c.b16 %v2283, %v2282
      %v2293 = vpack.c.b16 %v2285, %v2284
      %2302 = vmatprep.subr.bf16.mxu0 0
      %2303 = vmatpush1.bf16.msra.mxu0 %v2293
      %2304 = vmatprep.subr.bf16.mxu0 0
      %2305 = vmatpush1.bf16.msra.mxu0 %v2292
      %2306 = vmatprep.subr.bf16.mxu0 0
      %2307 = vmatpush1.bf16.msra.mxu0 %v2291
      %2308 = vmatprep.subr.bf16.mxu0 0
      %2309 = vmatpush1.bf16.msra.mxu0 %v2290
      %2310 = vmatprep.subr.bf16.mxu0 0
      %2311 = vmatpush1.bf16.msra.mxu0 %v2289
      %2312 = vmatprep.subr.bf16.mxu0 0
      %2313 = vmatpush1.bf16.msra.mxu0 %v2288
      %2314 = vmatprep.subr.bf16.mxu0 0
      %2315 = vmatpush1.bf16.msra.mxu0 %v2287
      %2316 = vmatprep.subr.bf16.mxu0 0
      %2317 = vmatpush1.bf16.msra.mxu0 %v2286
      %2318 = vmatprep.subr.bf16.mxu0 0
      %2319 = vmatpush2.bf16.msra.mxu0 0
      %2320 = vmatprep.subr.bf16.mxu0 0
      %2321 = vmatpush2.bf16.msra.mxu0 0
      %2322 = vmatprep.subr.bf16.mxu0 0
      %2323 = vmatpush2.bf16.msra.mxu0 0
      %2324 = vmatprep.subr.bf16.mxu0 0
      %2325 = vmatpush2.bf16.msra.mxu0 0
      %2326 = vmatprep.subr.bf16.mxu0 0
      %2327 = vmatpush2.bf16.msra.mxu0 0
      %2328 = vmatprep.subr.bf16.mxu0 0
      %2329 = vmatpush2.bf16.msra.mxu0 0
      %2330 = vmatprep.subr.bf16.mxu0 0
      %2331 = vmatpush2.bf16.msra.mxu0 0
      %2332 = vmatprep.subr.bf16.mxu0 0
      %2333 = vmatpush2.bf16.msra.mxu0 0
      %2334 = vmatprep.mubr.bf16.mxu0 0
      %2335 = vmatmul.mubr.bf16.gmra.mxu0 %v2238
      %v2336 = vpop.f32.mrf.mxu0
      %v2337 = vadd.f32 0.0, %v2336
      %v2338 = vpop.f32.mrf.mxu0
      %v2339 = vpop.f32.mrf.mxu0
      %v2340 = vadd.f32 0.0, %v2339
      %v2341 = vpop.f32.mrf.mxu0
      %2342 = vmatprep.mubr.bf16.mxu0 0
      %2343 = vmatmul.mubr.bf16.gmra.mxu0 %v2239
      %v2344 = vpop.f32.mrf.mxu0
      %v2345 = vadd.f32 0.0, %v2344
      %v2346 = vpop.f32.mrf.mxu0
      %v2347 = vpop.f32.mrf.mxu0
      %v2348 = vadd.f32 0.0, %v2347
      %v2349 = vpop.f32.mrf.mxu0
      %2350 = vmatprep.mubr.bf16.mxu0 0
      %2351 = vmatmul.mubr.bf16.gmra.mxu0 %v2240
      %v2352 = vpop.f32.mrf.mxu0
      %v2353 = vadd.f32 0.0, %v2352
      %v2354 = vpop.f32.mrf.mxu0
      %v2355 = vpop.f32.mrf.mxu0
      %v2356 = vadd.f32 0.0, %v2355
      %v2357 = vpop.f32.mrf.mxu0
      %2358 = vmatprep.mubr.bf16.mxu0 0
      %2359 = vmatmul.mubr.bf16.gmra.mxu0 %v2241
      %v2360 = vpop.f32.mrf.mxu0
      %v2361 = vadd.f32 0.0, %v2360
      %v2362 = vpop.f32.mrf.mxu0
      %v2363 = vpop.f32.mrf.mxu0
      %v2364 = vadd.f32 0.0, %v2363
      %v2365 = vpop.f32.mrf.mxu0
      %2366 = vmatprep.mubr.bf16.mxu0 0
      %2367 = vmatmul.mubr.bf16.gmra.mxu0 %v2242
      %v2368 = vpop.f32.mrf.mxu0
      %v2369 = vadd.f32 0.0, %v2368
      %v2370 = vpop.f32.mrf.mxu0
      %v2371 = vpop.f32.mrf.mxu0
      %v2372 = vadd.f32 0.0, %v2371
      %v2373 = vpop.f32.mrf.mxu0
      %2374 = vmatprep.mubr.bf16.mxu0 0
      %2375 = vmatmul.mubr.bf16.gmra.mxu0 %v2243
      %v2376 = vpop.f32.mrf.mxu0
      %v2377 = vadd.f32 0.0, %v2376
      %v2378 = vpop.f32.mrf.mxu0
      %v2379 = vpop.f32.mrf.mxu0
      %v2380 = vadd.f32 0.0, %v2379
      %v2381 = vpop.f32.mrf.mxu0
      %2382 = vmatprep.mubr.bf16.mxu0 0
      %2383 = vmatmul.mubr.bf16.gmra.mxu0 %v2244
      %v2384 = vpop.f32.mrf.mxu0
      %v2385 = vadd.f32 0.0, %v2384
      %v2386 = vpop.f32.mrf.mxu0
      %v2387 = vpop.f32.mrf.mxu0
      %v2388 = vadd.f32 0.0, %v2387
      %v2389 = vpop.f32.mrf.mxu0
      %2390 = vmatprep.mubr.bf16.mxu0 0
      %2391 = vmatmul.mubr.bf16.gmra.mxu0 %v2245
      %v2392 = vpop.f32.mrf.mxu0
      %v2393 = vadd.f32 0.0, %v2392
      %v2394 = vpop.f32.mrf.mxu0
      %v2395 = vpop.f32.mrf.mxu0
      %v2396 = vadd.f32 0.0, %v2395
      %v2397 = vpop.f32.mrf.mxu0
      %2398 = vdwg.mxu0
      %v2399 = vadd.f32 %v2060, %v2337
      %v2400 = vadd.f32 %v2063, %v2340
      %v2401 = vadd.f32 %v2068, %v2345
      %v2402 = vadd.f32 %v2071, %v2348
      %v2403 = vadd.f32 %v2076, %v2353
      %v2404 = vadd.f32 %v2079, %v2356
      %v2405 = vadd.f32 %v2084, %v2361
      %v2406 = vadd.f32 %v2087, %v2364
      %v2407 = vadd.f32 %v2092, %v2369
      %v2408 = vadd.f32 %v2095, %v2372
      %v2409 = vadd.f32 %v2100, %v2377
      %v2410 = vadd.f32 %v2103, %v2380
      %v2411 = vadd.f32 %v2108, %v2385
      %v2412 = vadd.f32 %v2111, %v2388
      %v2413 = vadd.f32 %v2116, %v2393
      %v2414 = vadd.f32 %v2119, %v2396
      %v2415 = vld [vmem:[%s951] sm:$0xf]
      %v2416 = vld [vmem:[%s951 + $0x4] sm:$0xf]
      %v2417 = vld [vmem:[%s951 + $0xc] sm:$0xf]
      %v2418 = vld [vmem:[%s951 + $0x10] sm:$0xf]
      %v2419 = vld [vmem:[%s951 + $0x18] sm:$0xf]
      %v2420 = vld [vmem:[%s951 + $0x1c] sm:$0xf]
      %v2421 = vld [vmem:[%s951 + $0x24] sm:$0xf]
      %v2422 = vld [vmem:[%s951 + $0x28] sm:$0xf]
      %v2423 = vld [vmem:[%s951 + $0x30] sm:$0xf]
      %v2424 = vld [vmem:[%s951 + $0x34] sm:$0xf]
      %v2425 = vld [vmem:[%s951 + $0x3c] sm:$0xf]
      %v2426 = vld [vmem:[%s951 + $0x40] sm:$0xf]
      %v2427 = vld [vmem:[%s951 + $0x48] sm:$0xf]
      %v2428 = vld [vmem:[%s951 + $0x4c] sm:$0xf]
      %v2429 = vld [vmem:[%s951 + $0x54] sm:$0xf]
      %v2430 = vld [vmem:[%s951 + $0x58] sm:$0xf]
      %s2431 = scalar_lea.vmem %s6, 192
      %v2432 = vld [vmem:[%s2431] sm:$0xf]
      %v2433 = vld [vmem:[%s2431 + $0x4] sm:$0xf]
      %v2434 = vld [vmem:[%s2431 + $0x8] sm:$0xf]
      %v2435 = vld [vmem:[%s2431 + $0xc] sm:$0xf]
      %v2436 = vld [vmem:[%s2431 + $0x10] sm:$0xf]
      %v2437 = vld [vmem:[%s2431 + $0x14] sm:$0xf]
      %v2438 = vld [vmem:[%s2431 + $0x18] sm:$0xf]
      %v2439 = vld [vmem:[%s2431 + $0x1c] sm:$0xf]
      %v2440 = vld [vmem:[%s2431 + $0x20] sm:$0xf]
      %v2441 = vld [vmem:[%s2431 + $0x24] sm:$0xf]
      %v2442 = vld [vmem:[%s2431 + $0x28] sm:$0xf]
      %v2443 = vld [vmem:[%s2431 + $0x2c] sm:$0xf]
      %v2444 = vld [vmem:[%s2431 + $0x30] sm:$0xf]
      %v2445 = vld [vmem:[%s2431 + $0x34] sm:$0xf]
      %v2446 = vld [vmem:[%s2431 + $0x38] sm:$0xf]
      %v2447 = vld [vmem:[%s2431 + $0x3c] sm:$0xf]
      %v2464 = vunpack.c.l.b16 %v2415
      %v2465 = vunpack.c.l.b16 %v2416
      %v2466 = vunpack.c.l.b16 %v2417
      %v2467 = vunpack.c.l.b16 %v2418
      %v2468 = vunpack.c.l.b16 %v2419
      %v2469 = vunpack.c.l.b16 %v2420
      %v2470 = vunpack.c.l.b16 %v2421
      %v2471 = vunpack.c.l.b16 %v2422
      %v2472 = vunpack.c.l.b16 %v2423
      %v2473 = vunpack.c.l.b16 %v2424
      %v2474 = vunpack.c.l.b16 %v2425
      %v2475 = vunpack.c.l.b16 %v2426
      %v2476 = vunpack.c.l.b16 %v2427
      %v2477 = vunpack.c.l.b16 %v2428
      %v2478 = vunpack.c.l.b16 %v2429
      %v2479 = vunpack.c.l.b16 %v2430
      %v2480 = vpack.c.b16 %v2465, %v2464
      %v2481 = vpack.c.b16 %v2467, %v2466
      %v2482 = vpack.c.b16 %v2469, %v2468
      %v2483 = vpack.c.b16 %v2471, %v2470
      %v2484 = vpack.c.b16 %v2473, %v2472
      %v2485 = vpack.c.b16 %v2475, %v2474
      %v2486 = vpack.c.b16 %v2477, %v2476
      %v2487 = vpack.c.b16 %v2479, %v2478
      %v2512 = vunpack.c.l.b16 %v2432
      %v2513 = vunpack.c.l.b16 %v2433
      %v2514 = vunpack.c.l.b16 %v2434
      %v2515 = vunpack.c.l.b16 %v2435
      %v2516 = vunpack.c.l.b16 %v2436
      %v2517 = vunpack.c.l.b16 %v2437
      %v2518 = vunpack.c.l.b16 %v2438
      %v2519 = vunpack.c.l.b16 %v2439
      %v2520 = vunpack.c.l.b16 %v2440
      %v2521 = vunpack.c.l.b16 %v2441
      %v2522 = vunpack.c.l.b16 %v2442
      %v2523 = vunpack.c.l.b16 %v2443
      %v2524 = vunpack.c.l.b16 %v2444
      %v2525 = vunpack.c.l.b16 %v2445
      %v2526 = vunpack.c.l.b16 %v2446
      %v2527 = vunpack.c.l.b16 %v2447
      %v2528 = vpack.c.b16 %v2513, %v2512
      %v2529 = vpack.c.b16 %v2515, %v2514
      %v2530 = vpack.c.b16 %v2517, %v2516
      %v2531 = vpack.c.b16 %v2519, %v2518
      %v2532 = vpack.c.b16 %v2521, %v2520
      %v2533 = vpack.c.b16 %v2523, %v2522
      %v2534 = vpack.c.b16 %v2525, %v2524
      %v2535 = vpack.c.b16 %v2527, %v2526
      %2544 = vmatprep.subr.bf16.mxu0 0
      %2545 = vmatpush1.bf16.msra.mxu0 %v2535
      %2546 = vmatprep.subr.bf16.mxu0 0
      %2547 = vmatpush1.bf16.msra.mxu0 %v2534
      %2548 = vmatprep.subr.bf16.mxu0 0
      %2549 = vmatpush1.bf16.msra.mxu0 %v2533
      %2550 = vmatprep.subr.bf16.mxu0 0
      %2551 = vmatpush1.bf16.msra.mxu0 %v2532
      %2552 = vmatprep.subr.bf16.mxu0 0
      %2553 = vmatpush1.bf16.msra.mxu0 %v2531
      %2554 = vmatprep.subr.bf16.mxu0 0
      %2555 = vmatpush1.bf16.msra.mxu0 %v2530
      %2556 = vmatprep.subr.bf16.mxu0 0
      %2557 = vmatpush1.bf16.msra.mxu0 %v2529
      %2558 = vmatprep.subr.bf16.mxu0 0
      %2559 = vmatpush1.bf16.msra.mxu0 %v2528
      %2560 = vmatprep.subr.bf16.mxu0 0
      %2561 = vmatpush2.bf16.msra.mxu0 0
      %2562 = vmatprep.subr.bf16.mxu0 0
      %2563 = vmatpush2.bf16.msra.mxu0 0
      %2564 = vmatprep.subr.bf16.mxu0 0
      %2565 = vmatpush2.bf16.msra.mxu0 0
      %2566 = vmatprep.subr.bf16.mxu0 0
      %2567 = vmatpush2.bf16.msra.mxu0 0
      %2568 = vmatprep.subr.bf16.mxu0 0
      %2569 = vmatpush2.bf16.msra.mxu0 0
      %2570 = vmatprep.subr.bf16.mxu0 0
      %2571 = vmatpush2.bf16.msra.mxu0 0
      %2572 = vmatprep.subr.bf16.mxu0 0
      %2573 = vmatpush2.bf16.msra.mxu0 0
      %2574 = vmatprep.subr.bf16.mxu0 0
      %2575 = vmatpush2.bf16.msra.mxu0 0
      %2576 = vmatprep.mubr.bf16.mxu0 0
      %2577 = vmatmul.mubr.bf16.gmra.mxu0 %v2480
      %v2578 = vpop.f32.mrf.mxu0
      %v2579 = vadd.f32 0.0, %v2578
      %v2580 = vpop.f32.mrf.mxu0
      %v2581 = vpop.f32.mrf.mxu0
      %v2582 = vadd.f32 0.0, %v2581
      %v2583 = vpop.f32.mrf.mxu0
      %2584 = vmatprep.mubr.bf16.mxu0 0
      %2585 = vmatmul.mubr.bf16.gmra.mxu0 %v2481
      %v2586 = vpop.f32.mrf.mxu0
      %v2587 = vadd.f32 0.0, %v2586
      %v2588 = vpop.f32.mrf.mxu0
      %v2589 = vpop.f32.mrf.mxu0
      %v2590 = vadd.f32 0.0, %v2589
      %v2591 = vpop.f32.mrf.mxu0
      %2592 = vmatprep.mubr.bf16.mxu0 0
      %2593 = vmatmul.mubr.bf16.gmra.mxu0 %v2482
      %v2594 = vpop.f32.mrf.mxu0
      %v2595 = vadd.f32 0.0, %v2594
      %v2596 = vpop.f32.mrf.mxu0
      %v2597 = vpop.f32.mrf.mxu0
      %v2598 = vadd.f32 0.0, %v2597
      %v2599 = vpop.f32.mrf.mxu0
      %2600 = vmatprep.mubr.bf16.mxu0 0
      %2601 = vmatmul.mubr.bf16.gmra.mxu0 %v2483
      %v2602 = vpop.f32.mrf.mxu0
      %v2603 = vadd.f32 0.0, %v2602
      %v2604 = vpop.f32.mrf.mxu0
      %v2605 = vpop.f32.mrf.mxu0
      %v2606 = vadd.f32 0.0, %v2605
      %v2607 = vpop.f32.mrf.mxu0
      %2608 = vmatprep.mubr.bf16.mxu0 0
      %2609 = vmatmul.mubr.bf16.gmra.mxu0 %v2484
      %v2610 = vpop.f32.mrf.mxu0
      %v2611 = vadd.f32 0.0, %v2610
      %v2612 = vpop.f32.mrf.mxu0
      %v2613 = vpop.f32.mrf.mxu0
      %v2614 = vadd.f32 0.0, %v2613
      %v2615 = vpop.f32.mrf.mxu0
      %2616 = vmatprep.mubr.bf16.mxu0 0
      %2617 = vmatmul.mubr.bf16.gmra.mxu0 %v2485
      %v2618 = vpop.f32.mrf.mxu0
      %v2619 = vadd.f32 0.0, %v2618
      %v2620 = vpop.f32.mrf.mxu0
      %v2621 = vpop.f32.mrf.mxu0
      %v2622 = vadd.f32 0.0, %v2621
      %v2623 = vpop.f32.mrf.mxu0
      %2624 = vmatprep.mubr.bf16.mxu0 0
      %2625 = vmatmul.mubr.bf16.gmra.mxu0 %v2486
      %v2626 = vpop.f32.mrf.mxu0
      %v2627 = vadd.f32 0.0, %v2626
      %v2628 = vpop.f32.mrf.mxu0
      %v2629 = vpop.f32.mrf.mxu0
      %v2630 = vadd.f32 0.0, %v2629
      %v2631 = vpop.f32.mrf.mxu0
      %2632 = vmatprep.mubr.bf16.mxu0 0
      %2633 = vmatmul.mubr.bf16.gmra.mxu0 %v2487
      %v2634 = vpop.f32.mrf.mxu0
      %v2635 = vadd.f32 0.0, %v2634
      %v2636 = vpop.f32.mrf.mxu0
      %v2637 = vpop.f32.mrf.mxu0
      %v2638 = vadd.f32 0.0, %v2637
      %v2639 = vpop.f32.mrf.mxu0
      %2640 = vdwg.mxu0
      %v2641 = vadd.f32 %v2399, %v2579
      %v2642 = vadd.f32 %v2400, %v2582
      %v2643 = vadd.f32 %v2401, %v2587
      %v2644 = vadd.f32 %v2402, %v2590
      %v2645 = vadd.f32 %v2403, %v2595
      %v2646 = vadd.f32 %v2404, %v2598
      %v2647 = vadd.f32 %v2405, %v2603
      %v2648 = vadd.f32 %v2406, %v2606
      %v2649 = vadd.f32 %v2407, %v2611
      %v2650 = vadd.f32 %v2408, %v2614
      %v2651 = vadd.f32 %v2409, %v2619
      %v2652 = vadd.f32 %v2410, %v2622
      %v2653 = vadd.f32 %v2411, %v2627
      %v2654 = vadd.f32 %v2412, %v2630
      %v2655 = vadd.f32 %v2413, %v2635
      %v2656 = vadd.f32 %v2414, %v2638
      %v2657 = vld [vmem:[%s951] sm:$0xf]
      %v2658 = vld [vmem:[%s951 + $0x4] sm:$0xf]
      %v2659 = vld [vmem:[%s951 + $0x8] sm:$0x1]
      %v2660 = vld [vmem:[%s951 + $0xc] sm:$0xf]
      %v2661 = vld [vmem:[%s951 + $0x10] sm:$0xf]
      %v2662 = vld [vmem:[%s951 + $0x14] sm:$0x1]
      %v2663 = vld [vmem:[%s951 + $0x18] sm:$0xf]
      %v2664 = vld [vmem:[%s951 + $0x1c] sm:$0xf]
      %v2665 = vld [vmem:[%s951 + $0x20] sm:$0x1]
      %v2666 = vld [vmem:[%s951 + $0x24] sm:$0xf]
      %v2667 = vld [vmem:[%s951 + $0x28] sm:$0xf]
      %v2668 = vld [vmem:[%s951 + $0x2c] sm:$0x1]
      %v2669 = vld [vmem:[%s951 + $0x30] sm:$0xf]
      %v2670 = vld [vmem:[%s951 + $0x34] sm:$0xf]
      %v2671 = vld [vmem:[%s951 + $0x38] sm:$0x1]
      %v2672 = vld [vmem:[%s951 + $0x3c] sm:$0xf]
      %v2673 = vld [vmem:[%s951 + $0x40] sm:$0xf]
      %v2674 = vld [vmem:[%s951 + $0x44] sm:$0x1]
      %v2675 = vld [vmem:[%s951 + $0x48] sm:$0xf]
      %v2676 = vld [vmem:[%s951 + $0x4c] sm:$0xf]
      %v2677 = vld [vmem:[%s951 + $0x50] sm:$0x1]
      %v2678 = vld [vmem:[%s951 + $0x54] sm:$0xf]
      %v2679 = vld [vmem:[%s951 + $0x58] sm:$0xf]
      %v2680 = vld [vmem:[%s951 + $0x5c] sm:$0x1]
      %v2682 = vshrl.u32 %v2657, 16
      %v2684 = vrot.slane %v2682, 4
      %v2685 = vshll.u32 %v2657, 16
      %v2687 = vrot.slane %v2685, 5
      %v2688 = vor.u32 %v2684, %v2687
      %v2689 = vrot.slane %v2688, 4
      %v2691 = vshll.u32 %v2658, 16
      %v2693 = vrot.slane %v2691, 5
      %v2694 = vsel %vm1542, %v2689, %v2693
      %v2695 = vshrl.u32 %v2658, 16
      %v2697 = vrot.slane %v2695, 4
      %v2698 = vor.u32 %v2697, %v2693
      %v2699 = vrot.slane %v2698, 4
      %v2701 = vshll.u32 %v2659, 16
      %v2703 = vrot.slane %v2701, 5
      %v2704 = vsel %vm1542, %v2699, %v2703
      %v2706 = vshrl.u32 %v2660, 16
      %v2708 = vrot.slane %v2706, 4
      %v2709 = vshll.u32 %v2660, 16
      %v2711 = vrot.slane %v2709, 5
      %v2712 = vor.u32 %v2708, %v2711
      %v2713 = vrot.slane %v2712, 4
      %v2715 = vshll.u32 %v2661, 16
      %v2717 = vrot.slane %v2715, 5
      %v2718 = vsel %vm1542, %v2713, %v2717
      %v2719 = vshrl.u32 %v2661, 16
      %v2721 = vrot.slane %v2719, 4
      %v2722 = vor.u32 %v2721, %v2717
      %v2723 = vrot.slane %v2722, 4
      %v2725 = vshll.u32 %v2662, 16
      %v2727 = vrot.slane %v2725, 5
      %v2728 = vsel %vm1542, %v2723, %v2727
      %v2730 = vshrl.u32 %v2663, 16
      %v2732 = vrot.slane %v2730, 4
      %v2733 = vshll.u32 %v2663, 16
      %v2735 = vrot.slane %v2733, 5
      %v2736 = vor.u32 %v2732, %v2735
      %v2737 = vrot.slane %v2736, 4
      %v2739 = vshll.u32 %v2664, 16
      %v2741 = vrot.slane %v2739, 5
      %v2742 = vsel %vm1542, %v2737, %v2741
      %v2743 = vshrl.u32 %v2664, 16
      %v2745 = vrot.slane %v2743, 4
      %v2746 = vor.u32 %v2745, %v2741
      %v2747 = vrot.slane %v2746, 4
      %v2749 = vshll.u32 %v2665, 16
      %v2751 = vrot.slane %v2749, 5
      %v2752 = vsel %vm1542, %v2747, %v2751
      %v2754 = vshrl.u32 %v2666, 16
      %v2756 = vrot.slane %v2754, 4
      %v2757 = vshll.u32 %v2666, 16
      %v2759 = vrot.slane %v2757, 5
      %v2760 = vor.u32 %v2756, %v2759
      %v2761 = vrot.slane %v2760, 4
      %v2763 = vshll.u32 %v2667, 16
      %v2765 = vrot.slane %v2763, 5
      %v2766 = vsel %vm1542, %v2761, %v2765
      %v2767 = vshrl.u32 %v2667, 16
      %v2769 = vrot.slane %v2767, 4
      %v2770 = vor.u32 %v2769, %v2765
      %v2771 = vrot.slane %v2770, 4
      %v2773 = vshll.u32 %v2668, 16
      %v2775 = vrot.slane %v2773, 5
      %v2776 = vsel %vm1542, %v2771, %v2775
      %v2778 = vshrl.u32 %v2669, 16
      %v2780 = vrot.slane %v2778, 4
      %v2781 = vshll.u32 %v2669, 16
      %v2783 = vrot.slane %v2781, 5
      %v2784 = vor.u32 %v2780, %v2783
      %v2785 = vrot.slane %v2784, 4
      %v2787 = vshll.u32 %v2670, 16
      %v2789 = vrot.slane %v2787, 5
      %v2790 = vsel %vm1542, %v2785, %v2789
      %v2791 = vshrl.u32 %v2670, 16
      %v2793 = vrot.slane %v2791, 4
      %v2794 = vor.u32 %v2793, %v2789
      %v2795 = vrot.slane %v2794, 4
      %v2797 = vshll.u32 %v2671, 16
      %v2799 = vrot.slane %v2797, 5
      %v2800 = vsel %vm1542, %v2795, %v2799
      %v2802 = vshrl.u32 %v2672, 16
      %v2804 = vrot.slane %v2802, 4
      %v2805 = vshll.u32 %v2672, 16
      %v2807 = vrot.slane %v2805, 5
      %v2808 = vor.u32 %v2804, %v2807
      %v2809 = vrot.slane %v2808, 4
      %v2811 = vshll.u32 %v2673, 16
      %v2813 = vrot.slane %v2811, 5
      %v2814 = vsel %vm1542, %v2809, %v2813
      %v2815 = vshrl.u32 %v2673, 16
      %v2817 = vrot.slane %v2815, 4
      %v2818 = vor.u32 %v2817, %v2813
      %v2819 = vrot.slane %v2818, 4
      %v2821 = vshll.u32 %v2674, 16
      %v2823 = vrot.slane %v2821, 5
      %v2824 = vsel %vm1542, %v2819, %v2823
      %v2826 = vshrl.u32 %v2675, 16
      %v2828 = vrot.slane %v2826, 4
      %v2829 = vshll.u32 %v2675, 16
      %v2831 = vrot.slane %v2829, 5
      %v2832 = vor.u32 %v2828, %v2831
      %v2833 = vrot.slane %v2832, 4
      %v2835 = vshll.u32 %v2676, 16
      %v2837 = vrot.slane %v2835, 5
      %v2838 = vsel %vm1542, %v2833, %v2837
      %v2839 = vshrl.u32 %v2676, 16
      %v2841 = vrot.slane %v2839, 4
      %v2842 = vor.u32 %v2841, %v2837
      %v2843 = vrot.slane %v2842, 4
      %v2845 = vshll.u32 %v2677, 16
      %v2847 = vrot.slane %v2845, 5
      %v2848 = vsel %vm1542, %v2843, %v2847
      %v2850 = vshrl.u32 %v2678, 16
      %v2852 = vrot.slane %v2850, 4
      %v2853 = vshll.u32 %v2678, 16
      %v2855 = vrot.slane %v2853, 5
      %v2856 = vor.u32 %v2852, %v2855
      %v2857 = vrot.slane %v2856, 4
      %v2859 = vshll.u32 %v2679, 16
      %v2861 = vrot.slane %v2859, 5
      %v2862 = vsel %vm1542, %v2857, %v2861
      %v2863 = vshrl.u32 %v2679, 16
      %v2865 = vrot.slane %v2863, 4
      %v2866 = vor.u32 %v2865, %v2861
      %v2867 = vrot.slane %v2866, 4
      %v2869 = vshll.u32 %v2680, 16
      %v2871 = vrot.slane %v2869, 5
      %v2872 = vsel %vm1542, %v2867, %v2871
      %s2873 = scalar_lea.vmem %s6, 256
      %v2874 = vld [vmem:[%s2873] sm:$0xf]
      %v2875 = vld [vmem:[%s2873 + $0x4] sm:$0xf]
      %v2876 = vld [vmem:[%s2873 + $0x8] sm:$0xf]
      %v2877 = vld [vmem:[%s2873 + $0xc] sm:$0xf]
      %v2878 = vld [vmem:[%s2873 + $0x10] sm:$0xf]
      %v2879 = vld [vmem:[%s2873 + $0x14] sm:$0xf]
      %v2880 = vld [vmem:[%s2873 + $0x18] sm:$0xf]
      %v2881 = vld [vmem:[%s2873 + $0x1c] sm:$0xf]
      %v2882 = vld [vmem:[%s2873 + $0x20] sm:$0xf]
      %v2883 = vld [vmem:[%s2873 + $0x24] sm:$0xf]
      %v2884 = vld [vmem:[%s2873 + $0x28] sm:$0xf]
      %v2885 = vld [vmem:[%s2873 + $0x2c] sm:$0xf]
      %v2886 = vld [vmem:[%s2873 + $0x30] sm:$0xf]
      %v2887 = vld [vmem:[%s2873 + $0x34] sm:$0xf]
      %v2888 = vld [vmem:[%s2873 + $0x38] sm:$0xf]
      %v2889 = vld [vmem:[%s2873 + $0x3c] sm:$0xf]
      %v2890 = vunpack.c.l.b16 %v2694
      %v2891 = vunpack.c.l.b16 %v2704
      %v2892 = vunpack.c.l.b16 %v2718
      %v2893 = vunpack.c.l.b16 %v2728
      %v2894 = vunpack.c.l.b16 %v2742
      %v2895 = vunpack.c.l.b16 %v2752
      %v2896 = vunpack.c.l.b16 %v2766
      %v2897 = vunpack.c.l.b16 %v2776
      %v2898 = vunpack.c.l.b16 %v2790
      %v2899 = vunpack.c.l.b16 %v2800
      %v2900 = vunpack.c.l.b16 %v2814
      %v2901 = vunpack.c.l.b16 %v2824
      %v2902 = vunpack.c.l.b16 %v2838
      %v2903 = vunpack.c.l.b16 %v2848
      %v2904 = vunpack.c.l.b16 %v2862
      %v2905 = vunpack.c.l.b16 %v2872
      %v2906 = vpack.c.b16 %v2891, %v2890
      %v2907 = vpack.c.b16 %v2893, %v2892
      %v2908 = vpack.c.b16 %v2895, %v2894
      %v2909 = vpack.c.b16 %v2897, %v2896
      %v2910 = vpack.c.b16 %v2899, %v2898
      %v2911 = vpack.c.b16 %v2901, %v2900
      %v2912 = vpack.c.b16 %v2903, %v2902
      %v2913 = vpack.c.b16 %v2905, %v2904
      %v2938 = vunpack.c.l.b16 %v2874
      %v2939 = vunpack.c.l.b16 %v2875
      %v2940 = vunpack.c.l.b16 %v2876
      %v2941 = vunpack.c.l.b16 %v2877
      %v2942 = vunpack.c.l.b16 %v2878
      %v2943 = vunpack.c.l.b16 %v2879
      %v2944 = vunpack.c.l.b16 %v2880
      %v2945 = vunpack.c.l.b16 %v2881
      %v2946 = vunpack.c.l.b16 %v2882
      %v2947 = vunpack.c.l.b16 %v2883
      %v2948 = vunpack.c.l.b16 %v2884
      %v2949 = vunpack.c.l.b16 %v2885
      %v2950 = vunpack.c.l.b16 %v2886
      %v2951 = vunpack.c.l.b16 %v2887
      %v2952 = vunpack.c.l.b16 %v2888
      %v2953 = vunpack.c.l.b16 %v2889
      %v2954 = vpack.c.b16 %v2939, %v2938
      %v2955 = vpack.c.b16 %v2941, %v2940
      %v2956 = vpack.c.b16 %v2943, %v2942
      %v2957 = vpack.c.b16 %v2945, %v2944
      %v2958 = vpack.c.b16 %v2947, %v2946
      %v2959 = vpack.c.b16 %v2949, %v2948
      %v2960 = vpack.c.b16 %v2951, %v2950
      %v2961 = vpack.c.b16 %v2953, %v2952
      %2970 = vmatprep.subr.bf16.mxu0 0
      %2971 = vmatpush1.bf16.msra.mxu0 %v2961
      %2972 = vmatprep.subr.bf16.mxu0 0
      %2973 = vmatpush1.bf16.msra.mxu0 %v2960
      %2974 = vmatprep.subr.bf16.mxu0 0
      %2975 = vmatpush1.bf16.msra.mxu0 %v2959
      %2976 = vmatprep.subr.bf16.mxu0 0
      %2977 = vmatpush1.bf16.msra.mxu0 %v2958
      %2978 = vmatprep.subr.bf16.mxu0 0
      %2979 = vmatpush1.bf16.msra.mxu0 %v2957
      %2980 = vmatprep.subr.bf16.mxu0 0
      %2981 = vmatpush1.bf16.msra.mxu0 %v2956
      %2982 = vmatprep.subr.bf16.mxu0 0
      %2983 = vmatpush1.bf16.msra.mxu0 %v2955
      %2984 = vmatprep.subr.bf16.mxu0 0
      %2985 = vmatpush1.bf16.msra.mxu0 %v2954
      %2986 = vmatprep.subr.bf16.mxu0 0
      %2987 = vmatpush2.bf16.msra.mxu0 0
      %2988 = vmatprep.subr.bf16.mxu0 0
      %2989 = vmatpush2.bf16.msra.mxu0 0
      %2990 = vmatprep.subr.bf16.mxu0 0
      %2991 = vmatpush2.bf16.msra.mxu0 0
      %2992 = vmatprep.subr.bf16.mxu0 0
      %2993 = vmatpush2.bf16.msra.mxu0 0
      %2994 = vmatprep.subr.bf16.mxu0 0
      %2995 = vmatpush2.bf16.msra.mxu0 0
      %2996 = vmatprep.subr.bf16.mxu0 0
      %2997 = vmatpush2.bf16.msra.mxu0 0
      %2998 = vmatprep.subr.bf16.mxu0 0
      %2999 = vmatpush2.bf16.msra.mxu0 0
      %3000 = vmatprep.subr.bf16.mxu0 0
      %3001 = vmatpush2.bf16.msra.mxu0 0
      %3002 = vmatprep.mubr.bf16.mxu0 0
      %3003 = vmatmul.mubr.bf16.gmra.mxu0 %v2906
      %v3004 = vpop.f32.mrf.mxu0
      %v3005 = vadd.f32 0.0, %v3004
      %v3006 = vpop.f32.mrf.mxu0
      %v3007 = vpop.f32.mrf.mxu0
      %v3008 = vadd.f32 0.0, %v3007
      %v3009 = vpop.f32.mrf.mxu0
      %3010 = vmatprep.mubr.bf16.mxu0 0
      %3011 = vmatmul.mubr.bf16.gmra.mxu0 %v2907
      %v3012 = vpop.f32.mrf.mxu0
      %v3013 = vadd.f32 0.0, %v3012
      %v3014 = vpop.f32.mrf.mxu0
      %v3015 = vpop.f32.mrf.mxu0
      %v3016 = vadd.f32 0.0, %v3015
      %v3017 = vpop.f32.mrf.mxu0
      %3018 = vmatprep.mubr.bf16.mxu0 0
      %3019 = vmatmul.mubr.bf16.gmra.mxu0 %v2908
      %v3020 = vpop.f32.mrf.mxu0
      %v3021 = vadd.f32 0.0, %v3020
      %v3022 = vpop.f32.mrf.mxu0
      %v3023 = vpop.f32.mrf.mxu0
      %v3024 = vadd.f32 0.0, %v3023
      %v3025 = vpop.f32.mrf.mxu0
      %3026 = vmatprep.mubr.bf16.mxu0 0
      %3027 = vmatmul.mubr.bf16.gmra.mxu0 %v2909
      %v3028 = vpop.f32.mrf.mxu0
      %v3029 = vadd.f32 0.0, %v3028
      %v3030 = vpop.f32.mrf.mxu0
      %v3031 = vpop.f32.mrf.mxu0
      %v3032 = vadd.f32 0.0, %v3031
      %v3033 = vpop.f32.mrf.mxu0
      %3034 = vmatprep.mubr.bf16.mxu0 0
      %3035 = vmatmul.mubr.bf16.gmra.mxu0 %v2910
      %v3036 = vpop.f32.mrf.mxu0
      %v3037 = vadd.f32 0.0, %v3036
      %v3038 = vpop.f32.mrf.mxu0
      %v3039 = vpop.f32.mrf.mxu0
      %v3040 = vadd.f32 0.0, %v3039
      %v3041 = vpop.f32.mrf.mxu0
      %3042 = vmatprep.mubr.bf16.mxu0 0
      %3043 = vmatmul.mubr.bf16.gmra.mxu0 %v2911
      %v3044 = vpop.f32.mrf.mxu0
      %v3045 = vadd.f32 0.0, %v3044
      %v3046 = vpop.f32.mrf.mxu0
      %v3047 = vpop.f32.mrf.mxu0
      %v3048 = vadd.f32 0.0, %v3047
      %v3049 = vpop.f32.mrf.mxu0
      %3050 = vmatprep.mubr.bf16.mxu0 0
      %3051 = vmatmul.mubr.bf16.gmra.mxu0 %v2912
      %v3052 = vpop.f32.mrf.mxu0
      %v3053 = vadd.f32 0.0, %v3052
      %v3054 = vpop.f32.mrf.mxu0
      %v3055 = vpop.f32.mrf.mxu0
      %v3056 = vadd.f32 0.0, %v3055
      %v3057 = vpop.f32.mrf.mxu0
      %3058 = vmatprep.mubr.bf16.mxu0 0
      %3059 = vmatmul.mubr.bf16.gmra.mxu0 %v2913
      %v3060 = vpop.f32.mrf.mxu0
      %v3061 = vadd.f32 0.0, %v3060
      %v3062 = vpop.f32.mrf.mxu0
      %v3063 = vpop.f32.mrf.mxu0
      %v3064 = vadd.f32 0.0, %v3063
      %v3065 = vpop.f32.mrf.mxu0
      %3066 = vdwg.mxu0
      %v3067 = vadd.f32 %v2641, %v3005
      %v3068 = vadd.f32 %v2642, %v3008
      %v3069 = vadd.f32 %v2643, %v3013
      %v3070 = vadd.f32 %v2644, %v3016
      %v3071 = vadd.f32 %v2645, %v3021
      %v3072 = vadd.f32 %v2646, %v3024
      %v3073 = vadd.f32 %v2647, %v3029
      %v3074 = vadd.f32 %v2648, %v3032
      %v3075 = vadd.f32 %v2649, %v3037
      %v3076 = vadd.f32 %v2650, %v3040
      %v3077 = vadd.f32 %v2651, %v3045
      %v3078 = vadd.f32 %v2652, %v3048
      %v3079 = vadd.f32 %v2653, %v3053
      %v3080 = vadd.f32 %v2654, %v3056
      %v3081 = vadd.f32 %v2655, %v3061
      %v3082 = vadd.f32 %v2656, %v3064
      %v3083 = vld [vmem:[%s951] sm:$0xe]
      %v3084 = vld [vmem:[%s951 + $0xc] sm:$0xe]
      %v3085 = vld [vmem:[%s951 + $0x18] sm:$0xe]
      %v3086 = vld [vmem:[%s951 + $0x24] sm:$0xe]
      %v3087 = vld [vmem:[%s951 + $0x30] sm:$0xe]
      %v3088 = vld [vmem:[%s951 + $0x3c] sm:$0xe]
      %v3089 = vld [vmem:[%s951 + $0x48] sm:$0xe]
      %v3090 = vld [vmem:[%s951 + $0x54] sm:$0xe]
      %v3115 = vrot.slane %v3083, 5
      %v3116 = vrot.slane %v3115, 4
      %v3117 = vrot.slane %v2658, 5
      %v3118 = vsel %vm2148, %v3116, %v3117
      %v3119 = vrot.slane %v3117, 4
      %v3120 = vrot.slane %v2659, 5
      %v3121 = vsel %vm2148, %v3119, %v3120
      %v3122 = vrot.slane %v3084, 5
      %v3123 = vrot.slane %v3122, 4
      %v3124 = vrot.slane %v2661, 5
      %v3125 = vsel %vm2148, %v3123, %v3124
      %v3126 = vrot.slane %v3124, 4
      %v3127 = vrot.slane %v2662, 5
      %v3128 = vsel %vm2148, %v3126, %v3127
      %v3129 = vrot.slane %v3085, 5
      %v3130 = vrot.slane %v3129, 4
      %v3131 = vrot.slane %v2664, 5
      %v3132 = vsel %vm2148, %v3130, %v3131
      %v3133 = vrot.slane %v3131, 4
      %v3134 = vrot.slane %v2665, 5
      %v3135 = vsel %vm2148, %v3133, %v3134
      %v3136 = vrot.slane %v3086, 5
      %v3137 = vrot.slane %v3136, 4
      %v3138 = vrot.slane %v2667, 5
      %v3139 = vsel %vm2148, %v3137, %v3138
      %v3140 = vrot.slane %v3138, 4
      %v3141 = vrot.slane %v2668, 5
      %v3142 = vsel %vm2148, %v3140, %v3141
      %v3143 = vrot.slane %v3087, 5
      %v3144 = vrot.slane %v3143, 4
      %v3145 = vrot.slane %v2670, 5
      %v3146 = vsel %vm2148, %v3144, %v3145
      %v3147 = vrot.slane %v3145, 4
      %v3148 = vrot.slane %v2671, 5
      %v3149 = vsel %vm2148, %v3147, %v3148
      %v3150 = vrot.slane %v3088, 5
      %v3151 = vrot.slane %v3150, 4
      %v3152 = vrot.slane %v2673, 5
      %v3153 = vsel %vm2148, %v3151, %v3152
      %v3154 = vrot.slane %v3152, 4
      %v3155 = vrot.slane %v2674, 5
      %v3156 = vsel %vm2148, %v3154, %v3155
      %v3157 = vrot.slane %v3089, 5
      %v3158 = vrot.slane %v3157, 4
      %v3159 = vrot.slane %v2676, 5
      %v3160 = vsel %vm2148, %v3158, %v3159
      %v3161 = vrot.slane %v3159, 4
      %v3162 = vrot.slane %v2677, 5
      %v3163 = vsel %vm2148, %v3161, %v3162
      %v3164 = vrot.slane %v3090, 5
      %v3165 = vrot.slane %v3164, 4
      %v3166 = vrot.slane %v2679, 5
      %v3167 = vsel %vm2148, %v3165, %v3166
      %v3168 = vrot.slane %v3166, 4
      %v3169 = vrot.slane %v2680, 5
      %v3170 = vsel %vm2148, %v3168, %v3169
      %s3171 = scalar_lea.vmem %s6, 320
      %v3172 = vld [vmem:[%s3171] sm:$0xf]
      %v3173 = vld [vmem:[%s3171 + $0x4] sm:$0xf]
      %v3174 = vld [vmem:[%s3171 + $0x8] sm:$0xf]
      %v3175 = vld [vmem:[%s3171 + $0xc] sm:$0xf]
      %v3176 = vld [vmem:[%s3171 + $0x10] sm:$0xf]
      %v3177 = vld [vmem:[%s3171 + $0x14] sm:$0xf]
      %v3178 = vld [vmem:[%s3171 + $0x18] sm:$0xf]
      %v3179 = vld [vmem:[%s3171 + $0x1c] sm:$0xf]
      %v3180 = vld [vmem:[%s3171 + $0x20] sm:$0xf]
      %v3181 = vld [vmem:[%s3171 + $0x24] sm:$0xf]
      %v3182 = vld [vmem:[%s3171 + $0x28] sm:$0xf]
      %v3183 = vld [vmem:[%s3171 + $0x2c] sm:$0xf]
      %v3184 = vld [vmem:[%s3171 + $0x30] sm:$0xf]
      %v3185 = vld [vmem:[%s3171 + $0x34] sm:$0xf]
      %v3186 = vld [vmem:[%s3171 + $0x38] sm:$0xf]
      %v3187 = vld [vmem:[%s3171 + $0x3c] sm:$0xf]
      %v3188 = vunpack.c.l.b16 %v3118
      %v3189 = vunpack.c.l.b16 %v3121
      %v3190 = vunpack.c.l.b16 %v3125
      %v3191 = vunpack.c.l.b16 %v3128
      %v3192 = vunpack.c.l.b16 %v3132
      %v3193 = vunpack.c.l.b16 %v3135
      %v3194 = vunpack.c.l.b16 %v3139
      %v3195 = vunpack.c.l.b16 %v3142
      %v3196 = vunpack.c.l.b16 %v3146
      %v3197 = vunpack.c.l.b16 %v3149
      %v3198 = vunpack.c.l.b16 %v3153
      %v3199 = vunpack.c.l.b16 %v3156
      %v3200 = vunpack.c.l.b16 %v3160
      %v3201 = vunpack.c.l.b16 %v3163
      %v3202 = vunpack.c.l.b16 %v3167
      %v3203 = vunpack.c.l.b16 %v3170
      %v3204 = vpack.c.b16 %v3189, %v3188
      %v3205 = vpack.c.b16 %v3191, %v3190
      %v3206 = vpack.c.b16 %v3193, %v3192
      %v3207 = vpack.c.b16 %v3195, %v3194
      %v3208 = vpack.c.b16 %v3197, %v3196
      %v3209 = vpack.c.b16 %v3199, %v3198
      %v3210 = vpack.c.b16 %v3201, %v3200
      %v3211 = vpack.c.b16 %v3203, %v3202
      %v3236 = vunpack.c.l.b16 %v3172
      %v3237 = vunpack.c.l.b16 %v3173
      %v3238 = vunpack.c.l.b16 %v3174
      %v3239 = vunpack.c.l.b16 %v3175
      %v3240 = vunpack.c.l.b16 %v3176
      %v3241 = vunpack.c.l.b16 %v3177
      %v3242 = vunpack.c.l.b16 %v3178
      %v3243 = vunpack.c.l.b16 %v3179
      %v3244 = vunpack.c.l.b16 %v3180
      %v3245 = vunpack.c.l.b16 %v3181
      %v3246 = vunpack.c.l.b16 %v3182
      %v3247 = vunpack.c.l.b16 %v3183
      %v3248 = vunpack.c.l.b16 %v3184
      %v3249 = vunpack.c.l.b16 %v3185
      %v3250 = vunpack.c.l.b16 %v3186
      %v3251 = vunpack.c.l.b16 %v3187
      %v3252 = vpack.c.b16 %v3237, %v3236
      %v3253 = vpack.c.b16 %v3239, %v3238
      %v3254 = vpack.c.b16 %v3241, %v3240
      %v3255 = vpack.c.b16 %v3243, %v3242
      %v3256 = vpack.c.b16 %v3245, %v3244
      %v3257 = vpack.c.b16 %v3247, %v3246
      %v3258 = vpack.c.b16 %v3249, %v3248
      %v3259 = vpack.c.b16 %v3251, %v3250
      %3268 = vmatprep.subr.bf16.mxu0 0
      %3269 = vmatpush1.bf16.msra.mxu0 %v3259
      %3270 = vmatprep.subr.bf16.mxu0 0
      %3271 = vmatpush1.bf16.msra.mxu0 %v3258
      %3272 = vmatprep.subr.bf16.mxu0 0
      %3273 = vmatpush1.bf16.msra.mxu0 %v3257
      %3274 = vmatprep.subr.bf16.mxu0 0
      %3275 = vmatpush1.bf16.msra.mxu0 %v3256
      %3276 = vmatprep.subr.bf16.mxu0 0
      %3277 = vmatpush1.bf16.msra.mxu0 %v3255
      %3278 = vmatprep.subr.bf16.mxu0 0
      %3279 = vmatpush1.bf16.msra.mxu0 %v3254
      %3280 = vmatprep.subr.bf16.mxu0 0
      %3281 = vmatpush1.bf16.msra.mxu0 %v3253
      %3282 = vmatprep.subr.bf16.mxu0 0
      %3283 = vmatpush1.bf16.msra.mxu0 %v3252
      %3284 = vmatprep.subr.bf16.mxu0 0
      %3285 = vmatpush2.bf16.msra.mxu0 0
      %3286 = vmatprep.subr.bf16.mxu0 0
      %3287 = vmatpush2.bf16.msra.mxu0 0
      %3288 = vmatprep.subr.bf16.mxu0 0
      %3289 = vmatpush2.bf16.msra.mxu0 0
      %3290 = vmatprep.subr.bf16.mxu0 0
      %3291 = vmatpush2.bf16.msra.mxu0 0
      %3292 = vmatprep.subr.bf16.mxu0 0
      %3293 = vmatpush2.bf16.msra.mxu0 0
      %3294 = vmatprep.subr.bf16.mxu0 0
      %3295 = vmatpush2.bf16.msra.mxu0 0
      %3296 = vmatprep.subr.bf16.mxu0 0
      %3297 = vmatpush2.bf16.msra.mxu0 0
      %3298 = vmatprep.subr.bf16.mxu0 0
      %3299 = vmatpush2.bf16.msra.mxu0 0
      %3300 = vmatprep.mubr.bf16.mxu0 0
      %3301 = vmatmul.mubr.bf16.gmra.mxu0 %v3204
      %v3302 = vpop.f32.mrf.mxu0
      %v3303 = vadd.f32 0.0, %v3302
      %v3304 = vpop.f32.mrf.mxu0
      %v3305 = vpop.f32.mrf.mxu0
      %v3306 = vadd.f32 0.0, %v3305
      %v3307 = vpop.f32.mrf.mxu0
      %3308 = vmatprep.mubr.bf16.mxu0 0
      %3309 = vmatmul.mubr.bf16.gmra.mxu0 %v3205
      %v3310 = vpop.f32.mrf.mxu0
      %v3311 = vadd.f32 0.0, %v3310
      %v3312 = vpop.f32.mrf.mxu0
      %v3313 = vpop.f32.mrf.mxu0
      %v3314 = vadd.f32 0.0, %v3313
      %v3315 = vpop.f32.mrf.mxu0
      %3316 = vmatprep.mubr.bf16.mxu0 0
      %3317 = vmatmul.mubr.bf16.gmra.mxu0 %v3206
      %v3318 = vpop.f32.mrf.mxu0
      %v3319 = vadd.f32 0.0, %v3318
      %v3320 = vpop.f32.mrf.mxu0
      %v3321 = vpop.f32.mrf.mxu0
      %v3322 = vadd.f32 0.0, %v3321
      %v3323 = vpop.f32.mrf.mxu0
      %3324 = vmatprep.mubr.bf16.mxu0 0
      %3325 = vmatmul.mubr.bf16.gmra.mxu0 %v3207
      %v3326 = vpop.f32.mrf.mxu0
      %v3327 = vadd.f32 0.0, %v3326
      %v3328 = vpop.f32.mrf.mxu0
      %v3329 = vpop.f32.mrf.mxu0
      %v3330 = vadd.f32 0.0, %v3329
      %v3331 = vpop.f32.mrf.mxu0
      %3332 = vmatprep.mubr.bf16.mxu0 0
      %3333 = vmatmul.mubr.bf16.gmra.mxu0 %v3208
      %v3334 = vpop.f32.mrf.mxu0
      %v3335 = vadd.f32 0.0, %v3334
      %v3336 = vpop.f32.mrf.mxu0
      %v3337 = vpop.f32.mrf.mxu0
      %v3338 = vadd.f32 0.0, %v3337
      %v3339 = vpop.f32.mrf.mxu0
      %3340 = vmatprep.mubr.bf16.mxu0 0
      %3341 = vmatmul.mubr.bf16.gmra.mxu0 %v3209
      %v3342 = vpop.f32.mrf.mxu0
      %v3343 = vadd.f32 0.0, %v3342
      %v3344 = vpop.f32.mrf.mxu0
      %v3345 = vpop.f32.mrf.mxu0
      %v3346 = vadd.f32 0.0, %v3345
      %v3347 = vpop.f32.mrf.mxu0
      %3348 = vmatprep.mubr.bf16.mxu0 0
      %3349 = vmatmul.mubr.bf16.gmra.mxu0 %v3210
      %v3350 = vpop.f32.mrf.mxu0
      %v3351 = vadd.f32 0.0, %v3350
      %v3352 = vpop.f32.mrf.mxu0
      %v3353 = vpop.f32.mrf.mxu0
      %v3354 = vadd.f32 0.0, %v3353
      %v3355 = vpop.f32.mrf.mxu0
      %3356 = vmatprep.mubr.bf16.mxu0 0
      %3357 = vmatmul.mubr.bf16.gmra.mxu0 %v3211
      %v3358 = vpop.f32.mrf.mxu0
      %v3359 = vadd.f32 0.0, %v3358
      %v3360 = vpop.f32.mrf.mxu0
      %v3361 = vpop.f32.mrf.mxu0
      %v3362 = vadd.f32 0.0, %v3361
      %v3363 = vpop.f32.mrf.mxu0
      %3364 = vdwg.mxu0
      %v3365 = vadd.f32 %v3067, %v3303
      %v3366 = vadd.f32 %v3068, %v3306
      %v3367 = vadd.f32 %v3069, %v3311
      %v3368 = vadd.f32 %v3070, %v3314
      %v3369 = vadd.f32 %v3071, %v3319
      %v3370 = vadd.f32 %v3072, %v3322
      %v3371 = vadd.f32 %v3073, %v3327
      %v3372 = vadd.f32 %v3074, %v3330
      %v3373 = vadd.f32 %v3075, %v3335
      %v3374 = vadd.f32 %v3076, %v3338
      %v3375 = vadd.f32 %v3077, %v3343
      %v3376 = vadd.f32 %v3078, %v3346
      %v3377 = vadd.f32 %v3079, %v3351
      %v3378 = vadd.f32 %v3080, %v3354
      %v3379 = vadd.f32 %v3081, %v3359
      %v3380 = vadd.f32 %v3082, %v3362
      %s3381 = scalar_lea.vmem [#allocation2], 24
      %v3382 = vld [vmem:[%s3381] sm:$0xf]
      %v3383 = vld [vmem:[%s3381 + $0x4] sm:$0xf]
      %v3384 = vld [vmem:[%s3381 + $0xc] sm:$0xf]
      %v3385 = vld [vmem:[%s3381 + $0x10] sm:$0xf]
      %v3386 = vld [vmem:[%s3381 + $0x18] sm:$0xf]
      %v3387 = vld [vmem:[%s3381 + $0x1c] sm:$0xf]
      %v3388 = vld [vmem:[%s3381 + $0x24] sm:$0xf]
      %v3389 = vld [vmem:[%s3381 + $0x28] sm:$0xf]
      %v3390 = vld [vmem:[%s3381 + $0x30] sm:$0xf]
      %v3391 = vld [vmem:[%s3381 + $0x34] sm:$0xf]
      %v3392 = vld [vmem:[%s3381 + $0x3c] sm:$0xf]
      %v3393 = vld [vmem:[%s3381 + $0x40] sm:$0xf]
      %v3394 = vld [vmem:[%s3381 + $0x48] sm:$0xf]
      %v3395 = vld [vmem:[%s3381 + $0x4c] sm:$0xf]
      %v3396 = vld [vmem:[%s3381 + $0x54] sm:$0xf]
      %v3397 = vld [vmem:[%s3381 + $0x58] sm:$0xf]
      %s3398 = scalar_lea.vmem %s6, 384
      %v3399 = vld [vmem:[%s3398] sm:$0xf]
      %v3400 = vld [vmem:[%s3398 + $0x4] sm:$0xf]
      %v3401 = vld [vmem:[%s3398 + $0x8] sm:$0xf]
      %v3402 = vld [vmem:[%s3398 + $0xc] sm:$0xf]
      %v3403 = vld [vmem:[%s3398 + $0x10] sm:$0xf]
      %v3404 = vld [vmem:[%s3398 + $0x14] sm:$0xf]
      %v3405 = vld [vmem:[%s3398 + $0x18] sm:$0xf]
      %v3406 = vld [vmem:[%s3398 + $0x1c] sm:$0xf]
      %v3407 = vld [vmem:[%s3398 + $0x20] sm:$0xf]
      %v3408 = vld [vmem:[%s3398 + $0x24] sm:$0xf]
      %v3409 = vld [vmem:[%s3398 + $0x28] sm:$0xf]
      %v3410 = vld [vmem:[%s3398 + $0x2c] sm:$0xf]
      %v3411 = vld [vmem:[%s3398 + $0x30] sm:$0xf]
      %v3412 = vld [vmem:[%s3398 + $0x34] sm:$0xf]
      %v3413 = vld [vmem:[%s3398 + $0x38] sm:$0xf]
      %v3414 = vld [vmem:[%s3398 + $0x3c] sm:$0xf]
      %v3431 = vunpack.c.l.b16 %v3382
      %v3432 = vunpack.c.l.b16 %v3383
      %v3433 = vunpack.c.l.b16 %v3384
      %v3434 = vunpack.c.l.b16 %v3385
      %v3435 = vunpack.c.l.b16 %v3386
      %v3436 = vunpack.c.l.b16 %v3387
      %v3437 = vunpack.c.l.b16 %v3388
      %v3438 = vunpack.c.l.b16 %v3389
      %v3439 = vunpack.c.l.b16 %v3390
      %v3440 = vunpack.c.l.b16 %v3391
      %v3441 = vunpack.c.l.b16 %v3392
      %v3442 = vunpack.c.l.b16 %v3393
      %v3443 = vunpack.c.l.b16 %v3394
      %v3444 = vunpack.c.l.b16 %v3395
      %v3445 = vunpack.c.l.b16 %v3396
      %v3446 = vunpack.c.l.b16 %v3397
      %v3447 = vpack.c.b16 %v3432, %v3431
      %v3448 = vpack.c.b16 %v3434, %v3433
      %v3449 = vpack.c.b16 %v3436, %v3435
      %v3450 = vpack.c.b16 %v3438, %v3437
      %v3451 = vpack.c.b16 %v3440, %v3439
      %v3452 = vpack.c.b16 %v3442, %v3441
      %v3453 = vpack.c.b16 %v3444, %v3443
      %v3454 = vpack.c.b16 %v3446, %v3445
      %v3479 = vunpack.c.l.b16 %v3399
      %v3480 = vunpack.c.l.b16 %v3400
      %v3481 = vunpack.c.l.b16 %v3401
      %v3482 = vunpack.c.l.b16 %v3402
      %v3483 = vunpack.c.l.b16 %v3403
      %v3484 = vunpack.c.l.b16 %v3404
      %v3485 = vunpack.c.l.b16 %v3405
      %v3486 = vunpack.c.l.b16 %v3406
      %v3487 = vunpack.c.l.b16 %v3407
      %v3488 = vunpack.c.l.b16 %v3408
      %v3489 = vunpack.c.l.b16 %v3409
      %v3490 = vunpack.c.l.b16 %v3410
      %v3491 = vunpack.c.l.b16 %v3411
      %v3492 = vunpack.c.l.b16 %v3412
      %v3493 = vunpack.c.l.b16 %v3413
      %v3494 = vunpack.c.l.b16 %v3414
      %v3495 = vpack.c.b16 %v3480, %v3479
      %v3496 = vpack.c.b16 %v3482, %v3481
      %v3497 = vpack.c.b16 %v3484, %v3483
      %v3498 = vpack.c.b16 %v3486, %v3485
      %v3499 = vpack.c.b16 %v3488, %v3487
      %v3500 = vpack.c.b16 %v3490, %v3489
      %v3501 = vpack.c.b16 %v3492, %v3491
      %v3502 = vpack.c.b16 %v3494, %v3493
      %3511 = vmatprep.subr.bf16.mxu0 0
      %3512 = vmatpush1.bf16.msra.mxu0 %v3502
      %3513 = vmatprep.subr.bf16.mxu0 0
      %3514 = vmatpush1.bf16.msra.mxu0 %v3501
      %3515 = vmatprep.subr.bf16.mxu0 0
      %3516 = vmatpush1.bf16.msra.mxu0 %v3500
      %3517 = vmatprep.subr.bf16.mxu0 0
      %3518 = vmatpush1.bf16.msra.mxu0 %v3499
      %3519 = vmatprep.subr.bf16.mxu0 0
      %3520 = vmatpush1.bf16.msra.mxu0 %v3498
      %3521 = vmatprep.subr.bf16.mxu0 0
      %3522 = vmatpush1.bf16.msra.mxu0 %v3497
      %3523 = vmatprep.subr.bf16.mxu0 0
      %3524 = vmatpush1.bf16.msra.mxu0 %v3496
      %3525 = vmatprep.subr.bf16.mxu0 0
      %3526 = vmatpush1.bf16.msra.mxu0 %v3495
      %3527 = vmatprep.subr.bf16.mxu0 0
      %3528 = vmatpush2.bf16.msra.mxu0 0
      %3529 = vmatprep.subr.bf16.mxu0 0
      %3530 = vmatpush2.bf16.msra.mxu0 0
      %3531 = vmatprep.subr.bf16.mxu0 0
      %3532 = vmatpush2.bf16.msra.mxu0 0
      %3533 = vmatprep.subr.bf16.mxu0 0
      %3534 = vmatpush2.bf16.msra.mxu0 0
      %3535 = vmatprep.subr.bf16.mxu0 0
      %3536 = vmatpush2.bf16.msra.mxu0 0
      %3537 = vmatprep.subr.bf16.mxu0 0
      %3538 = vmatpush2.bf16.msra.mxu0 0
      %3539 = vmatprep.subr.bf16.mxu0 0
      %3540 = vmatpush2.bf16.msra.mxu0 0
      %3541 = vmatprep.subr.bf16.mxu0 0
      %3542 = vmatpush2.bf16.msra.mxu0 0
      %3543 = vmatprep.mubr.bf16.mxu0 0
      %3544 = vmatmul.mubr.bf16.gmra.mxu0 %v3447
      %v3545 = vpop.f32.mrf.mxu0
      %v3546 = vadd.f32 0.0, %v3545
      %v3547 = vpop.f32.mrf.mxu0
      %v3548 = vpop.f32.mrf.mxu0
      %v3549 = vadd.f32 0.0, %v3548
      %v3550 = vpop.f32.mrf.mxu0
      %3551 = vmatprep.mubr.bf16.mxu0 0
      %3552 = vmatmul.mubr.bf16.gmra.mxu0 %v3448
      %v3553 = vpop.f32.mrf.mxu0
      %v3554 = vadd.f32 0.0, %v3553
      %v3555 = vpop.f32.mrf.mxu0
      %v3556 = vpop.f32.mrf.mxu0
      %v3557 = vadd.f32 0.0, %v3556
      %v3558 = vpop.f32.mrf.mxu0
      %3559 = vmatprep.mubr.bf16.mxu0 0
      %3560 = vmatmul.mubr.bf16.gmra.mxu0 %v3449
      %v3561 = vpop.f32.mrf.mxu0
      %v3562 = vadd.f32 0.0, %v3561
      %v3563 = vpop.f32.mrf.mxu0
      %v3564 = vpop.f32.mrf.mxu0
      %v3565 = vadd.f32 0.0, %v3564
      %v3566 = vpop.f32.mrf.mxu0
      %3567 = vmatprep.mubr.bf16.mxu0 0
      %3568 = vmatmul.mubr.bf16.gmra.mxu0 %v3450
      %v3569 = vpop.f32.mrf.mxu0
      %v3570 = vadd.f32 0.0, %v3569
      %v3571 = vpop.f32.mrf.mxu0
      %v3572 = vpop.f32.mrf.mxu0
      %v3573 = vadd.f32 0.0, %v3572
      %v3574 = vpop.f32.mrf.mxu0
      %3575 = vmatprep.mubr.bf16.mxu0 0
      %3576 = vmatmul.mubr.bf16.gmra.mxu0 %v3451
      %v3577 = vpop.f32.mrf.mxu0
      %v3578 = vadd.f32 0.0, %v3577
      %v3579 = vpop.f32.mrf.mxu0
      %v3580 = vpop.f32.mrf.mxu0
      %v3581 = vadd.f32 0.0, %v3580
      %v3582 = vpop.f32.mrf.mxu0
      %3583 = vmatprep.mubr.bf16.mxu0 0
      %3584 = vmatmul.mubr.bf16.gmra.mxu0 %v3452
      %v3585 = vpop.f32.mrf.mxu0
      %v3586 = vadd.f32 0.0, %v3585
      %v3587 = vpop.f32.mrf.mxu0
      %v3588 = vpop.f32.mrf.mxu0
      %v3589 = vadd.f32 0.0, %v3588
      %v3590 = vpop.f32.mrf.mxu0
      %3591 = vmatprep.mubr.bf16.mxu0 0
      %3592 = vmatmul.mubr.bf16.gmra.mxu0 %v3453
      %v3593 = vpop.f32.mrf.mxu0
      %v3594 = vadd.f32 0.0, %v3593
      %v3595 = vpop.f32.mrf.mxu0
      %v3596 = vpop.f32.mrf.mxu0
      %v3597 = vadd.f32 0.0, %v3596
      %v3598 = vpop.f32.mrf.mxu0
      %3599 = vmatprep.mubr.bf16.mxu0 0
      %3600 = vmatmul.mubr.bf16.gmra.mxu0 %v3454
      %v3601 = vpop.f32.mrf.mxu0
      %v3602 = vadd.f32 0.0, %v3601
      %v3603 = vpop.f32.mrf.mxu0
      %v3604 = vpop.f32.mrf.mxu0
      %v3605 = vadd.f32 0.0, %v3604
      %v3606 = vpop.f32.mrf.mxu0
      %3607 = vdwg.mxu0
      %v3608 = vadd.f32 %v3365, %v3546
      %v3609 = vadd.f32 %v3366, %v3549
      %v3610 = vadd.f32 %v3367, %v3554
      %v3611 = vadd.f32 %v3368, %v3557
      %v3612 = vadd.f32 %v3369, %v3562
      %v3613 = vadd.f32 %v3370, %v3565
      %v3614 = vadd.f32 %v3371, %v3570
      %v3615 = vadd.f32 %v3372, %v3573
      %v3616 = vadd.f32 %v3373, %v3578
      %v3617 = vadd.f32 %v3374, %v3581
      %v3618 = vadd.f32 %v3375, %v3586
      %v3619 = vadd.f32 %v3376, %v3589
      %v3620 = vadd.f32 %v3377, %v3594
      %v3621 = vadd.f32 %v3378, %v3597
      %v3622 = vadd.f32 %v3379, %v3602
      %v3623 = vadd.f32 %v3380, %v3605
      %v3624 = vld [vmem:[%s3381] sm:$0xf]
      %v3625 = vld [vmem:[%s3381 + $0x4] sm:$0xf]
      %v3626 = vld [vmem:[%s3381 + $0x8] sm:$0x1]
      %v3627 = vld [vmem:[%s3381 + $0xc] sm:$0xf]
      %v3628 = vld [vmem:[%s3381 + $0x10] sm:$0xf]
      %v3629 = vld [vmem:[%s3381 + $0x14] sm:$0x1]
      %v3630 = vld [vmem:[%s3381 + $0x18] sm:$0xf]
      %v3631 = vld [vmem:[%s3381 + $0x1c] sm:$0xf]
      %v3632 = vld [vmem:[%s3381 + $0x20] sm:$0x1]
      %v3633 = vld [vmem:[%s3381 + $0x24] sm:$0xf]
      %v3634 = vld [vmem:[%s3381 + $0x28] sm:$0xf]
      %v3635 = vld [vmem:[%s3381 + $0x2c] sm:$0x1]
      %v3636 = vld [vmem:[%s3381 + $0x30] sm:$0xf]
      %v3637 = vld [vmem:[%s3381 + $0x34] sm:$0xf]
      %v3638 = vld [vmem:[%s3381 + $0x38] sm:$0x1]
      %v3639 = vld [vmem:[%s3381 + $0x3c] sm:$0xf]
      %v3640 = vld [vmem:[%s3381 + $0x40] sm:$0xf]
      %v3641 = vld [vmem:[%s3381 + $0x44] sm:$0x1]
      %v3642 = vld [vmem:[%s3381 + $0x48] sm:$0xf]
      %v3643 = vld [vmem:[%s3381 + $0x4c] sm:$0xf]
      %v3644 = vld [vmem:[%s3381 + $0x50] sm:$0x1]
      %v3645 = vld [vmem:[%s3381 + $0x54] sm:$0xf]
      %v3646 = vld [vmem:[%s3381 + $0x58] sm:$0xf]
      %v3647 = vld [vmem:[%s3381 + $0x5c] sm:$0x1]
      %v3649 = vshrl.u32 %v3624, 16
      %v3651 = vrot.slane %v3649, 4
      %v3652 = vshll.u32 %v3624, 16
      %v3654 = vrot.slane %v3652, 5
      %v3655 = vor.u32 %v3651, %v3654
      %v3656 = vrot.slane %v3655, 4
      %v3658 = vshll.u32 %v3625, 16
      %v3660 = vrot.slane %v3658, 5
      %v3661 = vsel %vm1542, %v3656, %v3660
      %v3662 = vshrl.u32 %v3625, 16
      %v3664 = vrot.slane %v3662, 4
      %v3665 = vor.u32 %v3664, %v3660
      %v3666 = vrot.slane %v3665, 4
      %v3668 = vshll.u32 %v3626, 16
      %v3670 = vrot.slane %v3668, 5
      %v3671 = vsel %vm1542, %v3666, %v3670
      %v3673 = vshrl.u32 %v3627, 16
      %v3675 = vrot.slane %v3673, 4
      %v3676 = vshll.u32 %v3627, 16
      %v3678 = vrot.slane %v3676, 5
      %v3679 = vor.u32 %v3675, %v3678
      %v3680 = vrot.slane %v3679, 4
      %v3682 = vshll.u32 %v3628, 16
      %v3684 = vrot.slane %v3682, 5
      %v3685 = vsel %vm1542, %v3680, %v3684
      %v3686 = vshrl.u32 %v3628, 16
      %v3688 = vrot.slane %v3686, 4
      %v3689 = vor.u32 %v3688, %v3684
      %v3690 = vrot.slane %v3689, 4
      %v3692 = vshll.u32 %v3629, 16
      %v3694 = vrot.slane %v3692, 5
      %v3695 = vsel %vm1542, %v3690, %v3694
      %v3697 = vshrl.u32 %v3630, 16
      %v3699 = vrot.slane %v3697, 4
      %v3700 = vshll.u32 %v3630, 16
      %v3702 = vrot.slane %v3700, 5
      %v3703 = vor.u32 %v3699, %v3702
      %v3704 = vrot.slane %v3703, 4
      %v3706 = vshll.u32 %v3631, 16
      %v3708 = vrot.slane %v3706, 5
      %v3709 = vsel %vm1542, %v3704, %v3708
      %v3710 = vshrl.u32 %v3631, 16
      %v3712 = vrot.slane %v3710, 4
      %v3713 = vor.u32 %v3712, %v3708
      %v3714 = vrot.slane %v3713, 4
      %v3716 = vshll.u32 %v3632, 16
      %v3718 = vrot.slane %v3716, 5
      %v3719 = vsel %vm1542, %v3714, %v3718
      %v3721 = vshrl.u32 %v3633, 16
      %v3723 = vrot.slane %v3721, 4
      %v3724 = vshll.u32 %v3633, 16
      %v3726 = vrot.slane %v3724, 5
      %v3727 = vor.u32 %v3723, %v3726
      %v3728 = vrot.slane %v3727, 4
      %v3730 = vshll.u32 %v3634, 16
      %v3732 = vrot.slane %v3730, 5
      %v3733 = vsel %vm1542, %v3728, %v3732
      %v3734 = vshrl.u32 %v3634, 16
      %v3736 = vrot.slane %v3734, 4
      %v3737 = vor.u32 %v3736, %v3732
      %v3738 = vrot.slane %v3737, 4
      %v3740 = vshll.u32 %v3635, 16
      %v3742 = vrot.slane %v3740, 5
      %v3743 = vsel %vm1542, %v3738, %v3742
      %v3745 = vshrl.u32 %v3636, 16
      %v3747 = vrot.slane %v3745, 4
      %v3748 = vshll.u32 %v3636, 16
      %v3750 = vrot.slane %v3748, 5
      %v3751 = vor.u32 %v3747, %v3750
      %v3752 = vrot.slane %v3751, 4
      %v3754 = vshll.u32 %v3637, 16
      %v3756 = vrot.slane %v3754, 5
      %v3757 = vsel %vm1542, %v3752, %v3756
      %v3758 = vshrl.u32 %v3637, 16
      %v3760 = vrot.slane %v3758, 4
      %v3761 = vor.u32 %v3760, %v3756
      %v3762 = vrot.slane %v3761, 4
      %v3764 = vshll.u32 %v3638, 16
      %v3766 = vrot.slane %v3764, 5
      %v3767 = vsel %vm1542, %v3762, %v3766
      %v3769 = vshrl.u32 %v3639, 16
      %v3771 = vrot.slane %v3769, 4
      %v3772 = vshll.u32 %v3639, 16
      %v3774 = vrot.slane %v3772, 5
      %v3775 = vor.u32 %v3771, %v3774
      %v3776 = vrot.slane %v3775, 4
      %v3778 = vshll.u32 %v3640, 16
      %v3780 = vrot.slane %v3778, 5
      %v3781 = vsel %vm1542, %v3776, %v3780
      %v3782 = vshrl.u32 %v3640, 16
      %v3784 = vrot.slane %v3782, 4
      %v3785 = vor.u32 %v3784, %v3780
      %v3786 = vrot.slane %v3785, 4
      %v3788 = vshll.u32 %v3641, 16
      %v3790 = vrot.slane %v3788, 5
      %v3791 = vsel %vm1542, %v3786, %v3790
      %v3793 = vshrl.u32 %v3642, 16
      %v3795 = vrot.slane %v3793, 4
      %v3796 = vshll.u32 %v3642, 16
      %v3798 = vrot.slane %v3796, 5
      %v3799 = vor.u32 %v3795, %v3798
      %v3800 = vrot.slane %v3799, 4
      %v3802 = vshll.u32 %v3643, 16
      %v3804 = vrot.slane %v3802, 5
      %v3805 = vsel %vm1542, %v3800, %v3804
      %v3806 = vshrl.u32 %v3643, 16
      %v3808 = vrot.slane %v3806, 4
      %v3809 = vor.u32 %v3808, %v3804
      %v3810 = vrot.slane %v3809, 4
      %v3812 = vshll.u32 %v3644, 16
      %v3814 = vrot.slane %v3812, 5
      %v3815 = vsel %vm1542, %v3810, %v3814
      %v3817 = vshrl.u32 %v3645, 16
      %v3819 = vrot.slane %v3817, 4
      %v3820 = vshll.u32 %v3645, 16
      %v3822 = vrot.slane %v3820, 5
      %v3823 = vor.u32 %v3819, %v3822
      %v3824 = vrot.slane %v3823, 4
      %v3826 = vshll.u32 %v3646, 16
      %v3828 = vrot.slane %v3826, 5
      %v3829 = vsel %vm1542, %v3824, %v3828
      %v3830 = vshrl.u32 %v3646, 16
      %v3832 = vrot.slane %v3830, 4
      %v3833 = vor.u32 %v3832, %v3828
      %v3834 = vrot.slane %v3833, 4
      %v3836 = vshll.u32 %v3647, 16
      %v3838 = vrot.slane %v3836, 5
      %v3839 = vsel %vm1542, %v3834, %v3838
      %s3840 = scalar_lea.vmem %s6, 448
      %v3841 = vld [vmem:[%s3840] sm:$0xf]
      %v3842 = vld [vmem:[%s3840 + $0x4] sm:$0xf]
      %v3843 = vld [vmem:[%s3840 + $0x8] sm:$0xf]
      %v3844 = vld [vmem:[%s3840 + $0xc] sm:$0xf]
      %v3845 = vld [vmem:[%s3840 + $0x10] sm:$0xf]
      %v3846 = vld [vmem:[%s3840 + $0x14] sm:$0xf]
      %v3847 = vld [vmem:[%s3840 + $0x18] sm:$0xf]
      %v3848 = vld [vmem:[%s3840 + $0x1c] sm:$0xf]
      %v3849 = vld [vmem:[%s3840 + $0x20] sm:$0xf]
      %v3850 = vld [vmem:[%s3840 + $0x24] sm:$0xf]
      %v3851 = vld [vmem:[%s3840 + $0x28] sm:$0xf]
      %v3852 = vld [vmem:[%s3840 + $0x2c] sm:$0xf]
      %v3853 = vld [vmem:[%s3840 + $0x30] sm:$0xf]
      %v3854 = vld [vmem:[%s3840 + $0x34] sm:$0xf]
      %v3855 = vld [vmem:[%s3840 + $0x38] sm:$0xf]
      %v3856 = vld [vmem:[%s3840 + $0x3c] sm:$0xf]
      %v3857 = vunpack.c.l.b16 %v3661
      %v3858 = vunpack.c.l.b16 %v3671
      %v3859 = vunpack.c.l.b16 %v3685
      %v3860 = vunpack.c.l.b16 %v3695
      %v3861 = vunpack.c.l.b16 %v3709
      %v3862 = vunpack.c.l.b16 %v3719
      %v3863 = vunpack.c.l.b16 %v3733
      %v3864 = vunpack.c.l.b16 %v3743
      %v3865 = vunpack.c.l.b16 %v3757
      %v3866 = vunpack.c.l.b16 %v3767
      %v3867 = vunpack.c.l.b16 %v3781
      %v3868 = vunpack.c.l.b16 %v3791
      %v3869 = vunpack.c.l.b16 %v3805
      %v3870 = vunpack.c.l.b16 %v3815
      %v3871 = vunpack.c.l.b16 %v3829
      %v3872 = vunpack.c.l.b16 %v3839
      %v3873 = vpack.c.b16 %v3858, %v3857
      %v3874 = vpack.c.b16 %v3860, %v3859
      %v3875 = vpack.c.b16 %v3862, %v3861
      %v3876 = vpack.c.b16 %v3864, %v3863
      %v3877 = vpack.c.b16 %v3866, %v3865
      %v3878 = vpack.c.b16 %v3868, %v3867
      %v3879 = vpack.c.b16 %v3870, %v3869
      %v3880 = vpack.c.b16 %v3872, %v3871
      %v3905 = vunpack.c.l.b16 %v3841
      %v3906 = vunpack.c.l.b16 %v3842
      %v3907 = vunpack.c.l.b16 %v3843
      %v3908 = vunpack.c.l.b16 %v3844
      %v3909 = vunpack.c.l.b16 %v3845
      %v3910 = vunpack.c.l.b16 %v3846
      %v3911 = vunpack.c.l.b16 %v3847
      %v3912 = vunpack.c.l.b16 %v3848
      %v3913 = vunpack.c.l.b16 %v3849
      %v3914 = vunpack.c.l.b16 %v3850
      %v3915 = vunpack.c.l.b16 %v3851
      %v3916 = vunpack.c.l.b16 %v3852
      %v3917 = vunpack.c.l.b16 %v3853
      %v3918 = vunpack.c.l.b16 %v3854
      %v3919 = vunpack.c.l.b16 %v3855
      %v3920 = vunpack.c.l.b16 %v3856
      %v3921 = vpack.c.b16 %v3906, %v3905
      %v3922 = vpack.c.b16 %v3908, %v3907
      %v3923 = vpack.c.b16 %v3910, %v3909
      %v3924 = vpack.c.b16 %v3912, %v3911
      %v3925 = vpack.c.b16 %v3914, %v3913
      %v3926 = vpack.c.b16 %v3916, %v3915
      %v3927 = vpack.c.b16 %v3918, %v3917
      %v3928 = vpack.c.b16 %v3920, %v3919
      %3937 = vmatprep.subr.bf16.mxu0 0
      %3938 = vmatpush1.bf16.msra.mxu0 %v3928
      %3939 = vmatprep.subr.bf16.mxu0 0
      %3940 = vmatpush1.bf16.msra.mxu0 %v3927
      %3941 = vmatprep.subr.bf16.mxu0 0
      %3942 = vmatpush1.bf16.msra.mxu0 %v3926
      %3943 = vmatprep.subr.bf16.mxu0 0
      %3944 = vmatpush1.bf16.msra.mxu0 %v3925
      %3945 = vmatprep.subr.bf16.mxu0 0
      %3946 = vmatpush1.bf16.msra.mxu0 %v3924
      %3947 = vmatprep.subr.bf16.mxu0 0
      %3948 = vmatpush1.bf16.msra.mxu0 %v3923
      %3949 = vmatprep.subr.bf16.mxu0 0
      %3950 = vmatpush1.bf16.msra.mxu0 %v3922
      %3951 = vmatprep.subr.bf16.mxu0 0
      %3952 = vmatpush1.bf16.msra.mxu0 %v3921
      %3953 = vmatprep.subr.bf16.mxu0 0
      %3954 = vmatpush2.bf16.msra.mxu0 0
      %3955 = vmatprep.subr.bf16.mxu0 0
      %3956 = vmatpush2.bf16.msra.mxu0 0
      %3957 = vmatprep.subr.bf16.mxu0 0
      %3958 = vmatpush2.bf16.msra.mxu0 0
      %3959 = vmatprep.subr.bf16.mxu0 0
      %3960 = vmatpush2.bf16.msra.mxu0 0
      %3961 = vmatprep.subr.bf16.mxu0 0
      %3962 = vmatpush2.bf16.msra.mxu0 0
      %3963 = vmatprep.subr.bf16.mxu0 0
      %3964 = vmatpush2.bf16.msra.mxu0 0
      %3965 = vmatprep.subr.bf16.mxu0 0
      %3966 = vmatpush2.bf16.msra.mxu0 0
      %3967 = vmatprep.subr.bf16.mxu0 0
      %3968 = vmatpush2.bf16.msra.mxu0 0
      %3969 = vmatprep.mubr.bf16.mxu0 0
      %3970 = vmatmul.mubr.bf16.gmra.mxu0 %v3873
      %v3971 = vpop.f32.mrf.mxu0
      %v3972 = vadd.f32 0.0, %v3971
      %v3973 = vpop.f32.mrf.mxu0
      %v3974 = vpop.f32.mrf.mxu0
      %v3975 = vadd.f32 0.0, %v3974
      %v3976 = vpop.f32.mrf.mxu0
      %3977 = vmatprep.mubr.bf16.mxu0 0
      %3978 = vmatmul.mubr.bf16.gmra.mxu0 %v3874
      %v3979 = vpop.f32.mrf.mxu0
      %v3980 = vadd.f32 0.0, %v3979
      %v3981 = vpop.f32.mrf.mxu0
      %v3982 = vpop.f32.mrf.mxu0
      %v3983 = vadd.f32 0.0, %v3982
      %v3984 = vpop.f32.mrf.mxu0
      %3985 = vmatprep.mubr.bf16.mxu0 0
      %3986 = vmatmul.mubr.bf16.gmra.mxu0 %v3875
      %v3987 = vpop.f32.mrf.mxu0
      %v3988 = vadd.f32 0.0, %v3987
      %v3989 = vpop.f32.mrf.mxu0
      %v3990 = vpop.f32.mrf.mxu0
      %v3991 = vadd.f32 0.0, %v3990
      %v3992 = vpop.f32.mrf.mxu0
      %3993 = vmatprep.mubr.bf16.mxu0 0
      %3994 = vmatmul.mubr.bf16.gmra.mxu0 %v3876
      %v3995 = vpop.f32.mrf.mxu0
      %v3996 = vadd.f32 0.0, %v3995
      %v3997 = vpop.f32.mrf.mxu0
      %v3998 = vpop.f32.mrf.mxu0
      %v3999 = vadd.f32 0.0, %v3998
      %v4000 = vpop.f32.mrf.mxu0
      %4001 = vmatprep.mubr.bf16.mxu0 0
      %4002 = vmatmul.mubr.bf16.gmra.mxu0 %v3877
      %v4003 = vpop.f32.mrf.mxu0
      %v4004 = vadd.f32 0.0, %v4003
      %v4005 = vpop.f32.mrf.mxu0
      %v4006 = vpop.f32.mrf.mxu0
      %v4007 = vadd.f32 0.0, %v4006
      %v4008 = vpop.f32.mrf.mxu0
      %4009 = vmatprep.mubr.bf16.mxu0 0
      %4010 = vmatmul.mubr.bf16.gmra.mxu0 %v3878
      %v4011 = vpop.f32.mrf.mxu0
      %v4012 = vadd.f32 0.0, %v4011
      %v4013 = vpop.f32.mrf.mxu0
      %v4014 = vpop.f32.mrf.mxu0
      %v4015 = vadd.f32 0.0, %v4014
      %v4016 = vpop.f32.mrf.mxu0
      %4017 = vmatprep.mubr.bf16.mxu0 0
      %4018 = vmatmul.mubr.bf16.gmra.mxu0 %v3879
      %v4019 = vpop.f32.mrf.mxu0
      %v4020 = vadd.f32 0.0, %v4019
      %v4021 = vpop.f32.mrf.mxu0
      %v4022 = vpop.f32.mrf.mxu0
      %v4023 = vadd.f32 0.0, %v4022
      %v4024 = vpop.f32.mrf.mxu0
      %4025 = vmatprep.mubr.bf16.mxu0 0
      %4026 = vmatmul.mubr.bf16.gmra.mxu0 %v3880
      %v4027 = vpop.f32.mrf.mxu0
      %v4028 = vadd.f32 0.0, %v4027
      %v4029 = vpop.f32.mrf.mxu0
      %v4030 = vpop.f32.mrf.mxu0
      %v4031 = vadd.f32 0.0, %v4030
      %v4032 = vpop.f32.mrf.mxu0
      %4033 = vdwg.mxu0
      %v4034 = vadd.f32 %v3608, %v3972
      %v4035 = vadd.f32 %v3609, %v3975
      %v4036 = vadd.f32 %v3610, %v3980
      %v4037 = vadd.f32 %v3611, %v3983
      %v4038 = vadd.f32 %v3612, %v3988
      %v4039 = vadd.f32 %v3613, %v3991
      %v4040 = vadd.f32 %v3614, %v3996
      %v4041 = vadd.f32 %v3615, %v3999
      %v4042 = vadd.f32 %v3616, %v4004
      %v4043 = vadd.f32 %v3617, %v4007
      %v4044 = vadd.f32 %v3618, %v4012
      %v4045 = vadd.f32 %v3619, %v4015
      %v4046 = vadd.f32 %v3620, %v4020
      %v4047 = vadd.f32 %v3621, %v4023
      %v4048 = vadd.f32 %v3622, %v4028
      %v4049 = vadd.f32 %v3623, %v4031
      %v4050 = vld [vmem:[%s3381] sm:$0xe]
      %v4051 = vld [vmem:[%s3381 + $0xc] sm:$0xe]
      %v4052 = vld [vmem:[%s3381 + $0x18] sm:$0xe]
      %v4053 = vld [vmem:[%s3381 + $0x24] sm:$0xe]
      %v4054 = vld [vmem:[%s3381 + $0x30] sm:$0xe]
      %v4055 = vld [vmem:[%s3381 + $0x3c] sm:$0xe]
      %v4056 = vld [vmem:[%s3381 + $0x48] sm:$0xe]
      %v4057 = vld [vmem:[%s3381 + $0x54] sm:$0xe]
      %v4082 = vrot.slane %v4050, 5
      %v4083 = vrot.slane %v4082, 4
      %v4084 = vrot.slane %v3625, 5
      %v4085 = vsel %vm2148, %v4083, %v4084
      %v4086 = vrot.slane %v4084, 4
      %v4087 = vrot.slane %v3626, 5
      %v4088 = vsel %vm2148, %v4086, %v4087
      %v4089 = vrot.slane %v4051, 5
      %v4090 = vrot.slane %v4089, 4
      %v4091 = vrot.slane %v3628, 5
      %v4092 = vsel %vm2148, %v4090, %v4091
      %v4093 = vrot.slane %v4091, 4
      %v4094 = vrot.slane %v3629, 5
      %v4095 = vsel %vm2148, %v4093, %v4094
      %v4096 = vrot.slane %v4052, 5
      %v4097 = vrot.slane %v4096, 4
      %v4098 = vrot.slane %v3631, 5
      %v4099 = vsel %vm2148, %v4097, %v4098
      %v4100 = vrot.slane %v4098, 4
      %v4101 = vrot.slane %v3632, 5
      %v4102 = vsel %vm2148, %v4100, %v4101
      %v4103 = vrot.slane %v4053, 5
      %v4104 = vrot.slane %v4103, 4
      %v4105 = vrot.slane %v3634, 5
      %v4106 = vsel %vm2148, %v4104, %v4105
      %v4107 = vrot.slane %v4105, 4
      %v4108 = vrot.slane %v3635, 5
      %v4109 = vsel %vm2148, %v4107, %v4108
      %v4110 = vrot.slane %v4054, 5
      %v4111 = vrot.slane %v4110, 4
      %v4112 = vrot.slane %v3637, 5
      %v4113 = vsel %vm2148, %v4111, %v4112
      %v4114 = vrot.slane %v4112, 4
      %v4115 = vrot.slane %v3638, 5
      %v4116 = vsel %vm2148, %v4114, %v4115
      %v4117 = vrot.slane %v4055, 5
      %v4118 = vrot.slane %v4117, 4
      %v4119 = vrot.slane %v3640, 5
      %v4120 = vsel %vm2148, %v4118, %v4119
      %v4121 = vrot.slane %v4119, 4
      %v4122 = vrot.slane %v3641, 5
      %v4123 = vsel %vm2148, %v4121, %v4122
      %v4124 = vrot.slane %v4056, 5
      %v4125 = vrot.slane %v4124, 4
      %v4126 = vrot.slane %v3643, 5
      %v4127 = vsel %vm2148, %v4125, %v4126
      %v4128 = vrot.slane %v4126, 4
      %v4129 = vrot.slane %v3644, 5
      %v4130 = vsel %vm2148, %v4128, %v4129
      %v4131 = vrot.slane %v4057, 5
      %v4132 = vrot.slane %v4131, 4
      %v4133 = vrot.slane %v3646, 5
      %v4134 = vsel %vm2148, %v4132, %v4133
      %v4135 = vrot.slane %v4133, 4
      %v4136 = vrot.slane %v3647, 5
      %v4137 = vsel %vm2148, %v4135, %v4136
      %s4138 = scalar_lea.vmem %s6, 512
      %v4139 = vld [vmem:[%s4138] sm:$0xf]
      %v4140 = vld [vmem:[%s4138 + $0x4] sm:$0xf]
      %v4141 = vld [vmem:[%s4138 + $0x8] sm:$0xf]
      %v4142 = vld [vmem:[%s4138 + $0xc] sm:$0xf]
      %v4143 = vld [vmem:[%s4138 + $0x10] sm:$0xf]
      %v4144 = vld [vmem:[%s4138 + $0x14] sm:$0xf]
      %v4145 = vld [vmem:[%s4138 + $0x18] sm:$0xf]
      %v4146 = vld [vmem:[%s4138 + $0x1c] sm:$0xf]
      %v4147 = vld [vmem:[%s4138 + $0x20] sm:$0xf]
      %v4148 = vld [vmem:[%s4138 + $0x24] sm:$0xf]
      %v4149 = vld [vmem:[%s4138 + $0x28] sm:$0xf]
      %v4150 = vld [vmem:[%s4138 + $0x2c] sm:$0xf]
      %v4151 = vld [vmem:[%s4138 + $0x30] sm:$0xf]
      %v4152 = vld [vmem:[%s4138 + $0x34] sm:$0xf]
      %v4153 = vld [vmem:[%s4138 + $0x38] sm:$0xf]
      %v4154 = vld [vmem:[%s4138 + $0x3c] sm:$0xf]
      %v4155 = vunpack.c.l.b16 %v4085
      %v4156 = vunpack.c.l.b16 %v4088
      %v4157 = vunpack.c.l.b16 %v4092
      %v4158 = vunpack.c.l.b16 %v4095
      %v4159 = vunpack.c.l.b16 %v4099
      %v4160 = vunpack.c.l.b16 %v4102
      %v4161 = vunpack.c.l.b16 %v4106
      %v4162 = vunpack.c.l.b16 %v4109
      %v4163 = vunpack.c.l.b16 %v4113
      %v4164 = vunpack.c.l.b16 %v4116
      %v4165 = vunpack.c.l.b16 %v4120
      %v4166 = vunpack.c.l.b16 %v4123
      %v4167 = vunpack.c.l.b16 %v4127
      %v4168 = vunpack.c.l.b16 %v4130
      %v4169 = vunpack.c.l.b16 %v4134
      %v4170 = vunpack.c.l.b16 %v4137
      %v4171 = vpack.c.b16 %v4156, %v4155
      %v4172 = vpack.c.b16 %v4158, %v4157
      %v4173 = vpack.c.b16 %v4160, %v4159
      %v4174 = vpack.c.b16 %v4162, %v4161
      %v4175 = vpack.c.b16 %v4164, %v4163
      %v4176 = vpack.c.b16 %v4166, %v4165
      %v4177 = vpack.c.b16 %v4168, %v4167
      %v4178 = vpack.c.b16 %v4170, %v4169
      %v4203 = vunpack.c.l.b16 %v4139
      %v4204 = vunpack.c.l.b16 %v4140
      %v4205 = vunpack.c.l.b16 %v4141
      %v4206 = vunpack.c.l.b16 %v4142
      %v4207 = vunpack.c.l.b16 %v4143
      %v4208 = vunpack.c.l.b16 %v4144
      %v4209 = vunpack.c.l.b16 %v4145
      %v4210 = vunpack.c.l.b16 %v4146
      %v4211 = vunpack.c.l.b16 %v4147
      %v4212 = vunpack.c.l.b16 %v4148
      %v4213 = vunpack.c.l.b16 %v4149
      %v4214 = vunpack.c.l.b16 %v4150
      %v4215 = vunpack.c.l.b16 %v4151
      %v4216 = vunpack.c.l.b16 %v4152
      %v4217 = vunpack.c.l.b16 %v4153
      %v4218 = vunpack.c.l.b16 %v4154
      %v4219 = vpack.c.b16 %v4204, %v4203
      %v4220 = vpack.c.b16 %v4206, %v4205
      %v4221 = vpack.c.b16 %v4208, %v4207
      %v4222 = vpack.c.b16 %v4210, %v4209
      %v4223 = vpack.c.b16 %v4212, %v4211
      %v4224 = vpack.c.b16 %v4214, %v4213
      %v4225 = vpack.c.b16 %v4216, %v4215
      %v4226 = vpack.c.b16 %v4218, %v4217
      %4235 = vmatprep.subr.bf16.mxu0 0
      %4236 = vmatpush1.bf16.msra.mxu0 %v4226
      %4237 = vmatprep.subr.bf16.mxu0 0
      %4238 = vmatpush1.bf16.msra.mxu0 %v4225
      %4239 = vmatprep.subr.bf16.mxu0 0
      %4240 = vmatpush1.bf16.msra.mxu0 %v4224
      %4241 = vmatprep.subr.bf16.mxu0 0
      %4242 = vmatpush1.bf16.msra.mxu0 %v4223
      %4243 = vmatprep.subr.bf16.mxu0 0
      %4244 = vmatpush1.bf16.msra.mxu0 %v4222
      %4245 = vmatprep.subr.bf16.mxu0 0
      %4246 = vmatpush1.bf16.msra.mxu0 %v4221
      %4247 = vmatprep.subr.bf16.mxu0 0
      %4248 = vmatpush1.bf16.msra.mxu0 %v4220
      %4249 = vmatprep.subr.bf16.mxu0 0
      %4250 = vmatpush1.bf16.msra.mxu0 %v4219
      %4251 = vmatprep.subr.bf16.mxu0 0
      %4252 = vmatpush2.bf16.msra.mxu0 0
      %4253 = vmatprep.subr.bf16.mxu0 0
      %4254 = vmatpush2.bf16.msra.mxu0 0
      %4255 = vmatprep.subr.bf16.mxu0 0
      %4256 = vmatpush2.bf16.msra.mxu0 0
      %4257 = vmatprep.subr.bf16.mxu0 0
      %4258 = vmatpush2.bf16.msra.mxu0 0
      %4259 = vmatprep.subr.bf16.mxu0 0
      %4260 = vmatpush2.bf16.msra.mxu0 0
      %4261 = vmatprep.subr.bf16.mxu0 0
      %4262 = vmatpush2.bf16.msra.mxu0 0
      %4263 = vmatprep.subr.bf16.mxu0 0
      %4264 = vmatpush2.bf16.msra.mxu0 0
      %4265 = vmatprep.subr.bf16.mxu0 0
      %4266 = vmatpush2.bf16.msra.mxu0 0
      %4267 = vmatprep.mubr.bf16.mxu0 0
      %4268 = vmatmul.mubr.bf16.gmra.mxu0 %v4171
      %v4269 = vpop.f32.mrf.mxu0
      %v4270 = vadd.f32 0.0, %v4269
      %v4271 = vpop.f32.mrf.mxu0
      %v4272 = vpop.f32.mrf.mxu0
      %v4273 = vadd.f32 0.0, %v4272
      %v4274 = vpop.f32.mrf.mxu0
      %4275 = vmatprep.mubr.bf16.mxu0 0
      %4276 = vmatmul.mubr.bf16.gmra.mxu0 %v4172
      %v4277 = vpop.f32.mrf.mxu0
      %v4278 = vadd.f32 0.0, %v4277
      %v4279 = vpop.f32.mrf.mxu0
      %v4280 = vpop.f32.mrf.mxu0
      %v4281 = vadd.f32 0.0, %v4280
      %v4282 = vpop.f32.mrf.mxu0
      %4283 = vmatprep.mubr.bf16.mxu0 0
      %4284 = vmatmul.mubr.bf16.gmra.mxu0 %v4173
      %v4285 = vpop.f32.mrf.mxu0
      %v4286 = vadd.f32 0.0, %v4285
      %v4287 = vpop.f32.mrf.mxu0
      %v4288 = vpop.f32.mrf.mxu0
      %v4289 = vadd.f32 0.0, %v4288
      %v4290 = vpop.f32.mrf.mxu0
      %4291 = vmatprep.mubr.bf16.mxu0 0
      %4292 = vmatmul.mubr.bf16.gmra.mxu0 %v4174
      %v4293 = vpop.f32.mrf.mxu0
      %v4294 = vadd.f32 0.0, %v4293
      %v4295 = vpop.f32.mrf.mxu0
      %v4296 = vpop.f32.mrf.mxu0
      %v4297 = vadd.f32 0.0, %v4296
      %v4298 = vpop.f32.mrf.mxu0
      %4299 = vmatprep.mubr.bf16.mxu0 0
      %4300 = vmatmul.mubr.bf16.gmra.mxu0 %v4175
      %v4301 = vpop.f32.mrf.mxu0
      %v4302 = vadd.f32 0.0, %v4301
      %v4303 = vpop.f32.mrf.mxu0
      %v4304 = vpop.f32.mrf.mxu0
      %v4305 = vadd.f32 0.0, %v4304
      %v4306 = vpop.f32.mrf.mxu0
      %4307 = vmatprep.mubr.bf16.mxu0 0
      %4308 = vmatmul.mubr.bf16.gmra.mxu0 %v4176
      %v4309 = vpop.f32.mrf.mxu0
      %v4310 = vadd.f32 0.0, %v4309
      %v4311 = vpop.f32.mrf.mxu0
      %v4312 = vpop.f32.mrf.mxu0
      %v4313 = vadd.f32 0.0, %v4312
      %v4314 = vpop.f32.mrf.mxu0
      %4315 = vmatprep.mubr.bf16.mxu0 0
      %4316 = vmatmul.mubr.bf16.gmra.mxu0 %v4177
      %v4317 = vpop.f32.mrf.mxu0
      %v4318 = vadd.f32 0.0, %v4317
      %v4319 = vpop.f32.mrf.mxu0
      %v4320 = vpop.f32.mrf.mxu0
      %v4321 = vadd.f32 0.0, %v4320
      %v4322 = vpop.f32.mrf.mxu0
      %4323 = vmatprep.mubr.bf16.mxu0 0
      %4324 = vmatmul.mubr.bf16.gmra.mxu0 %v4178
      %v4325 = vpop.f32.mrf.mxu0
      %v4326 = vadd.f32 0.0, %v4325
      %v4327 = vpop.f32.mrf.mxu0
      %v4328 = vpop.f32.mrf.mxu0
      %v4329 = vadd.f32 0.0, %v4328
      %v4330 = vpop.f32.mrf.mxu0
      %4331 = vdwg.mxu0
      %v4332 = vadd.f32 %v4034, %v4270
      %v4333 = vadd.f32 %v4035, %v4273
      %v4334 = vadd.f32 %v4036, %v4278
      %v4335 = vadd.f32 %v4037, %v4281
      %v4336 = vadd.f32 %v4038, %v4286
      %v4337 = vadd.f32 %v4039, %v4289
      %v4338 = vadd.f32 %v4040, %v4294
      %v4339 = vadd.f32 %v4041, %v4297
      %v4340 = vadd.f32 %v4042, %v4302
      %v4341 = vadd.f32 %v4043, %v4305
      %v4342 = vadd.f32 %v4044, %v4310
      %v4343 = vadd.f32 %v4045, %v4313
      %v4344 = vadd.f32 %v4046, %v4318
      %v4345 = vadd.f32 %v4047, %v4321
      %v4346 = vadd.f32 %v4048, %v4326
      %v4347 = vadd.f32 %v4049, %v4329
      %v4348 = vpack.c.bf16 %v4333, %v4332
      %v4349 = vpack.c.bf16 %v4335, %v4334
      %v4350 = vpack.c.bf16 %v4337, %v4336
      %v4351 = vpack.c.bf16 %v4339, %v4338
      %v4352 = vpack.c.bf16 %v4341, %v4340
      %v4353 = vpack.c.bf16 %v4343, %v4342
      %v4354 = vpack.c.bf16 %v4345, %v4344
      %v4355 = vpack.c.bf16 %v4347, %v4346
      %v4364 = vunpack.c.l.b16 %v4348
      %v4365 = vunpack.c.h.b16 %v4348
      %v4366 = vunpack.c.l.b16 %v4349
      %v4367 = vunpack.c.h.b16 %v4349
      %v4368 = vunpack.c.l.b16 %v4350
      %v4369 = vunpack.c.h.b16 %v4350
      %v4370 = vunpack.c.l.b16 %v4351
      %v4371 = vunpack.c.h.b16 %v4351
      %v4372 = vunpack.c.l.b16 %v4352
      %v4373 = vunpack.c.h.b16 %v4352
      %v4374 = vunpack.c.l.b16 %v4353
      %v4375 = vunpack.c.h.b16 %v4353
      %v4376 = vunpack.c.l.b16 %v4354
      %v4377 = vunpack.c.h.b16 %v4354
      %v4378 = vunpack.c.l.b16 %v4355
      %v4379 = vunpack.c.h.b16 %v4355
      %v4380 = vpack.c.b16 %v4364, %v4364
      %v4381 = vpack.c.b16 %v4365, %v4365
      %v4382 = vpack.c.b16 %v4366, %v4366
      %v4383 = vpack.c.b16 %v4367, %v4367
      %v4384 = vpack.c.b16 %v4368, %v4368
      %v4385 = vpack.c.b16 %v4369, %v4369
      %v4386 = vpack.c.b16 %v4370, %v4370
      %v4387 = vpack.c.b16 %v4371, %v4371
      %v4388 = vpack.c.b16 %v4372, %v4372
      %v4389 = vpack.c.b16 %v4373, %v4373
      %v4390 = vpack.c.b16 %v4374, %v4374
      %v4391 = vpack.c.b16 %v4375, %v4375
      %v4392 = vpack.c.b16 %v4376, %v4376
      %v4393 = vpack.c.b16 %v4377, %v4377
      %v4394 = vpack.c.b16 %v4378, %v4378
      %v4395 = vpack.c.b16 %v4379, %v4379
      %4412 = vst [vmem:[%s668] sm:$0xf] %v4380
      %4413 = vst [vmem:[%s668 + $0x4] sm:$0xf] %v4381
      %4414 = vst [vmem:[%s668 + $0x8] sm:$0xf] %v4382
      %4415 = vst [vmem:[%s668 + $0xc] sm:$0xf] %v4383
      %4416 = vst [vmem:[%s668 + $0x10] sm:$0xf] %v4384
      %4417 = vst [vmem:[%s668 + $0x14] sm:$0xf] %v4385
      %4418 = vst [vmem:[%s668 + $0x18] sm:$0xf] %v4386
      %4419 = vst [vmem:[%s668 + $0x1c] sm:$0xf] %v4387
      %4420 = vst [vmem:[%s668 + $0x20] sm:$0xf] %v4388
      %4421 = vst [vmem:[%s668 + $0x24] sm:$0xf] %v4389
      %4422 = vst [vmem:[%s668 + $0x28] sm:$0xf] %v4390
      %4423 = vst [vmem:[%s668 + $0x2c] sm:$0xf] %v4391
      %4424 = vst [vmem:[%s668 + $0x30] sm:$0xf] %v4392
      %4425 = vst [vmem:[%s668 + $0x34] sm:$0xf] %v4393
      %4426 = vst [vmem:[%s668 + $0x38] sm:$0xf] %v4394
      %4427 = vst [vmem:[%s668 + $0x3c] sm:$0xf] %v4395
      %v4428 = vadd.f32 %v4332, %v4333
      %v4429 = vadd.f32 %v4428, %v4334
      %v4430 = vadd.f32 %v4429, %v4335
      %v4431 = vadd.f32 %v4430, %v4336
      %v4432 = vadd.f32 %v4431, %v4337
      %v4433 = vadd.f32 %v4432, %v4338
      %v4434 = vadd.f32 %v4433, %v4339
      %v4435 = vadd.f32 %v4434, %v4340
      %v4436 = vadd.f32 %v4435, %v4341
      %v4437 = vadd.f32 %v4436, %v4342
      %v4438 = vadd.f32 %v4437, %v4343
      %v4439 = vadd.f32 %v4438, %v4344
      %v4440 = vadd.f32 %v4439, %v4345
      %v4441 = vadd.f32 %v4440, %v4346
      %v4442 = vadd.f32 %v4441, %v4347
      %v4443 = vrot.slane %v4442, 4
      %v4444 = vadd.f32 %v4442, %v4443
      %v4445 = vrot.slane %v4444, 2
      %v4446 = vadd.f32 %v4444, %v4445
      %v4447 = vrot.slane %v4446, 1
      %v4448 = vadd.f32 %v4446, %v4447
      %v4449 = vmul.f32 %v4332, %v4332
      %v4450 = vmul.f32 %v4333, %v4333
      %v4451 = vmul.f32 %v4334, %v4334
      %v4452 = vmul.f32 %v4335, %v4335
      %v4453 = vmul.f32 %v4336, %v4336
      %v4454 = vmul.f32 %v4337, %v4337
      %v4455 = vmul.f32 %v4338, %v4338
      %v4456 = vmul.f32 %v4339, %v4339
      %v4457 = vmul.f32 %v4340, %v4340
      %v4458 = vmul.f32 %v4341, %v4341
      %v4459 = vmul.f32 %v4342, %v4342
      %v4460 = vmul.f32 %v4343, %v4343
      %v4461 = vmul.f32 %v4344, %v4344
      %v4462 = vmul.f32 %v4345, %v4345
      %v4463 = vmul.f32 %v4346, %v4346
      %v4464 = vmul.f32 %v4347, %v4347
      %v4465 = vadd.f32 %v4449, %v4450
      %v4466 = vadd.f32 %v4465, %v4451
      %v4467 = vadd.f32 %v4466, %v4452
      %v4468 = vadd.f32 %v4467, %v4453
      %v4469 = vadd.f32 %v4468, %v4454
      %v4470 = vadd.f32 %v4469, %v4455
      %v4471 = vadd.f32 %v4470, %v4456
      %v4472 = vadd.f32 %v4471, %v4457
      %v4473 = vadd.f32 %v4472, %v4458
      %v4474 = vadd.f32 %v4473, %v4459
      %v4475 = vadd.f32 %v4474, %v4460
      %v4476 = vadd.f32 %v4475, %v4461
      %v4477 = vadd.f32 %v4476, %v4462
      %v4478 = vadd.f32 %v4477, %v4463
      %v4479 = vadd.f32 %v4478, %v4464
      %v4480 = vrot.slane %v4479, 4
      %v4481 = vadd.f32 %v4479, %v4480
      %v4482 = vrot.slane %v4481, 2
      %v4483 = vadd.f32 %v4481, %v4482
      %v4484 = vrot.slane %v4483, 1
      %v4485 = vadd.f32 %v4483, %v4484
      %vm4486 = vcmask 1040384
      %v4487 = vsel %vm4486, %v4448, %v4485
      %4488 = vst [vmem:[%s676] sm:$0x3] %v4487
      %p4489 = scmp.lt.s32.totalorder %s26, 1
      %s4490 = scalar_select %p4489, %s26, 1
      %p4491 = scmp.lt.s32.totalorder %s27, 1
      %s4492 = scalar_select %p4491, %s27, 1
      %s4493 = smul.addr %s4492, 16
      %s4494 = smul.addr %s4490, 32
      %s4495 = sadd.s32 %s4493, %s4494
      %s4496 = smul.addr %s4495, 4
      %s4497 = scalar_lea.vmem %s9, %s4496
      %p4498 = scmp.lt.s32.totalorder %s26, 1
      %s4499 = scalar_select %p4498, %s26, 1
      %p4500 = scmp.lt.s32.totalorder %s27, 1
      %s4501 = scalar_select %p4500, %s27, 1
      %s4502 = smul.addr %s4499, 2
      %s4503 = sadd.s32 %s4501, %s4502
      %s4504 = smul.addr %s4503, 2
      %s4505 = scalar_lea.vmem %s10, %s4504
      // Predicated region
      $region57: #{_lambda_.3} parent=55 // pred_check
        %p4506 = pneg %p309
      $region58: #{_lambda_.3} parent=55 // pred_check_branch
        %4508 = sbr.rel (%p4506) target = $region60
      $region59: #{_lambda_.3} parent=55 // pred_region
        _
      $region60: #{_lambda_.3} parent=55 // pred_fallthru
        _
      // Predicated region
      $region61: #{_lambda_.3} parent=55 // pred_check
        %p4509 = pneg %p337
      $region62: #{_lambda_.3} parent=55 // pred_check_branch
        %4511 = sbr.rel (%p4509) target = $region64
      $region63: #{_lambda_.3} parent=55 // pred_region
        _
      $region64: #{_lambda_.3} parent=55 // pred_fallthru
        _
    $region56: #{_lambda_.3} parent=5 // pred_fallthru
      _
    %p4512 = scmp.le.s32.totalorder 2, %s17
    // Predicated region
    $region65: #{_lambda_.3} parent=5 // pred_check
      %p4513 = pneg %p4512
    $region66: #{_lambda_.3} parent=5 // pred_check_branch
      %4515 = sbr.rel (%p4513) target = $region68
    $region67: #{_lambda_.3} parent=5 // pred_region
      %s4516 = ssub.s32 %s17, 2
      // Predicated region
      $region69: #{_lambda_.3} parent=67 // pred_check
        %p4517 = pneg %p315
      $region70: #{_lambda_.3} parent=67 // pred_check_branch
        %4519 = sbr.rel (%p4517) target = $region72
      $region71: #{_lambda_.3} parent=67 // pred_region
        %p4520 = scmp.lt.s32.totalorder %s28, 1
        %s4521 = scalar_select %p4520, %s28, 1
        %p4522 = scmp.lt.s32.totalorder %s29, 1
        %s4523 = scalar_select %p4522, %s29, 1
        %s4524 = smul.addr %s4523, 16
        %s4525 = smul.addr %s4521, 32
        %s4526 = sadd.s32 %s4524, %s4525
        %s4527 = smul.addr %s4526, 4
        %s4528 = scalar_lea.vmem %s9, %s4527
      $region72: #{_lambda_.3} parent=67 // pred_fallthru
        _
      // Predicated region
      $region73: #{_lambda_.3} parent=67 // pred_check
        %p4529 = pneg %p343
      $region74: #{_lambda_.3} parent=67 // pred_check_branch
        %4531 = sbr.rel (%p4529) target = $region76
      $region75: #{_lambda_.3} parent=67 // pred_region
        %p4532 = scmp.lt.s32.totalorder %s28, 1
        %s4533 = scalar_select %p4532, %s28, 1
        %p4534 = scmp.lt.s32.totalorder %s29, 1
        %s4535 = scalar_select %p4534, %s29, 1
        %s4536 = smul.addr %s4533, 2
        %s4537 = sadd.s32 %s4535, %s4536
        %s4538 = smul.addr %s4537, 2
        %s4539 = scalar_lea.vmem %s10, %s4538
      $region76: #{_lambda_.3} parent=67 // pred_fallthru
        _
    $region68: #{_lambda_.3} parent=5 // pred_fallthru
      _
  $region6: #{_lambda_.3} parent=0 // loop_footer
    %s21 = sadd.s32 1, %s17
  $region7: #{_lambda_.3} parent=0 // loop_footer_branch
    %16 = sbr.rel target = $region3
  $region8: #{_lambda_.3} parent=0 // loop_exit
    _

</llo_original>
